<compile_context>
chip_gen: v6e
topology: v6e:2x2x1
jax: 0.10.0
libtpu: 0.0.40
codegen_flags: <defaults>
</compile_context>

<pallas_src>
import functools
import math

import jax
import jax.numpy as jnp
import numpy as np
from jax.experimental import pallas as pl
from jax.experimental.pallas import tpu as pltpu


def _round_up(x, m):
    return ((x + m - 1) // m) * m


# ----------------------------- Pallas kernel ------------------------------ #

def meta_lstm_fused_kernel(x_ref, *refs, T, Bp, H, HH, num_layers):
    """Fused multi-layer MetaLSTM forward.

    refs = [5 fused weight refs per layer ...] + [y_ref, h_ref, c_ref, seq_ref]
      per layer: wx    (Din, 4H+4HH)   input projection   [main | meta]
                 wcomb (H+HH, 4H+4HH)  recurrent projection (LHS=[main_h|meta_h])
                 wmz   (HH, 12H)       pre-composed hyper modulation
                 dconst(1, 12H)        z-bias terms + main bias (g-cols x2)
                 xbias (1, 4H+4HH)     [0 | bias_hyper] (g-cols x2)
    """
    nw = 5 * num_layers
    w_refs = refs[:nw]
    y_ref, h_ref, c_ref, seq_ref = refs[nw:]

    GM = 4 * H            # main gate width (lane-aligned, first block)
    GH = 4 * HH           # meta (hyper) gate width (second block)

    for l in range(num_layers):
        wx, wcomb, wmz, dconst, xbias = w_refs[5 * l: 5 * l + 5]
        wx_v = wx[...]
        wcomb_v = wcomb[...]
        wmz_v = wmz[...]

        # ---- prologue: one batched input-projection dot for all T steps ----
        xin = x_ref[...] if l == 0 else seq_ref[...]          # (T*Bp, Din)
        xp = jnp.dot(xin, wx_v, preferred_element_type=jnp.float32)
        xp = xp + xbias[...]          # folds bias_hyper into the meta columns

        # Hoisted broadcast (JAX does not CSE broadcast_in_dim in the
        # statically unrolled loop).
        dconst_b = jnp.broadcast_to(dconst[...], (Bp, 3 * GM))

        main_h = jnp.zeros((Bp, H), jnp.float32)
        main_c = jnp.zeros((Bp, H), jnp.float32)
        meta_h = jnp.zeros((Bp, HH), jnp.float32)
        meta_c = jnp.zeros((Bp, HH), jnp.float32)

        last = l == num_layers - 1

        # TODO(synk): if T grows beyond ~32, switch to lax.fori_loop with
        # carried state to bound vreg live ranges; static unroll is fine at T=8.
        for t in range(T):
            xpt = xp[t * Bp:(t + 1) * Bp, :]     # (Bp, GM+GH), 8-row aligned

            # Single fused recurrent projection:
            #   rec[:, :GM] = main_h @ W_HH                     (main recurrent)
            #   rec[:, GM:] = main_h @ W_ih_h + meta_h @ W_hh   (meta pre-acts)
            hcat = jnp.concatenate([main_h, meta_h], axis=1)   # (Bp, H+HH)
            rec = jnp.dot(hcat, wcomb_v, preferred_element_type=jnp.float32)

            # --- meta (hyper) LSTM half: one wide sigmoid; the g-gate columns
            #     were pre-scaled by 2 offline so tanh(u) = 2*sigmoid(2u) - 1.
            meta_pre = xpt[:, GM:] + rec[:, GM:]
            sm = jax.nn.sigmoid(meta_pre)
            mi = sm[:, :HH]
            mf = sm[:, HH:2 * HH]
            mo = sm[:, 3 * HH:]
            mg = 2.0 * sm[:, 2 * HH:3 * HH] - 1.0
            meta_c = mf * meta_c + mi * mg
            meta_h = mo * jnp.tanh(meta_c)

            # --- hyper modulation: single pre-composed dot; z-biases + main
            #     bias live in dconst. ---
            d = jnp.dot(meta_h, wmz_v,
                        preferred_element_type=jnp.float32) + dconst_b

            # --- main LSTM half (hyper-modulated pre-activations) ---
            pre = (d[:, :GM] * xpt[:, :GM]
                   + d[:, GM:2 * GM] * rec[:, :GM]
                   + d[:, 2 * GM:])
            s = jax.nn.sigmoid(pre)
            ii = s[:, :H]
            ff = s[:, H:2 * H]
            oo = s[:, 3 * H:]
            gg = 2.0 * s[:, 2 * H:3 * H] - 1.0
            main_c = ff * main_c + ii * gg       # dropout(g) == g in eval mode
            main_h = oo * jnp.tanh(main_c)

            if last:
                y_ref[t] = main_h                          # stream final output
            else:
                seq_ref[t * Bp:(t + 1) * Bp, :] = main_h   # inter-layer buffer

        h_ref[l] = main_h
        c_ref[l] = main_c


# ------------------------------ JAX wrapper -------------------------------- #

def meta_rnn_base_forward(x, fused_layer_params, hidden_size, hyper_hidden_size):
    """MetaRNNBase.forward (mode='MetaLSTM', hidden=None, task_index=0).

    x: (T, B, input_size) -> (output (T,B,H), (h_n (L,B,H), c_n (L,B,H)))
    """
    T, B, D = x.shape
    H, HH = hidden_size, hyper_hidden_size
    L = len(fused_layer_params)

    # Pad the batch to a full 8-sublane tile: compute cost is unchanged (a
    # (2,*) f32 value occupies a full (8,128) vreg anyway), and every per-step
    # slice / scratch write becomes vreg-aligned. Padded rows are zero-input,
    # zero-state and are sliced off after the call.
    Bp = _round_up(max(B, 1), 8)
    x_p = jnp.zeros((T, Bp, D), x.dtype).at[:, :B, :].set(x)
    x_flat = x_p.reshape(T * Bp, D)       # one prologue dot per layer

    flat_weights = [w for layer in fused_layer_params for w in layer]

    kernel = functools.partial(
        meta_lstm_fused_kernel, T=T, Bp=Bp, H=H, HH=HH, num_layers=L)

    vmem = pltpu.MemorySpace.VMEM
    y, h_n, c_n = pl.pallas_call(
        kernel,
        out_shape=[
            jax.ShapeDtypeStruct((T, Bp, H), jnp.float32),
            jax.ShapeDtypeStruct((L, Bp, H), jnp.float32),
            jax.ShapeDtypeStruct((L, Bp, H), jnp.float32),
        ],
        # No grid: everything (inputs, weights, outputs) is a full VMEM-resident
        # block for a single kernel invocation.
        in_specs=[pl.BlockSpec(memory_space=vmem)] * (1 + 5 * L),
        out_specs=[pl.BlockSpec(memory_space=vmem)] * 3,
        scratch_shapes=[pltpu.VMEM((T * Bp, H), jnp.float32)],
    )(x_flat, *flat_weights)

    return y[:, :B], (h_n[:, :B], c_n[:, :B])


# ------------------------- parameter construction -------------------------- #

def init_layer_params(key, input_size, H, HH, E, task_num=1):
    """Same parameter shapes / init distribution as MetaLSTMCell.__init__."""
    stdv = 1.0 / math.sqrt(H)
    shapes = {
        "weight_iH": (task_num, 4 * H, input_size),
        "weight_HH": (task_num, 4 * H, H),
        "weight_ih": (4 * HH, input_size + H),
        "weight_hh": (4 * HH, HH),
        "weight_hzi": (E, HH),
        "weight_hzH": (E, HH),
        "weight_hzb": (E, HH),
        "weight_dziH": (4 * H, E),
        "weight_dzHH": (4 * H, E),
        "weight_bzH": (4 * H, E),
        "bias_i": (E,),
        "bias_H": (E,),
        "bias": (4 * H,),
        "bias_hyper": (4 * HH,),
    }
    keys = jax.random.split(key, len(shapes))
    return {
        name: jax.random.uniform(k, shape, jnp.float32, -stdv, stdv)
        for k, (name, shape) in zip(keys, shapes.items())
    }


def build_fused_layer_params(p, input_size, H, HH, E):
    """Pre-transpose / pre-compose PyTorch-layout weights (task_index=0).

    Column order is [main 4H | meta 4HH] so the 4H-wide main block is
    lane-aligned.  g-gate columns are pre-scaled by 2 so a single wide sigmoid
    plus a (2s-1) correction reproduces tanh on the g gate.
    """
    D = input_size
    GM, GH = 4 * H, 4 * HH
    hi = jax.lax.Precision.HIGHEST

    sGM = jnp.ones((GM,), jnp.float32).at[2 * H:3 * H].set(2.0)
    sGH = jnp.ones((GH,), jnp.float32).at[2 * HH:3 * HH].set(2.0)

    w_ih = p["weight_ih"]                                   # (4HH, D+H)
    a_ihx = jnp.transpose(w_ih[:, :D]) * sGH                # (D, 4HH)  meta <- x
    a_ihh = jnp.transpose(w_ih[:, D:]) * sGH                # (H, 4HH)  meta <- main_h
    a_hh = jnp.transpose(p["weight_hh"]) * sGH              # (HH, 4HH) meta recurrent
    a_iH = jnp.transpose(p["weight_iH"][0])                 # (D, 4H)   main <- x
    a_HH = jnp.transpose(p["weight_HH"][0])                 # (H, 4H)   main recurrent

    # Input projection [main | meta].
    wx = jnp.concatenate([a_iH, a_ihx], axis=1)             # (D, GM+GH)

    # Single recurrent projection; LHS = [main_h | meta_h].
    wcomb = jnp.concatenate([
        jnp.concatenate([a_HH, a_ihh], axis=1),                              # rows 0:H
        jnp.concatenate([jnp.zeros((HH, GM), jnp.float32), a_hh], axis=1),   # rows H:H+HH
    ], axis=0)                                              # (H+HH, GM+GH)

    # Pre-composed hyper modulation: d = meta_h @ wmz + dconst, where
    #   d[:, :GM]    = dziH(zi)        (multiplies the main input projection)
    #   d[:, GM:2GM] = dzHH(zH)        (multiplies the main recurrent projection)
    #   d[:, 2GM:]   = bzH(zb) + bias  (additive)
    b1 = jnp.dot(jnp.transpose(p["weight_hzi"]),
                 jnp.transpose(p["weight_dziH"]), precision=hi) * sGM
    b2 = jnp.dot(jnp.transpose(p["weight_hzH"]),
                 jnp.transpose(p["weight_dzHH"]), precision=hi) * sGM
    b3 = jnp.dot(jnp.transpose(p["weight_hzb"]),
                 jnp.transpose(p["weight_bzH"]), precision=hi) * sGM
    wmz = jnp.concatenate([b1, b2, b3], axis=1)             # (HH, 3*GM)

    c1 = jnp.dot(p["bias_i"], jnp.transpose(p["weight_dziH"]), precision=hi) * sGM
    c2 = jnp.dot(p["bias_H"], jnp.transpose(p["weight_dzHH"]), precision=hi) * sGM
    c3 = p["bias"] * sGM
    dconst = jnp.concatenate([c1, c2, c3])[None, :]         # (1, 3*GM)

    # bias_hyper folded into the meta columns of the input projection.
    xbias = jnp.concatenate([jnp.zeros((GM,), jnp.float32),
                             p["bias_hyper"] * sGH])[None, :]  # (1, GM+GH)

    return [wx, wcomb, wmz, dconst, xbias]


# ----------------------------- pure-JAX reference --------------------------- #

def reference_forward(x, raw_layer_params, H, HH):
    """Direct translation of the PyTorch module math (raw, unfused weights)."""
    T, B, _ = x.shape
    cur = x
    hs, cs = [], []
    for p in raw_layer_params:
        main_h = jnp.zeros((B, H)); main_c = jnp.zeros((B, H))
        meta_h = jnp.zeros((B, HH)); meta_c = jnp.zeros((B, HH))
        ys = []
        for t in range(T):
            xt = cur[t]
            meta_pre = (jnp.concatenate([xt, main_h], axis=1) @ p["weight_ih"].T
                        + meta_h @ p["weight_hh"].T + p["bias_hyper"])
            mi = jax.nn.sigmoid(meta_pre[:, :HH])
            mf = jax.nn.sigmoid(meta_pre[:, HH:2 * HH])
            mg = jnp.tanh(meta_pre[:, 2 * HH:3 * HH])
            mo = jax.nn.sigmoid(meta_pre[:, 3 * HH:])
            meta_c = mf * meta_c + mi * mg
            meta_h = mo * jnp.tanh(meta_c)
            zi = meta_h @ p["weight_hzi"].T + p["bias_i"]
            zH = meta_h @ p["weight_hzH"].T + p["bias_H"]
            zb = meta_h @ p["weight_hzb"].T
            pre = ((zi @ p["weight_dziH"].T) * (xt @ p["weight_iH"][0].T)
                   + (zH @ p["weight_dzHH"].T) * (main_h @ p["weight_HH"][0].T)
                   + (zb @ p["weight_bzH"].T) + p["bias"])
            ii = jax.nn.sigmoid(pre[:, :H])
            ff = jax.nn.sigmoid(pre[:, H:2 * H])
            gg = jnp.tanh(pre[:, 2 * H:3 * H])
            oo = jax.nn.sigmoid(pre[:, 3 * H:])
            main_c = ff * main_c + ii * gg
            main_h = oo * jnp.tanh(main_c)
            ys.append(main_h)
        cur = jnp.stack(ys)
        hs.append(main_h)
        cs.append(main_c)
    return cur, (jnp.stack(hs), jnp.stack(cs))


# ----------------------------------- main ----------------------------------- #

if __name__ == "__main__":
    INPUT_SIZE = 16
    HIDDEN = 32
    HYPER_HIDDEN = 16
    HYPER_EMB = 8
    NUM_LAYERS = 2
    T, B = 8, 2

    key = jax.random.PRNGKey(0)
    kx, *kl = jax.random.split(key, 1 + NUM_LAYERS)

    raw_params, fused_params = [], []
    for i in range(NUM_LAYERS):
        d_in = INPUT_SIZE if i == 0 else HIDDEN
        raw = init_layer_params(kl[i], d_in, HIDDEN, HYPER_HIDDEN, HYPER_EMB)
        raw_params.append(raw)
        fused_params.append(
            build_fused_layer_params(raw, d_in, HIDDEN, HYPER_HIDDEN, HYPER_EMB))

    x = jax.random.normal(kx, (T, B, INPUT_SIZE), dtype=jnp.float32)

    out, (h_n, c_n) = meta_rnn_base_forward(x, fused_params, HIDDEN, HYPER_HIDDEN)
    jax.block_until_ready((out, h_n, c_n))

    # Cross-check against a pure-JAX reference built from the raw (unfused)
    # weights — guards both kernel math and the weight-fusion plumbing
    # (whz@wdz pre-composition, gate scaling, bias folding, column reorder).
    ref_out, (ref_h, ref_c) = reference_forward(x, raw_params, HIDDEN, HYPER_HIDDEN)
    np.testing.assert_allclose(np.asarray(out), np.asarray(ref_out),
                               rtol=1e-3, atol=1e-3)
    np.testing.assert_allclose(np.asarray(h_n), np.asarray(ref_h),
                               rtol=1e-3, atol=1e-3)
    np.testing.assert_allclose(np.asarray(c_n), np.asarray(ref_c),
                               rtol=1e-3, atol=1e-3)

    assert out.shape == (T, B, HIDDEN)
    assert h_n.shape == (NUM_LAYERS, B, HIDDEN)
    assert c_n.shape == (NUM_LAYERS, B, HIDDEN)
    print("KERNEL_OK")
</pallas_src>

<mosaic_0001>
module attributes {stable_mosaic.version = 11 : i64} {
  func.func @meta_lstm_fused_kernel(%arg0: memref<64x16xf32, #tpu.memory_space<vmem>>, %arg1: memref<16x192xf32, #tpu.memory_space<vmem>>, %arg2: memref<48x192xf32, #tpu.memory_space<vmem>>, %arg3: memref<16x384xf32, #tpu.memory_space<vmem>>, %arg4: memref<1x384xf32, #tpu.memory_space<vmem>>, %arg5: memref<1x192xf32, #tpu.memory_space<vmem>>, %arg6: memref<32x192xf32, #tpu.memory_space<vmem>>, %arg7: memref<48x192xf32, #tpu.memory_space<vmem>>, %arg8: memref<16x384xf32, #tpu.memory_space<vmem>>, %arg9: memref<1x384xf32, #tpu.memory_space<vmem>>, %arg10: memref<1x192xf32, #tpu.memory_space<vmem>>, %arg11: memref<8x8x32xf32, #tpu.memory_space<vmem>>, %arg12: memref<2x8x32xf32, #tpu.memory_space<vmem>>, %arg13: memref<2x8x32xf32, #tpu.memory_space<vmem>>, %arg14: memref<64x32xf32, #tpu.memory_space<vmem>>) attributes {dimension_semantics = [], scalar_prefetch = 0 : i64, scratch_operands = 1 : i64, tpu.core_type = #tpu.core_type<tc>} {
    %c0 = arith.constant 0 : index
    %c0_0 = arith.constant 0 : index
    %0 = vector.load %arg1[%c0, %c0_0] : memref<16x192xf32, #tpu.memory_space<vmem>>, vector<16x192xf32>
    %c0_1 = arith.constant 0 : index
    %c0_2 = arith.constant 0 : index
    %1 = vector.load %arg2[%c0_1, %c0_2] : memref<48x192xf32, #tpu.memory_space<vmem>>, vector<48x192xf32>
    %c0_3 = arith.constant 0 : index
    %c0_4 = arith.constant 0 : index
    %2 = vector.load %arg3[%c0_3, %c0_4] : memref<16x384xf32, #tpu.memory_space<vmem>>, vector<16x384xf32>
    %c0_5 = arith.constant 0 : index
    %c0_6 = arith.constant 0 : index
    %3 = vector.load %arg0[%c0_5, %c0_6] : memref<64x16xf32, #tpu.memory_space<vmem>>, vector<64x16xf32>
    %cst = arith.constant dense<0.000000e+00> : vector<64x192xf32>
    %4 = tpu.matmul %3, %0, %cst {dimension_numbers = #tpu.dot_dimension_numbers<[1], [0], [0], [1], [0, 0, 1, 1], [], []>} : vector<64x16xf32>, vector<16x192xf32>, vector<64x192xf32> -> vector<64x192xf32>
    %c0_7 = arith.constant 0 : index
    %c0_8 = arith.constant 0 : index
    %5 = vector.load %arg5[%c0_7, %c0_8] : memref<1x192xf32, #tpu.memory_space<vmem>>, vector<1x192xf32>
    %6 = vector.broadcast %5 : vector<1x192xf32> to vector<64x192xf32>
    %7 = arith.addf %4, %6 : vector<64x192xf32>
    %c0_9 = arith.constant 0 : index
    %c0_10 = arith.constant 0 : index
    %8 = vector.load %arg4[%c0_9, %c0_10] : memref<1x384xf32, #tpu.memory_space<vmem>>, vector<1x384xf32>
    %9 = vector.shape_cast %8 : vector<1x384xf32> to vector<1x384xf32>
    %10 = vector.broadcast %9 : vector<1x384xf32> to vector<8x384xf32>
    %cst_11 = arith.constant 0.000000e+00 : f32
    %11 = vector.broadcast %cst_11 : f32 to vector<8x32xf32>
    %cst_12 = arith.constant 0.000000e+00 : f32
    %12 = vector.broadcast %cst_12 : f32 to vector<8x32xf32>
    %cst_13 = arith.constant 0.000000e+00 : f32
    %13 = vector.broadcast %cst_13 : f32 to vector<8x16xf32>
    %cst_14 = arith.constant 0.000000e+00 : f32
    %14 = vector.broadcast %cst_14 : f32 to vector<8x16xf32>
    %15 = vector.extract_strided_slice %7 {offsets = [0, 0], sizes = [8, 192], strides = [1, 1]} : vector<64x192xf32> to vector<8x192xf32>
    %16 = tpu.concatenate %11, %13 in 1 : vector<8x32xf32>, vector<8x16xf32> -> vector<8x48xf32>
    %cst_15 = arith.constant dense<0.000000e+00> : vector<8x192xf32>
    %17 = tpu.matmul %16, %1, %cst_15 {dimension_numbers = #tpu.dot_dimension_numbers<[1], [0], [0], [1], [0, 0, 1, 1], [], []>} : vector<8x48xf32>, vector<48x192xf32>, vector<8x192xf32> -> vector<8x192xf32>
    %18 = vector.extract_strided_slice %15 {offsets = [0, 128], sizes = [8, 64], strides = [1, 1]} : vector<8x192xf32> to vector<8x64xf32>
    %19 = vector.extract_strided_slice %17 {offsets = [0, 128], sizes = [8, 64], strides = [1, 1]} : vector<8x192xf32> to vector<8x64xf32>
    %20 = arith.addf %18, %19 : vector<8x64xf32>
    %21 = arith.negf %20 : vector<8x64xf32>
    %22 = math.exp %21 : vector<8x64xf32>
    %cst_16 = arith.constant 1.000000e+00 : f32
    %23 = vector.broadcast %cst_16 : f32 to vector<8x64xf32>
    %24 = arith.addf %23, %22 : vector<8x64xf32>
    %25 = arith.divf %23, %24 : vector<8x64xf32>
    %26 = vector.extract_strided_slice %25 {offsets = [0, 0], sizes = [8, 16], strides = [1, 1]} : vector<8x64xf32> to vector<8x16xf32>
    %27 = vector.extract_strided_slice %25 {offsets = [0, 16], sizes = [8, 16], strides = [1, 1]} : vector<8x64xf32> to vector<8x16xf32>
    %28 = vector.extract_strided_slice %25 {offsets = [0, 48], sizes = [8, 16], strides = [1, 1]} : vector<8x64xf32> to vector<8x16xf32>
    %29 = vector.extract_strided_slice %25 {offsets = [0, 32], sizes = [8, 16], strides = [1, 1]} : vector<8x64xf32> to vector<8x16xf32>
    %cst_17 = arith.constant 2.000000e+00 : f32
    %30 = vector.broadcast %cst_17 : f32 to vector<8x16xf32>
    %31 = arith.mulf %30, %29 : vector<8x16xf32>
    %cst_18 = arith.constant 1.000000e+00 : f32
    %32 = vector.broadcast %cst_18 : f32 to vector<8x16xf32>
    %33 = arith.subf %31, %32 : vector<8x16xf32>
    %34 = arith.mulf %27, %14 : vector<8x16xf32>
    %35 = arith.mulf %26, %33 : vector<8x16xf32>
    %36 = arith.addf %34, %35 : vector<8x16xf32>
    %37 = math.tanh %36 : vector<8x16xf32>
    %38 = arith.mulf %28, %37 : vector<8x16xf32>
    %cst_19 = arith.constant dense<0.000000e+00> : vector<8x384xf32>
    %39 = tpu.matmul %38, %2, %cst_19 {dimension_numbers = #tpu.dot_dimension_numbers<[1], [0], [0], [1], [0, 0, 1, 1], [], []>} : vector<8x16xf32>, vector<16x384xf32>, vector<8x384xf32> -> vector<8x384xf32>
    %40 = arith.addf %39, %10 : vector<8x384xf32>
    %41 = vector.extract_strided_slice %40 {offsets = [0, 0], sizes = [8, 128], strides = [1, 1]} : vector<8x384xf32> to vector<8x128xf32>
    %42 = vector.extract_strided_slice %15 {offsets = [0, 0], sizes = [8, 128], strides = [1, 1]} : vector<8x192xf32> to vector<8x128xf32>
    %43 = arith.mulf %41, %42 : vector<8x128xf32>
    %44 = vector.extract_strided_slice %40 {offsets = [0, 128], sizes = [8, 128], strides = [1, 1]} : vector<8x384xf32> to vector<8x128xf32>
    %45 = vector.extract_strided_slice %17 {offsets = [0, 0], sizes = [8, 128], strides = [1, 1]} : vector<8x192xf32> to vector<8x128xf32>
    %46 = arith.mulf %44, %45 : vector<8x128xf32>
    %47 = arith.addf %43, %46 : vector<8x128xf32>
    %48 = vector.extract_strided_slice %40 {offsets = [0, 256], sizes = [8, 128], strides = [1, 1]} : vector<8x384xf32> to vector<8x128xf32>
    %49 = arith.addf %47, %48 : vector<8x128xf32>
    %50 = arith.negf %49 : vector<8x128xf32>
    %51 = math.exp %50 : vector<8x128xf32>
    %cst_20 = arith.constant 1.000000e+00 : f32
    %52 = vector.broadcast %cst_20 : f32 to vector<8x128xf32>
    %53 = arith.addf %52, %51 : vector<8x128xf32>
    %54 = arith.divf %52, %53 : vector<8x128xf32>
    %55 = vector.extract_strided_slice %54 {offsets = [0, 0], sizes = [8, 32], strides = [1, 1]} : vector<8x128xf32> to vector<8x32xf32>
    %56 = vector.extract_strided_slice %54 {offsets = [0, 32], sizes = [8, 32], strides = [1, 1]} : vector<8x128xf32> to vector<8x32xf32>
    %57 = vector.extract_strided_slice %54 {offsets = [0, 96], sizes = [8, 32], strides = [1, 1]} : vector<8x128xf32> to vector<8x32xf32>
    %58 = vector.extract_strided_slice %54 {offsets = [0, 64], sizes = [8, 32], strides = [1, 1]} : vector<8x128xf32> to vector<8x32xf32>
    %cst_21 = arith.constant 2.000000e+00 : f32
    %59 = vector.broadcast %cst_21 : f32 to vector<8x32xf32>
    %60 = arith.mulf %59, %58 : vector<8x32xf32>
    %cst_22 = arith.constant 1.000000e+00 : f32
    %61 = vector.broadcast %cst_22 : f32 to vector<8x32xf32>
    %62 = arith.subf %60, %61 : vector<8x32xf32>
    %63 = arith.mulf %56, %12 : vector<8x32xf32>
    %64 = arith.mulf %55, %62 : vector<8x32xf32>
    %65 = arith.addf %63, %64 : vector<8x32xf32>
    %66 = math.tanh %65 : vector<8x32xf32>
    %67 = arith.mulf %57, %66 : vector<8x32xf32>
    %c0_23 = arith.constant 0 : index
    %c0_24 = arith.constant 0 : index
    %68 = vector.load %arg14[%c0_23, %c0_24] : memref<64x32xf32, #tpu.memory_space<vmem>>, vector<8x32xf32>
    tpu.vector_store %arg14[%c0_23, %c0_24], %67 {strides = array<i32>} : memref<64x32xf32, #tpu.memory_space<vmem>>, vector<8x32xf32>,
    %69 = vector.extract_strided_slice %7 {offsets = [8, 0], sizes = [8, 192], strides = [1, 1]} : vector<64x192xf32> to vector<8x192xf32>
    %70 = tpu.concatenate %67, %38 in 1 : vector<8x32xf32>, vector<8x16xf32> -> vector<8x48xf32>
    %cst_25 = arith.constant dense<0.000000e+00> : vector<8x192xf32>
    %71 = tpu.matmul %70, %1, %cst_25 {dimension_numbers = #tpu.dot_dimension_numbers<[1], [0], [0], [1], [0, 0, 1, 1], [], []>} : vector<8x48xf32>, vector<48x192xf32>, vector<8x192xf32> -> vector<8x192xf32>
    %72 = vector.extract_strided_slice %69 {offsets = [0, 128], sizes = [8, 64], strides = [1, 1]} : vector<8x192xf32> to vector<8x64xf32>
    %73 = vector.extract_strided_slice %71 {offsets = [0, 128], sizes = [8, 64], strides = [1, 1]} : vector<8x192xf32> to vector<8x64xf32>
    %74 = arith.addf %72, %73 : vector<8x64xf32>
    %75 = arith.negf %74 : vector<8x64xf32>
    %76 = math.exp %75 : vector<8x64xf32>
    %cst_26 = arith.constant 1.000000e+00 : f32
    %77 = vector.broadcast %cst_26 : f32 to vector<8x64xf32>
    %78 = arith.addf %77, %76 : vector<8x64xf32>
    %79 = arith.divf %77, %78 : vector<8x64xf32>
    %80 = vector.extract_strided_slice %79 {offsets = [0, 0], sizes = [8, 16], strides = [1, 1]} : vector<8x64xf32> to vector<8x16xf32>
    %81 = vector.extract_strided_slice %79 {offsets = [0, 16], sizes = [8, 16], strides = [1, 1]} : vector<8x64xf32> to vector<8x16xf32>
    %82 = vector.extract_strided_slice %79 {offsets = [0, 48], sizes = [8, 16], strides = [1, 1]} : vector<8x64xf32> to vector<8x16xf32>
    %83 = vector.extract_strided_slice %79 {offsets = [0, 32], sizes = [8, 16], strides = [1, 1]} : vector<8x64xf32> to vector<8x16xf32>
    %cst_27 = arith.constant 2.000000e+00 : f32
    %84 = vector.broadcast %cst_27 : f32 to vector<8x16xf32>
    %85 = arith.mulf %84, %83 : vector<8x16xf32>
    %cst_28 = arith.constant 1.000000e+00 : f32
    %86 = vector.broadcast %cst_28 : f32 to vector<8x16xf32>
    %87 = arith.subf %85, %86 : vector<8x16xf32>
    %88 = arith.mulf %81, %36 : vector<8x16xf32>
    %89 = arith.mulf %80, %87 : vector<8x16xf32>
    %90 = arith.addf %88, %89 : vector<8x16xf32>
    %91 = math.tanh %90 : vector<8x16xf32>
    %92 = arith.mulf %82, %91 : vector<8x16xf32>
    %cst_29 = arith.constant dense<0.000000e+00> : vector<8x384xf32>
    %93 = tpu.matmul %92, %2, %cst_29 {dimension_numbers = #tpu.dot_dimension_numbers<[1], [0], [0], [1], [0, 0, 1, 1], [], []>} : vector<8x16xf32>, vector<16x384xf32>, vector<8x384xf32> -> vector<8x384xf32>
    %94 = arith.addf %93, %10 : vector<8x384xf32>
    %95 = vector.extract_strided_slice %94 {offsets = [0, 0], sizes = [8, 128], strides = [1, 1]} : vector<8x384xf32> to vector<8x128xf32>
    %96 = vector.extract_strided_slice %69 {offsets = [0, 0], sizes = [8, 128], strides = [1, 1]} : vector<8x192xf32> to vector<8x128xf32>
    %97 = arith.mulf %95, %96 : vector<8x128xf32>
    %98 = vector.extract_strided_slice %94 {offsets = [0, 128], sizes = [8, 128], strides = [1, 1]} : vector<8x384xf32> to vector<8x128xf32>
    %99 = vector.extract_strided_slice %71 {offsets = [0, 0], sizes = [8, 128], strides = [1, 1]} : vector<8x192xf32> to vector<8x128xf32>
    %100 = arith.mulf %98, %99 : vector<8x128xf32>
    %101 = arith.addf %97, %100 : vector<8x128xf32>
    %102 = vector.extract_strided_slice %94 {offsets = [0, 256], sizes = [8, 128], strides = [1, 1]} : vector<8x384xf32> to vector<8x128xf32>
    %103 = arith.addf %101, %102 : vector<8x128xf32>
    %104 = arith.negf %103 : vector<8x128xf32>
    %105 = math.exp %104 : vector<8x128xf32>
    %cst_30 = arith.constant 1.000000e+00 : f32
    %106 = vector.broadcast %cst_30 : f32 to vector<8x128xf32>
    %107 = arith.addf %106, %105 : vector<8x128xf32>
    %108 = arith.divf %106, %107 : vector<8x128xf32>
    %109 = vector.extract_strided_slice %108 {offsets = [0, 0], sizes = [8, 32], strides = [1, 1]} : vector<8x128xf32> to vector<8x32xf32>
    %110 = vector.extract_strided_slice %108 {offsets = [0, 32], sizes = [8, 32], strides = [1, 1]} : vector<8x128xf32> to vector<8x32xf32>
    %111 = vector.extract_strided_slice %108 {offsets = [0, 96], sizes = [8, 32], strides = [1, 1]} : vector<8x128xf32> to vector<8x32xf32>
    %112 = vector.extract_strided_slice %108 {offsets = [0, 64], sizes = [8, 32], strides = [1, 1]} : vector<8x128xf32> to vector<8x32xf32>
    %cst_31 = arith.constant 2.000000e+00 : f32
    %113 = vector.broadcast %cst_31 : f32 to vector<8x32xf32>
    %114 = arith.mulf %113, %112 : vector<8x32xf32>
    %cst_32 = arith.constant 1.000000e+00 : f32
    %115 = vector.broadcast %cst_32 : f32 to vector<8x32xf32>
    %116 = arith.subf %114, %115 : vector<8x32xf32>
    %117 = arith.mulf %110, %65 : vector<8x32xf32>
    %118 = arith.mulf %109, %116 : vector<8x32xf32>
    %119 = arith.addf %117, %118 : vector<8x32xf32>
    %120 = math.tanh %119 : vector<8x32xf32>
    %121 = arith.mulf %111, %120 : vector<8x32xf32>
    %c8 = arith.constant 8 : index
    %c0_33 = arith.constant 0 : index
    %122 = vector.load %arg14[%c8, %c0_33] : memref<64x32xf32, #tpu.memory_space<vmem>>, vector<8x32xf32>
    tpu.vector_store %arg14[%c8, %c0_33], %121 {strides = array<i32>} : memref<64x32xf32, #tpu.memory_space<vmem>>, vector<8x32xf32>,
    %123 = vector.extract_strided_slice %7 {offsets = [16, 0], sizes = [8, 192], strides = [1, 1]} : vector<64x192xf32> to vector<8x192xf32>
    %124 = tpu.concatenate %121, %92 in 1 : vector<8x32xf32>, vector<8x16xf32> -> vector<8x48xf32>
    %cst_34 = arith.constant dense<0.000000e+00> : vector<8x192xf32>
    %125 = tpu.matmul %124, %1, %cst_34 {dimension_numbers = #tpu.dot_dimension_numbers<[1], [0], [0], [1], [0, 0, 1, 1], [], []>} : vector<8x48xf32>, vector<48x192xf32>, vector<8x192xf32> -> vector<8x192xf32>
    %126 = vector.extract_strided_slice %123 {offsets = [0, 128], sizes = [8, 64], strides = [1, 1]} : vector<8x192xf32> to vector<8x64xf32>
    %127 = vector.extract_strided_slice %125 {offsets = [0, 128], sizes = [8, 64], strides = [1, 1]} : vector<8x192xf32> to vector<8x64xf32>
    %128 = arith.addf %126, %127 : vector<8x64xf32>
    %129 = arith.negf %128 : vector<8x64xf32>
    %130 = math.exp %129 : vector<8x64xf32>
    %cst_35 = arith.constant 1.000000e+00 : f32
    %131 = vector.broadcast %cst_35 : f32 to vector<8x64xf32>
    %132 = arith.addf %131, %130 : vector<8x64xf32>
    %133 = arith.divf %131, %132 : vector<8x64xf32>
    %134 = vector.extract_strided_slice %133 {offsets = [0, 0], sizes = [8, 16], strides = [1, 1]} : vector<8x64xf32> to vector<8x16xf32>
    %135 = vector.extract_strided_slice %133 {offsets = [0, 16], sizes = [8, 16], strides = [1, 1]} : vector<8x64xf32> to vector<8x16xf32>
    %136 = vector.extract_strided_slice %133 {offsets = [0, 48], sizes = [8, 16], strides = [1, 1]} : vector<8x64xf32> to vector<8x16xf32>
    %137 = vector.extract_strided_slice %133 {offsets = [0, 32], sizes = [8, 16], strides = [1, 1]} : vector<8x64xf32> to vector<8x16xf32>
    %cst_36 = arith.constant 2.000000e+00 : f32
    %138 = vector.broadcast %cst_36 : f32 to vector<8x16xf32>
    %139 = arith.mulf %138, %137 : vector<8x16xf32>
    %cst_37 = arith.constant 1.000000e+00 : f32
    %140 = vector.broadcast %cst_37 : f32 to vector<8x16xf32>
    %141 = arith.subf %139, %140 : vector<8x16xf32>
    %142 = arith.mulf %135, %90 : vector<8x16xf32>
    %143 = arith.mulf %134, %141 : vector<8x16xf32>
    %144 = arith.addf %142, %143 : vector<8x16xf32>
    %145 = math.tanh %144 : vector<8x16xf32>
    %146 = arith.mulf %136, %145 : vector<8x16xf32>
    %cst_38 = arith.constant dense<0.000000e+00> : vector<8x384xf32>
    %147 = tpu.matmul %146, %2, %cst_38 {dimension_numbers = #tpu.dot_dimension_numbers<[1], [0], [0], [1], [0, 0, 1, 1], [], []>} : vector<8x16xf32>, vector<16x384xf32>, vector<8x384xf32> -> vector<8x384xf32>
    %148 = arith.addf %147, %10 : vector<8x384xf32>
    %149 = vector.extract_strided_slice %148 {offsets = [0, 0], sizes = [8, 128], strides = [1, 1]} : vector<8x384xf32> to vector<8x128xf32>
    %150 = vector.extract_strided_slice %123 {offsets = [0, 0], sizes = [8, 128], strides = [1, 1]} : vector<8x192xf32> to vector<8x128xf32>
    %151 = arith.mulf %149, %150 : vector<8x128xf32>
    %152 = vector.extract_strided_slice %148 {offsets = [0, 128], sizes = [8, 128], strides = [1, 1]} : vector<8x384xf32> to vector<8x128xf32>
    %153 = vector.extract_strided_slice %125 {offsets = [0, 0], sizes = [8, 128], strides = [1, 1]} : vector<8x192xf32> to vector<8x128xf32>
    %154 = arith.mulf %152, %153 : vector<8x128xf32>
    %155 = arith.addf %151, %154 : vector<8x128xf32>
    %156 = vector.extract_strided_slice %148 {offsets = [0, 256], sizes = [8, 128], strides = [1, 1]} : vector<8x384xf32> to vector<8x128xf32>
    %157 = arith.addf %155, %156 : vector<8x128xf32>
    %158 = arith.negf %157 : vector<8x128xf32>
    %159 = math.exp %158 : vector<8x128xf32>
    %cst_39 = arith.constant 1.000000e+00 : f32
    %160 = vector.broadcast %cst_39 : f32 to vector<8x128xf32>
    %161 = arith.addf %160, %159 : vector<8x128xf32>
    %162 = arith.divf %160, %161 : vector<8x128xf32>
    %163 = vector.extract_strided_slice %162 {offsets = [0, 0], sizes = [8, 32], strides = [1, 1]} : vector<8x128xf32> to vector<8x32xf32>
    %164 = vector.extract_strided_slice %162 {offsets = [0, 32], sizes = [8, 32], strides = [1, 1]} : vector<8x128xf32> to vector<8x32xf32>
    %165 = vector.extract_strided_slice %162 {offsets = [0, 96], sizes = [8, 32], strides = [1, 1]} : vector<8x128xf32> to vector<8x32xf32>
    %166 = vector.extract_strided_slice %162 {offsets = [0, 64], sizes = [8, 32], strides = [1, 1]} : vector<8x128xf32> to vector<8x32xf32>
    %cst_40 = arith.constant 2.000000e+00 : f32
    %167 = vector.broadcast %cst_40 : f32 to vector<8x32xf32>
    %168 = arith.mulf %167, %166 : vector<8x32xf32>
    %cst_41 = arith.constant 1.000000e+00 : f32
    %169 = vector.broadcast %cst_41 : f32 to vector<8x32xf32>
    %170 = arith.subf %168, %169 : vector<8x32xf32>
    %171 = arith.mulf %164, %119 : vector<8x32xf32>
    %172 = arith.mulf %163, %170 : vector<8x32xf32>
    %173 = arith.addf %171, %172 : vector<8x32xf32>
    %174 = math.tanh %173 : vector<8x32xf32>
    %175 = arith.mulf %165, %174 : vector<8x32xf32>
    %c16 = arith.constant 16 : index
    %c0_42 = arith.constant 0 : index
    %176 = vector.load %arg14[%c16, %c0_42] : memref<64x32xf32, #tpu.memory_space<vmem>>, vector<8x32xf32>
    tpu.vector_store %arg14[%c16, %c0_42], %175 {strides = array<i32>} : memref<64x32xf32, #tpu.memory_space<vmem>>, vector<8x32xf32>,
    %177 = vector.extract_strided_slice %7 {offsets = [24, 0], sizes = [8, 192], strides = [1, 1]} : vector<64x192xf32> to vector<8x192xf32>
    %178 = tpu.concatenate %175, %146 in 1 : vector<8x32xf32>, vector<8x16xf32> -> vector<8x48xf32>
    %cst_43 = arith.constant dense<0.000000e+00> : vector<8x192xf32>
    %179 = tpu.matmul %178, %1, %cst_43 {dimension_numbers = #tpu.dot_dimension_numbers<[1], [0], [0], [1], [0, 0, 1, 1], [], []>} : vector<8x48xf32>, vector<48x192xf32>, vector<8x192xf32> -> vector<8x192xf32>
    %180 = vector.extract_strided_slice %177 {offsets = [0, 128], sizes = [8, 64], strides = [1, 1]} : vector<8x192xf32> to vector<8x64xf32>
    %181 = vector.extract_strided_slice %179 {offsets = [0, 128], sizes = [8, 64], strides = [1, 1]} : vector<8x192xf32> to vector<8x64xf32>
    %182 = arith.addf %180, %181 : vector<8x64xf32>
    %183 = arith.negf %182 : vector<8x64xf32>
    %184 = math.exp %183 : vector<8x64xf32>
    %cst_44 = arith.constant 1.000000e+00 : f32
    %185 = vector.broadcast %cst_44 : f32 to vector<8x64xf32>
    %186 = arith.addf %185, %184 : vector<8x64xf32>
    %187 = arith.divf %185, %186 : vector<8x64xf32>
    %188 = vector.extract_strided_slice %187 {offsets = [0, 0], sizes = [8, 16], strides = [1, 1]} : vector<8x64xf32> to vector<8x16xf32>
    %189 = vector.extract_strided_slice %187 {offsets = [0, 16], sizes = [8, 16], strides = [1, 1]} : vector<8x64xf32> to vector<8x16xf32>
    %190 = vector.extract_strided_slice %187 {offsets = [0, 48], sizes = [8, 16], strides = [1, 1]} : vector<8x64xf32> to vector<8x16xf32>
    %191 = vector.extract_strided_slice %187 {offsets = [0, 32], sizes = [8, 16], strides = [1, 1]} : vector<8x64xf32> to vector<8x16xf32>
    %cst_45 = arith.constant 2.000000e+00 : f32
    %192 = vector.broadcast %cst_45 : f32 to vector<8x16xf32>
    %193 = arith.mulf %192, %191 : vector<8x16xf32>
    %cst_46 = arith.constant 1.000000e+00 : f32
    %194 = vector.broadcast %cst_46 : f32 to vector<8x16xf32>
    %195 = arith.subf %193, %194 : vector<8x16xf32>
    %196 = arith.mulf %189, %144 : vector<8x16xf32>
    %197 = arith.mulf %188, %195 : vector<8x16xf32>
    %198 = arith.addf %196, %197 : vector<8x16xf32>
    %199 = math.tanh %198 : vector<8x16xf32>
    %200 = arith.mulf %190, %199 : vector<8x16xf32>
    %cst_47 = arith.constant dense<0.000000e+00> : vector<8x384xf32>
    %201 = tpu.matmul %200, %2, %cst_47 {dimension_numbers = #tpu.dot_dimension_numbers<[1], [0], [0], [1], [0, 0, 1, 1], [], []>} : vector<8x16xf32>, vector<16x384xf32>, vector<8x384xf32> -> vector<8x384xf32>
    %202 = arith.addf %201, %10 : vector<8x384xf32>
    %203 = vector.extract_strided_slice %202 {offsets = [0, 0], sizes = [8, 128], strides = [1, 1]} : vector<8x384xf32> to vector<8x128xf32>
    %204 = vector.extract_strided_slice %177 {offsets = [0, 0], sizes = [8, 128], strides = [1, 1]} : vector<8x192xf32> to vector<8x128xf32>
    %205 = arith.mulf %203, %204 : vector<8x128xf32>
    %206 = vector.extract_strided_slice %202 {offsets = [0, 128], sizes = [8, 128], strides = [1, 1]} : vector<8x384xf32> to vector<8x128xf32>
    %207 = vector.extract_strided_slice %179 {offsets = [0, 0], sizes = [8, 128], strides = [1, 1]} : vector<8x192xf32> to vector<8x128xf32>
    %208 = arith.mulf %206, %207 : vector<8x128xf32>
    %209 = arith.addf %205, %208 : vector<8x128xf32>
    %210 = vector.extract_strided_slice %202 {offsets = [0, 256], sizes = [8, 128], strides = [1, 1]} : vector<8x384xf32> to vector<8x128xf32>
    %211 = arith.addf %209, %210 : vector<8x128xf32>
    %212 = arith.negf %211 : vector<8x128xf32>
    %213 = math.exp %212 : vector<8x128xf32>
    %cst_48 = arith.constant 1.000000e+00 : f32
    %214 = vector.broadcast %cst_48 : f32 to vector<8x128xf32>
    %215 = arith.addf %214, %213 : vector<8x128xf32>
    %216 = arith.divf %214, %215 : vector<8x128xf32>
    %217 = vector.extract_strided_slice %216 {offsets = [0, 0], sizes = [8, 32], strides = [1, 1]} : vector<8x128xf32> to vector<8x32xf32>
    %218 = vector.extract_strided_slice %216 {offsets = [0, 32], sizes = [8, 32], strides = [1, 1]} : vector<8x128xf32> to vector<8x32xf32>
    %219 = vector.extract_strided_slice %216 {offsets = [0, 96], sizes = [8, 32], strides = [1, 1]} : vector<8x128xf32> to vector<8x32xf32>
    %220 = vector.extract_strided_slice %216 {offsets = [0, 64], sizes = [8, 32], strides = [1, 1]} : vector<8x128xf32> to vector<8x32xf32>
    %cst_49 = arith.constant 2.000000e+00 : f32
    %221 = vector.broadcast %cst_49 : f32 to vector<8x32xf32>
    %222 = arith.mulf %221, %220 : vector<8x32xf32>
    %cst_50 = arith.constant 1.000000e+00 : f32
    %223 = vector.broadcast %cst_50 : f32 to vector<8x32xf32>
    %224 = arith.subf %222, %223 : vector<8x32xf32>
    %225 = arith.mulf %218, %173 : vector<8x32xf32>
    %226 = arith.mulf %217, %224 : vector<8x32xf32>
    %227 = arith.addf %225, %226 : vector<8x32xf32>
    %228 = math.tanh %227 : vector<8x32xf32>
    %229 = arith.mulf %219, %228 : vector<8x32xf32>
    %c24 = arith.constant 24 : index
    %c0_51 = arith.constant 0 : index
    %230 = vector.load %arg14[%c24, %c0_51] : memref<64x32xf32, #tpu.memory_space<vmem>>, vector<8x32xf32>
    tpu.vector_store %arg14[%c24, %c0_51], %229 {strides = array<i32>} : memref<64x32xf32, #tpu.memory_space<vmem>>, vector<8x32xf32>,
    %231 = vector.extract_strided_slice %7 {offsets = [32, 0], sizes = [8, 192], strides = [1, 1]} : vector<64x192xf32> to vector<8x192xf32>
    %232 = tpu.concatenate %229, %200 in 1 : vector<8x32xf32>, vector<8x16xf32> -> vector<8x48xf32>
    %cst_52 = arith.constant dense<0.000000e+00> : vector<8x192xf32>
    %233 = tpu.matmul %232, %1, %cst_52 {dimension_numbers = #tpu.dot_dimension_numbers<[1], [0], [0], [1], [0, 0, 1, 1], [], []>} : vector<8x48xf32>, vector<48x192xf32>, vector<8x192xf32> -> vector<8x192xf32>
    %234 = vector.extract_strided_slice %231 {offsets = [0, 128], sizes = [8, 64], strides = [1, 1]} : vector<8x192xf32> to vector<8x64xf32>
    %235 = vector.extract_strided_slice %233 {offsets = [0, 128], sizes = [8, 64], strides = [1, 1]} : vector<8x192xf32> to vector<8x64xf32>
    %236 = arith.addf %234, %235 : vector<8x64xf32>
    %237 = arith.negf %236 : vector<8x64xf32>
    %238 = math.exp %237 : vector<8x64xf32>
    %cst_53 = arith.constant 1.000000e+00 : f32
    %239 = vector.broadcast %cst_53 : f32 to vector<8x64xf32>
    %240 = arith.addf %239, %238 : vector<8x64xf32>
    %241 = arith.divf %239, %240 : vector<8x64xf32>
    %242 = vector.extract_strided_slice %241 {offsets = [0, 0], sizes = [8, 16], strides = [1, 1]} : vector<8x64xf32> to vector<8x16xf32>
    %243 = vector.extract_strided_slice %241 {offsets = [0, 16], sizes = [8, 16], strides = [1, 1]} : vector<8x64xf32> to vector<8x16xf32>
    %244 = vector.extract_strided_slice %241 {offsets = [0, 48], sizes = [8, 16], strides = [1, 1]} : vector<8x64xf32> to vector<8x16xf32>
    %245 = vector.extract_strided_slice %241 {offsets = [0, 32], sizes = [8, 16], strides = [1, 1]} : vector<8x64xf32> to vector<8x16xf32>
    %cst_54 = arith.constant 2.000000e+00 : f32
    %246 = vector.broadcast %cst_54 : f32 to vector<8x16xf32>
    %247 = arith.mulf %246, %245 : vector<8x16xf32>
    %cst_55 = arith.constant 1.000000e+00 : f32
    %248 = vector.broadcast %cst_55 : f32 to vector<8x16xf32>
    %249 = arith.subf %247, %248 : vector<8x16xf32>
    %250 = arith.mulf %243, %198 : vector<8x16xf32>
    %251 = arith.mulf %242, %249 : vector<8x16xf32>
    %252 = arith.addf %250, %251 : vector<8x16xf32>
    %253 = math.tanh %252 : vector<8x16xf32>
    %254 = arith.mulf %244, %253 : vector<8x16xf32>
    %cst_56 = arith.constant dense<0.000000e+00> : vector<8x384xf32>
    %255 = tpu.matmul %254, %2, %cst_56 {dimension_numbers = #tpu.dot_dimension_numbers<[1], [0], [0], [1], [0, 0, 1, 1], [], []>} : vector<8x16xf32>, vector<16x384xf32>, vector<8x384xf32> -> vector<8x384xf32>
    %256 = arith.addf %255, %10 : vector<8x384xf32>
    %257 = vector.extract_strided_slice %256 {offsets = [0, 0], sizes = [8, 128], strides = [1, 1]} : vector<8x384xf32> to vector<8x128xf32>
    %258 = vector.extract_strided_slice %231 {offsets = [0, 0], sizes = [8, 128], strides = [1, 1]} : vector<8x192xf32> to vector<8x128xf32>
    %259 = arith.mulf %257, %258 : vector<8x128xf32>
    %260 = vector.extract_strided_slice %256 {offsets = [0, 128], sizes = [8, 128], strides = [1, 1]} : vector<8x384xf32> to vector<8x128xf32>
    %261 = vector.extract_strided_slice %233 {offsets = [0, 0], sizes = [8, 128], strides = [1, 1]} : vector<8x192xf32> to vector<8x128xf32>
    %262 = arith.mulf %260, %261 : vector<8x128xf32>
    %263 = arith.addf %259, %262 : vector<8x128xf32>
    %264 = vector.extract_strided_slice %256 {offsets = [0, 256], sizes = [8, 128], strides = [1, 1]} : vector<8x384xf32> to vector<8x128xf32>
    %265 = arith.addf %263, %264 : vector<8x128xf32>
    %266 = arith.negf %265 : vector<8x128xf32>
    %267 = math.exp %266 : vector<8x128xf32>
    %cst_57 = arith.constant 1.000000e+00 : f32
    %268 = vector.broadcast %cst_57 : f32 to vector<8x128xf32>
    %269 = arith.addf %268, %267 : vector<8x128xf32>
    %270 = arith.divf %268, %269 : vector<8x128xf32>
    %271 = vector.extract_strided_slice %270 {offsets = [0, 0], sizes = [8, 32], strides = [1, 1]} : vector<8x128xf32> to vector<8x32xf32>
    %272 = vector.extract_strided_slice %270 {offsets = [0, 32], sizes = [8, 32], strides = [1, 1]} : vector<8x128xf32> to vector<8x32xf32>
    %273 = vector.extract_strided_slice %270 {offsets = [0, 96], sizes = [8, 32], strides = [1, 1]} : vector<8x128xf32> to vector<8x32xf32>
    %274 = vector.extract_strided_slice %270 {offsets = [0, 64], sizes = [8, 32], strides = [1, 1]} : vector<8x128xf32> to vector<8x32xf32>
    %cst_58 = arith.constant 2.000000e+00 : f32
    %275 = vector.broadcast %cst_58 : f32 to vector<8x32xf32>
    %276 = arith.mulf %275, %274 : vector<8x32xf32>
    %cst_59 = arith.constant 1.000000e+00 : f32
    %277 = vector.broadcast %cst_59 : f32 to vector<8x32xf32>
    %278 = arith.subf %276, %277 : vector<8x32xf32>
    %279 = arith.mulf %272, %227 : vector<8x32xf32>
    %280 = arith.mulf %271, %278 : vector<8x32xf32>
    %281 = arith.addf %279, %280 : vector<8x32xf32>
    %282 = math.tanh %281 : vector<8x32xf32>
    %283 = arith.mulf %273, %282 : vector<8x32xf32>
    %c32 = arith.constant 32 : index
    %c0_60 = arith.constant 0 : index
    %284 = vector.load %arg14[%c32, %c0_60] : memref<64x32xf32, #tpu.memory_space<vmem>>, vector<8x32xf32>
    tpu.vector_store %arg14[%c32, %c0_60], %283 {strides = array<i32>} : memref<64x32xf32, #tpu.memory_space<vmem>>, vector<8x32xf32>,
    %285 = vector.extract_strided_slice %7 {offsets = [40, 0], sizes = [8, 192], strides = [1, 1]} : vector<64x192xf32> to vector<8x192xf32>
    %286 = tpu.concatenate %283, %254 in 1 : vector<8x32xf32>, vector<8x16xf32> -> vector<8x48xf32>
    %cst_61 = arith.constant dense<0.000000e+00> : vector<8x192xf32>
    %287 = tpu.matmul %286, %1, %cst_61 {dimension_numbers = #tpu.dot_dimension_numbers<[1], [0], [0], [1], [0, 0, 1, 1], [], []>} : vector<8x48xf32>, vector<48x192xf32>, vector<8x192xf32> -> vector<8x192xf32>
    %288 = vector.extract_strided_slice %285 {offsets = [0, 128], sizes = [8, 64], strides = [1, 1]} : vector<8x192xf32> to vector<8x64xf32>
    %289 = vector.extract_strided_slice %287 {offsets = [0, 128], sizes = [8, 64], strides = [1, 1]} : vector<8x192xf32> to vector<8x64xf32>
    %290 = arith.addf %288, %289 : vector<8x64xf32>
    %291 = arith.negf %290 : vector<8x64xf32>
    %292 = math.exp %291 : vector<8x64xf32>
    %cst_62 = arith.constant 1.000000e+00 : f32
    %293 = vector.broadcast %cst_62 : f32 to vector<8x64xf32>
    %294 = arith.addf %293, %292 : vector<8x64xf32>
    %295 = arith.divf %293, %294 : vector<8x64xf32>
    %296 = vector.extract_strided_slice %295 {offsets = [0, 0], sizes = [8, 16], strides = [1, 1]} : vector<8x64xf32> to vector<8x16xf32>
    %297 = vector.extract_strided_slice %295 {offsets = [0, 16], sizes = [8, 16], strides = [1, 1]} : vector<8x64xf32> to vector<8x16xf32>
    %298 = vector.extract_strided_slice %295 {offsets = [0, 48], sizes = [8, 16], strides = [1, 1]} : vector<8x64xf32> to vector<8x16xf32>
    %299 = vector.extract_strided_slice %295 {offsets = [0, 32], sizes = [8, 16], strides = [1, 1]} : vector<8x64xf32> to vector<8x16xf32>
    %cst_63 = arith.constant 2.000000e+00 : f32
    %300 = vector.broadcast %cst_63 : f32 to vector<8x16xf32>
    %301 = arith.mulf %300, %299 : vector<8x16xf32>
    %cst_64 = arith.constant 1.000000e+00 : f32
    %302 = vector.broadcast %cst_64 : f32 to vector<8x16xf32>
    %303 = arith.subf %301, %302 : vector<8x16xf32>
    %304 = arith.mulf %297, %252 : vector<8x16xf32>
    %305 = arith.mulf %296, %303 : vector<8x16xf32>
    %306 = arith.addf %304, %305 : vector<8x16xf32>
    %307 = math.tanh %306 : vector<8x16xf32>
    %308 = arith.mulf %298, %307 : vector<8x16xf32>
    %cst_65 = arith.constant dense<0.000000e+00> : vector<8x384xf32>
    %309 = tpu.matmul %308, %2, %cst_65 {dimension_numbers = #tpu.dot_dimension_numbers<[1], [0], [0], [1], [0, 0, 1, 1], [], []>} : vector<8x16xf32>, vector<16x384xf32>, vector<8x384xf32> -> vector<8x384xf32>
    %310 = arith.addf %309, %10 : vector<8x384xf32>
    %311 = vector.extract_strided_slice %310 {offsets = [0, 0], sizes = [8, 128], strides = [1, 1]} : vector<8x384xf32> to vector<8x128xf32>
    %312 = vector.extract_strided_slice %285 {offsets = [0, 0], sizes = [8, 128], strides = [1, 1]} : vector<8x192xf32> to vector<8x128xf32>
    %313 = arith.mulf %311, %312 : vector<8x128xf32>
    %314 = vector.extract_strided_slice %310 {offsets = [0, 128], sizes = [8, 128], strides = [1, 1]} : vector<8x384xf32> to vector<8x128xf32>
    %315 = vector.extract_strided_slice %287 {offsets = [0, 0], sizes = [8, 128], strides = [1, 1]} : vector<8x192xf32> to vector<8x128xf32>
    %316 = arith.mulf %314, %315 : vector<8x128xf32>
    %317 = arith.addf %313, %316 : vector<8x128xf32>
    %318 = vector.extract_strided_slice %310 {offsets = [0, 256], sizes = [8, 128], strides = [1, 1]} : vector<8x384xf32> to vector<8x128xf32>
    %319 = arith.addf %317, %318 : vector<8x128xf32>
    %320 = arith.negf %319 : vector<8x128xf32>
    %321 = math.exp %320 : vector<8x128xf32>
    %cst_66 = arith.constant 1.000000e+00 : f32
    %322 = vector.broadcast %cst_66 : f32 to vector<8x128xf32>
    %323 = arith.addf %322, %321 : vector<8x128xf32>
    %324 = arith.divf %322, %323 : vector<8x128xf32>
    %325 = vector.extract_strided_slice %324 {offsets = [0, 0], sizes = [8, 32], strides = [1, 1]} : vector<8x128xf32> to vector<8x32xf32>
    %326 = vector.extract_strided_slice %324 {offsets = [0, 32], sizes = [8, 32], strides = [1, 1]} : vector<8x128xf32> to vector<8x32xf32>
    %327 = vector.extract_strided_slice %324 {offsets = [0, 96], sizes = [8, 32], strides = [1, 1]} : vector<8x128xf32> to vector<8x32xf32>
    %328 = vector.extract_strided_slice %324 {offsets = [0, 64], sizes = [8, 32], strides = [1, 1]} : vector<8x128xf32> to vector<8x32xf32>
    %cst_67 = arith.constant 2.000000e+00 : f32
    %329 = vector.broadcast %cst_67 : f32 to vector<8x32xf32>
    %330 = arith.mulf %329, %328 : vector<8x32xf32>
    %cst_68 = arith.constant 1.000000e+00 : f32
    %331 = vector.broadcast %cst_68 : f32 to vector<8x32xf32>
    %332 = arith.subf %330, %331 : vector<8x32xf32>
    %333 = arith.mulf %326, %281 : vector<8x32xf32>
    %334 = arith.mulf %325, %332 : vector<8x32xf32>
    %335 = arith.addf %333, %334 : vector<8x32xf32>
    %336 = math.tanh %335 : vector<8x32xf32>
    %337 = arith.mulf %327, %336 : vector<8x32xf32>
    %c40 = arith.constant 40 : index
    %c0_69 = arith.constant 0 : index
    %338 = vector.load %arg14[%c40, %c0_69] : memref<64x32xf32, #tpu.memory_space<vmem>>, vector<8x32xf32>
    tpu.vector_store %arg14[%c40, %c0_69], %337 {strides = array<i32>} : memref<64x32xf32, #tpu.memory_space<vmem>>, vector<8x32xf32>,
    %339 = vector.extract_strided_slice %7 {offsets = [48, 0], sizes = [8, 192], strides = [1, 1]} : vector<64x192xf32> to vector<8x192xf32>
    %340 = tpu.concatenate %337, %308 in 1 : vector<8x32xf32>, vector<8x16xf32> -> vector<8x48xf32>
    %cst_70 = arith.constant dense<0.000000e+00> : vector<8x192xf32>
    %341 = tpu.matmul %340, %1, %cst_70 {dimension_numbers = #tpu.dot_dimension_numbers<[1], [0], [0], [1], [0, 0, 1, 1], [], []>} : vector<8x48xf32>, vector<48x192xf32>, vector<8x192xf32> -> vector<8x192xf32>
    %342 = vector.extract_strided_slice %339 {offsets = [0, 128], sizes = [8, 64], strides = [1, 1]} : vector<8x192xf32> to vector<8x64xf32>
    %343 = vector.extract_strided_slice %341 {offsets = [0, 128], sizes = [8, 64], strides = [1, 1]} : vector<8x192xf32> to vector<8x64xf32>
    %344 = arith.addf %342, %343 : vector<8x64xf32>
    %345 = arith.negf %344 : vector<8x64xf32>
    %346 = math.exp %345 : vector<8x64xf32>
    %cst_71 = arith.constant 1.000000e+00 : f32
    %347 = vector.broadcast %cst_71 : f32 to vector<8x64xf32>
    %348 = arith.addf %347, %346 : vector<8x64xf32>
    %349 = arith.divf %347, %348 : vector<8x64xf32>
    %350 = vector.extract_strided_slice %349 {offsets = [0, 0], sizes = [8, 16], strides = [1, 1]} : vector<8x64xf32> to vector<8x16xf32>
    %351 = vector.extract_strided_slice %349 {offsets = [0, 16], sizes = [8, 16], strides = [1, 1]} : vector<8x64xf32> to vector<8x16xf32>
    %352 = vector.extract_strided_slice %349 {offsets = [0, 48], sizes = [8, 16], strides = [1, 1]} : vector<8x64xf32> to vector<8x16xf32>
    %353 = vector.extract_strided_slice %349 {offsets = [0, 32], sizes = [8, 16], strides = [1, 1]} : vector<8x64xf32> to vector<8x16xf32>
    %cst_72 = arith.constant 2.000000e+00 : f32
    %354 = vector.broadcast %cst_72 : f32 to vector<8x16xf32>
    %355 = arith.mulf %354, %353 : vector<8x16xf32>
    %cst_73 = arith.constant 1.000000e+00 : f32
    %356 = vector.broadcast %cst_73 : f32 to vector<8x16xf32>
    %357 = arith.subf %355, %356 : vector<8x16xf32>
    %358 = arith.mulf %351, %306 : vector<8x16xf32>
    %359 = arith.mulf %350, %357 : vector<8x16xf32>
    %360 = arith.addf %358, %359 : vector<8x16xf32>
    %361 = math.tanh %360 : vector<8x16xf32>
    %362 = arith.mulf %352, %361 : vector<8x16xf32>
    %cst_74 = arith.constant dense<0.000000e+00> : vector<8x384xf32>
    %363 = tpu.matmul %362, %2, %cst_74 {dimension_numbers = #tpu.dot_dimension_numbers<[1], [0], [0], [1], [0, 0, 1, 1], [], []>} : vector<8x16xf32>, vector<16x384xf32>, vector<8x384xf32> -> vector<8x384xf32>
    %364 = arith.addf %363, %10 : vector<8x384xf32>
    %365 = vector.extract_strided_slice %364 {offsets = [0, 0], sizes = [8, 128], strides = [1, 1]} : vector<8x384xf32> to vector<8x128xf32>
    %366 = vector.extract_strided_slice %339 {offsets = [0, 0], sizes = [8, 128], strides = [1, 1]} : vector<8x192xf32> to vector<8x128xf32>
    %367 = arith.mulf %365, %366 : vector<8x128xf32>
    %368 = vector.extract_strided_slice %364 {offsets = [0, 128], sizes = [8, 128], strides = [1, 1]} : vector<8x384xf32> to vector<8x128xf32>
    %369 = vector.extract_strided_slice %341 {offsets = [0, 0], sizes = [8, 128], strides = [1, 1]} : vector<8x192xf32> to vector<8x128xf32>
    %370 = arith.mulf %368, %369 : vector<8x128xf32>
    %371 = arith.addf %367, %370 : vector<8x128xf32>
    %372 = vector.extract_strided_slice %364 {offsets = [0, 256], sizes = [8, 128], strides = [1, 1]} : vector<8x384xf32> to vector<8x128xf32>
    %373 = arith.addf %371, %372 : vector<8x128xf32>
    %374 = arith.negf %373 : vector<8x128xf32>
    %375 = math.exp %374 : vector<8x128xf32>
    %cst_75 = arith.constant 1.000000e+00 : f32
    %376 = vector.broadcast %cst_75 : f32 to vector<8x128xf32>
    %377 = arith.addf %376, %375 : vector<8x128xf32>
    %378 = arith.divf %376, %377 : vector<8x128xf32>
    %379 = vector.extract_strided_slice %378 {offsets = [0, 0], sizes = [8, 32], strides = [1, 1]} : vector<8x128xf32> to vector<8x32xf32>
    %380 = vector.extract_strided_slice %378 {offsets = [0, 32], sizes = [8, 32], strides = [1, 1]} : vector<8x128xf32> to vector<8x32xf32>
    %381 = vector.extract_strided_slice %378 {offsets = [0, 96], sizes = [8, 32], strides = [1, 1]} : vector<8x128xf32> to vector<8x32xf32>
    %382 = vector.extract_strided_slice %378 {offsets = [0, 64], sizes = [8, 32], strides = [1, 1]} : vector<8x128xf32> to vector<8x32xf32>
    %cst_76 = arith.constant 2.000000e+00 : f32
    %383 = vector.broadcast %cst_76 : f32 to vector<8x32xf32>
    %384 = arith.mulf %383, %382 : vector<8x32xf32>
    %cst_77 = arith.constant 1.000000e+00 : f32
    %385 = vector.broadcast %cst_77 : f32 to vector<8x32xf32>
    %386 = arith.subf %384, %385 : vector<8x32xf32>
    %387 = arith.mulf %380, %335 : vector<8x32xf32>
    %388 = arith.mulf %379, %386 : vector<8x32xf32>
    %389 = arith.addf %387, %388 : vector<8x32xf32>
    %390 = math.tanh %389 : vector<8x32xf32>
    %391 = arith.mulf %381, %390 : vector<8x32xf32>
    %c48 = arith.constant 48 : index
    %c0_78 = arith.constant 0 : index
    %392 = vector.load %arg14[%c48, %c0_78] : memref<64x32xf32, #tpu.memory_space<vmem>>, vector<8x32xf32>
    tpu.vector_store %arg14[%c48, %c0_78], %391 {strides = array<i32>} : memref<64x32xf32, #tpu.memory_space<vmem>>, vector<8x32xf32>,
    %393 = vector.extract_strided_slice %7 {offsets = [56, 0], sizes = [8, 192], strides = [1, 1]} : vector<64x192xf32> to vector<8x192xf32>
    %394 = tpu.concatenate %391, %362 in 1 : vector<8x32xf32>, vector<8x16xf32> -> vector<8x48xf32>
    %cst_79 = arith.constant dense<0.000000e+00> : vector<8x192xf32>
    %395 = tpu.matmul %394, %1, %cst_79 {dimension_numbers = #tpu.dot_dimension_numbers<[1], [0], [0], [1], [0, 0, 1, 1], [], []>} : vector<8x48xf32>, vector<48x192xf32>, vector<8x192xf32> -> vector<8x192xf32>
    %396 = vector.extract_strided_slice %393 {offsets = [0, 128], sizes = [8, 64], strides = [1, 1]} : vector<8x192xf32> to vector<8x64xf32>
    %397 = vector.extract_strided_slice %395 {offsets = [0, 128], sizes = [8, 64], strides = [1, 1]} : vector<8x192xf32> to vector<8x64xf32>
    %398 = arith.addf %396, %397 : vector<8x64xf32>
    %399 = arith.negf %398 : vector<8x64xf32>
    %400 = math.exp %399 : vector<8x64xf32>
    %cst_80 = arith.constant 1.000000e+00 : f32
    %401 = vector.broadcast %cst_80 : f32 to vector<8x64xf32>
    %402 = arith.addf %401, %400 : vector<8x64xf32>
    %403 = arith.divf %401, %402 : vector<8x64xf32>
    %404 = vector.extract_strided_slice %403 {offsets = [0, 0], sizes = [8, 16], strides = [1, 1]} : vector<8x64xf32> to vector<8x16xf32>
    %405 = vector.extract_strided_slice %403 {offsets = [0, 16], sizes = [8, 16], strides = [1, 1]} : vector<8x64xf32> to vector<8x16xf32>
    %406 = vector.extract_strided_slice %403 {offsets = [0, 48], sizes = [8, 16], strides = [1, 1]} : vector<8x64xf32> to vector<8x16xf32>
    %407 = vector.extract_strided_slice %403 {offsets = [0, 32], sizes = [8, 16], strides = [1, 1]} : vector<8x64xf32> to vector<8x16xf32>
    %cst_81 = arith.constant 2.000000e+00 : f32
    %408 = vector.broadcast %cst_81 : f32 to vector<8x16xf32>
    %409 = arith.mulf %408, %407 : vector<8x16xf32>
    %cst_82 = arith.constant 1.000000e+00 : f32
    %410 = vector.broadcast %cst_82 : f32 to vector<8x16xf32>
    %411 = arith.subf %409, %410 : vector<8x16xf32>
    %412 = arith.mulf %405, %360 : vector<8x16xf32>
    %413 = arith.mulf %404, %411 : vector<8x16xf32>
    %414 = arith.addf %412, %413 : vector<8x16xf32>
    %415 = math.tanh %414 : vector<8x16xf32>
    %416 = arith.mulf %406, %415 : vector<8x16xf32>
    %cst_83 = arith.constant dense<0.000000e+00> : vector<8x384xf32>
    %417 = tpu.matmul %416, %2, %cst_83 {dimension_numbers = #tpu.dot_dimension_numbers<[1], [0], [0], [1], [0, 0, 1, 1], [], []>} : vector<8x16xf32>, vector<16x384xf32>, vector<8x384xf32> -> vector<8x384xf32>
    %418 = arith.addf %417, %10 : vector<8x384xf32>
    %419 = vector.extract_strided_slice %418 {offsets = [0, 0], sizes = [8, 128], strides = [1, 1]} : vector<8x384xf32> to vector<8x128xf32>
    %420 = vector.extract_strided_slice %393 {offsets = [0, 0], sizes = [8, 128], strides = [1, 1]} : vector<8x192xf32> to vector<8x128xf32>
    %421 = arith.mulf %419, %420 : vector<8x128xf32>
    %422 = vector.extract_strided_slice %418 {offsets = [0, 128], sizes = [8, 128], strides = [1, 1]} : vector<8x384xf32> to vector<8x128xf32>
    %423 = vector.extract_strided_slice %395 {offsets = [0, 0], sizes = [8, 128], strides = [1, 1]} : vector<8x192xf32> to vector<8x128xf32>
    %424 = arith.mulf %422, %423 : vector<8x128xf32>
    %425 = arith.addf %421, %424 : vector<8x128xf32>
    %426 = vector.extract_strided_slice %418 {offsets = [0, 256], sizes = [8, 128], strides = [1, 1]} : vector<8x384xf32> to vector<8x128xf32>
    %427 = arith.addf %425, %426 : vector<8x128xf32>
    %428 = arith.negf %427 : vector<8x128xf32>
    %429 = math.exp %428 : vector<8x128xf32>
    %cst_84 = arith.constant 1.000000e+00 : f32
    %430 = vector.broadcast %cst_84 : f32 to vector<8x128xf32>
    %431 = arith.addf %430, %429 : vector<8x128xf32>
    %432 = arith.divf %430, %431 : vector<8x128xf32>
    %433 = vector.extract_strided_slice %432 {offsets = [0, 0], sizes = [8, 32], strides = [1, 1]} : vector<8x128xf32> to vector<8x32xf32>
    %434 = vector.extract_strided_slice %432 {offsets = [0, 32], sizes = [8, 32], strides = [1, 1]} : vector<8x128xf32> to vector<8x32xf32>
    %435 = vector.extract_strided_slice %432 {offsets = [0, 96], sizes = [8, 32], strides = [1, 1]} : vector<8x128xf32> to vector<8x32xf32>
    %436 = vector.extract_strided_slice %432 {offsets = [0, 64], sizes = [8, 32], strides = [1, 1]} : vector<8x128xf32> to vector<8x32xf32>
    %cst_85 = arith.constant 2.000000e+00 : f32
    %437 = vector.broadcast %cst_85 : f32 to vector<8x32xf32>
    %438 = arith.mulf %437, %436 : vector<8x32xf32>
    %cst_86 = arith.constant 1.000000e+00 : f32
    %439 = vector.broadcast %cst_86 : f32 to vector<8x32xf32>
    %440 = arith.subf %438, %439 : vector<8x32xf32>
    %441 = arith.mulf %434, %389 : vector<8x32xf32>
    %442 = arith.mulf %433, %440 : vector<8x32xf32>
    %443 = arith.addf %441, %442 : vector<8x32xf32>
    %444 = math.tanh %443 : vector<8x32xf32>
    %445 = arith.mulf %435, %444 : vector<8x32xf32>
    %c56 = arith.constant 56 : index
    %c0_87 = arith.constant 0 : index
    %446 = vector.load %arg14[%c56, %c0_87] : memref<64x32xf32, #tpu.memory_space<vmem>>, vector<8x32xf32>
    tpu.vector_store %arg14[%c56, %c0_87], %445 {strides = array<i32>} : memref<64x32xf32, #tpu.memory_space<vmem>>, vector<8x32xf32>,
    %c0_88 = arith.constant 0 : index
    %c0_89 = arith.constant 0 : index
    %c0_90 = arith.constant 0 : index
    %447 = vector.load %arg12[%c0_88, %c0_89, %c0_90] : memref<2x8x32xf32, #tpu.memory_space<vmem>>, vector<1x8x32xf32>
    %448 = vector.shape_cast %447 : vector<1x8x32xf32> to vector<8x32xf32>
    %449 = vector.shape_cast %445 : vector<8x32xf32> to vector<1x8x32xf32>
    tpu.vector_store %arg12[%c0_88, %c0_89, %c0_90], %449 {strides = array<i32>} : memref<2x8x32xf32, #tpu.memory_space<vmem>>, vector<1x8x32xf32>,
    %c0_91 = arith.constant 0 : index
    %c0_92 = arith.constant 0 : index
    %c0_93 = arith.constant 0 : index
    %450 = vector.load %arg13[%c0_91, %c0_92, %c0_93] : memref<2x8x32xf32, #tpu.memory_space<vmem>>, vector<1x8x32xf32>
    %451 = vector.shape_cast %450 : vector<1x8x32xf32> to vector<8x32xf32>
    %452 = vector.shape_cast %443 : vector<8x32xf32> to vector<1x8x32xf32>
    tpu.vector_store %arg13[%c0_91, %c0_92, %c0_93], %452 {strides = array<i32>} : memref<2x8x32xf32, #tpu.memory_space<vmem>>, vector<1x8x32xf32>,
    %c0_94 = arith.constant 0 : index
    %c0_95 = arith.constant 0 : index
    %453 = vector.load %arg6[%c0_94, %c0_95] : memref<32x192xf32, #tpu.memory_space<vmem>>, vector<32x192xf32>
    %c0_96 = arith.constant 0 : index
    %c0_97 = arith.constant 0 : index
    %454 = vector.load %arg7[%c0_96, %c0_97] : memref<48x192xf32, #tpu.memory_space<vmem>>, vector<48x192xf32>
    %c0_98 = arith.constant 0 : index
    %c0_99 = arith.constant 0 : index
    %455 = vector.load %arg8[%c0_98, %c0_99] : memref<16x384xf32, #tpu.memory_space<vmem>>, vector<16x384xf32>
    %c0_100 = arith.constant 0 : index
    %c0_101 = arith.constant 0 : index
    %456 = vector.load %arg14[%c0_100, %c0_101] : memref<64x32xf32, #tpu.memory_space<vmem>>, vector<64x32xf32>
    %cst_102 = arith.constant dense<0.000000e+00> : vector<64x192xf32>
    %457 = tpu.matmul %456, %453, %cst_102 {dimension_numbers = #tpu.dot_dimension_numbers<[1], [0], [0], [1], [0, 0, 1, 1], [], []>} : vector<64x32xf32>, vector<32x192xf32>, vector<64x192xf32> -> vector<64x192xf32>
    %c0_103 = arith.constant 0 : index
    %c0_104 = arith.constant 0 : index
    %458 = vector.load %arg10[%c0_103, %c0_104] : memref<1x192xf32, #tpu.memory_space<vmem>>, vector<1x192xf32>
    %459 = vector.broadcast %458 : vector<1x192xf32> to vector<64x192xf32>
    %460 = arith.addf %457, %459 : vector<64x192xf32>
    %c0_105 = arith.constant 0 : index
    %c0_106 = arith.constant 0 : index
    %461 = vector.load %arg9[%c0_105, %c0_106] : memref<1x384xf32, #tpu.memory_space<vmem>>, vector<1x384xf32>
    %462 = vector.shape_cast %461 : vector<1x384xf32> to vector<1x384xf32>
    %463 = vector.broadcast %462 : vector<1x384xf32> to vector<8x384xf32>
    %cst_107 = arith.constant 0.000000e+00 : f32
    %464 = vector.broadcast %cst_107 : f32 to vector<8x32xf32>
    %cst_108 = arith.constant 0.000000e+00 : f32
    %465 = vector.broadcast %cst_108 : f32 to vector<8x32xf32>
    %cst_109 = arith.constant 0.000000e+00 : f32
    %466 = vector.broadcast %cst_109 : f32 to vector<8x16xf32>
    %cst_110 = arith.constant 0.000000e+00 : f32
    %467 = vector.broadcast %cst_110 : f32 to vector<8x16xf32>
    %468 = vector.extract_strided_slice %460 {offsets = [0, 0], sizes = [8, 192], strides = [1, 1]} : vector<64x192xf32> to vector<8x192xf32>
    %469 = tpu.concatenate %464, %466 in 1 : vector<8x32xf32>, vector<8x16xf32> -> vector<8x48xf32>
    %cst_111 = arith.constant dense<0.000000e+00> : vector<8x192xf32>
    %470 = tpu.matmul %469, %454, %cst_111 {dimension_numbers = #tpu.dot_dimension_numbers<[1], [0], [0], [1], [0, 0, 1, 1], [], []>} : vector<8x48xf32>, vector<48x192xf32>, vector<8x192xf32> -> vector<8x192xf32>
    %471 = vector.extract_strided_slice %468 {offsets = [0, 128], sizes = [8, 64], strides = [1, 1]} : vector<8x192xf32> to vector<8x64xf32>
    %472 = vector.extract_strided_slice %470 {offsets = [0, 128], sizes = [8, 64], strides = [1, 1]} : vector<8x192xf32> to vector<8x64xf32>
    %473 = arith.addf %471, %472 : vector<8x64xf32>
    %474 = arith.negf %473 : vector<8x64xf32>
    %475 = math.exp %474 : vector<8x64xf32>
    %cst_112 = arith.constant 1.000000e+00 : f32
    %476 = vector.broadcast %cst_112 : f32 to vector<8x64xf32>
    %477 = arith.addf %476, %475 : vector<8x64xf32>
    %478 = arith.divf %476, %477 : vector<8x64xf32>
    %479 = vector.extract_strided_slice %478 {offsets = [0, 0], sizes = [8, 16], strides = [1, 1]} : vector<8x64xf32> to vector<8x16xf32>
    %480 = vector.extract_strided_slice %478 {offsets = [0, 16], sizes = [8, 16], strides = [1, 1]} : vector<8x64xf32> to vector<8x16xf32>
    %481 = vector.extract_strided_slice %478 {offsets = [0, 48], sizes = [8, 16], strides = [1, 1]} : vector<8x64xf32> to vector<8x16xf32>
    %482 = vector.extract_strided_slice %478 {offsets = [0, 32], sizes = [8, 16], strides = [1, 1]} : vector<8x64xf32> to vector<8x16xf32>
    %cst_113 = arith.constant 2.000000e+00 : f32
    %483 = vector.broadcast %cst_113 : f32 to vector<8x16xf32>
    %484 = arith.mulf %483, %482 : vector<8x16xf32>
    %cst_114 = arith.constant 1.000000e+00 : f32
    %485 = vector.broadcast %cst_114 : f32 to vector<8x16xf32>
    %486 = arith.subf %484, %485 : vector<8x16xf32>
    %487 = arith.mulf %480, %467 : vector<8x16xf32>
    %488 = arith.mulf %479, %486 : vector<8x16xf32>
    %489 = arith.addf %487, %488 : vector<8x16xf32>
    %490 = math.tanh %489 : vector<8x16xf32>
    %491 = arith.mulf %481, %490 : vector<8x16xf32>
    %cst_115 = arith.constant dense<0.000000e+00> : vector<8x384xf32>
    %492 = tpu.matmul %491, %455, %cst_115 {dimension_numbers = #tpu.dot_dimension_numbers<[1], [0], [0], [1], [0, 0, 1, 1], [], []>} : vector<8x16xf32>, vector<16x384xf32>, vector<8x384xf32> -> vector<8x384xf32>
    %493 = arith.addf %492, %463 : vector<8x384xf32>
    %494 = vector.extract_strided_slice %493 {offsets = [0, 0], sizes = [8, 128], strides = [1, 1]} : vector<8x384xf32> to vector<8x128xf32>
    %495 = vector.extract_strided_slice %468 {offsets = [0, 0], sizes = [8, 128], strides = [1, 1]} : vector<8x192xf32> to vector<8x128xf32>
    %496 = arith.mulf %494, %495 : vector<8x128xf32>
    %497 = vector.extract_strided_slice %493 {offsets = [0, 128], sizes = [8, 128], strides = [1, 1]} : vector<8x384xf32> to vector<8x128xf32>
    %498 = vector.extract_strided_slice %470 {offsets = [0, 0], sizes = [8, 128], strides = [1, 1]} : vector<8x192xf32> to vector<8x128xf32>
    %499 = arith.mulf %497, %498 : vector<8x128xf32>
    %500 = arith.addf %496, %499 : vector<8x128xf32>
    %501 = vector.extract_strided_slice %493 {offsets = [0, 256], sizes = [8, 128], strides = [1, 1]} : vector<8x384xf32> to vector<8x128xf32>
    %502 = arith.addf %500, %501 : vector<8x128xf32>
    %503 = arith.negf %502 : vector<8x128xf32>
    %504 = math.exp %503 : vector<8x128xf32>
    %cst_116 = arith.constant 1.000000e+00 : f32
    %505 = vector.broadcast %cst_116 : f32 to vector<8x128xf32>
    %506 = arith.addf %505, %504 : vector<8x128xf32>
    %507 = arith.divf %505, %506 : vector<8x128xf32>
    %508 = vector.extract_strided_slice %507 {offsets = [0, 0], sizes = [8, 32], strides = [1, 1]} : vector<8x128xf32> to vector<8x32xf32>
    %509 = vector.extract_strided_slice %507 {offsets = [0, 32], sizes = [8, 32], strides = [1, 1]} : vector<8x128xf32> to vector<8x32xf32>
    %510 = vector.extract_strided_slice %507 {offsets = [0, 96], sizes = [8, 32], strides = [1, 1]} : vector<8x128xf32> to vector<8x32xf32>
    %511 = vector.extract_strided_slice %507 {offsets = [0, 64], sizes = [8, 32], strides = [1, 1]} : vector<8x128xf32> to vector<8x32xf32>
    %cst_117 = arith.constant 2.000000e+00 : f32
    %512 = vector.broadcast %cst_117 : f32 to vector<8x32xf32>
    %513 = arith.mulf %512, %511 : vector<8x32xf32>
    %cst_118 = arith.constant 1.000000e+00 : f32
    %514 = vector.broadcast %cst_118 : f32 to vector<8x32xf32>
    %515 = arith.subf %513, %514 : vector<8x32xf32>
    %516 = arith.mulf %509, %465 : vector<8x32xf32>
    %517 = arith.mulf %508, %515 : vector<8x32xf32>
    %518 = arith.addf %516, %517 : vector<8x32xf32>
    %519 = math.tanh %518 : vector<8x32xf32>
    %520 = arith.mulf %510, %519 : vector<8x32xf32>
    %c0_119 = arith.constant 0 : index
    %c0_120 = arith.constant 0 : index
    %c0_121 = arith.constant 0 : index
    %521 = vector.load %arg11[%c0_119, %c0_120, %c0_121] : memref<8x8x32xf32, #tpu.memory_space<vmem>>, vector<1x8x32xf32>
    %522 = vector.shape_cast %521 : vector<1x8x32xf32> to vector<8x32xf32>
    %523 = vector.shape_cast %520 : vector<8x32xf32> to vector<1x8x32xf32>
    tpu.vector_store %arg11[%c0_119, %c0_120, %c0_121], %523 {strides = array<i32>} : memref<8x8x32xf32, #tpu.memory_space<vmem>>, vector<1x8x32xf32>,
    %524 = vector.extract_strided_slice %460 {offsets = [8, 0], sizes = [8, 192], strides = [1, 1]} : vector<64x192xf32> to vector<8x192xf32>
    %525 = tpu.concatenate %520, %491 in 1 : vector<8x32xf32>, vector<8x16xf32> -> vector<8x48xf32>
    %cst_122 = arith.constant dense<0.000000e+00> : vector<8x192xf32>
    %526 = tpu.matmul %525, %454, %cst_122 {dimension_numbers = #tpu.dot_dimension_numbers<[1], [0], [0], [1], [0, 0, 1, 1], [], []>} : vector<8x48xf32>, vector<48x192xf32>, vector<8x192xf32> -> vector<8x192xf32>
    %527 = vector.extract_strided_slice %524 {offsets = [0, 128], sizes = [8, 64], strides = [1, 1]} : vector<8x192xf32> to vector<8x64xf32>
    %528 = vector.extract_strided_slice %526 {offsets = [0, 128], sizes = [8, 64], strides = [1, 1]} : vector<8x192xf32> to vector<8x64xf32>
    %529 = arith.addf %527, %528 : vector<8x64xf32>
    %530 = arith.negf %529 : vector<8x64xf32>
    %531 = math.exp %530 : vector<8x64xf32>
    %cst_123 = arith.constant 1.000000e+00 : f32
    %532 = vector.broadcast %cst_123 : f32 to vector<8x64xf32>
    %533 = arith.addf %532, %531 : vector<8x64xf32>
    %534 = arith.divf %532, %533 : vector<8x64xf32>
    %535 = vector.extract_strided_slice %534 {offsets = [0, 0], sizes = [8, 16], strides = [1, 1]} : vector<8x64xf32> to vector<8x16xf32>
    %536 = vector.extract_strided_slice %534 {offsets = [0, 16], sizes = [8, 16], strides = [1, 1]} : vector<8x64xf32> to vector<8x16xf32>
    %537 = vector.extract_strided_slice %534 {offsets = [0, 48], sizes = [8, 16], strides = [1, 1]} : vector<8x64xf32> to vector<8x16xf32>
    %538 = vector.extract_strided_slice %534 {offsets = [0, 32], sizes = [8, 16], strides = [1, 1]} : vector<8x64xf32> to vector<8x16xf32>
    %cst_124 = arith.constant 2.000000e+00 : f32
    %539 = vector.broadcast %cst_124 : f32 to vector<8x16xf32>
    %540 = arith.mulf %539, %538 : vector<8x16xf32>
    %cst_125 = arith.constant 1.000000e+00 : f32
    %541 = vector.broadcast %cst_125 : f32 to vector<8x16xf32>
    %542 = arith.subf %540, %541 : vector<8x16xf32>
    %543 = arith.mulf %536, %489 : vector<8x16xf32>
    %544 = arith.mulf %535, %542 : vector<8x16xf32>
    %545 = arith.addf %543, %544 : vector<8x16xf32>
    %546 = math.tanh %545 : vector<8x16xf32>
    %547 = arith.mulf %537, %546 : vector<8x16xf32>
    %cst_126 = arith.constant dense<0.000000e+00> : vector<8x384xf32>
    %548 = tpu.matmul %547, %455, %cst_126 {dimension_numbers = #tpu.dot_dimension_numbers<[1], [0], [0], [1], [0, 0, 1, 1], [], []>} : vector<8x16xf32>, vector<16x384xf32>, vector<8x384xf32> -> vector<8x384xf32>
    %549 = arith.addf %548, %463 : vector<8x384xf32>
    %550 = vector.extract_strided_slice %549 {offsets = [0, 0], sizes = [8, 128], strides = [1, 1]} : vector<8x384xf32> to vector<8x128xf32>
    %551 = vector.extract_strided_slice %524 {offsets = [0, 0], sizes = [8, 128], strides = [1, 1]} : vector<8x192xf32> to vector<8x128xf32>
    %552 = arith.mulf %550, %551 : vector<8x128xf32>
    %553 = vector.extract_strided_slice %549 {offsets = [0, 128], sizes = [8, 128], strides = [1, 1]} : vector<8x384xf32> to vector<8x128xf32>
    %554 = vector.extract_strided_slice %526 {offsets = [0, 0], sizes = [8, 128], strides = [1, 1]} : vector<8x192xf32> to vector<8x128xf32>
    %555 = arith.mulf %553, %554 : vector<8x128xf32>
    %556 = arith.addf %552, %555 : vector<8x128xf32>
    %557 = vector.extract_strided_slice %549 {offsets = [0, 256], sizes = [8, 128], strides = [1, 1]} : vector<8x384xf32> to vector<8x128xf32>
    %558 = arith.addf %556, %557 : vector<8x128xf32>
    %559 = arith.negf %558 : vector<8x128xf32>
    %560 = math.exp %559 : vector<8x128xf32>
    %cst_127 = arith.constant 1.000000e+00 : f32
    %561 = vector.broadcast %cst_127 : f32 to vector<8x128xf32>
    %562 = arith.addf %561, %560 : vector<8x128xf32>
    %563 = arith.divf %561, %562 : vector<8x128xf32>
    %564 = vector.extract_strided_slice %563 {offsets = [0, 0], sizes = [8, 32], strides = [1, 1]} : vector<8x128xf32> to vector<8x32xf32>
    %565 = vector.extract_strided_slice %563 {offsets = [0, 32], sizes = [8, 32], strides = [1, 1]} : vector<8x128xf32> to vector<8x32xf32>
    %566 = vector.extract_strided_slice %563 {offsets = [0, 96], sizes = [8, 32], strides = [1, 1]} : vector<8x128xf32> to vector<8x32xf32>
    %567 = vector.extract_strided_slice %563 {offsets = [0, 64], sizes = [8, 32], strides = [1, 1]} : vector<8x128xf32> to vector<8x32xf32>
    %cst_128 = arith.constant 2.000000e+00 : f32
    %568 = vector.broadcast %cst_128 : f32 to vector<8x32xf32>
    %569 = arith.mulf %568, %567 : vector<8x32xf32>
    %cst_129 = arith.constant 1.000000e+00 : f32
    %570 = vector.broadcast %cst_129 : f32 to vector<8x32xf32>
    %571 = arith.subf %569, %570 : vector<8x32xf32>
    %572 = arith.mulf %565, %518 : vector<8x32xf32>
    %573 = arith.mulf %564, %571 : vector<8x32xf32>
    %574 = arith.addf %572, %573 : vector<8x32xf32>
    %575 = math.tanh %574 : vector<8x32xf32>
    %576 = arith.mulf %566, %575 : vector<8x32xf32>
    %c1 = arith.constant 1 : index
    %c0_130 = arith.constant 0 : index
    %c0_131 = arith.constant 0 : index
    %577 = vector.load %arg11[%c1, %c0_130, %c0_131] : memref<8x8x32xf32, #tpu.memory_space<vmem>>, vector<1x8x32xf32>
    %578 = vector.shape_cast %577 : vector<1x8x32xf32> to vector<8x32xf32>
    %579 = vector.shape_cast %576 : vector<8x32xf32> to vector<1x8x32xf32>
    tpu.vector_store %arg11[%c1, %c0_130, %c0_131], %579 {strides = array<i32>} : memref<8x8x32xf32, #tpu.memory_space<vmem>>, vector<1x8x32xf32>,
    %580 = vector.extract_strided_slice %460 {offsets = [16, 0], sizes = [8, 192], strides = [1, 1]} : vector<64x192xf32> to vector<8x192xf32>
    %581 = tpu.concatenate %576, %547 in 1 : vector<8x32xf32>, vector<8x16xf32> -> vector<8x48xf32>
    %cst_132 = arith.constant dense<0.000000e+00> : vector<8x192xf32>
    %582 = tpu.matmul %581, %454, %cst_132 {dimension_numbers = #tpu.dot_dimension_numbers<[1], [0], [0], [1], [0, 0, 1, 1], [], []>} : vector<8x48xf32>, vector<48x192xf32>, vector<8x192xf32> -> vector<8x192xf32>
    %583 = vector.extract_strided_slice %580 {offsets = [0, 128], sizes = [8, 64], strides = [1, 1]} : vector<8x192xf32> to vector<8x64xf32>
    %584 = vector.extract_strided_slice %582 {offsets = [0, 128], sizes = [8, 64], strides = [1, 1]} : vector<8x192xf32> to vector<8x64xf32>
    %585 = arith.addf %583, %584 : vector<8x64xf32>
    %586 = arith.negf %585 : vector<8x64xf32>
    %587 = math.exp %586 : vector<8x64xf32>
    %cst_133 = arith.constant 1.000000e+00 : f32
    %588 = vector.broadcast %cst_133 : f32 to vector<8x64xf32>
    %589 = arith.addf %588, %587 : vector<8x64xf32>
    %590 = arith.divf %588, %589 : vector<8x64xf32>
    %591 = vector.extract_strided_slice %590 {offsets = [0, 0], sizes = [8, 16], strides = [1, 1]} : vector<8x64xf32> to vector<8x16xf32>
    %592 = vector.extract_strided_slice %590 {offsets = [0, 16], sizes = [8, 16], strides = [1, 1]} : vector<8x64xf32> to vector<8x16xf32>
    %593 = vector.extract_strided_slice %590 {offsets = [0, 48], sizes = [8, 16], strides = [1, 1]} : vector<8x64xf32> to vector<8x16xf32>
    %594 = vector.extract_strided_slice %590 {offsets = [0, 32], sizes = [8, 16], strides = [1, 1]} : vector<8x64xf32> to vector<8x16xf32>
    %cst_134 = arith.constant 2.000000e+00 : f32
    %595 = vector.broadcast %cst_134 : f32 to vector<8x16xf32>
    %596 = arith.mulf %595, %594 : vector<8x16xf32>
    %cst_135 = arith.constant 1.000000e+00 : f32
    %597 = vector.broadcast %cst_135 : f32 to vector<8x16xf32>
    %598 = arith.subf %596, %597 : vector<8x16xf32>
    %599 = arith.mulf %592, %545 : vector<8x16xf32>
    %600 = arith.mulf %591, %598 : vector<8x16xf32>
    %601 = arith.addf %599, %600 : vector<8x16xf32>
    %602 = math.tanh %601 : vector<8x16xf32>
    %603 = arith.mulf %593, %602 : vector<8x16xf32>
    %cst_136 = arith.constant dense<0.000000e+00> : vector<8x384xf32>
    %604 = tpu.matmul %603, %455, %cst_136 {dimension_numbers = #tpu.dot_dimension_numbers<[1], [0], [0], [1], [0, 0, 1, 1], [], []>} : vector<8x16xf32>, vector<16x384xf32>, vector<8x384xf32> -> vector<8x384xf32>
    %605 = arith.addf %604, %463 : vector<8x384xf32>
    %606 = vector.extract_strided_slice %605 {offsets = [0, 0], sizes = [8, 128], strides = [1, 1]} : vector<8x384xf32> to vector<8x128xf32>
    %607 = vector.extract_strided_slice %580 {offsets = [0, 0], sizes = [8, 128], strides = [1, 1]} : vector<8x192xf32> to vector<8x128xf32>
    %608 = arith.mulf %606, %607 : vector<8x128xf32>
    %609 = vector.extract_strided_slice %605 {offsets = [0, 128], sizes = [8, 128], strides = [1, 1]} : vector<8x384xf32> to vector<8x128xf32>
    %610 = vector.extract_strided_slice %582 {offsets = [0, 0], sizes = [8, 128], strides = [1, 1]} : vector<8x192xf32> to vector<8x128xf32>
    %611 = arith.mulf %609, %610 : vector<8x128xf32>
    %612 = arith.addf %608, %611 : vector<8x128xf32>
    %613 = vector.extract_strided_slice %605 {offsets = [0, 256], sizes = [8, 128], strides = [1, 1]} : vector<8x384xf32> to vector<8x128xf32>
    %614 = arith.addf %612, %613 : vector<8x128xf32>
    %615 = arith.negf %614 : vector<8x128xf32>
    %616 = math.exp %615 : vector<8x128xf32>
    %cst_137 = arith.constant 1.000000e+00 : f32
    %617 = vector.broadcast %cst_137 : f32 to vector<8x128xf32>
    %618 = arith.addf %617, %616 : vector<8x128xf32>
    %619 = arith.divf %617, %618 : vector<8x128xf32>
    %620 = vector.extract_strided_slice %619 {offsets = [0, 0], sizes = [8, 32], strides = [1, 1]} : vector<8x128xf32> to vector<8x32xf32>
    %621 = vector.extract_strided_slice %619 {offsets = [0, 32], sizes = [8, 32], strides = [1, 1]} : vector<8x128xf32> to vector<8x32xf32>
    %622 = vector.extract_strided_slice %619 {offsets = [0, 96], sizes = [8, 32], strides = [1, 1]} : vector<8x128xf32> to vector<8x32xf32>
    %623 = vector.extract_strided_slice %619 {offsets = [0, 64], sizes = [8, 32], strides = [1, 1]} : vector<8x128xf32> to vector<8x32xf32>
    %cst_138 = arith.constant 2.000000e+00 : f32
    %624 = vector.broadcast %cst_138 : f32 to vector<8x32xf32>
    %625 = arith.mulf %624, %623 : vector<8x32xf32>
    %cst_139 = arith.constant 1.000000e+00 : f32
    %626 = vector.broadcast %cst_139 : f32 to vector<8x32xf32>
    %627 = arith.subf %625, %626 : vector<8x32xf32>
    %628 = arith.mulf %621, %574 : vector<8x32xf32>
    %629 = arith.mulf %620, %627 : vector<8x32xf32>
    %630 = arith.addf %628, %629 : vector<8x32xf32>
    %631 = math.tanh %630 : vector<8x32xf32>
    %632 = arith.mulf %622, %631 : vector<8x32xf32>
    %c2 = arith.constant 2 : index
    %c0_140 = arith.constant 0 : index
    %c0_141 = arith.constant 0 : index
    %633 = vector.load %arg11[%c2, %c0_140, %c0_141] : memref<8x8x32xf32, #tpu.memory_space<vmem>>, vector<1x8x32xf32>
    %634 = vector.shape_cast %633 : vector<1x8x32xf32> to vector<8x32xf32>
    %635 = vector.shape_cast %632 : vector<8x32xf32> to vector<1x8x32xf32>
    tpu.vector_store %arg11[%c2, %c0_140, %c0_141], %635 {strides = array<i32>} : memref<8x8x32xf32, #tpu.memory_space<vmem>>, vector<1x8x32xf32>,
    %636 = vector.extract_strided_slice %460 {offsets = [24, 0], sizes = [8, 192], strides = [1, 1]} : vector<64x192xf32> to vector<8x192xf32>
    %637 = tpu.concatenate %632, %603 in 1 : vector<8x32xf32>, vector<8x16xf32> -> vector<8x48xf32>
    %cst_142 = arith.constant dense<0.000000e+00> : vector<8x192xf32>
    %638 = tpu.matmul %637, %454, %cst_142 {dimension_numbers = #tpu.dot_dimension_numbers<[1], [0], [0], [1], [0, 0, 1, 1], [], []>} : vector<8x48xf32>, vector<48x192xf32>, vector<8x192xf32> -> vector<8x192xf32>
    %639 = vector.extract_strided_slice %636 {offsets = [0, 128], sizes = [8, 64], strides = [1, 1]} : vector<8x192xf32> to vector<8x64xf32>
    %640 = vector.extract_strided_slice %638 {offsets = [0, 128], sizes = [8, 64], strides = [1, 1]} : vector<8x192xf32> to vector<8x64xf32>
    %641 = arith.addf %639, %640 : vector<8x64xf32>
    %642 = arith.negf %641 : vector<8x64xf32>
    %643 = math.exp %642 : vector<8x64xf32>
    %cst_143 = arith.constant 1.000000e+00 : f32
    %644 = vector.broadcast %cst_143 : f32 to vector<8x64xf32>
    %645 = arith.addf %644, %643 : vector<8x64xf32>
    %646 = arith.divf %644, %645 : vector<8x64xf32>
    %647 = vector.extract_strided_slice %646 {offsets = [0, 0], sizes = [8, 16], strides = [1, 1]} : vector<8x64xf32> to vector<8x16xf32>
    %648 = vector.extract_strided_slice %646 {offsets = [0, 16], sizes = [8, 16], strides = [1, 1]} : vector<8x64xf32> to vector<8x16xf32>
    %649 = vector.extract_strided_slice %646 {offsets = [0, 48], sizes = [8, 16], strides = [1, 1]} : vector<8x64xf32> to vector<8x16xf32>
    %650 = vector.extract_strided_slice %646 {offsets = [0, 32], sizes = [8, 16], strides = [1, 1]} : vector<8x64xf32> to vector<8x16xf32>
    %cst_144 = arith.constant 2.000000e+00 : f32
    %651 = vector.broadcast %cst_144 : f32 to vector<8x16xf32>
    %652 = arith.mulf %651, %650 : vector<8x16xf32>
    %cst_145 = arith.constant 1.000000e+00 : f32
    %653 = vector.broadcast %cst_145 : f32 to vector<8x16xf32>
    %654 = arith.subf %652, %653 : vector<8x16xf32>
    %655 = arith.mulf %648, %601 : vector<8x16xf32>
    %656 = arith.mulf %647, %654 : vector<8x16xf32>
    %657 = arith.addf %655, %656 : vector<8x16xf32>
    %658 = math.tanh %657 : vector<8x16xf32>
    %659 = arith.mulf %649, %658 : vector<8x16xf32>
    %cst_146 = arith.constant dense<0.000000e+00> : vector<8x384xf32>
    %660 = tpu.matmul %659, %455, %cst_146 {dimension_numbers = #tpu.dot_dimension_numbers<[1], [0], [0], [1], [0, 0, 1, 1], [], []>} : vector<8x16xf32>, vector<16x384xf32>, vector<8x384xf32> -> vector<8x384xf32>
    %661 = arith.addf %660, %463 : vector<8x384xf32>
    %662 = vector.extract_strided_slice %661 {offsets = [0, 0], sizes = [8, 128], strides = [1, 1]} : vector<8x384xf32> to vector<8x128xf32>
    %663 = vector.extract_strided_slice %636 {offsets = [0, 0], sizes = [8, 128], strides = [1, 1]} : vector<8x192xf32> to vector<8x128xf32>
    %664 = arith.mulf %662, %663 : vector<8x128xf32>
    %665 = vector.extract_strided_slice %661 {offsets = [0, 128], sizes = [8, 128], strides = [1, 1]} : vector<8x384xf32> to vector<8x128xf32>
    %666 = vector.extract_strided_slice %638 {offsets = [0, 0], sizes = [8, 128], strides = [1, 1]} : vector<8x192xf32> to vector<8x128xf32>
    %667 = arith.mulf %665, %666 : vector<8x128xf32>
    %668 = arith.addf %664, %667 : vector<8x128xf32>
    %669 = vector.extract_strided_slice %661 {offsets = [0, 256], sizes = [8, 128], strides = [1, 1]} : vector<8x384xf32> to vector<8x128xf32>
    %670 = arith.addf %668, %669 : vector<8x128xf32>
    %671 = arith.negf %670 : vector<8x128xf32>
    %672 = math.exp %671 : vector<8x128xf32>
    %cst_147 = arith.constant 1.000000e+00 : f32
    %673 = vector.broadcast %cst_147 : f32 to vector<8x128xf32>
    %674 = arith.addf %673, %672 : vector<8x128xf32>
    %675 = arith.divf %673, %674 : vector<8x128xf32>
    %676 = vector.extract_strided_slice %675 {offsets = [0, 0], sizes = [8, 32], strides = [1, 1]} : vector<8x128xf32> to vector<8x32xf32>
    %677 = vector.extract_strided_slice %675 {offsets = [0, 32], sizes = [8, 32], strides = [1, 1]} : vector<8x128xf32> to vector<8x32xf32>
    %678 = vector.extract_strided_slice %675 {offsets = [0, 96], sizes = [8, 32], strides = [1, 1]} : vector<8x128xf32> to vector<8x32xf32>
    %679 = vector.extract_strided_slice %675 {offsets = [0, 64], sizes = [8, 32], strides = [1, 1]} : vector<8x128xf32> to vector<8x32xf32>
    %cst_148 = arith.constant 2.000000e+00 : f32
    %680 = vector.broadcast %cst_148 : f32 to vector<8x32xf32>
    %681 = arith.mulf %680, %679 : vector<8x32xf32>
    %cst_149 = arith.constant 1.000000e+00 : f32
    %682 = vector.broadcast %cst_149 : f32 to vector<8x32xf32>
    %683 = arith.subf %681, %682 : vector<8x32xf32>
    %684 = arith.mulf %677, %630 : vector<8x32xf32>
    %685 = arith.mulf %676, %683 : vector<8x32xf32>
    %686 = arith.addf %684, %685 : vector<8x32xf32>
    %687 = math.tanh %686 : vector<8x32xf32>
    %688 = arith.mulf %678, %687 : vector<8x32xf32>
    %c3 = arith.constant 3 : index
    %c0_150 = arith.constant 0 : index
    %c0_151 = arith.constant 0 : index
    %689 = vector.load %arg11[%c3, %c0_150, %c0_151] : memref<8x8x32xf32, #tpu.memory_space<vmem>>, vector<1x8x32xf32>
    %690 = vector.shape_cast %689 : vector<1x8x32xf32> to vector<8x32xf32>
    %691 = vector.shape_cast %688 : vector<8x32xf32> to vector<1x8x32xf32>
    tpu.vector_store %arg11[%c3, %c0_150, %c0_151], %691 {strides = array<i32>} : memref<8x8x32xf32, #tpu.memory_space<vmem>>, vector<1x8x32xf32>,
    %692 = vector.extract_strided_slice %460 {offsets = [32, 0], sizes = [8, 192], strides = [1, 1]} : vector<64x192xf32> to vector<8x192xf32>
    %693 = tpu.concatenate %688, %659 in 1 : vector<8x32xf32>, vector<8x16xf32> -> vector<8x48xf32>
    %cst_152 = arith.constant dense<0.000000e+00> : vector<8x192xf32>
    %694 = tpu.matmul %693, %454, %cst_152 {dimension_numbers = #tpu.dot_dimension_numbers<[1], [0], [0], [1], [0, 0, 1, 1], [], []>} : vector<8x48xf32>, vector<48x192xf32>, vector<8x192xf32> -> vector<8x192xf32>
    %695 = vector.extract_strided_slice %692 {offsets = [0, 128], sizes = [8, 64], strides = [1, 1]} : vector<8x192xf32> to vector<8x64xf32>
    %696 = vector.extract_strided_slice %694 {offsets = [0, 128], sizes = [8, 64], strides = [1, 1]} : vector<8x192xf32> to vector<8x64xf32>
    %697 = arith.addf %695, %696 : vector<8x64xf32>
    %698 = arith.negf %697 : vector<8x64xf32>
    %699 = math.exp %698 : vector<8x64xf32>
    %cst_153 = arith.constant 1.000000e+00 : f32
    %700 = vector.broadcast %cst_153 : f32 to vector<8x64xf32>
    %701 = arith.addf %700, %699 : vector<8x64xf32>
    %702 = arith.divf %700, %701 : vector<8x64xf32>
    %703 = vector.extract_strided_slice %702 {offsets = [0, 0], sizes = [8, 16], strides = [1, 1]} : vector<8x64xf32> to vector<8x16xf32>
    %704 = vector.extract_strided_slice %702 {offsets = [0, 16], sizes = [8, 16], strides = [1, 1]} : vector<8x64xf32> to vector<8x16xf32>
    %705 = vector.extract_strided_slice %702 {offsets = [0, 48], sizes = [8, 16], strides = [1, 1]} : vector<8x64xf32> to vector<8x16xf32>
    %706 = vector.extract_strided_slice %702 {offsets = [0, 32], sizes = [8, 16], strides = [1, 1]} : vector<8x64xf32> to vector<8x16xf32>
    %cst_154 = arith.constant 2.000000e+00 : f32
    %707 = vector.broadcast %cst_154 : f32 to vector<8x16xf32>
    %708 = arith.mulf %707, %706 : vector<8x16xf32>
    %cst_155 = arith.constant 1.000000e+00 : f32
    %709 = vector.broadcast %cst_155 : f32 to vector<8x16xf32>
    %710 = arith.subf %708, %709 : vector<8x16xf32>
    %711 = arith.mulf %704, %657 : vector<8x16xf32>
    %712 = arith.mulf %703, %710 : vector<8x16xf32>
    %713 = arith.addf %711, %712 : vector<8x16xf32>
    %714 = math.tanh %713 : vector<8x16xf32>
    %715 = arith.mulf %705, %714 : vector<8x16xf32>
    %cst_156 = arith.constant dense<0.000000e+00> : vector<8x384xf32>
    %716 = tpu.matmul %715, %455, %cst_156 {dimension_numbers = #tpu.dot_dimension_numbers<[1], [0], [0], [1], [0, 0, 1, 1], [], []>} : vector<8x16xf32>, vector<16x384xf32>, vector<8x384xf32> -> vector<8x384xf32>
    %717 = arith.addf %716, %463 : vector<8x384xf32>
    %718 = vector.extract_strided_slice %717 {offsets = [0, 0], sizes = [8, 128], strides = [1, 1]} : vector<8x384xf32> to vector<8x128xf32>
    %719 = vector.extract_strided_slice %692 {offsets = [0, 0], sizes = [8, 128], strides = [1, 1]} : vector<8x192xf32> to vector<8x128xf32>
    %720 = arith.mulf %718, %719 : vector<8x128xf32>
    %721 = vector.extract_strided_slice %717 {offsets = [0, 128], sizes = [8, 128], strides = [1, 1]} : vector<8x384xf32> to vector<8x128xf32>
    %722 = vector.extract_strided_slice %694 {offsets = [0, 0], sizes = [8, 128], strides = [1, 1]} : vector<8x192xf32> to vector<8x128xf32>
    %723 = arith.mulf %721, %722 : vector<8x128xf32>
    %724 = arith.addf %720, %723 : vector<8x128xf32>
    %725 = vector.extract_strided_slice %717 {offsets = [0, 256], sizes = [8, 128], strides = [1, 1]} : vector<8x384xf32> to vector<8x128xf32>
    %726 = arith.addf %724, %725 : vector<8x128xf32>
    %727 = arith.negf %726 : vector<8x128xf32>
    %728 = math.exp %727 : vector<8x128xf32>
    %cst_157 = arith.constant 1.000000e+00 : f32
    %729 = vector.broadcast %cst_157 : f32 to vector<8x128xf32>
    %730 = arith.addf %729, %728 : vector<8x128xf32>
    %731 = arith.divf %729, %730 : vector<8x128xf32>
    %732 = vector.extract_strided_slice %731 {offsets = [0, 0], sizes = [8, 32], strides = [1, 1]} : vector<8x128xf32> to vector<8x32xf32>
    %733 = vector.extract_strided_slice %731 {offsets = [0, 32], sizes = [8, 32], strides = [1, 1]} : vector<8x128xf32> to vector<8x32xf32>
    %734 = vector.extract_strided_slice %731 {offsets = [0, 96], sizes = [8, 32], strides = [1, 1]} : vector<8x128xf32> to vector<8x32xf32>
    %735 = vector.extract_strided_slice %731 {offsets = [0, 64], sizes = [8, 32], strides = [1, 1]} : vector<8x128xf32> to vector<8x32xf32>
    %cst_158 = arith.constant 2.000000e+00 : f32
    %736 = vector.broadcast %cst_158 : f32 to vector<8x32xf32>
    %737 = arith.mulf %736, %735 : vector<8x32xf32>
    %cst_159 = arith.constant 1.000000e+00 : f32
    %738 = vector.broadcast %cst_159 : f32 to vector<8x32xf32>
    %739 = arith.subf %737, %738 : vector<8x32xf32>
    %740 = arith.mulf %733, %686 : vector<8x32xf32>
    %741 = arith.mulf %732, %739 : vector<8x32xf32>
    %742 = arith.addf %740, %741 : vector<8x32xf32>
    %743 = math.tanh %742 : vector<8x32xf32>
    %744 = arith.mulf %734, %743 : vector<8x32xf32>
    %c4 = arith.constant 4 : index
    %c0_160 = arith.constant 0 : index
    %c0_161 = arith.constant 0 : index
    %745 = vector.load %arg11[%c4, %c0_160, %c0_161] : memref<8x8x32xf32, #tpu.memory_space<vmem>>, vector<1x8x32xf32>
    %746 = vector.shape_cast %745 : vector<1x8x32xf32> to vector<8x32xf32>
    %747 = vector.shape_cast %744 : vector<8x32xf32> to vector<1x8x32xf32>
    tpu.vector_store %arg11[%c4, %c0_160, %c0_161], %747 {strides = array<i32>} : memref<8x8x32xf32, #tpu.memory_space<vmem>>, vector<1x8x32xf32>,
    %748 = vector.extract_strided_slice %460 {offsets = [40, 0], sizes = [8, 192], strides = [1, 1]} : vector<64x192xf32> to vector<8x192xf32>
    %749 = tpu.concatenate %744, %715 in 1 : vector<8x32xf32>, vector<8x16xf32> -> vector<8x48xf32>
    %cst_162 = arith.constant dense<0.000000e+00> : vector<8x192xf32>
    %750 = tpu.matmul %749, %454, %cst_162 {dimension_numbers = #tpu.dot_dimension_numbers<[1], [0], [0], [1], [0, 0, 1, 1], [], []>} : vector<8x48xf32>, vector<48x192xf32>, vector<8x192xf32> -> vector<8x192xf32>
    %751 = vector.extract_strided_slice %748 {offsets = [0, 128], sizes = [8, 64], strides = [1, 1]} : vector<8x192xf32> to vector<8x64xf32>
    %752 = vector.extract_strided_slice %750 {offsets = [0, 128], sizes = [8, 64], strides = [1, 1]} : vector<8x192xf32> to vector<8x64xf32>
    %753 = arith.addf %751, %752 : vector<8x64xf32>
    %754 = arith.negf %753 : vector<8x64xf32>
    %755 = math.exp %754 : vector<8x64xf32>
    %cst_163 = arith.constant 1.000000e+00 : f32
    %756 = vector.broadcast %cst_163 : f32 to vector<8x64xf32>
    %757 = arith.addf %756, %755 : vector<8x64xf32>
    %758 = arith.divf %756, %757 : vector<8x64xf32>
    %759 = vector.extract_strided_slice %758 {offsets = [0, 0], sizes = [8, 16], strides = [1, 1]} : vector<8x64xf32> to vector<8x16xf32>
    %760 = vector.extract_strided_slice %758 {offsets = [0, 16], sizes = [8, 16], strides = [1, 1]} : vector<8x64xf32> to vector<8x16xf32>
    %761 = vector.extract_strided_slice %758 {offsets = [0, 48], sizes = [8, 16], strides = [1, 1]} : vector<8x64xf32> to vector<8x16xf32>
    %762 = vector.extract_strided_slice %758 {offsets = [0, 32], sizes = [8, 16], strides = [1, 1]} : vector<8x64xf32> to vector<8x16xf32>
    %cst_164 = arith.constant 2.000000e+00 : f32
    %763 = vector.broadcast %cst_164 : f32 to vector<8x16xf32>
    %764 = arith.mulf %763, %762 : vector<8x16xf32>
    %cst_165 = arith.constant 1.000000e+00 : f32
    %765 = vector.broadcast %cst_165 : f32 to vector<8x16xf32>
    %766 = arith.subf %764, %765 : vector<8x16xf32>
    %767 = arith.mulf %760, %713 : vector<8x16xf32>
    %768 = arith.mulf %759, %766 : vector<8x16xf32>
    %769 = arith.addf %767, %768 : vector<8x16xf32>
    %770 = math.tanh %769 : vector<8x16xf32>
    %771 = arith.mulf %761, %770 : vector<8x16xf32>
    %cst_166 = arith.constant dense<0.000000e+00> : vector<8x384xf32>
    %772 = tpu.matmul %771, %455, %cst_166 {dimension_numbers = #tpu.dot_dimension_numbers<[1], [0], [0], [1], [0, 0, 1, 1], [], []>} : vector<8x16xf32>, vector<16x384xf32>, vector<8x384xf32> -> vector<8x384xf32>
    %773 = arith.addf %772, %463 : vector<8x384xf32>
    %774 = vector.extract_strided_slice %773 {offsets = [0, 0], sizes = [8, 128], strides = [1, 1]} : vector<8x384xf32> to vector<8x128xf32>
    %775 = vector.extract_strided_slice %748 {offsets = [0, 0], sizes = [8, 128], strides = [1, 1]} : vector<8x192xf32> to vector<8x128xf32>
    %776 = arith.mulf %774, %775 : vector<8x128xf32>
    %777 = vector.extract_strided_slice %773 {offsets = [0, 128], sizes = [8, 128], strides = [1, 1]} : vector<8x384xf32> to vector<8x128xf32>
    %778 = vector.extract_strided_slice %750 {offsets = [0, 0], sizes = [8, 128], strides = [1, 1]} : vector<8x192xf32> to vector<8x128xf32>
    %779 = arith.mulf %777, %778 : vector<8x128xf32>
    %780 = arith.addf %776, %779 : vector<8x128xf32>
    %781 = vector.extract_strided_slice %773 {offsets = [0, 256], sizes = [8, 128], strides = [1, 1]} : vector<8x384xf32> to vector<8x128xf32>
    %782 = arith.addf %780, %781 : vector<8x128xf32>
    %783 = arith.negf %782 : vector<8x128xf32>
    %784 = math.exp %783 : vector<8x128xf32>
    %cst_167 = arith.constant 1.000000e+00 : f32
    %785 = vector.broadcast %cst_167 : f32 to vector<8x128xf32>
    %786 = arith.addf %785, %784 : vector<8x128xf32>
    %787 = arith.divf %785, %786 : vector<8x128xf32>
    %788 = vector.extract_strided_slice %787 {offsets = [0, 0], sizes = [8, 32], strides = [1, 1]} : vector<8x128xf32> to vector<8x32xf32>
    %789 = vector.extract_strided_slice %787 {offsets = [0, 32], sizes = [8, 32], strides = [1, 1]} : vector<8x128xf32> to vector<8x32xf32>
    %790 = vector.extract_strided_slice %787 {offsets = [0, 96], sizes = [8, 32], strides = [1, 1]} : vector<8x128xf32> to vector<8x32xf32>
    %791 = vector.extract_strided_slice %787 {offsets = [0, 64], sizes = [8, 32], strides = [1, 1]} : vector<8x128xf32> to vector<8x32xf32>
    %cst_168 = arith.constant 2.000000e+00 : f32
    %792 = vector.broadcast %cst_168 : f32 to vector<8x32xf32>
    %793 = arith.mulf %792, %791 : vector<8x32xf32>
    %cst_169 = arith.constant 1.000000e+00 : f32
    %794 = vector.broadcast %cst_169 : f32 to vector<8x32xf32>
    %795 = arith.subf %793, %794 : vector<8x32xf32>
    %796 = arith.mulf %789, %742 : vector<8x32xf32>
    %797 = arith.mulf %788, %795 : vector<8x32xf32>
    %798 = arith.addf %796, %797 : vector<8x32xf32>
    %799 = math.tanh %798 : vector<8x32xf32>
    %800 = arith.mulf %790, %799 : vector<8x32xf32>
    %c5 = arith.constant 5 : index
    %c0_170 = arith.constant 0 : index
    %c0_171 = arith.constant 0 : index
    %801 = vector.load %arg11[%c5, %c0_170, %c0_171] : memref<8x8x32xf32, #tpu.memory_space<vmem>>, vector<1x8x32xf32>
    %802 = vector.shape_cast %801 : vector<1x8x32xf32> to vector<8x32xf32>
    %803 = vector.shape_cast %800 : vector<8x32xf32> to vector<1x8x32xf32>
    tpu.vector_store %arg11[%c5, %c0_170, %c0_171], %803 {strides = array<i32>} : memref<8x8x32xf32, #tpu.memory_space<vmem>>, vector<1x8x32xf32>,
    %804 = vector.extract_strided_slice %460 {offsets = [48, 0], sizes = [8, 192], strides = [1, 1]} : vector<64x192xf32> to vector<8x192xf32>
    %805 = tpu.concatenate %800, %771 in 1 : vector<8x32xf32>, vector<8x16xf32> -> vector<8x48xf32>
    %cst_172 = arith.constant dense<0.000000e+00> : vector<8x192xf32>
    %806 = tpu.matmul %805, %454, %cst_172 {dimension_numbers = #tpu.dot_dimension_numbers<[1], [0], [0], [1], [0, 0, 1, 1], [], []>} : vector<8x48xf32>, vector<48x192xf32>, vector<8x192xf32> -> vector<8x192xf32>
    %807 = vector.extract_strided_slice %804 {offsets = [0, 128], sizes = [8, 64], strides = [1, 1]} : vector<8x192xf32> to vector<8x64xf32>
    %808 = vector.extract_strided_slice %806 {offsets = [0, 128], sizes = [8, 64], strides = [1, 1]} : vector<8x192xf32> to vector<8x64xf32>
    %809 = arith.addf %807, %808 : vector<8x64xf32>
    %810 = arith.negf %809 : vector<8x64xf32>
    %811 = math.exp %810 : vector<8x64xf32>
    %cst_173 = arith.constant 1.000000e+00 : f32
    %812 = vector.broadcast %cst_173 : f32 to vector<8x64xf32>
    %813 = arith.addf %812, %811 : vector<8x64xf32>
    %814 = arith.divf %812, %813 : vector<8x64xf32>
    %815 = vector.extract_strided_slice %814 {offsets = [0, 0], sizes = [8, 16], strides = [1, 1]} : vector<8x64xf32> to vector<8x16xf32>
    %816 = vector.extract_strided_slice %814 {offsets = [0, 16], sizes = [8, 16], strides = [1, 1]} : vector<8x64xf32> to vector<8x16xf32>
    %817 = vector.extract_strided_slice %814 {offsets = [0, 48], sizes = [8, 16], strides = [1, 1]} : vector<8x64xf32> to vector<8x16xf32>
    %818 = vector.extract_strided_slice %814 {offsets = [0, 32], sizes = [8, 16], strides = [1, 1]} : vector<8x64xf32> to vector<8x16xf32>
    %cst_174 = arith.constant 2.000000e+00 : f32
    %819 = vector.broadcast %cst_174 : f32 to vector<8x16xf32>
    %820 = arith.mulf %819, %818 : vector<8x16xf32>
    %cst_175 = arith.constant 1.000000e+00 : f32
    %821 = vector.broadcast %cst_175 : f32 to vector<8x16xf32>
    %822 = arith.subf %820, %821 : vector<8x16xf32>
    %823 = arith.mulf %816, %769 : vector<8x16xf32>
    %824 = arith.mulf %815, %822 : vector<8x16xf32>
    %825 = arith.addf %823, %824 : vector<8x16xf32>
    %826 = math.tanh %825 : vector<8x16xf32>
    %827 = arith.mulf %817, %826 : vector<8x16xf32>
    %cst_176 = arith.constant dense<0.000000e+00> : vector<8x384xf32>
    %828 = tpu.matmul %827, %455, %cst_176 {dimension_numbers = #tpu.dot_dimension_numbers<[1], [0], [0], [1], [0, 0, 1, 1], [], []>} : vector<8x16xf32>, vector<16x384xf32>, vector<8x384xf32> -> vector<8x384xf32>
    %829 = arith.addf %828, %463 : vector<8x384xf32>
    %830 = vector.extract_strided_slice %829 {offsets = [0, 0], sizes = [8, 128], strides = [1, 1]} : vector<8x384xf32> to vector<8x128xf32>
    %831 = vector.extract_strided_slice %804 {offsets = [0, 0], sizes = [8, 128], strides = [1, 1]} : vector<8x192xf32> to vector<8x128xf32>
    %832 = arith.mulf %830, %831 : vector<8x128xf32>
    %833 = vector.extract_strided_slice %829 {offsets = [0, 128], sizes = [8, 128], strides = [1, 1]} : vector<8x384xf32> to vector<8x128xf32>
    %834 = vector.extract_strided_slice %806 {offsets = [0, 0], sizes = [8, 128], strides = [1, 1]} : vector<8x192xf32> to vector<8x128xf32>
    %835 = arith.mulf %833, %834 : vector<8x128xf32>
    %836 = arith.addf %832, %835 : vector<8x128xf32>
    %837 = vector.extract_strided_slice %829 {offsets = [0, 256], sizes = [8, 128], strides = [1, 1]} : vector<8x384xf32> to vector<8x128xf32>
    %838 = arith.addf %836, %837 : vector<8x128xf32>
    %839 = arith.negf %838 : vector<8x128xf32>
    %840 = math.exp %839 : vector<8x128xf32>
    %cst_177 = arith.constant 1.000000e+00 : f32
    %841 = vector.broadcast %cst_177 : f32 to vector<8x128xf32>
    %842 = arith.addf %841, %840 : vector<8x128xf32>
    %843 = arith.divf %841, %842 : vector<8x128xf32>
    %844 = vector.extract_strided_slice %843 {offsets = [0, 0], sizes = [8, 32], strides = [1, 1]} : vector<8x128xf32> to vector<8x32xf32>
    %845 = vector.extract_strided_slice %843 {offsets = [0, 32], sizes = [8, 32], strides = [1, 1]} : vector<8x128xf32> to vector<8x32xf32>
    %846 = vector.extract_strided_slice %843 {offsets = [0, 96], sizes = [8, 32], strides = [1, 1]} : vector<8x128xf32> to vector<8x32xf32>
    %847 = vector.extract_strided_slice %843 {offsets = [0, 64], sizes = [8, 32], strides = [1, 1]} : vector<8x128xf32> to vector<8x32xf32>
    %cst_178 = arith.constant 2.000000e+00 : f32
    %848 = vector.broadcast %cst_178 : f32 to vector<8x32xf32>
    %849 = arith.mulf %848, %847 : vector<8x32xf32>
    %cst_179 = arith.constant 1.000000e+00 : f32
    %850 = vector.broadcast %cst_179 : f32 to vector<8x32xf32>
    %851 = arith.subf %849, %850 : vector<8x32xf32>
    %852 = arith.mulf %845, %798 : vector<8x32xf32>
    %853 = arith.mulf %844, %851 : vector<8x32xf32>
    %854 = arith.addf %852, %853 : vector<8x32xf32>
    %855 = math.tanh %854 : vector<8x32xf32>
    %856 = arith.mulf %846, %855 : vector<8x32xf32>
    %c6 = arith.constant 6 : index
    %c0_180 = arith.constant 0 : index
    %c0_181 = arith.constant 0 : index
    %857 = vector.load %arg11[%c6, %c0_180, %c0_181] : memref<8x8x32xf32, #tpu.memory_space<vmem>>, vector<1x8x32xf32>
    %858 = vector.shape_cast %857 : vector<1x8x32xf32> to vector<8x32xf32>
    %859 = vector.shape_cast %856 : vector<8x32xf32> to vector<1x8x32xf32>
    tpu.vector_store %arg11[%c6, %c0_180, %c0_181], %859 {strides = array<i32>} : memref<8x8x32xf32, #tpu.memory_space<vmem>>, vector<1x8x32xf32>,
    %860 = vector.extract_strided_slice %460 {offsets = [56, 0], sizes = [8, 192], strides = [1, 1]} : vector<64x192xf32> to vector<8x192xf32>
    %861 = tpu.concatenate %856, %827 in 1 : vector<8x32xf32>, vector<8x16xf32> -> vector<8x48xf32>
    %cst_182 = arith.constant dense<0.000000e+00> : vector<8x192xf32>
    %862 = tpu.matmul %861, %454, %cst_182 {dimension_numbers = #tpu.dot_dimension_numbers<[1], [0], [0], [1], [0, 0, 1, 1], [], []>} : vector<8x48xf32>, vector<48x192xf32>, vector<8x192xf32> -> vector<8x192xf32>
    %863 = vector.extract_strided_slice %860 {offsets = [0, 128], sizes = [8, 64], strides = [1, 1]} : vector<8x192xf32> to vector<8x64xf32>
    %864 = vector.extract_strided_slice %862 {offsets = [0, 128], sizes = [8, 64], strides = [1, 1]} : vector<8x192xf32> to vector<8x64xf32>
    %865 = arith.addf %863, %864 : vector<8x64xf32>
    %866 = arith.negf %865 : vector<8x64xf32>
    %867 = math.exp %866 : vector<8x64xf32>
    %cst_183 = arith.constant 1.000000e+00 : f32
    %868 = vector.broadcast %cst_183 : f32 to vector<8x64xf32>
    %869 = arith.addf %868, %867 : vector<8x64xf32>
    %870 = arith.divf %868, %869 : vector<8x64xf32>
    %871 = vector.extract_strided_slice %870 {offsets = [0, 0], sizes = [8, 16], strides = [1, 1]} : vector<8x64xf32> to vector<8x16xf32>
    %872 = vector.extract_strided_slice %870 {offsets = [0, 16], sizes = [8, 16], strides = [1, 1]} : vector<8x64xf32> to vector<8x16xf32>
    %873 = vector.extract_strided_slice %870 {offsets = [0, 48], sizes = [8, 16], strides = [1, 1]} : vector<8x64xf32> to vector<8x16xf32>
    %874 = vector.extract_strided_slice %870 {offsets = [0, 32], sizes = [8, 16], strides = [1, 1]} : vector<8x64xf32> to vector<8x16xf32>
    %cst_184 = arith.constant 2.000000e+00 : f32
    %875 = vector.broadcast %cst_184 : f32 to vector<8x16xf32>
    %876 = arith.mulf %875, %874 : vector<8x16xf32>
    %cst_185 = arith.constant 1.000000e+00 : f32
    %877 = vector.broadcast %cst_185 : f32 to vector<8x16xf32>
    %878 = arith.subf %876, %877 : vector<8x16xf32>
    %879 = arith.mulf %872, %825 : vector<8x16xf32>
    %880 = arith.mulf %871, %878 : vector<8x16xf32>
    %881 = arith.addf %879, %880 : vector<8x16xf32>
    %882 = math.tanh %881 : vector<8x16xf32>
    %883 = arith.mulf %873, %882 : vector<8x16xf32>
    %cst_186 = arith.constant dense<0.000000e+00> : vector<8x384xf32>
    %884 = tpu.matmul %883, %455, %cst_186 {dimension_numbers = #tpu.dot_dimension_numbers<[1], [0], [0], [1], [0, 0, 1, 1], [], []>} : vector<8x16xf32>, vector<16x384xf32>, vector<8x384xf32> -> vector<8x384xf32>
    %885 = arith.addf %884, %463 : vector<8x384xf32>
    %886 = vector.extract_strided_slice %885 {offsets = [0, 0], sizes = [8, 128], strides = [1, 1]} : vector<8x384xf32> to vector<8x128xf32>
    %887 = vector.extract_strided_slice %860 {offsets = [0, 0], sizes = [8, 128], strides = [1, 1]} : vector<8x192xf32> to vector<8x128xf32>
    %888 = arith.mulf %886, %887 : vector<8x128xf32>
    %889 = vector.extract_strided_slice %885 {offsets = [0, 128], sizes = [8, 128], strides = [1, 1]} : vector<8x384xf32> to vector<8x128xf32>
    %890 = vector.extract_strided_slice %862 {offsets = [0, 0], sizes = [8, 128], strides = [1, 1]} : vector<8x192xf32> to vector<8x128xf32>
    %891 = arith.mulf %889, %890 : vector<8x128xf32>
    %892 = arith.addf %888, %891 : vector<8x128xf32>
    %893 = vector.extract_strided_slice %885 {offsets = [0, 256], sizes = [8, 128], strides = [1, 1]} : vector<8x384xf32> to vector<8x128xf32>
    %894 = arith.addf %892, %893 : vector<8x128xf32>
    %895 = arith.negf %894 : vector<8x128xf32>
    %896 = math.exp %895 : vector<8x128xf32>
    %cst_187 = arith.constant 1.000000e+00 : f32
    %897 = vector.broadcast %cst_187 : f32 to vector<8x128xf32>
    %898 = arith.addf %897, %896 : vector<8x128xf32>
    %899 = arith.divf %897, %898 : vector<8x128xf32>
    %900 = vector.extract_strided_slice %899 {offsets = [0, 0], sizes = [8, 32], strides = [1, 1]} : vector<8x128xf32> to vector<8x32xf32>
    %901 = vector.extract_strided_slice %899 {offsets = [0, 32], sizes = [8, 32], strides = [1, 1]} : vector<8x128xf32> to vector<8x32xf32>
    %902 = vector.extract_strided_slice %899 {offsets = [0, 96], sizes = [8, 32], strides = [1, 1]} : vector<8x128xf32> to vector<8x32xf32>
    %903 = vector.extract_strided_slice %899 {offsets = [0, 64], sizes = [8, 32], strides = [1, 1]} : vector<8x128xf32> to vector<8x32xf32>
    %cst_188 = arith.constant 2.000000e+00 : f32
    %904 = vector.broadcast %cst_188 : f32 to vector<8x32xf32>
    %905 = arith.mulf %904, %903 : vector<8x32xf32>
    %cst_189 = arith.constant 1.000000e+00 : f32
    %906 = vector.broadcast %cst_189 : f32 to vector<8x32xf32>
    %907 = arith.subf %905, %906 : vector<8x32xf32>
    %908 = arith.mulf %901, %854 : vector<8x32xf32>
    %909 = arith.mulf %900, %907 : vector<8x32xf32>
    %910 = arith.addf %908, %909 : vector<8x32xf32>
    %911 = math.tanh %910 : vector<8x32xf32>
    %912 = arith.mulf %902, %911 : vector<8x32xf32>
    %c7 = arith.constant 7 : index
    %c0_190 = arith.constant 0 : index
    %c0_191 = arith.constant 0 : index
    %913 = vector.load %arg11[%c7, %c0_190, %c0_191] : memref<8x8x32xf32, #tpu.memory_space<vmem>>, vector<1x8x32xf32>
    %914 = vector.shape_cast %913 : vector<1x8x32xf32> to vector<8x32xf32>
    %915 = vector.shape_cast %912 : vector<8x32xf32> to vector<1x8x32xf32>
    tpu.vector_store %arg11[%c7, %c0_190, %c0_191], %915 {strides = array<i32>} : memref<8x8x32xf32, #tpu.memory_space<vmem>>, vector<1x8x32xf32>,
    %c1_192 = arith.constant 1 : index
    %c0_193 = arith.constant 0 : index
    %c0_194 = arith.constant 0 : index
    %916 = vector.load %arg12[%c1_192, %c0_193, %c0_194] : memref<2x8x32xf32, #tpu.memory_space<vmem>>, vector<1x8x32xf32>
    %917 = vector.shape_cast %916 : vector<1x8x32xf32> to vector<8x32xf32>
    %918 = vector.shape_cast %912 : vector<8x32xf32> to vector<1x8x32xf32>
    tpu.vector_store %arg12[%c1_192, %c0_193, %c0_194], %918 {strides = array<i32>} : memref<2x8x32xf32, #tpu.memory_space<vmem>>, vector<1x8x32xf32>,
    %c1_195 = arith.constant 1 : index
    %c0_196 = arith.constant 0 : index
    %c0_197 = arith.constant 0 : index
    %919 = vector.load %arg13[%c1_195, %c0_196, %c0_197] : memref<2x8x32xf32, #tpu.memory_space<vmem>>, vector<1x8x32xf32>
    %920 = vector.shape_cast %919 : vector<1x8x32xf32> to vector<8x32xf32>
    %921 = vector.shape_cast %910 : vector<8x32xf32> to vector<1x8x32xf32>
    tpu.vector_store %arg13[%c1_195, %c0_196, %c0_197], %921 {strides = array<i32>} : memref<2x8x32xf32, #tpu.memory_space<vmem>>, vector<1x8x32xf32>,
    return
  }
}

</mosaic_0001>

<llo_original>
// kernel: tpu_custom_call.1
$region0: #{tpu_custom_call.1}
  #allocation0 [shape = 'u32[]', space=smem, size = 0x4, offset = 0x4, fixed_abs, tag = 'smem constant byte address 0x4 - core index']
  #allocation1 [shape = 'u32[144,128]{1,0:T(1,128)}', space=vmem, size = 0x12000, scoped, tag = 'internal scratch']
  #allocation2 [shape = 'f32[64,32]{1,0:T(8,128)}', space=vmem, size = 0x8000, scoped, tag = 'scratch operand']
  %s0 = inlined_call_operand.vmem [shape: f32[64,16], index: 0, kind: input, shape index: {}]
  %s1 = inlined_call_operand.hbm [shape: f32[16,192], index: 1, kind: input, shape index: {}]
  %s2 = inlined_call_operand.hbm [shape: f32[48,192], index: 2, kind: input, shape index: {}]
  %s3 = inlined_call_operand.hbm [shape: f32[16,384], index: 3, kind: input, shape index: {}]
  %s4 = inlined_call_operand.vmem [shape: f32[1,384], index: 4, kind: input, shape index: {}]
  %s5 = inlined_call_operand.vmem [shape: f32[1,192], index: 5, kind: input, shape index: {}]
  %s6 = inlined_call_operand.vmem [shape: f32[32,192], index: 6, kind: input, shape index: {}]
  %s7 = inlined_call_operand.hbm [shape: f32[48,192], index: 7, kind: input, shape index: {}]
  %s8 = inlined_call_operand.hbm [shape: f32[16,384], index: 8, kind: input, shape index: {}]
  %s9 = inlined_call_operand.vmem [shape: f32[1,384], index: 9, kind: input, shape index: {}]
  %s10 = inlined_call_operand.vmem [shape: f32[1,192], index: 10, kind: input, shape index: {}]
  %s11 = inlined_call_operand.hbm [shape: f32[8,8,32], index: 11, kind: output, shape index: {0}]
  %s12 = inlined_call_operand.hbm [shape: f32[2,8,32], index: 12, kind: output, shape index: {1}]
  %s13 = inlined_call_operand.hbm [shape: f32[2,8,32], index: 13, kind: output, shape index: {2}]
  %14 = xla_tuple %s11, %s12, %s13
  %s15 = sld [smem:[#allocation0]]
  $region90: #{tpu_custom_call.1} parent=0
    _
  %s17 = ssub.s32 1, %s15
  %s18 = scalar_select 0, %s17, %s15
  $region1: #{tpu_custom_call.1} parent=0
    #allocation3 [shape = 'u8[16384]{0}', space=vmem, size = 0x4000, scoped, tag = 'input window, operand 1, single buffered']
    #allocation4 [shape = 's32[1]{0}', space=sflag, size = 0x4, scoped, tag = 'scoped memory for tpu_custom_call.1']
    #allocation5 [shape = 's32[1]{0}', space=sflag, size = 0x4, scoped, tag = 'scoped memory for tpu_custom_call.1']
    #allocation6 [shape = 'u8[49152]{0}', space=vmem, size = 0xc000, scoped, tag = 'input window, operand 2, single buffered']
    #allocation7 [shape = 's32[1]{0}', space=sflag, size = 0x4, scoped, tag = 'scoped memory for tpu_custom_call.1']
    #allocation8 [shape = 'u8[24576]{0}', space=vmem, size = 0x6000, scoped, tag = 'input window, operand 3, single buffered']
    #allocation9 [shape = 'u8[49152]{0}', space=vmem, size = 0xc000, scoped, tag = 'input window, operand 7, single buffered']
    #allocation10 [shape = 's32[1]{0}', space=sflag, size = 0x4, scoped, tag = 'scoped memory for tpu_custom_call.1']
    #allocation11 [shape = 'u8[24576]{0}', space=vmem, size = 0x6000, scoped, tag = 'input window, operand 8, single buffered']
    #allocation12 [shape = 'u8[32768]{0}', space=vmem, size = 0x8000, scoped, tag = 'output window, operand 0, single buffered']
    #allocation13 [shape = 'u8[8192]{0}', space=vmem, size = 0x2000, scoped, tag = 'output window, operand 1, single buffered']
    #allocation14 [shape = 's32[1]{0}', space=sflag, size = 0x4, scoped, tag = 'scoped memory for tpu_custom_call.1']
    #allocation15 [shape = 'u8[8192]{0}', space=vmem, size = 0x2000, scoped, tag = 'output window, operand 2, single buffered']
    %19 = vsyncpa [#allocation4], 0
    %20 = vsyncpa [#allocation7], 0
    %21 = vsyncpa [#allocation10], 0
    %22 = vsyncpa [#allocation5], 0
    %23 = vsyncpa [#allocation14], 0
    // Predicated region
    $region2: #{tpu_custom_call.1} parent=1 // pred_check
      _
    $region3: #{tpu_custom_call.1} parent=1 // pred_check_branch
      %25 = sbr.rel (0) target = $region5
    $region4: #{tpu_custom_call.1} parent=1 // pred_region
      _
    $region5: #{tpu_custom_call.1} parent=1 // pred_fallthru
      _
    // Predicated region
    $region6: #{tpu_custom_call.1} parent=1 // pred_check
      _
    $region7: #{tpu_custom_call.1} parent=1 // pred_check_branch
      %27 = sbr.rel (0) target = $region9
    $region8: #{tpu_custom_call.1} parent=1 // pred_region
      %s29 = ssub.s32 512, 512
      %30 = vsyncadd [#allocation4], %s29
      %s31 = sshll.u32 [#allocation3], 4
      %s32 = int_to_ptr.vmem [resolvable:$true] %s31
      %37 = dma.hbm_to_vmem [thread:$0]  %s1, 512, %s32, [#allocation4], 256, 256, 16
    $region9: #{tpu_custom_call.1} parent=1 // pred_fallthru
      _
    // Predicated region
    $region10: #{tpu_custom_call.1} parent=1 // pred_check
      _
    $region11: #{tpu_custom_call.1} parent=1 // pred_check_branch
      %39 = sbr.rel (0) target = $region13
    $region12: #{tpu_custom_call.1} parent=1 // pred_region
      %s41 = ssub.s32 1536, 1536
      %42 = vsyncadd [#allocation7], %s41
      %s43 = sshll.u32 [#allocation6], 4
      %s44 = int_to_ptr.vmem [resolvable:$true] %s43
      %49 = dma.hbm_to_vmem [thread:$0]  %s2, 1536, %s44, [#allocation7], 256, 256, 16
    $region13: #{tpu_custom_call.1} parent=1 // pred_fallthru
      _
    // Predicated region
    $region14: #{tpu_custom_call.1} parent=1 // pred_check
      _
    $region15: #{tpu_custom_call.1} parent=1 // pred_check_branch
      %51 = sbr.rel (0) target = $region17
    $region16: #{tpu_custom_call.1} parent=1 // pred_region
      %s53 = ssub.s32 768, 768
      %54 = vsyncadd [#allocation7], %s53
      %s55 = sshll.u32 [#allocation8], 4
      %s56 = int_to_ptr.vmem [resolvable:$true] %s55
      %61 = dma.hbm_to_vmem [thread:$0]  %s3, 768, %s56, [#allocation7], 384, 384, 24
    $region17: #{tpu_custom_call.1} parent=1 // pred_fallthru
      _
    // Predicated region
    $region18: #{tpu_custom_call.1} parent=1 // pred_check
      _
    $region19: #{tpu_custom_call.1} parent=1 // pred_check_branch
      %63 = sbr.rel (0) target = $region21
    $region20: #{tpu_custom_call.1} parent=1 // pred_region
      _
    $region21: #{tpu_custom_call.1} parent=1 // pred_fallthru
      _
    // Predicated region
    $region22: #{tpu_custom_call.1} parent=1 // pred_check
      _
    $region23: #{tpu_custom_call.1} parent=1 // pred_check_branch
      %65 = sbr.rel (0) target = $region25
    $region24: #{tpu_custom_call.1} parent=1 // pred_region
      _
    $region25: #{tpu_custom_call.1} parent=1 // pred_fallthru
      _
    // Predicated region
    $region26: #{tpu_custom_call.1} parent=1 // pred_check
      _
    $region27: #{tpu_custom_call.1} parent=1 // pred_check_branch
      %67 = sbr.rel (0) target = $region29
    $region28: #{tpu_custom_call.1} parent=1 // pred_region
      _
    $region29: #{tpu_custom_call.1} parent=1 // pred_fallthru
      _
    // Predicated region
    $region30: #{tpu_custom_call.1} parent=1 // pred_check
      _
    $region31: #{tpu_custom_call.1} parent=1 // pred_check_branch
      %69 = sbr.rel (0) target = $region33
    $region32: #{tpu_custom_call.1} parent=1 // pred_region
      %s71 = ssub.s32 1536, 1536
      %72 = vsyncadd [#allocation10], %s71
      %s73 = sshll.u32 [#allocation9], 4
      %s74 = int_to_ptr.vmem [resolvable:$true] %s73
      %79 = dma.hbm_to_vmem [thread:$0]  %s7, 1536, %s74, [#allocation10], 256, 256, 16
    $region33: #{tpu_custom_call.1} parent=1 // pred_fallthru
      _
    // Predicated region
    $region34: #{tpu_custom_call.1} parent=1 // pred_check
      _
    $region35: #{tpu_custom_call.1} parent=1 // pred_check_branch
      %81 = sbr.rel (0) target = $region37
    $region36: #{tpu_custom_call.1} parent=1 // pred_region
      %s83 = ssub.s32 768, 768
      %84 = vsyncadd [#allocation10], %s83
      %s85 = sshll.u32 [#allocation11], 4
      %s86 = int_to_ptr.vmem [resolvable:$true] %s85
      %91 = dma.hbm_to_vmem [thread:$0]  %s8, 768, %s86, [#allocation10], 384, 384, 24
    $region37: #{tpu_custom_call.1} parent=1 // pred_fallthru
      _
    // Predicated region
    $region38: #{tpu_custom_call.1} parent=1 // pred_check
      _
    $region39: #{tpu_custom_call.1} parent=1 // pred_check_branch
      %93 = sbr.rel (0) target = $region41
    $region40: #{tpu_custom_call.1} parent=1 // pred_region
      _
    $region41: #{tpu_custom_call.1} parent=1 // pred_fallthru
      _
    // Predicated region
    $region42: #{tpu_custom_call.1} parent=1 // pred_check
      _
    $region43: #{tpu_custom_call.1} parent=1 // pred_check_branch
      %95 = sbr.rel (0) target = $region45
    $region44: #{tpu_custom_call.1} parent=1 // pred_region
      _
    $region45: #{tpu_custom_call.1} parent=1 // pred_fallthru
      _
    // Predicated region
    $region46: #{tpu_custom_call.1} parent=1 // pred_check
      _
    $region47: #{tpu_custom_call.1} parent=1 // pred_check_branch
      %97 = sbr.rel (0) target = $region49
    $region48: #{tpu_custom_call.1} parent=1 // pred_region
      %98 = dma.done [#allocation4], 512
    $region49: #{tpu_custom_call.1} parent=1 // pred_fallthru
      _
    // Predicated region
    $region50: #{tpu_custom_call.1} parent=1 // pred_check
      _
    $region51: #{tpu_custom_call.1} parent=1 // pred_check_branch
      %100 = sbr.rel (0) target = $region53
    $region52: #{tpu_custom_call.1} parent=1 // pred_region
      %101 = dma.done [#allocation7], 1536
    $region53: #{tpu_custom_call.1} parent=1 // pred_fallthru
      _
    // Predicated region
    $region54: #{tpu_custom_call.1} parent=1 // pred_check
      _
    $region55: #{tpu_custom_call.1} parent=1 // pred_check_branch
      %103 = sbr.rel (0) target = $region57
    $region56: #{tpu_custom_call.1} parent=1 // pred_region
      %104 = dma.done [#allocation7], 768
    $region57: #{tpu_custom_call.1} parent=1 // pred_fallthru
      _
    // Predicated region
    $region58: #{tpu_custom_call.1} parent=1 // pred_check
      _
    $region59: #{tpu_custom_call.1} parent=1 // pred_check_branch
      %106 = sbr.rel (0) target = $region61
    $region60: #{tpu_custom_call.1} parent=1 // pred_region
      %107 = dma.done [#allocation10], 1536
    $region61: #{tpu_custom_call.1} parent=1 // pred_fallthru
      _
    // Predicated region
    $region62: #{tpu_custom_call.1} parent=1 // pred_check
      _
    $region63: #{tpu_custom_call.1} parent=1 // pred_check_branch
      %109 = sbr.rel (0) target = $region65
    $region64: #{tpu_custom_call.1} parent=1 // pred_region
      %110 = dma.done [#allocation10], 768
    $region65: #{tpu_custom_call.1} parent=1 // pred_fallthru
      _
    %v111 = vld [vmem:[#allocation3] sm:$0xff]
    %v112 = vld [vmem:[#allocation3 + $0x8] sm:$0xff]
    %v113 = vld [vmem:[#allocation3 + $0x10] sm:$0xff]
    %v114 = vld [vmem:[#allocation3 + $0x18] sm:$0xff]
    %v115 = vld [vmem:[#allocation6] sm:$0xff]
    %v116 = vld [vmem:[#allocation6 + $0x8] sm:$0xff]
    %v117 = vld [vmem:[#allocation6 + $0x10] sm:$0xff]
    %v118 = vld [vmem:[#allocation6 + $0x18] sm:$0xff]
    %v119 = vld [vmem:[#allocation6 + $0x20] sm:$0xff]
    %v120 = vld [vmem:[#allocation6 + $0x28] sm:$0xff]
    %v121 = vld [vmem:[#allocation6 + $0x30] sm:$0xff]
    %v122 = vld [vmem:[#allocation6 + $0x38] sm:$0xff]
    %v123 = vld [vmem:[#allocation6 + $0x40] sm:$0xff]
    %v124 = vld [vmem:[#allocation6 + $0x48] sm:$0xff]
    %v125 = vld [vmem:[#allocation6 + $0x50] sm:$0xff]
    %v126 = vld [vmem:[#allocation6 + $0x58] sm:$0xff]
    %v127 = vld [vmem:[#allocation8] sm:$0xff]
    %v128 = vld [vmem:[#allocation8 + $0x8] sm:$0xff]
    %v129 = vld [vmem:[#allocation8 + $0x10] sm:$0xff]
    %v130 = vld [vmem:[#allocation8 + $0x18] sm:$0xff]
    %v131 = vld [vmem:[#allocation8 + $0x20] sm:$0xff]
    %v132 = vld [vmem:[#allocation8 + $0x28] sm:$0xff]
    %v133 = vld [vmem:[%s0] sm:$0xff]
    %v134 = vld [vmem:[%s0 + $0x8] sm:$0xff]
    %v135 = vld [vmem:[%s0 + $0x10] sm:$0xff]
    %v136 = vld [vmem:[%s0 + $0x18] sm:$0xff]
    %v137 = vld [vmem:[%s0 + $0x20] sm:$0xff]
    %v138 = vld [vmem:[%s0 + $0x28] sm:$0xff]
    %v139 = vld [vmem:[%s0 + $0x30] sm:$0xff]
    %v140 = vld [vmem:[%s0 + $0x38] sm:$0xff]
    %v141 = vld [vmem:[%s5] sm:$0x3]
    %v143 = vlaneseq
    %v144 = vshrl.u32 %v143, 7
    %v145 = vsub.s32 0, %v144
    %v146 = vrot.slane %v141, %v145
    %v147 = vlaneseq
    %v148 = vshrl.u32 %v147, 7
    %v149 = vsub.s32 1, %v148
    %v150 = vrot.slane %v141, %v149
    %vm153 = vcmask 130048
    %v155 = vsel %vm153, %v133, 0
    %v158 = vsel %vm153, %v134, 0
    %v161 = vsel %vm153, %v135, 0
    %v164 = vsel %vm153, %v136, 0
    %v167 = vsel %vm153, %v137, 0
    %v170 = vsel %vm153, %v138, 0
    %v173 = vsel %vm153, %v139, 0
    %v176 = vsel %vm153, %v140, 0
    %178 = vmatprep.subr.mxu0 0.0
    %179 = vmatpush1.msra.mxu0 0.0
    %180 = vmatprep.subr.mxu0 0.0
    %181 = vmatpush1.msra.mxu0 0.0
    %182 = vmatprep.subr.mxu0 0.0
    %183 = vmatpush1.msra.mxu0 0.0
    %184 = vmatprep.subr.mxu0 0.0
    %185 = vmatpush1.msra.mxu0 0.0
    %186 = vmatprep.subr.mxu0 0.0
    %187 = vmatpush1.msra.mxu0 0.0
    %188 = vmatprep.subr.mxu0 0.0
    %189 = vmatpush1.msra.mxu0 0.0
    %190 = vmatprep.subr.mxu0 0.0
    %191 = vmatpush1.msra.mxu0 0.0
    %192 = vmatprep.subr.mxu0 0.0
    %193 = vmatpush1.msra.mxu0 0.0
    %194 = vmatprep.subr.mxu0 0.0
    %195 = vmatpush1.msra.mxu0 0.0
    %196 = vmatprep.subr.mxu0 0.0
    %197 = vmatpush1.msra.mxu0 0.0
    %198 = vmatprep.subr.mxu0 0.0
    %199 = vmatpush1.msra.mxu0 0.0
    %200 = vmatprep.subr.mxu0 0.0
    %201 = vmatpush1.msra.mxu0 0.0
    %202 = vmatprep.subr.mxu0 0.0
    %203 = vmatpush1.msra.mxu0 0.0
    %204 = vmatprep.subr.mxu0 0.0
    %205 = vmatpush1.msra.mxu0 0.0
    %206 = vmatprep.subr.mxu0 %v114
    %207 = vmatpush1.msra.mxu0 %v113
    %208 = vmatprep.subr.mxu0 %v112
    %209 = vmatpush1.msra.mxu0 %v111
    %210 = vmatprep.subr.mxu0 0.0
    %211 = vmatpush2.msra.mxu0 0.0
    %212 = vmatprep.subr.mxu0 0.0
    %213 = vmatpush2.msra.mxu0 0.0
    %214 = vmatprep.subr.mxu0 0.0
    %215 = vmatpush2.msra.mxu0 0.0
    %216 = vmatprep.subr.mxu0 0.0
    %217 = vmatpush2.msra.mxu0 0.0
    %218 = vmatprep.subr.mxu0 0.0
    %219 = vmatpush2.msra.mxu0 0.0
    %220 = vmatprep.subr.mxu0 0.0
    %221 = vmatpush2.msra.mxu0 0.0
    %222 = vmatprep.subr.mxu0 0.0
    %223 = vmatpush2.msra.mxu0 0.0
    %224 = vmatprep.subr.mxu0 0.0
    %225 = vmatpush2.msra.mxu0 0.0
    %226 = vmatprep.subr.mxu0 0.0
    %227 = vmatpush2.msra.mxu0 0.0
    %228 = vmatprep.subr.mxu0 0.0
    %229 = vmatpush2.msra.mxu0 0.0
    %230 = vmatprep.subr.mxu0 0.0
    %231 = vmatpush2.msra.mxu0 0.0
    %232 = vmatprep.subr.mxu0 0.0
    %233 = vmatpush2.msra.mxu0 0.0
    %234 = vmatprep.subr.mxu0 0.0
    %235 = vmatpush2.msra.mxu0 0.0
    %236 = vmatprep.subr.mxu0 0.0
    %237 = vmatpush2.msra.mxu0 0.0
    %238 = vmatprep.subr.mxu0 0.0
    %239 = vmatpush2.msra.mxu0 0.0
    %240 = vmatprep.subr.mxu0 0.0
    %241 = vmatpush2.msra.mxu0 0.0
    %242 = vmatprep.mubr.f32.mxu0 0.0
    %243 = vmatmul.mubr.f32.gmra.mxu0 %v155
    %v244 = vpop.f32.mrf.mxu0
    %v245 = vadd.f32 %v146, %v244
    %v246 = vpop.f32.mrf.mxu0
    %v247 = vadd.f32 %v150, %v246
    %248 = vmatprep.mubr.f32.mxu0 0.0
    %249 = vmatmul.mubr.f32.gmra.mxu0 %v158
    %v250 = vpop.f32.mrf.mxu0
    %v251 = vadd.f32 %v146, %v250
    %v252 = vpop.f32.mrf.mxu0
    %v253 = vadd.f32 %v150, %v252
    %254 = vmatprep.mubr.f32.mxu0 0.0
    %255 = vmatmul.mubr.f32.gmra.mxu0 %v161
    %v256 = vpop.f32.mrf.mxu0
    %v257 = vadd.f32 %v146, %v256
    %v258 = vpop.f32.mrf.mxu0
    %v259 = vadd.f32 %v150, %v258
    %260 = vmatprep.mubr.f32.mxu0 0.0
    %261 = vmatmul.mubr.f32.gmra.mxu0 %v164
    %v262 = vpop.f32.mrf.mxu0
    %v263 = vadd.f32 %v146, %v262
    %v264 = vpop.f32.mrf.mxu0
    %v265 = vadd.f32 %v150, %v264
    %266 = vmatprep.mubr.f32.mxu0 0.0
    %267 = vmatmul.mubr.f32.gmra.mxu0 %v167
    %v268 = vpop.f32.mrf.mxu0
    %v269 = vadd.f32 %v146, %v268
    %v270 = vpop.f32.mrf.mxu0
    %v271 = vadd.f32 %v150, %v270
    %272 = vmatprep.mubr.f32.mxu0 0.0
    %273 = vmatmul.mubr.f32.gmra.mxu0 %v170
    %v274 = vpop.f32.mrf.mxu0
    %v275 = vadd.f32 %v146, %v274
    %v276 = vpop.f32.mrf.mxu0
    %v277 = vadd.f32 %v150, %v276
    %278 = vmatprep.mubr.f32.mxu0 0.0
    %279 = vmatmul.mubr.f32.gmra.mxu0 %v173
    %v280 = vpop.f32.mrf.mxu0
    %v281 = vadd.f32 %v146, %v280
    %v282 = vpop.f32.mrf.mxu0
    %v283 = vadd.f32 %v150, %v282
    %284 = vmatprep.mubr.f32.mxu0 0.0
    %285 = vmatmul.mubr.f32.gmra.mxu0 %v176
    %v286 = vpop.f32.mrf.mxu0
    %v287 = vadd.f32 %v146, %v286
    %v288 = vpop.f32.mrf.mxu0
    %v289 = vadd.f32 %v150, %v288
    %290 = vdwg.mxu0
    %v291 = vld [vmem:[%s4] sm:$0x7]
    %v293 = vlaneseq
    %v294 = vshrl.u32 %v293, 7
    %v295 = vsub.s32 0, %v294
    %v296 = vrot.slane %v291, %v295
    %v297 = vlaneseq
    %v298 = vshrl.u32 %v297, 7
    %v299 = vsub.s32 1, %v298
    %v300 = vrot.slane %v291, %v299
    %v301 = vlaneseq
    %v302 = vshrl.u32 %v301, 7
    %v303 = vsub.s32 2, %v302
    %v304 = vrot.slane %v291, %v303
    %vm308 = vcmask 392192
    %v310 = vsel %vm308, 0.0, 0
    %312 = vmatprep.subr.mxu0 0.0
    %313 = vmatpush1.msra.mxu0 0.0
    %314 = vmatprep.subr.mxu0 0.0
    %315 = vmatpush1.msra.mxu0 0.0
    %316 = vmatprep.subr.mxu0 0.0
    %317 = vmatpush1.msra.mxu0 0.0
    %318 = vmatprep.subr.mxu0 0.0
    %319 = vmatpush1.msra.mxu0 0.0
    %320 = vmatprep.subr.mxu0 0.0
    %321 = vmatpush1.msra.mxu0 0.0
    %322 = vmatprep.subr.mxu0 0.0
    %323 = vmatpush1.msra.mxu0 0.0
    %324 = vmatprep.subr.mxu0 0.0
    %325 = vmatpush1.msra.mxu0 0.0
    %326 = vmatprep.subr.mxu0 0.0
    %327 = vmatpush1.msra.mxu0 0.0
    %328 = vmatprep.subr.mxu0 0.0
    %329 = vmatpush1.msra.mxu0 0.0
    %330 = vmatprep.subr.mxu0 0.0
    %331 = vmatpush1.msra.mxu0 0.0
    %332 = vmatprep.subr.mxu0 %v126
    %333 = vmatpush1.msra.mxu0 %v125
    %334 = vmatprep.subr.mxu0 %v124
    %335 = vmatpush1.msra.mxu0 %v123
    %336 = vmatprep.subr.mxu0 %v122
    %337 = vmatpush1.msra.mxu0 %v121
    %338 = vmatprep.subr.mxu0 %v120
    %339 = vmatpush1.msra.mxu0 %v119
    %340 = vmatprep.subr.mxu0 %v118
    %341 = vmatpush1.msra.mxu0 %v117
    %342 = vmatprep.subr.mxu0 %v116
    %343 = vmatpush1.msra.mxu0 %v115
    %344 = vmatprep.subr.mxu0 0.0
    %345 = vmatpush2.msra.mxu0 0.0
    %346 = vmatprep.subr.mxu0 0.0
    %347 = vmatpush2.msra.mxu0 0.0
    %348 = vmatprep.subr.mxu0 0.0
    %349 = vmatpush2.msra.mxu0 0.0
    %350 = vmatprep.subr.mxu0 0.0
    %351 = vmatpush2.msra.mxu0 0.0
    %352 = vmatprep.subr.mxu0 0.0
    %353 = vmatpush2.msra.mxu0 0.0
    %354 = vmatprep.subr.mxu0 0.0
    %355 = vmatpush2.msra.mxu0 0.0
    %356 = vmatprep.subr.mxu0 0.0
    %357 = vmatpush2.msra.mxu0 0.0
    %358 = vmatprep.subr.mxu0 0.0
    %359 = vmatpush2.msra.mxu0 0.0
    %360 = vmatprep.subr.mxu0 0.0
    %361 = vmatpush2.msra.mxu0 0.0
    %362 = vmatprep.subr.mxu0 0.0
    %363 = vmatpush2.msra.mxu0 0.0
    %364 = vmatprep.subr.mxu0 0.0
    %365 = vmatpush2.msra.mxu0 0.0
    %366 = vmatprep.subr.mxu0 0.0
    %367 = vmatpush2.msra.mxu0 0.0
    %368 = vmatprep.subr.mxu0 0.0
    %369 = vmatpush2.msra.mxu0 0.0
    %370 = vmatprep.subr.mxu0 0.0
    %371 = vmatpush2.msra.mxu0 0.0
    %372 = vmatprep.subr.mxu0 0.0
    %373 = vmatpush2.msra.mxu0 0.0
    %374 = vmatprep.subr.mxu0 0.0
    %375 = vmatpush2.msra.mxu0 0.0
    %376 = vmatprep.mubr.f32.mxu0 0.0
    %377 = vmatmul.mubr.f32.gmra.mxu0 %v310
    %v378 = vpop.f32.mrf.mxu0
    %v379 = vadd.f32 0.0, %v378
    %v380 = vpop.f32.mrf.mxu0
    %v381 = vadd.f32 0.0, %v380
    %382 = vdwg.mxu0
    %v383 = vadd.f32 %v247, %v381
    %v384 = vxor.u32 %v383, 2147483648
    %v385 = vmul.f32 %v384, 1.442695
    %v386 = vpow.pop %v385
    %v387 = vadd.f32 %v386, 1.0
    %v388 = vrcp.pop %v387
    %v389 = vmul.f32 1.0, %v388
    %v390 = vmul.f32 %v389, 2.0
    %v391 = vsub.f32 %v390, 1.0
    %v392 = vmul.f32 %v389, 0.0
    %394 = vrot.lane.b32.xlu0 %v391, 96
    %v395 = vpop.permute.xlu0 %394
    %v397 = vmul.f32 %v389, %v395
    %399 = vrot.lane.b32.xlu0 %v397, 16
    %v400 = vpop.permute.xlu0 %399
    %v402 = vadd.f32 %v392, %v400
    %v403 = vtanh.pop %v402
    %405 = vrot.lane.b32.xlu0 %v403, 32
    %v406 = vpop.permute.xlu0 %405
    %v408 = vmul.f32 %v389, %v406
    %410 = vrot.lane.b32.xlu0 %v408, 80
    %v411 = vpop.permute.xlu0 %410
    %v412 = vsel %vm153, %v411, 0
    %414 = vmatprep.subr.mxu0 0.0
    %415 = vmatpush1.msra.mxu0 0.0
    %416 = vmatprep.subr.mxu0 0.0
    %417 = vmatpush1.msra.mxu0 0.0
    %418 = vmatprep.subr.mxu0 0.0
    %419 = vmatpush1.msra.mxu0 0.0
    %420 = vmatprep.subr.mxu0 0.0
    %421 = vmatpush1.msra.mxu0 0.0
    %422 = vmatprep.subr.mxu0 0.0
    %423 = vmatpush1.msra.mxu0 0.0
    %424 = vmatprep.subr.mxu0 0.0
    %425 = vmatpush1.msra.mxu0 0.0
    %426 = vmatprep.subr.mxu0 0.0
    %427 = vmatpush1.msra.mxu0 0.0
    %428 = vmatprep.subr.mxu0 0.0
    %429 = vmatpush1.msra.mxu0 0.0
    %430 = vmatprep.subr.mxu0 0.0
    %431 = vmatpush1.msra.mxu0 0.0
    %432 = vmatprep.subr.mxu0 0.0
    %433 = vmatpush1.msra.mxu0 0.0
    %434 = vmatprep.subr.mxu0 0.0
    %435 = vmatpush1.msra.mxu0 0.0
    %436 = vmatprep.subr.mxu0 0.0
    %437 = vmatpush1.msra.mxu0 0.0
    %438 = vmatprep.subr.mxu0 0.0
    %439 = vmatpush1.msra.mxu0 0.0
    %440 = vmatprep.subr.mxu0 0.0
    %441 = vmatpush1.msra.mxu0 0.0
    %442 = vmatprep.subr.mxu0 %v131
    %443 = vmatpush1.msra.mxu0 %v130
    %444 = vmatprep.subr.mxu0 %v128
    %445 = vmatpush1.msra.mxu0 %v127
    %446 = vmatprep.subr.mxu0 0.0
    %447 = vmatpush2.msra.mxu0 0.0
    %448 = vmatprep.subr.mxu0 0.0
    %449 = vmatpush2.msra.mxu0 0.0
    %450 = vmatprep.subr.mxu0 0.0
    %451 = vmatpush2.msra.mxu0 0.0
    %452 = vmatprep.subr.mxu0 0.0
    %453 = vmatpush2.msra.mxu0 0.0
    %454 = vmatprep.subr.mxu0 0.0
    %455 = vmatpush2.msra.mxu0 0.0
    %456 = vmatprep.subr.mxu0 0.0
    %457 = vmatpush2.msra.mxu0 0.0
    %458 = vmatprep.subr.mxu0 0.0
    %459 = vmatpush2.msra.mxu0 0.0
    %460 = vmatprep.subr.mxu0 0.0
    %461 = vmatpush2.msra.mxu0 0.0
    %462 = vmatprep.subr.mxu0 0.0
    %463 = vmatpush2.msra.mxu0 0.0
    %464 = vmatprep.subr.mxu0 0.0
    %465 = vmatpush2.msra.mxu0 0.0
    %466 = vmatprep.subr.mxu0 0.0
    %467 = vmatpush2.msra.mxu0 0.0
    %468 = vmatprep.subr.mxu0 0.0
    %469 = vmatpush2.msra.mxu0 0.0
    %470 = vmatprep.subr.mxu0 0.0
    %471 = vmatpush2.msra.mxu0 0.0
    %472 = vmatprep.subr.mxu0 0.0
    %473 = vmatpush2.msra.mxu0 0.0
    %474 = vmatprep.subr.mxu0 0.0
    %475 = vmatpush2.msra.mxu0 0.0
    %476 = vmatprep.subr.mxu0 0.0
    %477 = vmatpush2.msra.mxu0 0.0
    %478 = vmatprep.mubr.f32.mxu0 0.0
    %479 = vmatmul.mubr.f32.gmra.mxu0 %v412
    %v480 = vpop.f32.mrf.mxu0
    %v481 = vadd.f32 %v296, %v480
    %v482 = vpop.f32.mrf.mxu0
    %v483 = vadd.f32 %v300, %v482
    %484 = vdwg.mxu0
    %485 = vmatprep.subr.mxu0 0.0
    %486 = vmatpush1.msra.mxu0 0.0
    %487 = vmatprep.subr.mxu0 0.0
    %488 = vmatpush1.msra.mxu0 0.0
    %489 = vmatprep.subr.mxu0 0.0
    %490 = vmatpush1.msra.mxu0 0.0
    %491 = vmatprep.subr.mxu0 0.0
    %492 = vmatpush1.msra.mxu0 0.0
    %493 = vmatprep.subr.mxu0 0.0
    %494 = vmatpush1.msra.mxu0 0.0
    %495 = vmatprep.subr.mxu0 0.0
    %496 = vmatpush1.msra.mxu0 0.0
    %497 = vmatprep.subr.mxu0 0.0
    %498 = vmatpush1.msra.mxu0 0.0
    %499 = vmatprep.subr.mxu0 0.0
    %500 = vmatpush1.msra.mxu0 0.0
    %501 = vmatprep.subr.mxu0 0.0
    %502 = vmatpush1.msra.mxu0 0.0
    %503 = vmatprep.subr.mxu0 0.0
    %504 = vmatpush1.msra.mxu0 0.0
    %505 = vmatprep.subr.mxu0 0.0
    %506 = vmatpush1.msra.mxu0 0.0
    %507 = vmatprep.subr.mxu0 0.0
    %508 = vmatpush1.msra.mxu0 0.0
    %509 = vmatprep.subr.mxu0 0.0
    %510 = vmatpush1.msra.mxu0 0.0
    %511 = vmatprep.subr.mxu0 0.0
    %512 = vmatpush1.msra.mxu0 0.0
    %513 = vmatprep.subr.mxu0 0.0
    %514 = vmatpush1.msra.mxu0 %v132
    %515 = vmatprep.subr.mxu0 0.0
    %516 = vmatpush1.msra.mxu0 %v129
    %517 = vmatprep.subr.mxu0 0.0
    %518 = vmatpush2.msra.mxu0 0.0
    %519 = vmatprep.subr.mxu0 0.0
    %520 = vmatpush2.msra.mxu0 0.0
    %521 = vmatprep.subr.mxu0 0.0
    %522 = vmatpush2.msra.mxu0 0.0
    %523 = vmatprep.subr.mxu0 0.0
    %524 = vmatpush2.msra.mxu0 0.0
    %525 = vmatprep.subr.mxu0 0.0
    %526 = vmatpush2.msra.mxu0 0.0
    %527 = vmatprep.subr.mxu0 0.0
    %528 = vmatpush2.msra.mxu0 0.0
    %529 = vmatprep.subr.mxu0 0.0
    %530 = vmatpush2.msra.mxu0 0.0
    %531 = vmatprep.subr.mxu0 0.0
    %532 = vmatpush2.msra.mxu0 0.0
    %533 = vmatprep.subr.mxu0 0.0
    %534 = vmatpush2.msra.mxu0 0.0
    %535 = vmatprep.subr.mxu0 0.0
    %536 = vmatpush2.msra.mxu0 0.0
    %537 = vmatprep.subr.mxu0 0.0
    %538 = vmatpush2.msra.mxu0 0.0
    %539 = vmatprep.subr.mxu0 0.0
    %540 = vmatpush2.msra.mxu0 0.0
    %541 = vmatprep.subr.mxu0 0.0
    %542 = vmatpush2.msra.mxu0 0.0
    %543 = vmatprep.subr.mxu0 0.0
    %544 = vmatpush2.msra.mxu0 0.0
    %545 = vmatprep.subr.mxu0 0.0
    %546 = vmatpush2.msra.mxu0 0.0
    %547 = vmatprep.subr.mxu0 0.0
    %548 = vmatpush2.msra.mxu0 0.0
    %549 = vmatprep.mubr.f32.mxu0 0.0
    %550 = vmatmul.mubr.f32.gmra.mxu0 %v412
    %v551 = vpop.f32.mrf.mxu0
    %v552 = vadd.f32 %v304, %v551
    %v553 = vpop.f32.mrf.mxu0
    %554 = vdwg.mxu0
    %v555 = vmul.f32 %v481, %v245
    %v556 = vmul.f32 %v483, %v379
    %v557 = vadd.f32 %v555, %v556
    %v558 = vadd.f32 %v557, %v552
    %v559 = vxor.u32 %v558, 2147483648
    %v560 = vmul.f32 %v559, 1.442695
    %v561 = vpow.pop %v560
    %v562 = vadd.f32 %v561, 1.0
    %v563 = vrcp.pop %v562
    %v564 = vmul.f32 1.0, %v563
    %v565 = vmul.f32 %v564, 2.0
    %v566 = vsub.f32 %v565, 1.0
    %v567 = vmul.f32 %v564, 0.0
    %569 = vrot.lane.b32.xlu0 %v566, 64
    %v570 = vpop.permute.xlu0 %569
    %v572 = vmul.f32 %v564, %v570
    %574 = vrot.lane.b32.xlu0 %v572, 32
    %v575 = vpop.permute.xlu0 %574
    %v577 = vadd.f32 %v567, %v575
    %v578 = vtanh.pop %v577
    %580 = vrot.lane.b32.xlu0 %v578, 64
    %v581 = vpop.permute.xlu0 %580
    %v583 = vmul.f32 %v564, %v581
    %585 = vrot.lane.b32.xlu0 %v583, 32
    %v586 = vpop.permute.xlu0 %585
    %vm588 = vcmask 261120
    %589 = vst.msk [vmem:[#allocation2] sm:$0xff] %vm588, %v586
    %590 = vrot.lane.b32.xlu0 %v408, 112
    %v591 = vpop.permute.xlu0 %590
    %v593 = vsel %vm588, %v586, %v591
    %v595 = vsel %vm308, %v593, 0
    %597 = vmatprep.subr.mxu0 0.0
    %598 = vmatpush1.msra.mxu0 0.0
    %599 = vmatprep.subr.mxu0 0.0
    %600 = vmatpush1.msra.mxu0 0.0
    %601 = vmatprep.subr.mxu0 0.0
    %602 = vmatpush1.msra.mxu0 0.0
    %603 = vmatprep.subr.mxu0 0.0
    %604 = vmatpush1.msra.mxu0 0.0
    %605 = vmatprep.subr.mxu0 0.0
    %606 = vmatpush1.msra.mxu0 0.0
    %607 = vmatprep.subr.mxu0 0.0
    %608 = vmatpush1.msra.mxu0 0.0
    %609 = vmatprep.subr.mxu0 0.0
    %610 = vmatpush1.msra.mxu0 0.0
    %611 = vmatprep.subr.mxu0 0.0
    %612 = vmatpush1.msra.mxu0 0.0
    %613 = vmatprep.subr.mxu0 0.0
    %614 = vmatpush1.msra.mxu0 0.0
    %615 = vmatprep.subr.mxu0 0.0
    %616 = vmatpush1.msra.mxu0 0.0
    %617 = vmatprep.subr.mxu0 %v126
    %618 = vmatpush1.msra.mxu0 %v125
    %619 = vmatprep.subr.mxu0 %v124
    %620 = vmatpush1.msra.mxu0 %v123
    %621 = vmatprep.subr.mxu0 %v122
    %622 = vmatpush1.msra.mxu0 %v121
    %623 = vmatprep.subr.mxu0 %v120
    %624 = vmatpush1.msra.mxu0 %v119
    %625 = vmatprep.subr.mxu0 %v118
    %626 = vmatpush1.msra.mxu0 %v117
    %627 = vmatprep.subr.mxu0 %v116
    %628 = vmatpush1.msra.mxu0 %v115
    %629 = vmatprep.subr.mxu0 0.0
    %630 = vmatpush2.msra.mxu0 0.0
    %631 = vmatprep.subr.mxu0 0.0
    %632 = vmatpush2.msra.mxu0 0.0
    %633 = vmatprep.subr.mxu0 0.0
    %634 = vmatpush2.msra.mxu0 0.0
    %635 = vmatprep.subr.mxu0 0.0
    %636 = vmatpush2.msra.mxu0 0.0
    %637 = vmatprep.subr.mxu0 0.0
    %638 = vmatpush2.msra.mxu0 0.0
    %639 = vmatprep.subr.mxu0 0.0
    %640 = vmatpush2.msra.mxu0 0.0
    %641 = vmatprep.subr.mxu0 0.0
    %642 = vmatpush2.msra.mxu0 0.0
    %643 = vmatprep.subr.mxu0 0.0
    %644 = vmatpush2.msra.mxu0 0.0
    %645 = vmatprep.subr.mxu0 0.0
    %646 = vmatpush2.msra.mxu0 0.0
    %647 = vmatprep.subr.mxu0 0.0
    %648 = vmatpush2.msra.mxu0 0.0
    %649 = vmatprep.subr.mxu0 0.0
    %650 = vmatpush2.msra.mxu0 0.0
    %651 = vmatprep.subr.mxu0 0.0
    %652 = vmatpush2.msra.mxu0 0.0
    %653 = vmatprep.subr.mxu0 0.0
    %654 = vmatpush2.msra.mxu0 0.0
    %655 = vmatprep.subr.mxu0 0.0
    %656 = vmatpush2.msra.mxu0 0.0
    %657 = vmatprep.subr.mxu0 0.0
    %658 = vmatpush2.msra.mxu0 0.0
    %659 = vmatprep.subr.mxu0 0.0
    %660 = vmatpush2.msra.mxu0 0.0
    %661 = vmatprep.mubr.f32.mxu0 0.0
    %662 = vmatmul.mubr.f32.gmra.mxu0 %v595
    %v663 = vpop.f32.mrf.mxu0
    %v664 = vadd.f32 0.0, %v663
    %v665 = vpop.f32.mrf.mxu0
    %v666 = vadd.f32 0.0, %v665
    %667 = vdwg.mxu0
    %v668 = vadd.f32 %v253, %v666
    %v669 = vxor.u32 %v668, 2147483648
    %v670 = vmul.f32 %v669, 1.442695
    %v671 = vpow.pop %v670
    %v672 = vadd.f32 %v671, 1.0
    %v673 = vrcp.pop %v672
    %v674 = vmul.f32 1.0, %v673
    %v675 = vmul.f32 %v674, 2.0
    %v676 = vsub.f32 %v675, 1.0
    %v677 = vmul.f32 %v674, %v402
    %679 = vrot.lane.b32.xlu0 %v676, 96
    %v680 = vpop.permute.xlu0 %679
    %v682 = vmul.f32 %v674, %v680
    %684 = vrot.lane.b32.xlu0 %v682, 16
    %v685 = vpop.permute.xlu0 %684
    %v687 = vadd.f32 %v677, %v685
    %v688 = vtanh.pop %v687
    %690 = vrot.lane.b32.xlu0 %v688, 32
    %v691 = vpop.permute.xlu0 %690
    %v693 = vmul.f32 %v674, %v691
    %695 = vrot.lane.b32.xlu0 %v693, 80
    %v696 = vpop.permute.xlu0 %695
    %v697 = vsel %vm153, %v696, 0
    %699 = vmatprep.subr.mxu0 0.0
    %700 = vmatpush1.msra.mxu0 0.0
    %701 = vmatprep.subr.mxu0 0.0
    %702 = vmatpush1.msra.mxu0 0.0
    %703 = vmatprep.subr.mxu0 0.0
    %704 = vmatpush1.msra.mxu0 0.0
    %705 = vmatprep.subr.mxu0 0.0
    %706 = vmatpush1.msra.mxu0 0.0
    %707 = vmatprep.subr.mxu0 0.0
    %708 = vmatpush1.msra.mxu0 0.0
    %709 = vmatprep.subr.mxu0 0.0
    %710 = vmatpush1.msra.mxu0 0.0
    %711 = vmatprep.subr.mxu0 0.0
    %712 = vmatpush1.msra.mxu0 0.0
    %713 = vmatprep.subr.mxu0 0.0
    %714 = vmatpush1.msra.mxu0 0.0
    %715 = vmatprep.subr.mxu0 0.0
    %716 = vmatpush1.msra.mxu0 0.0
    %717 = vmatprep.subr.mxu0 0.0
    %718 = vmatpush1.msra.mxu0 0.0
    %719 = vmatprep.subr.mxu0 0.0
    %720 = vmatpush1.msra.mxu0 0.0
    %721 = vmatprep.subr.mxu0 0.0
    %722 = vmatpush1.msra.mxu0 0.0
    %723 = vmatprep.subr.mxu0 0.0
    %724 = vmatpush1.msra.mxu0 0.0
    %725 = vmatprep.subr.mxu0 0.0
    %726 = vmatpush1.msra.mxu0 0.0
    %727 = vmatprep.subr.mxu0 %v131
    %728 = vmatpush1.msra.mxu0 %v130
    %729 = vmatprep.subr.mxu0 %v128
    %730 = vmatpush1.msra.mxu0 %v127
    %731 = vmatprep.subr.mxu0 0.0
    %732 = vmatpush2.msra.mxu0 0.0
    %733 = vmatprep.subr.mxu0 0.0
    %734 = vmatpush2.msra.mxu0 0.0
    %735 = vmatprep.subr.mxu0 0.0
    %736 = vmatpush2.msra.mxu0 0.0
    %737 = vmatprep.subr.mxu0 0.0
    %738 = vmatpush2.msra.mxu0 0.0
    %739 = vmatprep.subr.mxu0 0.0
    %740 = vmatpush2.msra.mxu0 0.0
    %741 = vmatprep.subr.mxu0 0.0
    %742 = vmatpush2.msra.mxu0 0.0
    %743 = vmatprep.subr.mxu0 0.0
    %744 = vmatpush2.msra.mxu0 0.0
    %745 = vmatprep.subr.mxu0 0.0
    %746 = vmatpush2.msra.mxu0 0.0
    %747 = vmatprep.subr.mxu0 0.0
    %748 = vmatpush2.msra.mxu0 0.0
    %749 = vmatprep.subr.mxu0 0.0
    %750 = vmatpush2.msra.mxu0 0.0
    %751 = vmatprep.subr.mxu0 0.0
    %752 = vmatpush2.msra.mxu0 0.0
    %753 = vmatprep.subr.mxu0 0.0
    %754 = vmatpush2.msra.mxu0 0.0
    %755 = vmatprep.subr.mxu0 0.0
    %756 = vmatpush2.msra.mxu0 0.0
    %757 = vmatprep.subr.mxu0 0.0
    %758 = vmatpush2.msra.mxu0 0.0
    %759 = vmatprep.subr.mxu0 0.0
    %760 = vmatpush2.msra.mxu0 0.0
    %761 = vmatprep.subr.mxu0 0.0
    %762 = vmatpush2.msra.mxu0 0.0
    %763 = vmatprep.mubr.f32.mxu0 0.0
    %764 = vmatmul.mubr.f32.gmra.mxu0 %v697
    %v765 = vpop.f32.mrf.mxu0
    %v766 = vadd.f32 %v296, %v765
    %v767 = vpop.f32.mrf.mxu0
    %v768 = vadd.f32 %v300, %v767
    %769 = vdwg.mxu0
    %770 = vmatprep.subr.mxu0 0.0
    %771 = vmatpush1.msra.mxu0 0.0
    %772 = vmatprep.subr.mxu0 0.0
    %773 = vmatpush1.msra.mxu0 0.0
    %774 = vmatprep.subr.mxu0 0.0
    %775 = vmatpush1.msra.mxu0 0.0
    %776 = vmatprep.subr.mxu0 0.0
    %777 = vmatpush1.msra.mxu0 0.0
    %778 = vmatprep.subr.mxu0 0.0
    %779 = vmatpush1.msra.mxu0 0.0
    %780 = vmatprep.subr.mxu0 0.0
    %781 = vmatpush1.msra.mxu0 0.0
    %782 = vmatprep.subr.mxu0 0.0
    %783 = vmatpush1.msra.mxu0 0.0
    %784 = vmatprep.subr.mxu0 0.0
    %785 = vmatpush1.msra.mxu0 0.0
    %786 = vmatprep.subr.mxu0 0.0
    %787 = vmatpush1.msra.mxu0 0.0
    %788 = vmatprep.subr.mxu0 0.0
    %789 = vmatpush1.msra.mxu0 0.0
    %790 = vmatprep.subr.mxu0 0.0
    %791 = vmatpush1.msra.mxu0 0.0
    %792 = vmatprep.subr.mxu0 0.0
    %793 = vmatpush1.msra.mxu0 0.0
    %794 = vmatprep.subr.mxu0 0.0
    %795 = vmatpush1.msra.mxu0 0.0
    %796 = vmatprep.subr.mxu0 0.0
    %797 = vmatpush1.msra.mxu0 0.0
    %798 = vmatprep.subr.mxu0 0.0
    %799 = vmatpush1.msra.mxu0 %v132
    %800 = vmatprep.subr.mxu0 0.0
    %801 = vmatpush1.msra.mxu0 %v129
    %802 = vmatprep.subr.mxu0 0.0
    %803 = vmatpush2.msra.mxu0 0.0
    %804 = vmatprep.subr.mxu0 0.0
    %805 = vmatpush2.msra.mxu0 0.0
    %806 = vmatprep.subr.mxu0 0.0
    %807 = vmatpush2.msra.mxu0 0.0
    %808 = vmatprep.subr.mxu0 0.0
    %809 = vmatpush2.msra.mxu0 0.0
    %810 = vmatprep.subr.mxu0 0.0
    %811 = vmatpush2.msra.mxu0 0.0
    %812 = vmatprep.subr.mxu0 0.0
    %813 = vmatpush2.msra.mxu0 0.0
    %814 = vmatprep.subr.mxu0 0.0
    %815 = vmatpush2.msra.mxu0 0.0
    %816 = vmatprep.subr.mxu0 0.0
    %817 = vmatpush2.msra.mxu0 0.0
    %818 = vmatprep.subr.mxu0 0.0
    %819 = vmatpush2.msra.mxu0 0.0
    %820 = vmatprep.subr.mxu0 0.0
    %821 = vmatpush2.msra.mxu0 0.0
    %822 = vmatprep.subr.mxu0 0.0
    %823 = vmatpush2.msra.mxu0 0.0
    %824 = vmatprep.subr.mxu0 0.0
    %825 = vmatpush2.msra.mxu0 0.0
    %826 = vmatprep.subr.mxu0 0.0
    %827 = vmatpush2.msra.mxu0 0.0
    %828 = vmatprep.subr.mxu0 0.0
    %829 = vmatpush2.msra.mxu0 0.0
    %830 = vmatprep.subr.mxu0 0.0
    %831 = vmatpush2.msra.mxu0 0.0
    %832 = vmatprep.subr.mxu0 0.0
    %833 = vmatpush2.msra.mxu0 0.0
    %834 = vmatprep.mubr.f32.mxu0 0.0
    %835 = vmatmul.mubr.f32.gmra.mxu0 %v697
    %v836 = vpop.f32.mrf.mxu0
    %v837 = vadd.f32 %v304, %v836
    %v838 = vpop.f32.mrf.mxu0
    %839 = vdwg.mxu0
    %v840 = vmul.f32 %v766, %v251
    %v841 = vmul.f32 %v768, %v664
    %v842 = vadd.f32 %v840, %v841
    %v843 = vadd.f32 %v842, %v837
    %v844 = vxor.u32 %v843, 2147483648
    %v845 = vmul.f32 %v844, 1.442695
    %v846 = vpow.pop %v845
    %v847 = vadd.f32 %v846, 1.0
    %v848 = vrcp.pop %v847
    %v849 = vmul.f32 1.0, %v848
    %v850 = vmul.f32 %v849, 2.0
    %v851 = vsub.f32 %v850, 1.0
    %v852 = vmul.f32 %v849, %v577
    %854 = vrot.lane.b32.xlu0 %v851, 64
    %v855 = vpop.permute.xlu0 %854
    %v857 = vmul.f32 %v849, %v855
    %859 = vrot.lane.b32.xlu0 %v857, 32
    %v860 = vpop.permute.xlu0 %859
    %v862 = vadd.f32 %v852, %v860
    %v863 = vtanh.pop %v862
    %865 = vrot.lane.b32.xlu0 %v863, 64
    %v866 = vpop.permute.xlu0 %865
    %v868 = vmul.f32 %v849, %v866
    %870 = vrot.lane.b32.xlu0 %v868, 32
    %v871 = vpop.permute.xlu0 %870
    %873 = vst.msk [vmem:[#allocation2 + $0x8] sm:$0xff] %vm588, %v871
    %874 = vrot.lane.b32.xlu0 %v693, 112
    %v875 = vpop.permute.xlu0 %874
    %v877 = vsel %vm588, %v871, %v875
    %v879 = vsel %vm308, %v877, 0
    %881 = vmatprep.subr.mxu0 0.0
    %882 = vmatpush1.msra.mxu0 0.0
    %883 = vmatprep.subr.mxu0 0.0
    %884 = vmatpush1.msra.mxu0 0.0
    %885 = vmatprep.subr.mxu0 0.0
    %886 = vmatpush1.msra.mxu0 0.0
    %887 = vmatprep.subr.mxu0 0.0
    %888 = vmatpush1.msra.mxu0 0.0
    %889 = vmatprep.subr.mxu0 0.0
    %890 = vmatpush1.msra.mxu0 0.0
    %891 = vmatprep.subr.mxu0 0.0
    %892 = vmatpush1.msra.mxu0 0.0
    %893 = vmatprep.subr.mxu0 0.0
    %894 = vmatpush1.msra.mxu0 0.0
    %895 = vmatprep.subr.mxu0 0.0
    %896 = vmatpush1.msra.mxu0 0.0
    %897 = vmatprep.subr.mxu0 0.0
    %898 = vmatpush1.msra.mxu0 0.0
    %899 = vmatprep.subr.mxu0 0.0
    %900 = vmatpush1.msra.mxu0 0.0
    %901 = vmatprep.subr.mxu0 %v126
    %902 = vmatpush1.msra.mxu0 %v125
    %903 = vmatprep.subr.mxu0 %v124
    %904 = vmatpush1.msra.mxu0 %v123
    %905 = vmatprep.subr.mxu0 %v122
    %906 = vmatpush1.msra.mxu0 %v121
    %907 = vmatprep.subr.mxu0 %v120
    %908 = vmatpush1.msra.mxu0 %v119
    %909 = vmatprep.subr.mxu0 %v118
    %910 = vmatpush1.msra.mxu0 %v117
    %911 = vmatprep.subr.mxu0 %v116
    %912 = vmatpush1.msra.mxu0 %v115
    %913 = vmatprep.subr.mxu0 0.0
    %914 = vmatpush2.msra.mxu0 0.0
    %915 = vmatprep.subr.mxu0 0.0
    %916 = vmatpush2.msra.mxu0 0.0
    %917 = vmatprep.subr.mxu0 0.0
    %918 = vmatpush2.msra.mxu0 0.0
    %919 = vmatprep.subr.mxu0 0.0
    %920 = vmatpush2.msra.mxu0 0.0
    %921 = vmatprep.subr.mxu0 0.0
    %922 = vmatpush2.msra.mxu0 0.0
    %923 = vmatprep.subr.mxu0 0.0
    %924 = vmatpush2.msra.mxu0 0.0
    %925 = vmatprep.subr.mxu0 0.0
    %926 = vmatpush2.msra.mxu0 0.0
    %927 = vmatprep.subr.mxu0 0.0
    %928 = vmatpush2.msra.mxu0 0.0
    %929 = vmatprep.subr.mxu0 0.0
    %930 = vmatpush2.msra.mxu0 0.0
    %931 = vmatprep.subr.mxu0 0.0
    %932 = vmatpush2.msra.mxu0 0.0
    %933 = vmatprep.subr.mxu0 0.0
    %934 = vmatpush2.msra.mxu0 0.0
    %935 = vmatprep.subr.mxu0 0.0
    %936 = vmatpush2.msra.mxu0 0.0
    %937 = vmatprep.subr.mxu0 0.0
    %938 = vmatpush2.msra.mxu0 0.0
    %939 = vmatprep.subr.mxu0 0.0
    %940 = vmatpush2.msra.mxu0 0.0
    %941 = vmatprep.subr.mxu0 0.0
    %942 = vmatpush2.msra.mxu0 0.0
    %943 = vmatprep.subr.mxu0 0.0
    %944 = vmatpush2.msra.mxu0 0.0
    %945 = vmatprep.mubr.f32.mxu0 0.0
    %946 = vmatmul.mubr.f32.gmra.mxu0 %v879
    %v947 = vpop.f32.mrf.mxu0
    %v948 = vadd.f32 0.0, %v947
    %v949 = vpop.f32.mrf.mxu0
    %v950 = vadd.f32 0.0, %v949
    %951 = vdwg.mxu0
    %v952 = vadd.f32 %v259, %v950
    %v953 = vxor.u32 %v952, 2147483648
    %v954 = vmul.f32 %v953, 1.442695
    %v955 = vpow.pop %v954
    %v956 = vadd.f32 %v955, 1.0
    %v957 = vrcp.pop %v956
    %v958 = vmul.f32 1.0, %v957
    %v959 = vmul.f32 %v958, 2.0
    %v960 = vsub.f32 %v959, 1.0
    %v961 = vmul.f32 %v958, %v687
    %963 = vrot.lane.b32.xlu0 %v960, 96
    %v964 = vpop.permute.xlu0 %963
    %v966 = vmul.f32 %v958, %v964
    %968 = vrot.lane.b32.xlu0 %v966, 16
    %v969 = vpop.permute.xlu0 %968
    %v971 = vadd.f32 %v961, %v969
    %v972 = vtanh.pop %v971
    %974 = vrot.lane.b32.xlu0 %v972, 32
    %v975 = vpop.permute.xlu0 %974
    %v977 = vmul.f32 %v958, %v975
    %979 = vrot.lane.b32.xlu0 %v977, 80
    %v980 = vpop.permute.xlu0 %979
    %v981 = vsel %vm153, %v980, 0
    %983 = vmatprep.subr.mxu0 0.0
    %984 = vmatpush1.msra.mxu0 0.0
    %985 = vmatprep.subr.mxu0 0.0
    %986 = vmatpush1.msra.mxu0 0.0
    %987 = vmatprep.subr.mxu0 0.0
    %988 = vmatpush1.msra.mxu0 0.0
    %989 = vmatprep.subr.mxu0 0.0
    %990 = vmatpush1.msra.mxu0 0.0
    %991 = vmatprep.subr.mxu0 0.0
    %992 = vmatpush1.msra.mxu0 0.0
    %993 = vmatprep.subr.mxu0 0.0
    %994 = vmatpush1.msra.mxu0 0.0
    %995 = vmatprep.subr.mxu0 0.0
    %996 = vmatpush1.msra.mxu0 0.0
    %997 = vmatprep.subr.mxu0 0.0
    %998 = vmatpush1.msra.mxu0 0.0
    %999 = vmatprep.subr.mxu0 0.0
    %1000 = vmatpush1.msra.mxu0 0.0
    %1001 = vmatprep.subr.mxu0 0.0
    %1002 = vmatpush1.msra.mxu0 0.0
    %1003 = vmatprep.subr.mxu0 0.0
    %1004 = vmatpush1.msra.mxu0 0.0
    %1005 = vmatprep.subr.mxu0 0.0
    %1006 = vmatpush1.msra.mxu0 0.0
    %1007 = vmatprep.subr.mxu0 0.0
    %1008 = vmatpush1.msra.mxu0 0.0
    %1009 = vmatprep.subr.mxu0 0.0
    %1010 = vmatpush1.msra.mxu0 0.0
    %1011 = vmatprep.subr.mxu0 %v131
    %1012 = vmatpush1.msra.mxu0 %v130
    %1013 = vmatprep.subr.mxu0 %v128
    %1014 = vmatpush1.msra.mxu0 %v127
    %1015 = vmatprep.subr.mxu0 0.0
    %1016 = vmatpush2.msra.mxu0 0.0
    %1017 = vmatprep.subr.mxu0 0.0
    %1018 = vmatpush2.msra.mxu0 0.0
    %1019 = vmatprep.subr.mxu0 0.0
    %1020 = vmatpush2.msra.mxu0 0.0
    %1021 = vmatprep.subr.mxu0 0.0
    %1022 = vmatpush2.msra.mxu0 0.0
    %1023 = vmatprep.subr.mxu0 0.0
    %1024 = vmatpush2.msra.mxu0 0.0
    %1025 = vmatprep.subr.mxu0 0.0
    %1026 = vmatpush2.msra.mxu0 0.0
    %1027 = vmatprep.subr.mxu0 0.0
    %1028 = vmatpush2.msra.mxu0 0.0
    %1029 = vmatprep.subr.mxu0 0.0
    %1030 = vmatpush2.msra.mxu0 0.0
    %1031 = vmatprep.subr.mxu0 0.0
    %1032 = vmatpush2.msra.mxu0 0.0
    %1033 = vmatprep.subr.mxu0 0.0
    %1034 = vmatpush2.msra.mxu0 0.0
    %1035 = vmatprep.subr.mxu0 0.0
    %1036 = vmatpush2.msra.mxu0 0.0
    %1037 = vmatprep.subr.mxu0 0.0
    %1038 = vmatpush2.msra.mxu0 0.0
    %1039 = vmatprep.subr.mxu0 0.0
    %1040 = vmatpush2.msra.mxu0 0.0
    %1041 = vmatprep.subr.mxu0 0.0
    %1042 = vmatpush2.msra.mxu0 0.0
    %1043 = vmatprep.subr.mxu0 0.0
    %1044 = vmatpush2.msra.mxu0 0.0
    %1045 = vmatprep.subr.mxu0 0.0
    %1046 = vmatpush2.msra.mxu0 0.0
    %1047 = vmatprep.mubr.f32.mxu0 0.0
    %1048 = vmatmul.mubr.f32.gmra.mxu0 %v981
    %v1049 = vpop.f32.mrf.mxu0
    %v1050 = vadd.f32 %v296, %v1049
    %v1051 = vpop.f32.mrf.mxu0
    %v1052 = vadd.f32 %v300, %v1051
    %1053 = vdwg.mxu0
    %1054 = vmatprep.subr.mxu0 0.0
    %1055 = vmatpush1.msra.mxu0 0.0
    %1056 = vmatprep.subr.mxu0 0.0
    %1057 = vmatpush1.msra.mxu0 0.0
    %1058 = vmatprep.subr.mxu0 0.0
    %1059 = vmatpush1.msra.mxu0 0.0
    %1060 = vmatprep.subr.mxu0 0.0
    %1061 = vmatpush1.msra.mxu0 0.0
    %1062 = vmatprep.subr.mxu0 0.0
    %1063 = vmatpush1.msra.mxu0 0.0
    %1064 = vmatprep.subr.mxu0 0.0
    %1065 = vmatpush1.msra.mxu0 0.0
    %1066 = vmatprep.subr.mxu0 0.0
    %1067 = vmatpush1.msra.mxu0 0.0
    %1068 = vmatprep.subr.mxu0 0.0
    %1069 = vmatpush1.msra.mxu0 0.0
    %1070 = vmatprep.subr.mxu0 0.0
    %1071 = vmatpush1.msra.mxu0 0.0
    %1072 = vmatprep.subr.mxu0 0.0
    %1073 = vmatpush1.msra.mxu0 0.0
    %1074 = vmatprep.subr.mxu0 0.0
    %1075 = vmatpush1.msra.mxu0 0.0
    %1076 = vmatprep.subr.mxu0 0.0
    %1077 = vmatpush1.msra.mxu0 0.0
    %1078 = vmatprep.subr.mxu0 0.0
    %1079 = vmatpush1.msra.mxu0 0.0
    %1080 = vmatprep.subr.mxu0 0.0
    %1081 = vmatpush1.msra.mxu0 0.0
    %1082 = vmatprep.subr.mxu0 0.0
    %1083 = vmatpush1.msra.mxu0 %v132
    %1084 = vmatprep.subr.mxu0 0.0
    %1085 = vmatpush1.msra.mxu0 %v129
    %1086 = vmatprep.subr.mxu0 0.0
    %1087 = vmatpush2.msra.mxu0 0.0
    %1088 = vmatprep.subr.mxu0 0.0
    %1089 = vmatpush2.msra.mxu0 0.0
    %1090 = vmatprep.subr.mxu0 0.0
    %1091 = vmatpush2.msra.mxu0 0.0
    %1092 = vmatprep.subr.mxu0 0.0
    %1093 = vmatpush2.msra.mxu0 0.0
    %1094 = vmatprep.subr.mxu0 0.0
    %1095 = vmatpush2.msra.mxu0 0.0
    %1096 = vmatprep.subr.mxu0 0.0
    %1097 = vmatpush2.msra.mxu0 0.0
    %1098 = vmatprep.subr.mxu0 0.0
    %1099 = vmatpush2.msra.mxu0 0.0
    %1100 = vmatprep.subr.mxu0 0.0
    %1101 = vmatpush2.msra.mxu0 0.0
    %1102 = vmatprep.subr.mxu0 0.0
    %1103 = vmatpush2.msra.mxu0 0.0
    %1104 = vmatprep.subr.mxu0 0.0
    %1105 = vmatpush2.msra.mxu0 0.0
    %1106 = vmatprep.subr.mxu0 0.0
    %1107 = vmatpush2.msra.mxu0 0.0
    %1108 = vmatprep.subr.mxu0 0.0
    %1109 = vmatpush2.msra.mxu0 0.0
    %1110 = vmatprep.subr.mxu0 0.0
    %1111 = vmatpush2.msra.mxu0 0.0
    %1112 = vmatprep.subr.mxu0 0.0
    %1113 = vmatpush2.msra.mxu0 0.0
    %1114 = vmatprep.subr.mxu0 0.0
    %1115 = vmatpush2.msra.mxu0 0.0
    %1116 = vmatprep.subr.mxu0 0.0
    %1117 = vmatpush2.msra.mxu0 0.0
    %1118 = vmatprep.mubr.f32.mxu0 0.0
    %1119 = vmatmul.mubr.f32.gmra.mxu0 %v981
    %v1120 = vpop.f32.mrf.mxu0
    %v1121 = vadd.f32 %v304, %v1120
    %v1122 = vpop.f32.mrf.mxu0
    %1123 = vdwg.mxu0
    %v1124 = vmul.f32 %v1050, %v257
    %v1125 = vmul.f32 %v1052, %v948
    %v1126 = vadd.f32 %v1124, %v1125
    %v1127 = vadd.f32 %v1126, %v1121
    %v1128 = vxor.u32 %v1127, 2147483648
    %v1129 = vmul.f32 %v1128, 1.442695
    %v1130 = vpow.pop %v1129
    %v1131 = vadd.f32 %v1130, 1.0
    %v1132 = vrcp.pop %v1131
    %v1133 = vmul.f32 1.0, %v1132
    %v1134 = vmul.f32 %v1133, 2.0
    %v1135 = vsub.f32 %v1134, 1.0
    %v1136 = vmul.f32 %v1133, %v862
    %1138 = vrot.lane.b32.xlu0 %v1135, 64
    %v1139 = vpop.permute.xlu0 %1138
    %v1141 = vmul.f32 %v1133, %v1139
    %1143 = vrot.lane.b32.xlu0 %v1141, 32
    %v1144 = vpop.permute.xlu0 %1143
    %v1146 = vadd.f32 %v1136, %v1144
    %v1147 = vtanh.pop %v1146
    %1149 = vrot.lane.b32.xlu0 %v1147, 64
    %v1150 = vpop.permute.xlu0 %1149
    %v1152 = vmul.f32 %v1133, %v1150
    %1154 = vrot.lane.b32.xlu0 %v1152, 32
    %v1155 = vpop.permute.xlu0 %1154
    %1157 = vst.msk [vmem:[#allocation2 + $0x10] sm:$0xff] %vm588, %v1155
    %1158 = vrot.lane.b32.xlu0 %v977, 112
    %v1159 = vpop.permute.xlu0 %1158
    %v1161 = vsel %vm588, %v1155, %v1159
    %v1163 = vsel %vm308, %v1161, 0
    %1165 = vmatprep.subr.mxu0 0.0
    %1166 = vmatpush1.msra.mxu0 0.0
    %1167 = vmatprep.subr.mxu0 0.0
    %1168 = vmatpush1.msra.mxu0 0.0
    %1169 = vmatprep.subr.mxu0 0.0
    %1170 = vmatpush1.msra.mxu0 0.0
    %1171 = vmatprep.subr.mxu0 0.0
    %1172 = vmatpush1.msra.mxu0 0.0
    %1173 = vmatprep.subr.mxu0 0.0
    %1174 = vmatpush1.msra.mxu0 0.0
    %1175 = vmatprep.subr.mxu0 0.0
    %1176 = vmatpush1.msra.mxu0 0.0
    %1177 = vmatprep.subr.mxu0 0.0
    %1178 = vmatpush1.msra.mxu0 0.0
    %1179 = vmatprep.subr.mxu0 0.0
    %1180 = vmatpush1.msra.mxu0 0.0
    %1181 = vmatprep.subr.mxu0 0.0
    %1182 = vmatpush1.msra.mxu0 0.0
    %1183 = vmatprep.subr.mxu0 0.0
    %1184 = vmatpush1.msra.mxu0 0.0
    %1185 = vmatprep.subr.mxu0 %v126
    %1186 = vmatpush1.msra.mxu0 %v125
    %1187 = vmatprep.subr.mxu0 %v124
    %1188 = vmatpush1.msra.mxu0 %v123
    %1189 = vmatprep.subr.mxu0 %v122
    %1190 = vmatpush1.msra.mxu0 %v121
    %1191 = vmatprep.subr.mxu0 %v120
    %1192 = vmatpush1.msra.mxu0 %v119
    %1193 = vmatprep.subr.mxu0 %v118
    %1194 = vmatpush1.msra.mxu0 %v117
    %1195 = vmatprep.subr.mxu0 %v116
    %1196 = vmatpush1.msra.mxu0 %v115
    %1197 = vmatprep.subr.mxu0 0.0
    %1198 = vmatpush2.msra.mxu0 0.0
    %1199 = vmatprep.subr.mxu0 0.0
    %1200 = vmatpush2.msra.mxu0 0.0
    %1201 = vmatprep.subr.mxu0 0.0
    %1202 = vmatpush2.msra.mxu0 0.0
    %1203 = vmatprep.subr.mxu0 0.0
    %1204 = vmatpush2.msra.mxu0 0.0
    %1205 = vmatprep.subr.mxu0 0.0
    %1206 = vmatpush2.msra.mxu0 0.0
    %1207 = vmatprep.subr.mxu0 0.0
    %1208 = vmatpush2.msra.mxu0 0.0
    %1209 = vmatprep.subr.mxu0 0.0
    %1210 = vmatpush2.msra.mxu0 0.0
    %1211 = vmatprep.subr.mxu0 0.0
    %1212 = vmatpush2.msra.mxu0 0.0
    %1213 = vmatprep.subr.mxu0 0.0
    %1214 = vmatpush2.msra.mxu0 0.0
    %1215 = vmatprep.subr.mxu0 0.0
    %1216 = vmatpush2.msra.mxu0 0.0
    %1217 = vmatprep.subr.mxu0 0.0
    %1218 = vmatpush2.msra.mxu0 0.0
    %1219 = vmatprep.subr.mxu0 0.0
    %1220 = vmatpush2.msra.mxu0 0.0
    %1221 = vmatprep.subr.mxu0 0.0
    %1222 = vmatpush2.msra.mxu0 0.0
    %1223 = vmatprep.subr.mxu0 0.0
    %1224 = vmatpush2.msra.mxu0 0.0
    %1225 = vmatprep.subr.mxu0 0.0
    %1226 = vmatpush2.msra.mxu0 0.0
    %1227 = vmatprep.subr.mxu0 0.0
    %1228 = vmatpush2.msra.mxu0 0.0
    %1229 = vmatprep.mubr.f32.mxu0 0.0
    %1230 = vmatmul.mubr.f32.gmra.mxu0 %v1163
    %v1231 = vpop.f32.mrf.mxu0
    %v1232 = vadd.f32 0.0, %v1231
    %v1233 = vpop.f32.mrf.mxu0
    %v1234 = vadd.f32 0.0, %v1233
    %1235 = vdwg.mxu0
    %v1236 = vadd.f32 %v265, %v1234
    %v1237 = vxor.u32 %v1236, 2147483648
    %v1238 = vmul.f32 %v1237, 1.442695
    %v1239 = vpow.pop %v1238
    %v1240 = vadd.f32 %v1239, 1.0
    %v1241 = vrcp.pop %v1240
    %v1242 = vmul.f32 1.0, %v1241
    %v1243 = vmul.f32 %v1242, 2.0
    %v1244 = vsub.f32 %v1243, 1.0
    %v1245 = vmul.f32 %v1242, %v971
    %1247 = vrot.lane.b32.xlu0 %v1244, 96
    %v1248 = vpop.permute.xlu0 %1247
    %v1250 = vmul.f32 %v1242, %v1248
    %1252 = vrot.lane.b32.xlu0 %v1250, 16
    %v1253 = vpop.permute.xlu0 %1252
    %v1255 = vadd.f32 %v1245, %v1253
    %v1256 = vtanh.pop %v1255
    %1258 = vrot.lane.b32.xlu0 %v1256, 32
    %v1259 = vpop.permute.xlu0 %1258
    %v1261 = vmul.f32 %v1242, %v1259
    %1263 = vrot.lane.b32.xlu0 %v1261, 80
    %v1264 = vpop.permute.xlu0 %1263
    %v1265 = vsel %vm153, %v1264, 0
    %1267 = vmatprep.subr.mxu0 0.0
    %1268 = vmatpush1.msra.mxu0 0.0
    %1269 = vmatprep.subr.mxu0 0.0
    %1270 = vmatpush1.msra.mxu0 0.0
    %1271 = vmatprep.subr.mxu0 0.0
    %1272 = vmatpush1.msra.mxu0 0.0
    %1273 = vmatprep.subr.mxu0 0.0
    %1274 = vmatpush1.msra.mxu0 0.0
    %1275 = vmatprep.subr.mxu0 0.0
    %1276 = vmatpush1.msra.mxu0 0.0
    %1277 = vmatprep.subr.mxu0 0.0
    %1278 = vmatpush1.msra.mxu0 0.0
    %1279 = vmatprep.subr.mxu0 0.0
    %1280 = vmatpush1.msra.mxu0 0.0
    %1281 = vmatprep.subr.mxu0 0.0
    %1282 = vmatpush1.msra.mxu0 0.0
    %1283 = vmatprep.subr.mxu0 0.0
    %1284 = vmatpush1.msra.mxu0 0.0
    %1285 = vmatprep.subr.mxu0 0.0
    %1286 = vmatpush1.msra.mxu0 0.0
    %1287 = vmatprep.subr.mxu0 0.0
    %1288 = vmatpush1.msra.mxu0 0.0
    %1289 = vmatprep.subr.mxu0 0.0
    %1290 = vmatpush1.msra.mxu0 0.0
    %1291 = vmatprep.subr.mxu0 0.0
    %1292 = vmatpush1.msra.mxu0 0.0
    %1293 = vmatprep.subr.mxu0 0.0
    %1294 = vmatpush1.msra.mxu0 0.0
    %1295 = vmatprep.subr.mxu0 %v131
    %1296 = vmatpush1.msra.mxu0 %v130
    %1297 = vmatprep.subr.mxu0 %v128
    %1298 = vmatpush1.msra.mxu0 %v127
    %1299 = vmatprep.subr.mxu0 0.0
    %1300 = vmatpush2.msra.mxu0 0.0
    %1301 = vmatprep.subr.mxu0 0.0
    %1302 = vmatpush2.msra.mxu0 0.0
    %1303 = vmatprep.subr.mxu0 0.0
    %1304 = vmatpush2.msra.mxu0 0.0
    %1305 = vmatprep.subr.mxu0 0.0
    %1306 = vmatpush2.msra.mxu0 0.0
    %1307 = vmatprep.subr.mxu0 0.0
    %1308 = vmatpush2.msra.mxu0 0.0
    %1309 = vmatprep.subr.mxu0 0.0
    %1310 = vmatpush2.msra.mxu0 0.0
    %1311 = vmatprep.subr.mxu0 0.0
    %1312 = vmatpush2.msra.mxu0 0.0
    %1313 = vmatprep.subr.mxu0 0.0
    %1314 = vmatpush2.msra.mxu0 0.0
    %1315 = vmatprep.subr.mxu0 0.0
    %1316 = vmatpush2.msra.mxu0 0.0
    %1317 = vmatprep.subr.mxu0 0.0
    %1318 = vmatpush2.msra.mxu0 0.0
    %1319 = vmatprep.subr.mxu0 0.0
    %1320 = vmatpush2.msra.mxu0 0.0
    %1321 = vmatprep.subr.mxu0 0.0
    %1322 = vmatpush2.msra.mxu0 0.0
    %1323 = vmatprep.subr.mxu0 0.0
    %1324 = vmatpush2.msra.mxu0 0.0
    %1325 = vmatprep.subr.mxu0 0.0
    %1326 = vmatpush2.msra.mxu0 0.0
    %1327 = vmatprep.subr.mxu0 0.0
    %1328 = vmatpush2.msra.mxu0 0.0
    %1329 = vmatprep.subr.mxu0 0.0
    %1330 = vmatpush2.msra.mxu0 0.0
    %1331 = vmatprep.mubr.f32.mxu0 0.0
    %1332 = vmatmul.mubr.f32.gmra.mxu0 %v1265
    %v1333 = vpop.f32.mrf.mxu0
    %v1334 = vadd.f32 %v296, %v1333
    %v1335 = vpop.f32.mrf.mxu0
    %v1336 = vadd.f32 %v300, %v1335
    %1337 = vdwg.mxu0
    %1338 = vmatprep.subr.mxu0 0.0
    %1339 = vmatpush1.msra.mxu0 0.0
    %1340 = vmatprep.subr.mxu0 0.0
    %1341 = vmatpush1.msra.mxu0 0.0
    %1342 = vmatprep.subr.mxu0 0.0
    %1343 = vmatpush1.msra.mxu0 0.0
    %1344 = vmatprep.subr.mxu0 0.0
    %1345 = vmatpush1.msra.mxu0 0.0
    %1346 = vmatprep.subr.mxu0 0.0
    %1347 = vmatpush1.msra.mxu0 0.0
    %1348 = vmatprep.subr.mxu0 0.0
    %1349 = vmatpush1.msra.mxu0 0.0
    %1350 = vmatprep.subr.mxu0 0.0
    %1351 = vmatpush1.msra.mxu0 0.0
    %1352 = vmatprep.subr.mxu0 0.0
    %1353 = vmatpush1.msra.mxu0 0.0
    %1354 = vmatprep.subr.mxu0 0.0
    %1355 = vmatpush1.msra.mxu0 0.0
    %1356 = vmatprep.subr.mxu0 0.0
    %1357 = vmatpush1.msra.mxu0 0.0
    %1358 = vmatprep.subr.mxu0 0.0
    %1359 = vmatpush1.msra.mxu0 0.0
    %1360 = vmatprep.subr.mxu0 0.0
    %1361 = vmatpush1.msra.mxu0 0.0
    %1362 = vmatprep.subr.mxu0 0.0
    %1363 = vmatpush1.msra.mxu0 0.0
    %1364 = vmatprep.subr.mxu0 0.0
    %1365 = vmatpush1.msra.mxu0 0.0
    %1366 = vmatprep.subr.mxu0 0.0
    %1367 = vmatpush1.msra.mxu0 %v132
    %1368 = vmatprep.subr.mxu0 0.0
    %1369 = vmatpush1.msra.mxu0 %v129
    %1370 = vmatprep.subr.mxu0 0.0
    %1371 = vmatpush2.msra.mxu0 0.0
    %1372 = vmatprep.subr.mxu0 0.0
    %1373 = vmatpush2.msra.mxu0 0.0
    %1374 = vmatprep.subr.mxu0 0.0
    %1375 = vmatpush2.msra.mxu0 0.0
    %1376 = vmatprep.subr.mxu0 0.0
    %1377 = vmatpush2.msra.mxu0 0.0
    %1378 = vmatprep.subr.mxu0 0.0
    %1379 = vmatpush2.msra.mxu0 0.0
    %1380 = vmatprep.subr.mxu0 0.0
    %1381 = vmatpush2.msra.mxu0 0.0
    %1382 = vmatprep.subr.mxu0 0.0
    %1383 = vmatpush2.msra.mxu0 0.0
    %1384 = vmatprep.subr.mxu0 0.0
    %1385 = vmatpush2.msra.mxu0 0.0
    %1386 = vmatprep.subr.mxu0 0.0
    %1387 = vmatpush2.msra.mxu0 0.0
    %1388 = vmatprep.subr.mxu0 0.0
    %1389 = vmatpush2.msra.mxu0 0.0
    %1390 = vmatprep.subr.mxu0 0.0
    %1391 = vmatpush2.msra.mxu0 0.0
    %1392 = vmatprep.subr.mxu0 0.0
    %1393 = vmatpush2.msra.mxu0 0.0
    %1394 = vmatprep.subr.mxu0 0.0
    %1395 = vmatpush2.msra.mxu0 0.0
    %1396 = vmatprep.subr.mxu0 0.0
    %1397 = vmatpush2.msra.mxu0 0.0
    %1398 = vmatprep.subr.mxu0 0.0
    %1399 = vmatpush2.msra.mxu0 0.0
    %1400 = vmatprep.subr.mxu0 0.0
    %1401 = vmatpush2.msra.mxu0 0.0
    %1402 = vmatprep.mubr.f32.mxu0 0.0
    %1403 = vmatmul.mubr.f32.gmra.mxu0 %v1265
    %v1404 = vpop.f32.mrf.mxu0
    %v1405 = vadd.f32 %v304, %v1404
    %v1406 = vpop.f32.mrf.mxu0
    %1407 = vdwg.mxu0
    %v1408 = vmul.f32 %v1334, %v263
    %v1409 = vmul.f32 %v1336, %v1232
    %v1410 = vadd.f32 %v1408, %v1409
    %v1411 = vadd.f32 %v1410, %v1405
    %v1412 = vxor.u32 %v1411, 2147483648
    %v1413 = vmul.f32 %v1412, 1.442695
    %v1414 = vpow.pop %v1413
    %v1415 = vadd.f32 %v1414, 1.0
    %v1416 = vrcp.pop %v1415
    %v1417 = vmul.f32 1.0, %v1416
    %v1418 = vmul.f32 %v1417, 2.0
    %v1419 = vsub.f32 %v1418, 1.0
    %v1420 = vmul.f32 %v1417, %v1146
    %1422 = vrot.lane.b32.xlu0 %v1419, 64
    %v1423 = vpop.permute.xlu0 %1422
    %v1425 = vmul.f32 %v1417, %v1423
    %1427 = vrot.lane.b32.xlu0 %v1425, 32
    %v1428 = vpop.permute.xlu0 %1427
    %v1430 = vadd.f32 %v1420, %v1428
    %v1431 = vtanh.pop %v1430
    %1433 = vrot.lane.b32.xlu0 %v1431, 64
    %v1434 = vpop.permute.xlu0 %1433
    %v1436 = vmul.f32 %v1417, %v1434
    %1438 = vrot.lane.b32.xlu0 %v1436, 32
    %v1439 = vpop.permute.xlu0 %1438
    %1441 = vst.msk [vmem:[#allocation2 + $0x18] sm:$0xff] %vm588, %v1439
    %1442 = vrot.lane.b32.xlu0 %v1261, 112
    %v1443 = vpop.permute.xlu0 %1442
    %v1445 = vsel %vm588, %v1439, %v1443
    %v1447 = vsel %vm308, %v1445, 0
    %1449 = vmatprep.subr.mxu0 0.0
    %1450 = vmatpush1.msra.mxu0 0.0
    %1451 = vmatprep.subr.mxu0 0.0
    %1452 = vmatpush1.msra.mxu0 0.0
    %1453 = vmatprep.subr.mxu0 0.0
    %1454 = vmatpush1.msra.mxu0 0.0
    %1455 = vmatprep.subr.mxu0 0.0
    %1456 = vmatpush1.msra.mxu0 0.0
    %1457 = vmatprep.subr.mxu0 0.0
    %1458 = vmatpush1.msra.mxu0 0.0
    %1459 = vmatprep.subr.mxu0 0.0
    %1460 = vmatpush1.msra.mxu0 0.0
    %1461 = vmatprep.subr.mxu0 0.0
    %1462 = vmatpush1.msra.mxu0 0.0
    %1463 = vmatprep.subr.mxu0 0.0
    %1464 = vmatpush1.msra.mxu0 0.0
    %1465 = vmatprep.subr.mxu0 0.0
    %1466 = vmatpush1.msra.mxu0 0.0
    %1467 = vmatprep.subr.mxu0 0.0
    %1468 = vmatpush1.msra.mxu0 0.0
    %1469 = vmatprep.subr.mxu0 %v126
    %1470 = vmatpush1.msra.mxu0 %v125
    %1471 = vmatprep.subr.mxu0 %v124
    %1472 = vmatpush1.msra.mxu0 %v123
    %1473 = vmatprep.subr.mxu0 %v122
    %1474 = vmatpush1.msra.mxu0 %v121
    %1475 = vmatprep.subr.mxu0 %v120
    %1476 = vmatpush1.msra.mxu0 %v119
    %1477 = vmatprep.subr.mxu0 %v118
    %1478 = vmatpush1.msra.mxu0 %v117
    %1479 = vmatprep.subr.mxu0 %v116
    %1480 = vmatpush1.msra.mxu0 %v115
    %1481 = vmatprep.subr.mxu0 0.0
    %1482 = vmatpush2.msra.mxu0 0.0
    %1483 = vmatprep.subr.mxu0 0.0
    %1484 = vmatpush2.msra.mxu0 0.0
    %1485 = vmatprep.subr.mxu0 0.0
    %1486 = vmatpush2.msra.mxu0 0.0
    %1487 = vmatprep.subr.mxu0 0.0
    %1488 = vmatpush2.msra.mxu0 0.0
    %1489 = vmatprep.subr.mxu0 0.0
    %1490 = vmatpush2.msra.mxu0 0.0
    %1491 = vmatprep.subr.mxu0 0.0
    %1492 = vmatpush2.msra.mxu0 0.0
    %1493 = vmatprep.subr.mxu0 0.0
    %1494 = vmatpush2.msra.mxu0 0.0
    %1495 = vmatprep.subr.mxu0 0.0
    %1496 = vmatpush2.msra.mxu0 0.0
    %1497 = vmatprep.subr.mxu0 0.0
    %1498 = vmatpush2.msra.mxu0 0.0
    %1499 = vmatprep.subr.mxu0 0.0
    %1500 = vmatpush2.msra.mxu0 0.0
    %1501 = vmatprep.subr.mxu0 0.0
    %1502 = vmatpush2.msra.mxu0 0.0
    %1503 = vmatprep.subr.mxu0 0.0
    %1504 = vmatpush2.msra.mxu0 0.0
    %1505 = vmatprep.subr.mxu0 0.0
    %1506 = vmatpush2.msra.mxu0 0.0
    %1507 = vmatprep.subr.mxu0 0.0
    %1508 = vmatpush2.msra.mxu0 0.0
    %1509 = vmatprep.subr.mxu0 0.0
    %1510 = vmatpush2.msra.mxu0 0.0
    %1511 = vmatprep.subr.mxu0 0.0
    %1512 = vmatpush2.msra.mxu0 0.0
    %1513 = vmatprep.mubr.f32.mxu0 0.0
    %1514 = vmatmul.mubr.f32.gmra.mxu0 %v1447
    %v1515 = vpop.f32.mrf.mxu0
    %v1516 = vadd.f32 0.0, %v1515
    %v1517 = vpop.f32.mrf.mxu0
    %v1518 = vadd.f32 0.0, %v1517
    %1519 = vdwg.mxu0
    %v1520 = vadd.f32 %v271, %v1518
    %v1521 = vxor.u32 %v1520, 2147483648
    %v1522 = vmul.f32 %v1521, 1.442695
    %v1523 = vpow.pop %v1522
    %v1524 = vadd.f32 %v1523, 1.0
    %v1525 = vrcp.pop %v1524
    %v1526 = vmul.f32 1.0, %v1525
    %v1527 = vmul.f32 %v1526, 2.0
    %v1528 = vsub.f32 %v1527, 1.0
    %v1529 = vmul.f32 %v1526, %v1255
    %1531 = vrot.lane.b32.xlu0 %v1528, 96
    %v1532 = vpop.permute.xlu0 %1531
    %v1534 = vmul.f32 %v1526, %v1532
    %1536 = vrot.lane.b32.xlu0 %v1534, 16
    %v1537 = vpop.permute.xlu0 %1536
    %v1539 = vadd.f32 %v1529, %v1537
    %v1540 = vtanh.pop %v1539
    %1542 = vrot.lane.b32.xlu0 %v1540, 32
    %v1543 = vpop.permute.xlu0 %1542
    %v1545 = vmul.f32 %v1526, %v1543
    %1547 = vrot.lane.b32.xlu0 %v1545, 80
    %v1548 = vpop.permute.xlu0 %1547
    %v1549 = vsel %vm153, %v1548, 0
    %1551 = vmatprep.subr.mxu0 0.0
    %1552 = vmatpush1.msra.mxu0 0.0
    %1553 = vmatprep.subr.mxu0 0.0
    %1554 = vmatpush1.msra.mxu0 0.0
    %1555 = vmatprep.subr.mxu0 0.0
    %1556 = vmatpush1.msra.mxu0 0.0
    %1557 = vmatprep.subr.mxu0 0.0
    %1558 = vmatpush1.msra.mxu0 0.0
    %1559 = vmatprep.subr.mxu0 0.0
    %1560 = vmatpush1.msra.mxu0 0.0
    %1561 = vmatprep.subr.mxu0 0.0
    %1562 = vmatpush1.msra.mxu0 0.0
    %1563 = vmatprep.subr.mxu0 0.0
    %1564 = vmatpush1.msra.mxu0 0.0
    %1565 = vmatprep.subr.mxu0 0.0
    %1566 = vmatpush1.msra.mxu0 0.0
    %1567 = vmatprep.subr.mxu0 0.0
    %1568 = vmatpush1.msra.mxu0 0.0
    %1569 = vmatprep.subr.mxu0 0.0
    %1570 = vmatpush1.msra.mxu0 0.0
    %1571 = vmatprep.subr.mxu0 0.0
    %1572 = vmatpush1.msra.mxu0 0.0
    %1573 = vmatprep.subr.mxu0 0.0
    %1574 = vmatpush1.msra.mxu0 0.0
    %1575 = vmatprep.subr.mxu0 0.0
    %1576 = vmatpush1.msra.mxu0 0.0
    %1577 = vmatprep.subr.mxu0 0.0
    %1578 = vmatpush1.msra.mxu0 0.0
    %1579 = vmatprep.subr.mxu0 %v131
    %1580 = vmatpush1.msra.mxu0 %v130
    %1581 = vmatprep.subr.mxu0 %v128
    %1582 = vmatpush1.msra.mxu0 %v127
    %1583 = vmatprep.subr.mxu0 0.0
    %1584 = vmatpush2.msra.mxu0 0.0
    %1585 = vmatprep.subr.mxu0 0.0
    %1586 = vmatpush2.msra.mxu0 0.0
    %1587 = vmatprep.subr.mxu0 0.0
    %1588 = vmatpush2.msra.mxu0 0.0
    %1589 = vmatprep.subr.mxu0 0.0
    %1590 = vmatpush2.msra.mxu0 0.0
    %1591 = vmatprep.subr.mxu0 0.0
    %1592 = vmatpush2.msra.mxu0 0.0
    %1593 = vmatprep.subr.mxu0 0.0
    %1594 = vmatpush2.msra.mxu0 0.0
    %1595 = vmatprep.subr.mxu0 0.0
    %1596 = vmatpush2.msra.mxu0 0.0
    %1597 = vmatprep.subr.mxu0 0.0
    %1598 = vmatpush2.msra.mxu0 0.0
    %1599 = vmatprep.subr.mxu0 0.0
    %1600 = vmatpush2.msra.mxu0 0.0
    %1601 = vmatprep.subr.mxu0 0.0
    %1602 = vmatpush2.msra.mxu0 0.0
    %1603 = vmatprep.subr.mxu0 0.0
    %1604 = vmatpush2.msra.mxu0 0.0
    %1605 = vmatprep.subr.mxu0 0.0
    %1606 = vmatpush2.msra.mxu0 0.0
    %1607 = vmatprep.subr.mxu0 0.0
    %1608 = vmatpush2.msra.mxu0 0.0
    %1609 = vmatprep.subr.mxu0 0.0
    %1610 = vmatpush2.msra.mxu0 0.0
    %1611 = vmatprep.subr.mxu0 0.0
    %1612 = vmatpush2.msra.mxu0 0.0
    %1613 = vmatprep.subr.mxu0 0.0
    %1614 = vmatpush2.msra.mxu0 0.0
    %1615 = vmatprep.mubr.f32.mxu0 0.0
    %1616 = vmatmul.mubr.f32.gmra.mxu0 %v1549
    %v1617 = vpop.f32.mrf.mxu0
    %v1618 = vadd.f32 %v296, %v1617
    %v1619 = vpop.f32.mrf.mxu0
    %v1620 = vadd.f32 %v300, %v1619
    %1621 = vdwg.mxu0
    %1622 = vmatprep.subr.mxu0 0.0
    %1623 = vmatpush1.msra.mxu0 0.0
    %1624 = vmatprep.subr.mxu0 0.0
    %1625 = vmatpush1.msra.mxu0 0.0
    %1626 = vmatprep.subr.mxu0 0.0
    %1627 = vmatpush1.msra.mxu0 0.0
    %1628 = vmatprep.subr.mxu0 0.0
    %1629 = vmatpush1.msra.mxu0 0.0
    %1630 = vmatprep.subr.mxu0 0.0
    %1631 = vmatpush1.msra.mxu0 0.0
    %1632 = vmatprep.subr.mxu0 0.0
    %1633 = vmatpush1.msra.mxu0 0.0
    %1634 = vmatprep.subr.mxu0 0.0
    %1635 = vmatpush1.msra.mxu0 0.0
    %1636 = vmatprep.subr.mxu0 0.0
    %1637 = vmatpush1.msra.mxu0 0.0
    %1638 = vmatprep.subr.mxu0 0.0
    %1639 = vmatpush1.msra.mxu0 0.0
    %1640 = vmatprep.subr.mxu0 0.0
    %1641 = vmatpush1.msra.mxu0 0.0
    %1642 = vmatprep.subr.mxu0 0.0
    %1643 = vmatpush1.msra.mxu0 0.0
    %1644 = vmatprep.subr.mxu0 0.0
    %1645 = vmatpush1.msra.mxu0 0.0
    %1646 = vmatprep.subr.mxu0 0.0
    %1647 = vmatpush1.msra.mxu0 0.0
    %1648 = vmatprep.subr.mxu0 0.0
    %1649 = vmatpush1.msra.mxu0 0.0
    %1650 = vmatprep.subr.mxu0 0.0
    %1651 = vmatpush1.msra.mxu0 %v132
    %1652 = vmatprep.subr.mxu0 0.0
    %1653 = vmatpush1.msra.mxu0 %v129
    %1654 = vmatprep.subr.mxu0 0.0
    %1655 = vmatpush2.msra.mxu0 0.0
    %1656 = vmatprep.subr.mxu0 0.0
    %1657 = vmatpush2.msra.mxu0 0.0
    %1658 = vmatprep.subr.mxu0 0.0
    %1659 = vmatpush2.msra.mxu0 0.0
    %1660 = vmatprep.subr.mxu0 0.0
    %1661 = vmatpush2.msra.mxu0 0.0
    %1662 = vmatprep.subr.mxu0 0.0
    %1663 = vmatpush2.msra.mxu0 0.0
    %1664 = vmatprep.subr.mxu0 0.0
    %1665 = vmatpush2.msra.mxu0 0.0
    %1666 = vmatprep.subr.mxu0 0.0
    %1667 = vmatpush2.msra.mxu0 0.0
    %1668 = vmatprep.subr.mxu0 0.0
    %1669 = vmatpush2.msra.mxu0 0.0
    %1670 = vmatprep.subr.mxu0 0.0
    %1671 = vmatpush2.msra.mxu0 0.0
    %1672 = vmatprep.subr.mxu0 0.0
    %1673 = vmatpush2.msra.mxu0 0.0
    %1674 = vmatprep.subr.mxu0 0.0
    %1675 = vmatpush2.msra.mxu0 0.0
    %1676 = vmatprep.subr.mxu0 0.0
    %1677 = vmatpush2.msra.mxu0 0.0
    %1678 = vmatprep.subr.mxu0 0.0
    %1679 = vmatpush2.msra.mxu0 0.0
    %1680 = vmatprep.subr.mxu0 0.0
    %1681 = vmatpush2.msra.mxu0 0.0
    %1682 = vmatprep.subr.mxu0 0.0
    %1683 = vmatpush2.msra.mxu0 0.0
    %1684 = vmatprep.subr.mxu0 0.0
    %1685 = vmatpush2.msra.mxu0 0.0
    %1686 = vmatprep.mubr.f32.mxu0 0.0
    %1687 = vmatmul.mubr.f32.gmra.mxu0 %v1549
    %v1688 = vpop.f32.mrf.mxu0
    %v1689 = vadd.f32 %v304, %v1688
    %v1690 = vpop.f32.mrf.mxu0
    %1691 = vdwg.mxu0
    %v1692 = vmul.f32 %v1618, %v269
    %v1693 = vmul.f32 %v1620, %v1516
    %v1694 = vadd.f32 %v1692, %v1693
    %v1695 = vadd.f32 %v1694, %v1689
    %v1696 = vxor.u32 %v1695, 2147483648
    %v1697 = vmul.f32 %v1696, 1.442695
    %v1698 = vpow.pop %v1697
    %v1699 = vadd.f32 %v1698, 1.0
    %v1700 = vrcp.pop %v1699
    %v1701 = vmul.f32 1.0, %v1700
    %v1702 = vmul.f32 %v1701, 2.0
    %v1703 = vsub.f32 %v1702, 1.0
    %v1704 = vmul.f32 %v1701, %v1430
    %1706 = vrot.lane.b32.xlu0 %v1703, 64
    %v1707 = vpop.permute.xlu0 %1706
    %v1709 = vmul.f32 %v1701, %v1707
    %1711 = vrot.lane.b32.xlu0 %v1709, 32
    %v1712 = vpop.permute.xlu0 %1711
    %v1714 = vadd.f32 %v1704, %v1712
    %v1715 = vtanh.pop %v1714
    %1717 = vrot.lane.b32.xlu0 %v1715, 64
    %v1718 = vpop.permute.xlu0 %1717
    %v1720 = vmul.f32 %v1701, %v1718
    %1722 = vrot.lane.b32.xlu0 %v1720, 32
    %v1723 = vpop.permute.xlu0 %1722
    %1725 = vst.msk [vmem:[#allocation2 + $0x20] sm:$0xff] %vm588, %v1723
    %1726 = vrot.lane.b32.xlu0 %v1545, 112
    %v1727 = vpop.permute.xlu0 %1726
    %v1729 = vsel %vm588, %v1723, %v1727
    %v1731 = vsel %vm308, %v1729, 0
    %1733 = vmatprep.subr.mxu0 0.0
    %1734 = vmatpush1.msra.mxu0 0.0
    %1735 = vmatprep.subr.mxu0 0.0
    %1736 = vmatpush1.msra.mxu0 0.0
    %1737 = vmatprep.subr.mxu0 0.0
    %1738 = vmatpush1.msra.mxu0 0.0
    %1739 = vmatprep.subr.mxu0 0.0
    %1740 = vmatpush1.msra.mxu0 0.0
    %1741 = vmatprep.subr.mxu0 0.0
    %1742 = vmatpush1.msra.mxu0 0.0
    %1743 = vmatprep.subr.mxu0 0.0
    %1744 = vmatpush1.msra.mxu0 0.0
    %1745 = vmatprep.subr.mxu0 0.0
    %1746 = vmatpush1.msra.mxu0 0.0
    %1747 = vmatprep.subr.mxu0 0.0
    %1748 = vmatpush1.msra.mxu0 0.0
    %1749 = vmatprep.subr.mxu0 0.0
    %1750 = vmatpush1.msra.mxu0 0.0
    %1751 = vmatprep.subr.mxu0 0.0
    %1752 = vmatpush1.msra.mxu0 0.0
    %1753 = vmatprep.subr.mxu0 %v126
    %1754 = vmatpush1.msra.mxu0 %v125
    %1755 = vmatprep.subr.mxu0 %v124
    %1756 = vmatpush1.msra.mxu0 %v123
    %1757 = vmatprep.subr.mxu0 %v122
    %1758 = vmatpush1.msra.mxu0 %v121
    %1759 = vmatprep.subr.mxu0 %v120
    %1760 = vmatpush1.msra.mxu0 %v119
    %1761 = vmatprep.subr.mxu0 %v118
    %1762 = vmatpush1.msra.mxu0 %v117
    %1763 = vmatprep.subr.mxu0 %v116
    %1764 = vmatpush1.msra.mxu0 %v115
    %1765 = vmatprep.subr.mxu0 0.0
    %1766 = vmatpush2.msra.mxu0 0.0
    %1767 = vmatprep.subr.mxu0 0.0
    %1768 = vmatpush2.msra.mxu0 0.0
    %1769 = vmatprep.subr.mxu0 0.0
    %1770 = vmatpush2.msra.mxu0 0.0
    %1771 = vmatprep.subr.mxu0 0.0
    %1772 = vmatpush2.msra.mxu0 0.0
    %1773 = vmatprep.subr.mxu0 0.0
    %1774 = vmatpush2.msra.mxu0 0.0
    %1775 = vmatprep.subr.mxu0 0.0
    %1776 = vmatpush2.msra.mxu0 0.0
    %1777 = vmatprep.subr.mxu0 0.0
    %1778 = vmatpush2.msra.mxu0 0.0
    %1779 = vmatprep.subr.mxu0 0.0
    %1780 = vmatpush2.msra.mxu0 0.0
    %1781 = vmatprep.subr.mxu0 0.0
    %1782 = vmatpush2.msra.mxu0 0.0
    %1783 = vmatprep.subr.mxu0 0.0
    %1784 = vmatpush2.msra.mxu0 0.0
    %1785 = vmatprep.subr.mxu0 0.0
    %1786 = vmatpush2.msra.mxu0 0.0
    %1787 = vmatprep.subr.mxu0 0.0
    %1788 = vmatpush2.msra.mxu0 0.0
    %1789 = vmatprep.subr.mxu0 0.0
    %1790 = vmatpush2.msra.mxu0 0.0
    %1791 = vmatprep.subr.mxu0 0.0
    %1792 = vmatpush2.msra.mxu0 0.0
    %1793 = vmatprep.subr.mxu0 0.0
    %1794 = vmatpush2.msra.mxu0 0.0
    %1795 = vmatprep.subr.mxu0 0.0
    %1796 = vmatpush2.msra.mxu0 0.0
    %1797 = vmatprep.mubr.f32.mxu0 0.0
    %1798 = vmatmul.mubr.f32.gmra.mxu0 %v1731
    %v1799 = vpop.f32.mrf.mxu0
    %v1800 = vadd.f32 0.0, %v1799
    %v1801 = vpop.f32.mrf.mxu0
    %v1802 = vadd.f32 0.0, %v1801
    %1803 = vdwg.mxu0
    %v1804 = vadd.f32 %v277, %v1802
    %v1805 = vxor.u32 %v1804, 2147483648
    %v1806 = vmul.f32 %v1805, 1.442695
    %v1807 = vpow.pop %v1806
    %v1808 = vadd.f32 %v1807, 1.0
    %v1809 = vrcp.pop %v1808
    %v1810 = vmul.f32 1.0, %v1809
    %v1811 = vmul.f32 %v1810, 2.0
    %v1812 = vsub.f32 %v1811, 1.0
    %v1813 = vmul.f32 %v1810, %v1539
    %1815 = vrot.lane.b32.xlu0 %v1812, 96
    %v1816 = vpop.permute.xlu0 %1815
    %v1818 = vmul.f32 %v1810, %v1816
    %1820 = vrot.lane.b32.xlu0 %v1818, 16
    %v1821 = vpop.permute.xlu0 %1820
    %v1823 = vadd.f32 %v1813, %v1821
    %v1824 = vtanh.pop %v1823
    %1826 = vrot.lane.b32.xlu0 %v1824, 32
    %v1827 = vpop.permute.xlu0 %1826
    %v1829 = vmul.f32 %v1810, %v1827
    %1831 = vrot.lane.b32.xlu0 %v1829, 80
    %v1832 = vpop.permute.xlu0 %1831
    %v1833 = vsel %vm153, %v1832, 0
    %1835 = vmatprep.subr.mxu0 0.0
    %1836 = vmatpush1.msra.mxu0 0.0
    %1837 = vmatprep.subr.mxu0 0.0
    %1838 = vmatpush1.msra.mxu0 0.0
    %1839 = vmatprep.subr.mxu0 0.0
    %1840 = vmatpush1.msra.mxu0 0.0
    %1841 = vmatprep.subr.mxu0 0.0
    %1842 = vmatpush1.msra.mxu0 0.0
    %1843 = vmatprep.subr.mxu0 0.0
    %1844 = vmatpush1.msra.mxu0 0.0
    %1845 = vmatprep.subr.mxu0 0.0
    %1846 = vmatpush1.msra.mxu0 0.0
    %1847 = vmatprep.subr.mxu0 0.0
    %1848 = vmatpush1.msra.mxu0 0.0
    %1849 = vmatprep.subr.mxu0 0.0
    %1850 = vmatpush1.msra.mxu0 0.0
    %1851 = vmatprep.subr.mxu0 0.0
    %1852 = vmatpush1.msra.mxu0 0.0
    %1853 = vmatprep.subr.mxu0 0.0
    %1854 = vmatpush1.msra.mxu0 0.0
    %1855 = vmatprep.subr.mxu0 0.0
    %1856 = vmatpush1.msra.mxu0 0.0
    %1857 = vmatprep.subr.mxu0 0.0
    %1858 = vmatpush1.msra.mxu0 0.0
    %1859 = vmatprep.subr.mxu0 0.0
    %1860 = vmatpush1.msra.mxu0 0.0
    %1861 = vmatprep.subr.mxu0 0.0
    %1862 = vmatpush1.msra.mxu0 0.0
    %1863 = vmatprep.subr.mxu0 %v131
    %1864 = vmatpush1.msra.mxu0 %v130
    %1865 = vmatprep.subr.mxu0 %v128
    %1866 = vmatpush1.msra.mxu0 %v127
    %1867 = vmatprep.subr.mxu0 0.0
    %1868 = vmatpush2.msra.mxu0 0.0
    %1869 = vmatprep.subr.mxu0 0.0
    %1870 = vmatpush2.msra.mxu0 0.0
    %1871 = vmatprep.subr.mxu0 0.0
    %1872 = vmatpush2.msra.mxu0 0.0
    %1873 = vmatprep.subr.mxu0 0.0
    %1874 = vmatpush2.msra.mxu0 0.0
    %1875 = vmatprep.subr.mxu0 0.0
    %1876 = vmatpush2.msra.mxu0 0.0
    %1877 = vmatprep.subr.mxu0 0.0
    %1878 = vmatpush2.msra.mxu0 0.0
    %1879 = vmatprep.subr.mxu0 0.0
    %1880 = vmatpush2.msra.mxu0 0.0
    %1881 = vmatprep.subr.mxu0 0.0
    %1882 = vmatpush2.msra.mxu0 0.0
    %1883 = vmatprep.subr.mxu0 0.0
    %1884 = vmatpush2.msra.mxu0 0.0
    %1885 = vmatprep.subr.mxu0 0.0
    %1886 = vmatpush2.msra.mxu0 0.0
    %1887 = vmatprep.subr.mxu0 0.0
    %1888 = vmatpush2.msra.mxu0 0.0
    %1889 = vmatprep.subr.mxu0 0.0
    %1890 = vmatpush2.msra.mxu0 0.0
    %1891 = vmatprep.subr.mxu0 0.0
    %1892 = vmatpush2.msra.mxu0 0.0
    %1893 = vmatprep.subr.mxu0 0.0
    %1894 = vmatpush2.msra.mxu0 0.0
    %1895 = vmatprep.subr.mxu0 0.0
    %1896 = vmatpush2.msra.mxu0 0.0
    %1897 = vmatprep.subr.mxu0 0.0
    %1898 = vmatpush2.msra.mxu0 0.0
    %1899 = vmatprep.mubr.f32.mxu0 0.0
    %1900 = vmatmul.mubr.f32.gmra.mxu0 %v1833
    %v1901 = vpop.f32.mrf.mxu0
    %v1902 = vadd.f32 %v296, %v1901
    %v1903 = vpop.f32.mrf.mxu0
    %v1904 = vadd.f32 %v300, %v1903
    %1905 = vdwg.mxu0
    %1906 = vmatprep.subr.mxu0 0.0
    %1907 = vmatpush1.msra.mxu0 0.0
    %1908 = vmatprep.subr.mxu0 0.0
    %1909 = vmatpush1.msra.mxu0 0.0
    %1910 = vmatprep.subr.mxu0 0.0
    %1911 = vmatpush1.msra.mxu0 0.0
    %1912 = vmatprep.subr.mxu0 0.0
    %1913 = vmatpush1.msra.mxu0 0.0
    %1914 = vmatprep.subr.mxu0 0.0
    %1915 = vmatpush1.msra.mxu0 0.0
    %1916 = vmatprep.subr.mxu0 0.0
    %1917 = vmatpush1.msra.mxu0 0.0
    %1918 = vmatprep.subr.mxu0 0.0
    %1919 = vmatpush1.msra.mxu0 0.0
    %1920 = vmatprep.subr.mxu0 0.0
    %1921 = vmatpush1.msra.mxu0 0.0
    %1922 = vmatprep.subr.mxu0 0.0
    %1923 = vmatpush1.msra.mxu0 0.0
    %1924 = vmatprep.subr.mxu0 0.0
    %1925 = vmatpush1.msra.mxu0 0.0
    %1926 = vmatprep.subr.mxu0 0.0
    %1927 = vmatpush1.msra.mxu0 0.0
    %1928 = vmatprep.subr.mxu0 0.0
    %1929 = vmatpush1.msra.mxu0 0.0
    %1930 = vmatprep.subr.mxu0 0.0
    %1931 = vmatpush1.msra.mxu0 0.0
    %1932 = vmatprep.subr.mxu0 0.0
    %1933 = vmatpush1.msra.mxu0 0.0
    %1934 = vmatprep.subr.mxu0 0.0
    %1935 = vmatpush1.msra.mxu0 %v132
    %1936 = vmatprep.subr.mxu0 0.0
    %1937 = vmatpush1.msra.mxu0 %v129
    %1938 = vmatprep.subr.mxu0 0.0
    %1939 = vmatpush2.msra.mxu0 0.0
    %1940 = vmatprep.subr.mxu0 0.0
    %1941 = vmatpush2.msra.mxu0 0.0
    %1942 = vmatprep.subr.mxu0 0.0
    %1943 = vmatpush2.msra.mxu0 0.0
    %1944 = vmatprep.subr.mxu0 0.0
    %1945 = vmatpush2.msra.mxu0 0.0
    %1946 = vmatprep.subr.mxu0 0.0
    %1947 = vmatpush2.msra.mxu0 0.0
    %1948 = vmatprep.subr.mxu0 0.0
    %1949 = vmatpush2.msra.mxu0 0.0
    %1950 = vmatprep.subr.mxu0 0.0
    %1951 = vmatpush2.msra.mxu0 0.0
    %1952 = vmatprep.subr.mxu0 0.0
    %1953 = vmatpush2.msra.mxu0 0.0
    %1954 = vmatprep.subr.mxu0 0.0
    %1955 = vmatpush2.msra.mxu0 0.0
    %1956 = vmatprep.subr.mxu0 0.0
    %1957 = vmatpush2.msra.mxu0 0.0
    %1958 = vmatprep.subr.mxu0 0.0
    %1959 = vmatpush2.msra.mxu0 0.0
    %1960 = vmatprep.subr.mxu0 0.0
    %1961 = vmatpush2.msra.mxu0 0.0
    %1962 = vmatprep.subr.mxu0 0.0
    %1963 = vmatpush2.msra.mxu0 0.0
    %1964 = vmatprep.subr.mxu0 0.0
    %1965 = vmatpush2.msra.mxu0 0.0
    %1966 = vmatprep.subr.mxu0 0.0
    %1967 = vmatpush2.msra.mxu0 0.0
    %1968 = vmatprep.subr.mxu0 0.0
    %1969 = vmatpush2.msra.mxu0 0.0
    %1970 = vmatprep.mubr.f32.mxu0 0.0
    %1971 = vmatmul.mubr.f32.gmra.mxu0 %v1833
    %v1972 = vpop.f32.mrf.mxu0
    %v1973 = vadd.f32 %v304, %v1972
    %v1974 = vpop.f32.mrf.mxu0
    %1975 = vdwg.mxu0
    %v1976 = vmul.f32 %v1902, %v275
    %v1977 = vmul.f32 %v1904, %v1800
    %v1978 = vadd.f32 %v1976, %v1977
    %v1979 = vadd.f32 %v1978, %v1973
    %v1980 = vxor.u32 %v1979, 2147483648
    %v1981 = vmul.f32 %v1980, 1.442695
    %v1982 = vpow.pop %v1981
    %v1983 = vadd.f32 %v1982, 1.0
    %v1984 = vrcp.pop %v1983
    %v1985 = vmul.f32 1.0, %v1984
    %v1986 = vmul.f32 %v1985, 2.0
    %v1987 = vsub.f32 %v1986, 1.0
    %v1988 = vmul.f32 %v1985, %v1714
    %1990 = vrot.lane.b32.xlu0 %v1987, 64
    %v1991 = vpop.permute.xlu0 %1990
    %v1993 = vmul.f32 %v1985, %v1991
    %1995 = vrot.lane.b32.xlu0 %v1993, 32
    %v1996 = vpop.permute.xlu0 %1995
    %v1998 = vadd.f32 %v1988, %v1996
    %v1999 = vtanh.pop %v1998
    %2001 = vrot.lane.b32.xlu0 %v1999, 64
    %v2002 = vpop.permute.xlu0 %2001
    %v2004 = vmul.f32 %v1985, %v2002
    %2006 = vrot.lane.b32.xlu0 %v2004, 32
    %v2007 = vpop.permute.xlu0 %2006
    %2009 = vst.msk [vmem:[#allocation2 + $0x28] sm:$0xff] %vm588, %v2007
    %2010 = vrot.lane.b32.xlu0 %v1829, 112
    %v2011 = vpop.permute.xlu0 %2010
    %v2013 = vsel %vm588, %v2007, %v2011
    %v2015 = vsel %vm308, %v2013, 0
    %2017 = vmatprep.subr.mxu0 0.0
    %2018 = vmatpush1.msra.mxu0 0.0
    %2019 = vmatprep.subr.mxu0 0.0
    %2020 = vmatpush1.msra.mxu0 0.0
    %2021 = vmatprep.subr.mxu0 0.0
    %2022 = vmatpush1.msra.mxu0 0.0
    %2023 = vmatprep.subr.mxu0 0.0
    %2024 = vmatpush1.msra.mxu0 0.0
    %2025 = vmatprep.subr.mxu0 0.0
    %2026 = vmatpush1.msra.mxu0 0.0
    %2027 = vmatprep.subr.mxu0 0.0
    %2028 = vmatpush1.msra.mxu0 0.0
    %2029 = vmatprep.subr.mxu0 0.0
    %2030 = vmatpush1.msra.mxu0 0.0
    %2031 = vmatprep.subr.mxu0 0.0
    %2032 = vmatpush1.msra.mxu0 0.0
    %2033 = vmatprep.subr.mxu0 0.0
    %2034 = vmatpush1.msra.mxu0 0.0
    %2035 = vmatprep.subr.mxu0 0.0
    %2036 = vmatpush1.msra.mxu0 0.0
    %2037 = vmatprep.subr.mxu0 %v126
    %2038 = vmatpush1.msra.mxu0 %v125
    %2039 = vmatprep.subr.mxu0 %v124
    %2040 = vmatpush1.msra.mxu0 %v123
    %2041 = vmatprep.subr.mxu0 %v122
    %2042 = vmatpush1.msra.mxu0 %v121
    %2043 = vmatprep.subr.mxu0 %v120
    %2044 = vmatpush1.msra.mxu0 %v119
    %2045 = vmatprep.subr.mxu0 %v118
    %2046 = vmatpush1.msra.mxu0 %v117
    %2047 = vmatprep.subr.mxu0 %v116
    %2048 = vmatpush1.msra.mxu0 %v115
    %2049 = vmatprep.subr.mxu0 0.0
    %2050 = vmatpush2.msra.mxu0 0.0
    %2051 = vmatprep.subr.mxu0 0.0
    %2052 = vmatpush2.msra.mxu0 0.0
    %2053 = vmatprep.subr.mxu0 0.0
    %2054 = vmatpush2.msra.mxu0 0.0
    %2055 = vmatprep.subr.mxu0 0.0
    %2056 = vmatpush2.msra.mxu0 0.0
    %2057 = vmatprep.subr.mxu0 0.0
    %2058 = vmatpush2.msra.mxu0 0.0
    %2059 = vmatprep.subr.mxu0 0.0
    %2060 = vmatpush2.msra.mxu0 0.0
    %2061 = vmatprep.subr.mxu0 0.0
    %2062 = vmatpush2.msra.mxu0 0.0
    %2063 = vmatprep.subr.mxu0 0.0
    %2064 = vmatpush2.msra.mxu0 0.0
    %2065 = vmatprep.subr.mxu0 0.0
    %2066 = vmatpush2.msra.mxu0 0.0
    %2067 = vmatprep.subr.mxu0 0.0
    %2068 = vmatpush2.msra.mxu0 0.0
    %2069 = vmatprep.subr.mxu0 0.0
    %2070 = vmatpush2.msra.mxu0 0.0
    %2071 = vmatprep.subr.mxu0 0.0
    %2072 = vmatpush2.msra.mxu0 0.0
    %2073 = vmatprep.subr.mxu0 0.0
    %2074 = vmatpush2.msra.mxu0 0.0
    %2075 = vmatprep.subr.mxu0 0.0
    %2076 = vmatpush2.msra.mxu0 0.0
    %2077 = vmatprep.subr.mxu0 0.0
    %2078 = vmatpush2.msra.mxu0 0.0
    %2079 = vmatprep.subr.mxu0 0.0
    %2080 = vmatpush2.msra.mxu0 0.0
    %2081 = vmatprep.mubr.f32.mxu0 0.0
    %2082 = vmatmul.mubr.f32.gmra.mxu0 %v2015
    %v2083 = vpop.f32.mrf.mxu0
    %v2084 = vadd.f32 0.0, %v2083
    %v2085 = vpop.f32.mrf.mxu0
    %v2086 = vadd.f32 0.0, %v2085
    %2087 = vdwg.mxu0
    %v2088 = vadd.f32 %v283, %v2086
    %v2089 = vxor.u32 %v2088, 2147483648
    %v2090 = vmul.f32 %v2089, 1.442695
    %v2091 = vpow.pop %v2090
    %v2092 = vadd.f32 %v2091, 1.0
    %v2093 = vrcp.pop %v2092
    %v2094 = vmul.f32 1.0, %v2093
    %v2095 = vmul.f32 %v2094, 2.0
    %v2096 = vsub.f32 %v2095, 1.0
    %v2097 = vmul.f32 %v2094, %v1823
    %2099 = vrot.lane.b32.xlu0 %v2096, 96
    %v2100 = vpop.permute.xlu0 %2099
    %v2102 = vmul.f32 %v2094, %v2100
    %2104 = vrot.lane.b32.xlu0 %v2102, 16
    %v2105 = vpop.permute.xlu0 %2104
    %v2107 = vadd.f32 %v2097, %v2105
    %v2108 = vtanh.pop %v2107
    %2110 = vrot.lane.b32.xlu0 %v2108, 32
    %v2111 = vpop.permute.xlu0 %2110
    %v2113 = vmul.f32 %v2094, %v2111
    %2115 = vrot.lane.b32.xlu0 %v2113, 80
    %v2116 = vpop.permute.xlu0 %2115
    %v2117 = vsel %vm153, %v2116, 0
    %2119 = vmatprep.subr.mxu0 0.0
    %2120 = vmatpush1.msra.mxu0 0.0
    %2121 = vmatprep.subr.mxu0 0.0
    %2122 = vmatpush1.msra.mxu0 0.0
    %2123 = vmatprep.subr.mxu0 0.0
    %2124 = vmatpush1.msra.mxu0 0.0
    %2125 = vmatprep.subr.mxu0 0.0
    %2126 = vmatpush1.msra.mxu0 0.0
    %2127 = vmatprep.subr.mxu0 0.0
    %2128 = vmatpush1.msra.mxu0 0.0
    %2129 = vmatprep.subr.mxu0 0.0
    %2130 = vmatpush1.msra.mxu0 0.0
    %2131 = vmatprep.subr.mxu0 0.0
    %2132 = vmatpush1.msra.mxu0 0.0
    %2133 = vmatprep.subr.mxu0 0.0
    %2134 = vmatpush1.msra.mxu0 0.0
    %2135 = vmatprep.subr.mxu0 0.0
    %2136 = vmatpush1.msra.mxu0 0.0
    %2137 = vmatprep.subr.mxu0 0.0
    %2138 = vmatpush1.msra.mxu0 0.0
    %2139 = vmatprep.subr.mxu0 0.0
    %2140 = vmatpush1.msra.mxu0 0.0
    %2141 = vmatprep.subr.mxu0 0.0
    %2142 = vmatpush1.msra.mxu0 0.0
    %2143 = vmatprep.subr.mxu0 0.0
    %2144 = vmatpush1.msra.mxu0 0.0
    %2145 = vmatprep.subr.mxu0 0.0
    %2146 = vmatpush1.msra.mxu0 0.0
    %2147 = vmatprep.subr.mxu0 %v131
    %2148 = vmatpush1.msra.mxu0 %v130
    %2149 = vmatprep.subr.mxu0 %v128
    %2150 = vmatpush1.msra.mxu0 %v127
    %2151 = vmatprep.subr.mxu0 0.0
    %2152 = vmatpush2.msra.mxu0 0.0
    %2153 = vmatprep.subr.mxu0 0.0
    %2154 = vmatpush2.msra.mxu0 0.0
    %2155 = vmatprep.subr.mxu0 0.0
    %2156 = vmatpush2.msra.mxu0 0.0
    %2157 = vmatprep.subr.mxu0 0.0
    %2158 = vmatpush2.msra.mxu0 0.0
    %2159 = vmatprep.subr.mxu0 0.0
    %2160 = vmatpush2.msra.mxu0 0.0
    %2161 = vmatprep.subr.mxu0 0.0
    %2162 = vmatpush2.msra.mxu0 0.0
    %2163 = vmatprep.subr.mxu0 0.0
    %2164 = vmatpush2.msra.mxu0 0.0
    %2165 = vmatprep.subr.mxu0 0.0
    %2166 = vmatpush2.msra.mxu0 0.0
    %2167 = vmatprep.subr.mxu0 0.0
    %2168 = vmatpush2.msra.mxu0 0.0
    %2169 = vmatprep.subr.mxu0 0.0
    %2170 = vmatpush2.msra.mxu0 0.0
    %2171 = vmatprep.subr.mxu0 0.0
    %2172 = vmatpush2.msra.mxu0 0.0
    %2173 = vmatprep.subr.mxu0 0.0
    %2174 = vmatpush2.msra.mxu0 0.0
    %2175 = vmatprep.subr.mxu0 0.0
    %2176 = vmatpush2.msra.mxu0 0.0
    %2177 = vmatprep.subr.mxu0 0.0
    %2178 = vmatpush2.msra.mxu0 0.0
    %2179 = vmatprep.subr.mxu0 0.0
    %2180 = vmatpush2.msra.mxu0 0.0
    %2181 = vmatprep.subr.mxu0 0.0
    %2182 = vmatpush2.msra.mxu0 0.0
    %2183 = vmatprep.mubr.f32.mxu0 0.0
    %2184 = vmatmul.mubr.f32.gmra.mxu0 %v2117
    %v2185 = vpop.f32.mrf.mxu0
    %v2186 = vadd.f32 %v296, %v2185
    %v2187 = vpop.f32.mrf.mxu0
    %v2188 = vadd.f32 %v300, %v2187
    %2189 = vdwg.mxu0
    %2190 = vmatprep.subr.mxu0 0.0
    %2191 = vmatpush1.msra.mxu0 0.0
    %2192 = vmatprep.subr.mxu0 0.0
    %2193 = vmatpush1.msra.mxu0 0.0
    %2194 = vmatprep.subr.mxu0 0.0
    %2195 = vmatpush1.msra.mxu0 0.0
    %2196 = vmatprep.subr.mxu0 0.0
    %2197 = vmatpush1.msra.mxu0 0.0
    %2198 = vmatprep.subr.mxu0 0.0
    %2199 = vmatpush1.msra.mxu0 0.0
    %2200 = vmatprep.subr.mxu0 0.0
    %2201 = vmatpush1.msra.mxu0 0.0
    %2202 = vmatprep.subr.mxu0 0.0
    %2203 = vmatpush1.msra.mxu0 0.0
    %2204 = vmatprep.subr.mxu0 0.0
    %2205 = vmatpush1.msra.mxu0 0.0
    %2206 = vmatprep.subr.mxu0 0.0
    %2207 = vmatpush1.msra.mxu0 0.0
    %2208 = vmatprep.subr.mxu0 0.0
    %2209 = vmatpush1.msra.mxu0 0.0
    %2210 = vmatprep.subr.mxu0 0.0
    %2211 = vmatpush1.msra.mxu0 0.0
    %2212 = vmatprep.subr.mxu0 0.0
    %2213 = vmatpush1.msra.mxu0 0.0
    %2214 = vmatprep.subr.mxu0 0.0
    %2215 = vmatpush1.msra.mxu0 0.0
    %2216 = vmatprep.subr.mxu0 0.0
    %2217 = vmatpush1.msra.mxu0 0.0
    %2218 = vmatprep.subr.mxu0 0.0
    %2219 = vmatpush1.msra.mxu0 %v132
    %2220 = vmatprep.subr.mxu0 0.0
    %2221 = vmatpush1.msra.mxu0 %v129
    %2222 = vmatprep.subr.mxu0 0.0
    %2223 = vmatpush2.msra.mxu0 0.0
    %2224 = vmatprep.subr.mxu0 0.0
    %2225 = vmatpush2.msra.mxu0 0.0
    %2226 = vmatprep.subr.mxu0 0.0
    %2227 = vmatpush2.msra.mxu0 0.0
    %2228 = vmatprep.subr.mxu0 0.0
    %2229 = vmatpush2.msra.mxu0 0.0
    %2230 = vmatprep.subr.mxu0 0.0
    %2231 = vmatpush2.msra.mxu0 0.0
    %2232 = vmatprep.subr.mxu0 0.0
    %2233 = vmatpush2.msra.mxu0 0.0
    %2234 = vmatprep.subr.mxu0 0.0
    %2235 = vmatpush2.msra.mxu0 0.0
    %2236 = vmatprep.subr.mxu0 0.0
    %2237 = vmatpush2.msra.mxu0 0.0
    %2238 = vmatprep.subr.mxu0 0.0
    %2239 = vmatpush2.msra.mxu0 0.0
    %2240 = vmatprep.subr.mxu0 0.0
    %2241 = vmatpush2.msra.mxu0 0.0
    %2242 = vmatprep.subr.mxu0 0.0
    %2243 = vmatpush2.msra.mxu0 0.0
    %2244 = vmatprep.subr.mxu0 0.0
    %2245 = vmatpush2.msra.mxu0 0.0
    %2246 = vmatprep.subr.mxu0 0.0
    %2247 = vmatpush2.msra.mxu0 0.0
    %2248 = vmatprep.subr.mxu0 0.0
    %2249 = vmatpush2.msra.mxu0 0.0
    %2250 = vmatprep.subr.mxu0 0.0
    %2251 = vmatpush2.msra.mxu0 0.0
    %2252 = vmatprep.subr.mxu0 0.0
    %2253 = vmatpush2.msra.mxu0 0.0
    %2254 = vmatprep.mubr.f32.mxu0 0.0
    %2255 = vmatmul.mubr.f32.gmra.mxu0 %v2117
    %v2256 = vpop.f32.mrf.mxu0
    %v2257 = vadd.f32 %v304, %v2256
    %v2258 = vpop.f32.mrf.mxu0
    %2259 = vdwg.mxu0
    %v2260 = vmul.f32 %v2186, %v281
    %v2261 = vmul.f32 %v2188, %v2084
    %v2262 = vadd.f32 %v2260, %v2261
    %v2263 = vadd.f32 %v2262, %v2257
    %v2264 = vxor.u32 %v2263, 2147483648
    %v2265 = vmul.f32 %v2264, 1.442695
    %v2266 = vpow.pop %v2265
    %v2267 = vadd.f32 %v2266, 1.0
    %v2268 = vrcp.pop %v2267
    %v2269 = vmul.f32 1.0, %v2268
    %v2270 = vmul.f32 %v2269, 2.0
    %v2271 = vsub.f32 %v2270, 1.0
    %v2272 = vmul.f32 %v2269, %v1998
    %2274 = vrot.lane.b32.xlu0 %v2271, 64
    %v2275 = vpop.permute.xlu0 %2274
    %v2277 = vmul.f32 %v2269, %v2275
    %2279 = vrot.lane.b32.xlu0 %v2277, 32
    %v2280 = vpop.permute.xlu0 %2279
    %v2282 = vadd.f32 %v2272, %v2280
    %v2283 = vtanh.pop %v2282
    %2285 = vrot.lane.b32.xlu0 %v2283, 64
    %v2286 = vpop.permute.xlu0 %2285
    %v2288 = vmul.f32 %v2269, %v2286
    %2290 = vrot.lane.b32.xlu0 %v2288, 32
    %v2291 = vpop.permute.xlu0 %2290
    %2293 = vst.msk [vmem:[#allocation2 + $0x30] sm:$0xff] %vm588, %v2291
    %2294 = vrot.lane.b32.xlu0 %v2113, 112
    %v2295 = vpop.permute.xlu0 %2294
    %v2297 = vsel %vm588, %v2291, %v2295
    %v2299 = vsel %vm308, %v2297, 0
    %2301 = vmatprep.subr.mxu0 0.0
    %2302 = vmatpush1.msra.mxu0 0.0
    %2303 = vmatprep.subr.mxu0 0.0
    %2304 = vmatpush1.msra.mxu0 0.0
    %2305 = vmatprep.subr.mxu0 0.0
    %2306 = vmatpush1.msra.mxu0 0.0
    %2307 = vmatprep.subr.mxu0 0.0
    %2308 = vmatpush1.msra.mxu0 0.0
    %2309 = vmatprep.subr.mxu0 0.0
    %2310 = vmatpush1.msra.mxu0 0.0
    %2311 = vmatprep.subr.mxu0 0.0
    %2312 = vmatpush1.msra.mxu0 0.0
    %2313 = vmatprep.subr.mxu0 0.0
    %2314 = vmatpush1.msra.mxu0 0.0
    %2315 = vmatprep.subr.mxu0 0.0
    %2316 = vmatpush1.msra.mxu0 0.0
    %2317 = vmatprep.subr.mxu0 0.0
    %2318 = vmatpush1.msra.mxu0 0.0
    %2319 = vmatprep.subr.mxu0 0.0
    %2320 = vmatpush1.msra.mxu0 0.0
    %2321 = vmatprep.subr.mxu0 %v126
    %2322 = vmatpush1.msra.mxu0 %v125
    %2323 = vmatprep.subr.mxu0 %v124
    %2324 = vmatpush1.msra.mxu0 %v123
    %2325 = vmatprep.subr.mxu0 %v122
    %2326 = vmatpush1.msra.mxu0 %v121
    %2327 = vmatprep.subr.mxu0 %v120
    %2328 = vmatpush1.msra.mxu0 %v119
    %2329 = vmatprep.subr.mxu0 %v118
    %2330 = vmatpush1.msra.mxu0 %v117
    %2331 = vmatprep.subr.mxu0 %v116
    %2332 = vmatpush1.msra.mxu0 %v115
    %2333 = vmatprep.subr.mxu0 0.0
    %2334 = vmatpush2.msra.mxu0 0.0
    %2335 = vmatprep.subr.mxu0 0.0
    %2336 = vmatpush2.msra.mxu0 0.0
    %2337 = vmatprep.subr.mxu0 0.0
    %2338 = vmatpush2.msra.mxu0 0.0
    %2339 = vmatprep.subr.mxu0 0.0
    %2340 = vmatpush2.msra.mxu0 0.0
    %2341 = vmatprep.subr.mxu0 0.0
    %2342 = vmatpush2.msra.mxu0 0.0
    %2343 = vmatprep.subr.mxu0 0.0
    %2344 = vmatpush2.msra.mxu0 0.0
    %2345 = vmatprep.subr.mxu0 0.0
    %2346 = vmatpush2.msra.mxu0 0.0
    %2347 = vmatprep.subr.mxu0 0.0
    %2348 = vmatpush2.msra.mxu0 0.0
    %2349 = vmatprep.subr.mxu0 0.0
    %2350 = vmatpush2.msra.mxu0 0.0
    %2351 = vmatprep.subr.mxu0 0.0
    %2352 = vmatpush2.msra.mxu0 0.0
    %2353 = vmatprep.subr.mxu0 0.0
    %2354 = vmatpush2.msra.mxu0 0.0
    %2355 = vmatprep.subr.mxu0 0.0
    %2356 = vmatpush2.msra.mxu0 0.0
    %2357 = vmatprep.subr.mxu0 0.0
    %2358 = vmatpush2.msra.mxu0 0.0
    %2359 = vmatprep.subr.mxu0 0.0
    %2360 = vmatpush2.msra.mxu0 0.0
    %2361 = vmatprep.subr.mxu0 0.0
    %2362 = vmatpush2.msra.mxu0 0.0
    %2363 = vmatprep.subr.mxu0 0.0
    %2364 = vmatpush2.msra.mxu0 0.0
    %2365 = vmatprep.mubr.f32.mxu0 0.0
    %2366 = vmatmul.mubr.f32.gmra.mxu0 %v2299
    %v2367 = vpop.f32.mrf.mxu0
    %v2368 = vadd.f32 0.0, %v2367
    %v2369 = vpop.f32.mrf.mxu0
    %v2370 = vadd.f32 0.0, %v2369
    %2371 = vdwg.mxu0
    %v2372 = vadd.f32 %v289, %v2370
    %v2373 = vxor.u32 %v2372, 2147483648
    %v2374 = vmul.f32 %v2373, 1.442695
    %v2375 = vpow.pop %v2374
    %v2376 = vadd.f32 %v2375, 1.0
    %v2377 = vrcp.pop %v2376
    %v2378 = vmul.f32 1.0, %v2377
    %v2379 = vmul.f32 %v2378, 2.0
    %v2380 = vsub.f32 %v2379, 1.0
    %v2381 = vmul.f32 %v2378, %v2107
    %2383 = vrot.lane.b32.xlu0 %v2380, 96
    %v2384 = vpop.permute.xlu0 %2383
    %v2386 = vmul.f32 %v2378, %v2384
    %2388 = vrot.lane.b32.xlu0 %v2386, 16
    %v2389 = vpop.permute.xlu0 %2388
    %v2391 = vadd.f32 %v2381, %v2389
    %v2392 = vtanh.pop %v2391
    %2394 = vrot.lane.b32.xlu0 %v2392, 32
    %v2395 = vpop.permute.xlu0 %2394
    %v2397 = vmul.f32 %v2378, %v2395
    %2399 = vrot.lane.b32.xlu0 %v2397, 80
    %v2400 = vpop.permute.xlu0 %2399
    %v2401 = vsel %vm153, %v2400, 0
    %2403 = vmatprep.subr.mxu0 0.0
    %2404 = vmatpush1.msra.mxu0 0.0
    %2405 = vmatprep.subr.mxu0 0.0
    %2406 = vmatpush1.msra.mxu0 0.0
    %2407 = vmatprep.subr.mxu0 0.0
    %2408 = vmatpush1.msra.mxu0 0.0
    %2409 = vmatprep.subr.mxu0 0.0
    %2410 = vmatpush1.msra.mxu0 0.0
    %2411 = vmatprep.subr.mxu0 0.0
    %2412 = vmatpush1.msra.mxu0 0.0
    %2413 = vmatprep.subr.mxu0 0.0
    %2414 = vmatpush1.msra.mxu0 0.0
    %2415 = vmatprep.subr.mxu0 0.0
    %2416 = vmatpush1.msra.mxu0 0.0
    %2417 = vmatprep.subr.mxu0 0.0
    %2418 = vmatpush1.msra.mxu0 0.0
    %2419 = vmatprep.subr.mxu0 0.0
    %2420 = vmatpush1.msra.mxu0 0.0
    %2421 = vmatprep.subr.mxu0 0.0
    %2422 = vmatpush1.msra.mxu0 0.0
    %2423 = vmatprep.subr.mxu0 0.0
    %2424 = vmatpush1.msra.mxu0 0.0
    %2425 = vmatprep.subr.mxu0 0.0
    %2426 = vmatpush1.msra.mxu0 0.0
    %2427 = vmatprep.subr.mxu0 0.0
    %2428 = vmatpush1.msra.mxu0 0.0
    %2429 = vmatprep.subr.mxu0 0.0
    %2430 = vmatpush1.msra.mxu0 0.0
    %2431 = vmatprep.subr.mxu0 %v131
    %2432 = vmatpush1.msra.mxu0 %v130
    %2433 = vmatprep.subr.mxu0 %v128
    %2434 = vmatpush1.msra.mxu0 %v127
    %2435 = vmatprep.subr.mxu0 0.0
    %2436 = vmatpush2.msra.mxu0 0.0
    %2437 = vmatprep.subr.mxu0 0.0
    %2438 = vmatpush2.msra.mxu0 0.0
    %2439 = vmatprep.subr.mxu0 0.0
    %2440 = vmatpush2.msra.mxu0 0.0
    %2441 = vmatprep.subr.mxu0 0.0
    %2442 = vmatpush2.msra.mxu0 0.0
    %2443 = vmatprep.subr.mxu0 0.0
    %2444 = vmatpush2.msra.mxu0 0.0
    %2445 = vmatprep.subr.mxu0 0.0
    %2446 = vmatpush2.msra.mxu0 0.0
    %2447 = vmatprep.subr.mxu0 0.0
    %2448 = vmatpush2.msra.mxu0 0.0
    %2449 = vmatprep.subr.mxu0 0.0
    %2450 = vmatpush2.msra.mxu0 0.0
    %2451 = vmatprep.subr.mxu0 0.0
    %2452 = vmatpush2.msra.mxu0 0.0
    %2453 = vmatprep.subr.mxu0 0.0
    %2454 = vmatpush2.msra.mxu0 0.0
    %2455 = vmatprep.subr.mxu0 0.0
    %2456 = vmatpush2.msra.mxu0 0.0
    %2457 = vmatprep.subr.mxu0 0.0
    %2458 = vmatpush2.msra.mxu0 0.0
    %2459 = vmatprep.subr.mxu0 0.0
    %2460 = vmatpush2.msra.mxu0 0.0
    %2461 = vmatprep.subr.mxu0 0.0
    %2462 = vmatpush2.msra.mxu0 0.0
    %2463 = vmatprep.subr.mxu0 0.0
    %2464 = vmatpush2.msra.mxu0 0.0
    %2465 = vmatprep.subr.mxu0 0.0
    %2466 = vmatpush2.msra.mxu0 0.0
    %2467 = vmatprep.mubr.f32.mxu0 0.0
    %2468 = vmatmul.mubr.f32.gmra.mxu0 %v2401
    %v2469 = vpop.f32.mrf.mxu0
    %v2470 = vadd.f32 %v296, %v2469
    %v2471 = vpop.f32.mrf.mxu0
    %v2472 = vadd.f32 %v300, %v2471
    %2473 = vdwg.mxu0
    %2474 = vmatprep.subr.mxu0 0.0
    %2475 = vmatpush1.msra.mxu0 0.0
    %2476 = vmatprep.subr.mxu0 0.0
    %2477 = vmatpush1.msra.mxu0 0.0
    %2478 = vmatprep.subr.mxu0 0.0
    %2479 = vmatpush1.msra.mxu0 0.0
    %2480 = vmatprep.subr.mxu0 0.0
    %2481 = vmatpush1.msra.mxu0 0.0
    %2482 = vmatprep.subr.mxu0 0.0
    %2483 = vmatpush1.msra.mxu0 0.0
    %2484 = vmatprep.subr.mxu0 0.0
    %2485 = vmatpush1.msra.mxu0 0.0
    %2486 = vmatprep.subr.mxu0 0.0
    %2487 = vmatpush1.msra.mxu0 0.0
    %2488 = vmatprep.subr.mxu0 0.0
    %2489 = vmatpush1.msra.mxu0 0.0
    %2490 = vmatprep.subr.mxu0 0.0
    %2491 = vmatpush1.msra.mxu0 0.0
    %2492 = vmatprep.subr.mxu0 0.0
    %2493 = vmatpush1.msra.mxu0 0.0
    %2494 = vmatprep.subr.mxu0 0.0
    %2495 = vmatpush1.msra.mxu0 0.0
    %2496 = vmatprep.subr.mxu0 0.0
    %2497 = vmatpush1.msra.mxu0 0.0
    %2498 = vmatprep.subr.mxu0 0.0
    %2499 = vmatpush1.msra.mxu0 0.0
    %2500 = vmatprep.subr.mxu0 0.0
    %2501 = vmatpush1.msra.mxu0 0.0
    %2502 = vmatprep.subr.mxu0 0.0
    %2503 = vmatpush1.msra.mxu0 %v132
    %2504 = vmatprep.subr.mxu0 0.0
    %2505 = vmatpush1.msra.mxu0 %v129
    %2506 = vmatprep.subr.mxu0 0.0
    %2507 = vmatpush2.msra.mxu0 0.0
    %2508 = vmatprep.subr.mxu0 0.0
    %2509 = vmatpush2.msra.mxu0 0.0
    %2510 = vmatprep.subr.mxu0 0.0
    %2511 = vmatpush2.msra.mxu0 0.0
    %2512 = vmatprep.subr.mxu0 0.0
    %2513 = vmatpush2.msra.mxu0 0.0
    %2514 = vmatprep.subr.mxu0 0.0
    %2515 = vmatpush2.msra.mxu0 0.0
    %2516 = vmatprep.subr.mxu0 0.0
    %2517 = vmatpush2.msra.mxu0 0.0
    %2518 = vmatprep.subr.mxu0 0.0
    %2519 = vmatpush2.msra.mxu0 0.0
    %2520 = vmatprep.subr.mxu0 0.0
    %2521 = vmatpush2.msra.mxu0 0.0
    %2522 = vmatprep.subr.mxu0 0.0
    %2523 = vmatpush2.msra.mxu0 0.0
    %2524 = vmatprep.subr.mxu0 0.0
    %2525 = vmatpush2.msra.mxu0 0.0
    %2526 = vmatprep.subr.mxu0 0.0
    %2527 = vmatpush2.msra.mxu0 0.0
    %2528 = vmatprep.subr.mxu0 0.0
    %2529 = vmatpush2.msra.mxu0 0.0
    %2530 = vmatprep.subr.mxu0 0.0
    %2531 = vmatpush2.msra.mxu0 0.0
    %2532 = vmatprep.subr.mxu0 0.0
    %2533 = vmatpush2.msra.mxu0 0.0
    %2534 = vmatprep.subr.mxu0 0.0
    %2535 = vmatpush2.msra.mxu0 0.0
    %2536 = vmatprep.subr.mxu0 0.0
    %2537 = vmatpush2.msra.mxu0 0.0
    %2538 = vmatprep.mubr.f32.mxu0 0.0
    %2539 = vmatmul.mubr.f32.gmra.mxu0 %v2401
    %v2540 = vpop.f32.mrf.mxu0
    %v2541 = vadd.f32 %v304, %v2540
    %v2542 = vpop.f32.mrf.mxu0
    %2543 = vdwg.mxu0
    %v2544 = vmul.f32 %v2470, %v287
    %v2545 = vmul.f32 %v2472, %v2368
    %v2546 = vadd.f32 %v2544, %v2545
    %v2547 = vadd.f32 %v2546, %v2541
    %v2548 = vxor.u32 %v2547, 2147483648
    %v2549 = vmul.f32 %v2548, 1.442695
    %v2550 = vpow.pop %v2549
    %v2551 = vadd.f32 %v2550, 1.0
    %v2552 = vrcp.pop %v2551
    %v2553 = vmul.f32 1.0, %v2552
    %v2554 = vmul.f32 %v2553, 2.0
    %v2555 = vsub.f32 %v2554, 1.0
    %v2556 = vmul.f32 %v2553, %v2282
    %2558 = vrot.lane.b32.xlu0 %v2555, 64
    %v2559 = vpop.permute.xlu0 %2558
    %v2561 = vmul.f32 %v2553, %v2559
    %2563 = vrot.lane.b32.xlu0 %v2561, 32
    %v2564 = vpop.permute.xlu0 %2563
    %v2566 = vadd.f32 %v2556, %v2564
    %v2567 = vtanh.pop %v2566
    %2569 = vrot.lane.b32.xlu0 %v2567, 64
    %v2570 = vpop.permute.xlu0 %2569
    %v2572 = vmul.f32 %v2553, %v2570
    %2574 = vrot.lane.b32.xlu0 %v2572, 32
    %v2575 = vpop.permute.xlu0 %2574
    %2577 = vst.msk [vmem:[#allocation2 + $0x38] sm:$0xff] %vm588, %v2575
    %2578 = vst.msk [vmem:[#allocation13] sm:$0xff] %vm588, %v2575
    %2580 = vrot.lane.b32.xlu0 %v2566, 96
    %v2581 = vpop.permute.xlu0 %2580
    %2583 = vst.msk [vmem:[#allocation15] sm:$0xff] %vm588, %v2581
    %v2584 = vld [vmem:[%s6] sm:$0xff]
    %v2585 = vld [vmem:[%s6 + $0x8] sm:$0xff]
    %v2586 = vld [vmem:[%s6 + $0x10] sm:$0xff]
    %v2587 = vld [vmem:[%s6 + $0x18] sm:$0xff]
    %v2588 = vld [vmem:[%s6 + $0x20] sm:$0xff]
    %v2589 = vld [vmem:[%s6 + $0x28] sm:$0xff]
    %v2590 = vld [vmem:[%s6 + $0x30] sm:$0xff]
    %v2591 = vld [vmem:[%s6 + $0x38] sm:$0xff]
    %v2592 = vld [vmem:[#allocation9] sm:$0xff]
    %v2593 = vld [vmem:[#allocation9 + $0x8] sm:$0xff]
    %v2594 = vld [vmem:[#allocation9 + $0x10] sm:$0xff]
    %v2595 = vld [vmem:[#allocation9 + $0x18] sm:$0xff]
    %v2596 = vld [vmem:[#allocation9 + $0x20] sm:$0xff]
    %v2597 = vld [vmem:[#allocation9 + $0x28] sm:$0xff]
    %v2598 = vld [vmem:[#allocation9 + $0x30] sm:$0xff]
    %v2599 = vld [vmem:[#allocation9 + $0x38] sm:$0xff]
    %v2600 = vld [vmem:[#allocation9 + $0x40] sm:$0xff]
    %v2601 = vld [vmem:[#allocation9 + $0x48] sm:$0xff]
    %v2602 = vld [vmem:[#allocation9 + $0x50] sm:$0xff]
    %v2603 = vld [vmem:[#allocation9 + $0x58] sm:$0xff]
    %v2604 = vld [vmem:[#allocation11] sm:$0xff]
    %v2605 = vld [vmem:[#allocation11 + $0x8] sm:$0xff]
    %v2606 = vld [vmem:[#allocation11 + $0x10] sm:$0xff]
    %v2607 = vld [vmem:[#allocation11 + $0x18] sm:$0xff]
    %v2608 = vld [vmem:[#allocation11 + $0x20] sm:$0xff]
    %v2609 = vld [vmem:[#allocation11 + $0x28] sm:$0xff]
    %v2610 = vld [vmem:[#allocation2] sm:$0xff]
    %v2611 = vld [vmem:[#allocation2 + $0x8] sm:$0xff]
    %v2612 = vld [vmem:[#allocation2 + $0x10] sm:$0xff]
    %v2613 = vld [vmem:[#allocation2 + $0x18] sm:$0xff]
    %v2614 = vld [vmem:[#allocation2 + $0x20] sm:$0xff]
    %v2615 = vld [vmem:[#allocation2 + $0x28] sm:$0xff]
    %v2616 = vld [vmem:[#allocation2 + $0x30] sm:$0xff]
    %v2617 = vld [vmem:[#allocation2 + $0x38] sm:$0xff]
    %v2618 = vld [vmem:[%s10] sm:$0x3]
    %v2620 = vlaneseq
    %v2621 = vshrl.u32 %v2620, 7
    %v2622 = vsub.s32 0, %v2621
    %v2623 = vrot.slane %v2618, %v2622
    %v2624 = vlaneseq
    %v2625 = vshrl.u32 %v2624, 7
    %v2626 = vsub.s32 1, %v2625
    %v2627 = vrot.slane %v2618, %v2626
    %v2631 = vsel %vm588, %v2610, 0
    %v2634 = vsel %vm588, %v2611, 0
    %v2637 = vsel %vm588, %v2612, 0
    %v2640 = vsel %vm588, %v2613, 0
    %v2643 = vsel %vm588, %v2614, 0
    %v2646 = vsel %vm588, %v2615, 0
    %v2649 = vsel %vm588, %v2616, 0
    %v2652 = vsel %vm588, %v2617, 0
    %2654 = vmatprep.subr.mxu0 0.0
    %2655 = vmatpush1.msra.mxu0 0.0
    %2656 = vmatprep.subr.mxu0 0.0
    %2657 = vmatpush1.msra.mxu0 0.0
    %2658 = vmatprep.subr.mxu0 0.0
    %2659 = vmatpush1.msra.mxu0 0.0
    %2660 = vmatprep.subr.mxu0 0.0
    %2661 = vmatpush1.msra.mxu0 0.0
    %2662 = vmatprep.subr.mxu0 0.0
    %2663 = vmatpush1.msra.mxu0 0.0
    %2664 = vmatprep.subr.mxu0 0.0
    %2665 = vmatpush1.msra.mxu0 0.0
    %2666 = vmatprep.subr.mxu0 0.0
    %2667 = vmatpush1.msra.mxu0 0.0
    %2668 = vmatprep.subr.mxu0 0.0
    %2669 = vmatpush1.msra.mxu0 0.0
    %2670 = vmatprep.subr.mxu0 0.0
    %2671 = vmatpush1.msra.mxu0 0.0
    %2672 = vmatprep.subr.mxu0 0.0
    %2673 = vmatpush1.msra.mxu0 0.0
    %2674 = vmatprep.subr.mxu0 0.0
    %2675 = vmatpush1.msra.mxu0 0.0
    %2676 = vmatprep.subr.mxu0 0.0
    %2677 = vmatpush1.msra.mxu0 0.0
    %2678 = vmatprep.subr.mxu0 %v2591
    %2679 = vmatpush1.msra.mxu0 %v2590
    %2680 = vmatprep.subr.mxu0 %v2589
    %2681 = vmatpush1.msra.mxu0 %v2588
    %2682 = vmatprep.subr.mxu0 %v2587
    %2683 = vmatpush1.msra.mxu0 %v2586
    %2684 = vmatprep.subr.mxu0 %v2585
    %2685 = vmatpush1.msra.mxu0 %v2584
    %2686 = vmatprep.subr.mxu0 0.0
    %2687 = vmatpush2.msra.mxu0 0.0
    %2688 = vmatprep.subr.mxu0 0.0
    %2689 = vmatpush2.msra.mxu0 0.0
    %2690 = vmatprep.subr.mxu0 0.0
    %2691 = vmatpush2.msra.mxu0 0.0
    %2692 = vmatprep.subr.mxu0 0.0
    %2693 = vmatpush2.msra.mxu0 0.0
    %2694 = vmatprep.subr.mxu0 0.0
    %2695 = vmatpush2.msra.mxu0 0.0
    %2696 = vmatprep.subr.mxu0 0.0
    %2697 = vmatpush2.msra.mxu0 0.0
    %2698 = vmatprep.subr.mxu0 0.0
    %2699 = vmatpush2.msra.mxu0 0.0
    %2700 = vmatprep.subr.mxu0 0.0
    %2701 = vmatpush2.msra.mxu0 0.0
    %2702 = vmatprep.subr.mxu0 0.0
    %2703 = vmatpush2.msra.mxu0 0.0
    %2704 = vmatprep.subr.mxu0 0.0
    %2705 = vmatpush2.msra.mxu0 0.0
    %2706 = vmatprep.subr.mxu0 0.0
    %2707 = vmatpush2.msra.mxu0 0.0
    %2708 = vmatprep.subr.mxu0 0.0
    %2709 = vmatpush2.msra.mxu0 0.0
    %2710 = vmatprep.subr.mxu0 0.0
    %2711 = vmatpush2.msra.mxu0 0.0
    %2712 = vmatprep.subr.mxu0 0.0
    %2713 = vmatpush2.msra.mxu0 0.0
    %2714 = vmatprep.subr.mxu0 0.0
    %2715 = vmatpush2.msra.mxu0 0.0
    %2716 = vmatprep.subr.mxu0 0.0
    %2717 = vmatpush2.msra.mxu0 0.0
    %2718 = vmatprep.mubr.f32.mxu0 0.0
    %2719 = vmatmul.mubr.f32.gmra.mxu0 %v2631
    %v2720 = vpop.f32.mrf.mxu0
    %v2721 = vadd.f32 %v2623, %v2720
    %v2722 = vpop.f32.mrf.mxu0
    %v2723 = vadd.f32 %v2627, %v2722
    %2724 = vmatprep.mubr.f32.mxu0 0.0
    %2725 = vmatmul.mubr.f32.gmra.mxu0 %v2634
    %v2726 = vpop.f32.mrf.mxu0
    %v2727 = vadd.f32 %v2623, %v2726
    %v2728 = vpop.f32.mrf.mxu0
    %v2729 = vadd.f32 %v2627, %v2728
    %2730 = vmatprep.mubr.f32.mxu0 0.0
    %2731 = vmatmul.mubr.f32.gmra.mxu0 %v2637
    %v2732 = vpop.f32.mrf.mxu0
    %v2733 = vadd.f32 %v2623, %v2732
    %v2734 = vpop.f32.mrf.mxu0
    %v2735 = vadd.f32 %v2627, %v2734
    %2736 = vmatprep.mubr.f32.mxu0 0.0
    %2737 = vmatmul.mubr.f32.gmra.mxu0 %v2640
    %v2738 = vpop.f32.mrf.mxu0
    %v2739 = vadd.f32 %v2623, %v2738
    %v2740 = vpop.f32.mrf.mxu0
    %v2741 = vadd.f32 %v2627, %v2740
    %2742 = vmatprep.mubr.f32.mxu0 0.0
    %2743 = vmatmul.mubr.f32.gmra.mxu0 %v2643
    %v2744 = vpop.f32.mrf.mxu0
    %v2745 = vadd.f32 %v2623, %v2744
    %v2746 = vpop.f32.mrf.mxu0
    %v2747 = vadd.f32 %v2627, %v2746
    %2748 = vmatprep.mubr.f32.mxu0 0.0
    %2749 = vmatmul.mubr.f32.gmra.mxu0 %v2646
    %v2750 = vpop.f32.mrf.mxu0
    %v2751 = vadd.f32 %v2623, %v2750
    %v2752 = vpop.f32.mrf.mxu0
    %v2753 = vadd.f32 %v2627, %v2752
    %2754 = vmatprep.mubr.f32.mxu0 0.0
    %2755 = vmatmul.mubr.f32.gmra.mxu0 %v2649
    %v2756 = vpop.f32.mrf.mxu0
    %v2757 = vadd.f32 %v2623, %v2756
    %v2758 = vpop.f32.mrf.mxu0
    %v2759 = vadd.f32 %v2627, %v2758
    %2760 = vmatprep.mubr.f32.mxu0 0.0
    %2761 = vmatmul.mubr.f32.gmra.mxu0 %v2652
    %v2762 = vpop.f32.mrf.mxu0
    %v2763 = vadd.f32 %v2623, %v2762
    %v2764 = vpop.f32.mrf.mxu0
    %v2765 = vadd.f32 %v2627, %v2764
    %2766 = vdwg.mxu0
    %v2767 = vld [vmem:[%s9] sm:$0x7]
    %v2769 = vlaneseq
    %v2770 = vshrl.u32 %v2769, 7
    %v2771 = vsub.s32 0, %v2770
    %v2772 = vrot.slane %v2767, %v2771
    %v2773 = vlaneseq
    %v2774 = vshrl.u32 %v2773, 7
    %v2775 = vsub.s32 1, %v2774
    %v2776 = vrot.slane %v2767, %v2775
    %v2777 = vlaneseq
    %v2778 = vshrl.u32 %v2777, 7
    %v2779 = vsub.s32 2, %v2778
    %v2780 = vrot.slane %v2767, %v2779
    %2784 = vmatprep.subr.mxu0 0.0
    %2785 = vmatpush1.msra.mxu0 0.0
    %2786 = vmatprep.subr.mxu0 0.0
    %2787 = vmatpush1.msra.mxu0 0.0
    %2788 = vmatprep.subr.mxu0 0.0
    %2789 = vmatpush1.msra.mxu0 0.0
    %2790 = vmatprep.subr.mxu0 0.0
    %2791 = vmatpush1.msra.mxu0 0.0
    %2792 = vmatprep.subr.mxu0 0.0
    %2793 = vmatpush1.msra.mxu0 0.0
    %2794 = vmatprep.subr.mxu0 0.0
    %2795 = vmatpush1.msra.mxu0 0.0
    %2796 = vmatprep.subr.mxu0 0.0
    %2797 = vmatpush1.msra.mxu0 0.0
    %2798 = vmatprep.subr.mxu0 0.0
    %2799 = vmatpush1.msra.mxu0 0.0
    %2800 = vmatprep.subr.mxu0 0.0
    %2801 = vmatpush1.msra.mxu0 0.0
    %2802 = vmatprep.subr.mxu0 0.0
    %2803 = vmatpush1.msra.mxu0 0.0
    %2804 = vmatprep.subr.mxu0 %v2603
    %2805 = vmatpush1.msra.mxu0 %v2602
    %2806 = vmatprep.subr.mxu0 %v2601
    %2807 = vmatpush1.msra.mxu0 %v2600
    %2808 = vmatprep.subr.mxu0 %v2599
    %2809 = vmatpush1.msra.mxu0 %v2598
    %2810 = vmatprep.subr.mxu0 %v2597
    %2811 = vmatpush1.msra.mxu0 %v2596
    %2812 = vmatprep.subr.mxu0 %v2595
    %2813 = vmatpush1.msra.mxu0 %v2594
    %2814 = vmatprep.subr.mxu0 %v2593
    %2815 = vmatpush1.msra.mxu0 %v2592
    %2816 = vmatprep.subr.mxu0 0.0
    %2817 = vmatpush2.msra.mxu0 0.0
    %2818 = vmatprep.subr.mxu0 0.0
    %2819 = vmatpush2.msra.mxu0 0.0
    %2820 = vmatprep.subr.mxu0 0.0
    %2821 = vmatpush2.msra.mxu0 0.0
    %2822 = vmatprep.subr.mxu0 0.0
    %2823 = vmatpush2.msra.mxu0 0.0
    %2824 = vmatprep.subr.mxu0 0.0
    %2825 = vmatpush2.msra.mxu0 0.0
    %2826 = vmatprep.subr.mxu0 0.0
    %2827 = vmatpush2.msra.mxu0 0.0
    %2828 = vmatprep.subr.mxu0 0.0
    %2829 = vmatpush2.msra.mxu0 0.0
    %2830 = vmatprep.subr.mxu0 0.0
    %2831 = vmatpush2.msra.mxu0 0.0
    %2832 = vmatprep.subr.mxu0 0.0
    %2833 = vmatpush2.msra.mxu0 0.0
    %2834 = vmatprep.subr.mxu0 0.0
    %2835 = vmatpush2.msra.mxu0 0.0
    %2836 = vmatprep.subr.mxu0 0.0
    %2837 = vmatpush2.msra.mxu0 0.0
    %2838 = vmatprep.subr.mxu0 0.0
    %2839 = vmatpush2.msra.mxu0 0.0
    %2840 = vmatprep.subr.mxu0 0.0
    %2841 = vmatpush2.msra.mxu0 0.0
    %2842 = vmatprep.subr.mxu0 0.0
    %2843 = vmatpush2.msra.mxu0 0.0
    %2844 = vmatprep.subr.mxu0 0.0
    %2845 = vmatpush2.msra.mxu0 0.0
    %2846 = vmatprep.subr.mxu0 0.0
    %2847 = vmatpush2.msra.mxu0 0.0
    %2848 = vmatprep.mubr.f32.mxu0 0.0
    %2849 = vmatmul.mubr.f32.gmra.mxu0 %v310
    %v2850 = vpop.f32.mrf.mxu0
    %v2851 = vadd.f32 0.0, %v2850
    %v2852 = vpop.f32.mrf.mxu0
    %v2853 = vadd.f32 0.0, %v2852
    %2854 = vdwg.mxu0
    %v2855 = vadd.f32 %v2723, %v2853
    %v2856 = vxor.u32 %v2855, 2147483648
    %v2857 = vmul.f32 %v2856, 1.442695
    %v2858 = vpow.pop %v2857
    %v2859 = vadd.f32 %v2858, 1.0
    %v2860 = vrcp.pop %v2859
    %v2861 = vmul.f32 1.0, %v2860
    %v2862 = vmul.f32 %v2861, 2.0
    %v2863 = vsub.f32 %v2862, 1.0
    %v2864 = vmul.f32 %v2861, 0.0
    %2866 = vrot.lane.b32.xlu0 %v2863, 96
    %v2867 = vpop.permute.xlu0 %2866
    %v2869 = vmul.f32 %v2861, %v2867
    %2871 = vrot.lane.b32.xlu0 %v2869, 16
    %v2872 = vpop.permute.xlu0 %2871
    %v2874 = vadd.f32 %v2864, %v2872
    %v2875 = vtanh.pop %v2874
    %2877 = vrot.lane.b32.xlu0 %v2875, 32
    %v2878 = vpop.permute.xlu0 %2877
    %v2880 = vmul.f32 %v2861, %v2878
    %2882 = vrot.lane.b32.xlu0 %v2880, 80
    %v2883 = vpop.permute.xlu0 %2882
    %v2884 = vsel %vm153, %v2883, 0
    %2886 = vmatprep.subr.mxu0 0.0
    %2887 = vmatpush1.msra.mxu0 0.0
    %2888 = vmatprep.subr.mxu0 0.0
    %2889 = vmatpush1.msra.mxu0 0.0
    %2890 = vmatprep.subr.mxu0 0.0
    %2891 = vmatpush1.msra.mxu0 0.0
    %2892 = vmatprep.subr.mxu0 0.0
    %2893 = vmatpush1.msra.mxu0 0.0
    %2894 = vmatprep.subr.mxu0 0.0
    %2895 = vmatpush1.msra.mxu0 0.0
    %2896 = vmatprep.subr.mxu0 0.0
    %2897 = vmatpush1.msra.mxu0 0.0
    %2898 = vmatprep.subr.mxu0 0.0
    %2899 = vmatpush1.msra.mxu0 0.0
    %2900 = vmatprep.subr.mxu0 0.0
    %2901 = vmatpush1.msra.mxu0 0.0
    %2902 = vmatprep.subr.mxu0 0.0
    %2903 = vmatpush1.msra.mxu0 0.0
    %2904 = vmatprep.subr.mxu0 0.0
    %2905 = vmatpush1.msra.mxu0 0.0
    %2906 = vmatprep.subr.mxu0 0.0
    %2907 = vmatpush1.msra.mxu0 0.0
    %2908 = vmatprep.subr.mxu0 0.0
    %2909 = vmatpush1.msra.mxu0 0.0
    %2910 = vmatprep.subr.mxu0 0.0
    %2911 = vmatpush1.msra.mxu0 0.0
    %2912 = vmatprep.subr.mxu0 0.0
    %2913 = vmatpush1.msra.mxu0 0.0
    %2914 = vmatprep.subr.mxu0 %v2608
    %2915 = vmatpush1.msra.mxu0 %v2607
    %2916 = vmatprep.subr.mxu0 %v2605
    %2917 = vmatpush1.msra.mxu0 %v2604
    %2918 = vmatprep.subr.mxu0 0.0
    %2919 = vmatpush2.msra.mxu0 0.0
    %2920 = vmatprep.subr.mxu0 0.0
    %2921 = vmatpush2.msra.mxu0 0.0
    %2922 = vmatprep.subr.mxu0 0.0
    %2923 = vmatpush2.msra.mxu0 0.0
    %2924 = vmatprep.subr.mxu0 0.0
    %2925 = vmatpush2.msra.mxu0 0.0
    %2926 = vmatprep.subr.mxu0 0.0
    %2927 = vmatpush2.msra.mxu0 0.0
    %2928 = vmatprep.subr.mxu0 0.0
    %2929 = vmatpush2.msra.mxu0 0.0
    %2930 = vmatprep.subr.mxu0 0.0
    %2931 = vmatpush2.msra.mxu0 0.0
    %2932 = vmatprep.subr.mxu0 0.0
    %2933 = vmatpush2.msra.mxu0 0.0
    %2934 = vmatprep.subr.mxu0 0.0
    %2935 = vmatpush2.msra.mxu0 0.0
    %2936 = vmatprep.subr.mxu0 0.0
    %2937 = vmatpush2.msra.mxu0 0.0
    %2938 = vmatprep.subr.mxu0 0.0
    %2939 = vmatpush2.msra.mxu0 0.0
    %2940 = vmatprep.subr.mxu0 0.0
    %2941 = vmatpush2.msra.mxu0 0.0
    %2942 = vmatprep.subr.mxu0 0.0
    %2943 = vmatpush2.msra.mxu0 0.0
    %2944 = vmatprep.subr.mxu0 0.0
    %2945 = vmatpush2.msra.mxu0 0.0
    %2946 = vmatprep.subr.mxu0 0.0
    %2947 = vmatpush2.msra.mxu0 0.0
    %2948 = vmatprep.subr.mxu0 0.0
    %2949 = vmatpush2.msra.mxu0 0.0
    %2950 = vmatprep.mubr.f32.mxu0 0.0
    %2951 = vmatmul.mubr.f32.gmra.mxu0 %v2884
    %v2952 = vpop.f32.mrf.mxu0
    %v2953 = vadd.f32 %v2772, %v2952
    %v2954 = vpop.f32.mrf.mxu0
    %v2955 = vadd.f32 %v2776, %v2954
    %2956 = vdwg.mxu0
    %2957 = vmatprep.subr.mxu0 0.0
    %2958 = vmatpush1.msra.mxu0 0.0
    %2959 = vmatprep.subr.mxu0 0.0
    %2960 = vmatpush1.msra.mxu0 0.0
    %2961 = vmatprep.subr.mxu0 0.0
    %2962 = vmatpush1.msra.mxu0 0.0
    %2963 = vmatprep.subr.mxu0 0.0
    %2964 = vmatpush1.msra.mxu0 0.0
    %2965 = vmatprep.subr.mxu0 0.0
    %2966 = vmatpush1.msra.mxu0 0.0
    %2967 = vmatprep.subr.mxu0 0.0
    %2968 = vmatpush1.msra.mxu0 0.0
    %2969 = vmatprep.subr.mxu0 0.0
    %2970 = vmatpush1.msra.mxu0 0.0
    %2971 = vmatprep.subr.mxu0 0.0
    %2972 = vmatpush1.msra.mxu0 0.0
    %2973 = vmatprep.subr.mxu0 0.0
    %2974 = vmatpush1.msra.mxu0 0.0
    %2975 = vmatprep.subr.mxu0 0.0
    %2976 = vmatpush1.msra.mxu0 0.0
    %2977 = vmatprep.subr.mxu0 0.0
    %2978 = vmatpush1.msra.mxu0 0.0
    %2979 = vmatprep.subr.mxu0 0.0
    %2980 = vmatpush1.msra.mxu0 0.0
    %2981 = vmatprep.subr.mxu0 0.0
    %2982 = vmatpush1.msra.mxu0 0.0
    %2983 = vmatprep.subr.mxu0 0.0
    %2984 = vmatpush1.msra.mxu0 0.0
    %2985 = vmatprep.subr.mxu0 0.0
    %2986 = vmatpush1.msra.mxu0 %v2609
    %2987 = vmatprep.subr.mxu0 0.0
    %2988 = vmatpush1.msra.mxu0 %v2606
    %2989 = vmatprep.subr.mxu0 0.0
    %2990 = vmatpush2.msra.mxu0 0.0
    %2991 = vmatprep.subr.mxu0 0.0
    %2992 = vmatpush2.msra.mxu0 0.0
    %2993 = vmatprep.subr.mxu0 0.0
    %2994 = vmatpush2.msra.mxu0 0.0
    %2995 = vmatprep.subr.mxu0 0.0
    %2996 = vmatpush2.msra.mxu0 0.0
    %2997 = vmatprep.subr.mxu0 0.0
    %2998 = vmatpush2.msra.mxu0 0.0
    %2999 = vmatprep.subr.mxu0 0.0
    %3000 = vmatpush2.msra.mxu0 0.0
    %3001 = vmatprep.subr.mxu0 0.0
    %3002 = vmatpush2.msra.mxu0 0.0
    %3003 = vmatprep.subr.mxu0 0.0
    %3004 = vmatpush2.msra.mxu0 0.0
    %3005 = vmatprep.subr.mxu0 0.0
    %3006 = vmatpush2.msra.mxu0 0.0
    %3007 = vmatprep.subr.mxu0 0.0
    %3008 = vmatpush2.msra.mxu0 0.0
    %3009 = vmatprep.subr.mxu0 0.0
    %3010 = vmatpush2.msra.mxu0 0.0
    %3011 = vmatprep.subr.mxu0 0.0
    %3012 = vmatpush2.msra.mxu0 0.0
    %3013 = vmatprep.subr.mxu0 0.0
    %3014 = vmatpush2.msra.mxu0 0.0
    %3015 = vmatprep.subr.mxu0 0.0
    %3016 = vmatpush2.msra.mxu0 0.0
    %3017 = vmatprep.subr.mxu0 0.0
    %3018 = vmatpush2.msra.mxu0 0.0
    %3019 = vmatprep.subr.mxu0 0.0
    %3020 = vmatpush2.msra.mxu0 0.0
    %3021 = vmatprep.mubr.f32.mxu0 0.0
    %3022 = vmatmul.mubr.f32.gmra.mxu0 %v2884
    %v3023 = vpop.f32.mrf.mxu0
    %v3024 = vadd.f32 %v2780, %v3023
    %v3025 = vpop.f32.mrf.mxu0
    %3026 = vdwg.mxu0
    %v3027 = vmul.f32 %v2953, %v2721
    %v3028 = vmul.f32 %v2955, %v2851
    %v3029 = vadd.f32 %v3027, %v3028
    %v3030 = vadd.f32 %v3029, %v3024
    %v3031 = vxor.u32 %v3030, 2147483648
    %v3032 = vmul.f32 %v3031, 1.442695
    %v3033 = vpow.pop %v3032
    %v3034 = vadd.f32 %v3033, 1.0
    %v3035 = vrcp.pop %v3034
    %v3036 = vmul.f32 1.0, %v3035
    %v3037 = vmul.f32 %v3036, 2.0
    %v3038 = vsub.f32 %v3037, 1.0
    %v3039 = vmul.f32 %v3036, 0.0
    %3041 = vrot.lane.b32.xlu0 %v3038, 64
    %v3042 = vpop.permute.xlu0 %3041
    %v3044 = vmul.f32 %v3036, %v3042
    %3046 = vrot.lane.b32.xlu0 %v3044, 32
    %v3047 = vpop.permute.xlu0 %3046
    %v3049 = vadd.f32 %v3039, %v3047
    %v3050 = vtanh.pop %v3049
    %3052 = vrot.lane.b32.xlu0 %v3050, 64
    %v3053 = vpop.permute.xlu0 %3052
    %v3055 = vmul.f32 %v3036, %v3053
    %3057 = vrot.lane.b32.xlu0 %v3055, 32
    %v3058 = vpop.permute.xlu0 %3057
    %3060 = vst.msk [vmem:[#allocation12] sm:$0xff] %vm588, %v3058
    %3061 = vrot.lane.b32.xlu0 %v2880, 112
    %v3062 = vpop.permute.xlu0 %3061
    %v3064 = vsel %vm588, %v3058, %v3062
    %v3066 = vsel %vm308, %v3064, 0
    %3068 = vmatprep.subr.mxu0 0.0
    %3069 = vmatpush1.msra.mxu0 0.0
    %3070 = vmatprep.subr.mxu0 0.0
    %3071 = vmatpush1.msra.mxu0 0.0
    %3072 = vmatprep.subr.mxu0 0.0
    %3073 = vmatpush1.msra.mxu0 0.0
    %3074 = vmatprep.subr.mxu0 0.0
    %3075 = vmatpush1.msra.mxu0 0.0
    %3076 = vmatprep.subr.mxu0 0.0
    %3077 = vmatpush1.msra.mxu0 0.0
    %3078 = vmatprep.subr.mxu0 0.0
    %3079 = vmatpush1.msra.mxu0 0.0
    %3080 = vmatprep.subr.mxu0 0.0
    %3081 = vmatpush1.msra.mxu0 0.0
    %3082 = vmatprep.subr.mxu0 0.0
    %3083 = vmatpush1.msra.mxu0 0.0
    %3084 = vmatprep.subr.mxu0 0.0
    %3085 = vmatpush1.msra.mxu0 0.0
    %3086 = vmatprep.subr.mxu0 0.0
    %3087 = vmatpush1.msra.mxu0 0.0
    %3088 = vmatprep.subr.mxu0 %v2603
    %3089 = vmatpush1.msra.mxu0 %v2602
    %3090 = vmatprep.subr.mxu0 %v2601
    %3091 = vmatpush1.msra.mxu0 %v2600
    %3092 = vmatprep.subr.mxu0 %v2599
    %3093 = vmatpush1.msra.mxu0 %v2598
    %3094 = vmatprep.subr.mxu0 %v2597
    %3095 = vmatpush1.msra.mxu0 %v2596
    %3096 = vmatprep.subr.mxu0 %v2595
    %3097 = vmatpush1.msra.mxu0 %v2594
    %3098 = vmatprep.subr.mxu0 %v2593
    %3099 = vmatpush1.msra.mxu0 %v2592
    %3100 = vmatprep.subr.mxu0 0.0
    %3101 = vmatpush2.msra.mxu0 0.0
    %3102 = vmatprep.subr.mxu0 0.0
    %3103 = vmatpush2.msra.mxu0 0.0
    %3104 = vmatprep.subr.mxu0 0.0
    %3105 = vmatpush2.msra.mxu0 0.0
    %3106 = vmatprep.subr.mxu0 0.0
    %3107 = vmatpush2.msra.mxu0 0.0
    %3108 = vmatprep.subr.mxu0 0.0
    %3109 = vmatpush2.msra.mxu0 0.0
    %3110 = vmatprep.subr.mxu0 0.0
    %3111 = vmatpush2.msra.mxu0 0.0
    %3112 = vmatprep.subr.mxu0 0.0
    %3113 = vmatpush2.msra.mxu0 0.0
    %3114 = vmatprep.subr.mxu0 0.0
    %3115 = vmatpush2.msra.mxu0 0.0
    %3116 = vmatprep.subr.mxu0 0.0
    %3117 = vmatpush2.msra.mxu0 0.0
    %3118 = vmatprep.subr.mxu0 0.0
    %3119 = vmatpush2.msra.mxu0 0.0
    %3120 = vmatprep.subr.mxu0 0.0
    %3121 = vmatpush2.msra.mxu0 0.0
    %3122 = vmatprep.subr.mxu0 0.0
    %3123 = vmatpush2.msra.mxu0 0.0
    %3124 = vmatprep.subr.mxu0 0.0
    %3125 = vmatpush2.msra.mxu0 0.0
    %3126 = vmatprep.subr.mxu0 0.0
    %3127 = vmatpush2.msra.mxu0 0.0
    %3128 = vmatprep.subr.mxu0 0.0
    %3129 = vmatpush2.msra.mxu0 0.0
    %3130 = vmatprep.subr.mxu0 0.0
    %3131 = vmatpush2.msra.mxu0 0.0
    %3132 = vmatprep.mubr.f32.mxu0 0.0
    %3133 = vmatmul.mubr.f32.gmra.mxu0 %v3066
    %v3134 = vpop.f32.mrf.mxu0
    %v3135 = vadd.f32 0.0, %v3134
    %v3136 = vpop.f32.mrf.mxu0
    %v3137 = vadd.f32 0.0, %v3136
    %3138 = vdwg.mxu0
    %v3139 = vadd.f32 %v2729, %v3137
    %v3140 = vxor.u32 %v3139, 2147483648
    %v3141 = vmul.f32 %v3140, 1.442695
    %v3142 = vpow.pop %v3141
    %v3143 = vadd.f32 %v3142, 1.0
    %v3144 = vrcp.pop %v3143
    %v3145 = vmul.f32 1.0, %v3144
    %v3146 = vmul.f32 %v3145, 2.0
    %v3147 = vsub.f32 %v3146, 1.0
    %v3148 = vmul.f32 %v3145, %v2874
    %3150 = vrot.lane.b32.xlu0 %v3147, 96
    %v3151 = vpop.permute.xlu0 %3150
    %v3153 = vmul.f32 %v3145, %v3151
    %3155 = vrot.lane.b32.xlu0 %v3153, 16
    %v3156 = vpop.permute.xlu0 %3155
    %v3158 = vadd.f32 %v3148, %v3156
    %v3159 = vtanh.pop %v3158
    %3161 = vrot.lane.b32.xlu0 %v3159, 32
    %v3162 = vpop.permute.xlu0 %3161
    %v3164 = vmul.f32 %v3145, %v3162
    %3166 = vrot.lane.b32.xlu0 %v3164, 80
    %v3167 = vpop.permute.xlu0 %3166
    %v3168 = vsel %vm153, %v3167, 0
    %3170 = vmatprep.subr.mxu0 0.0
    %3171 = vmatpush1.msra.mxu0 0.0
    %3172 = vmatprep.subr.mxu0 0.0
    %3173 = vmatpush1.msra.mxu0 0.0
    %3174 = vmatprep.subr.mxu0 0.0
    %3175 = vmatpush1.msra.mxu0 0.0
    %3176 = vmatprep.subr.mxu0 0.0
    %3177 = vmatpush1.msra.mxu0 0.0
    %3178 = vmatprep.subr.mxu0 0.0
    %3179 = vmatpush1.msra.mxu0 0.0
    %3180 = vmatprep.subr.mxu0 0.0
    %3181 = vmatpush1.msra.mxu0 0.0
    %3182 = vmatprep.subr.mxu0 0.0
    %3183 = vmatpush1.msra.mxu0 0.0
    %3184 = vmatprep.subr.mxu0 0.0
    %3185 = vmatpush1.msra.mxu0 0.0
    %3186 = vmatprep.subr.mxu0 0.0
    %3187 = vmatpush1.msra.mxu0 0.0
    %3188 = vmatprep.subr.mxu0 0.0
    %3189 = vmatpush1.msra.mxu0 0.0
    %3190 = vmatprep.subr.mxu0 0.0
    %3191 = vmatpush1.msra.mxu0 0.0
    %3192 = vmatprep.subr.mxu0 0.0
    %3193 = vmatpush1.msra.mxu0 0.0
    %3194 = vmatprep.subr.mxu0 0.0
    %3195 = vmatpush1.msra.mxu0 0.0
    %3196 = vmatprep.subr.mxu0 0.0
    %3197 = vmatpush1.msra.mxu0 0.0
    %3198 = vmatprep.subr.mxu0 %v2608
    %3199 = vmatpush1.msra.mxu0 %v2607
    %3200 = vmatprep.subr.mxu0 %v2605
    %3201 = vmatpush1.msra.mxu0 %v2604
    %3202 = vmatprep.subr.mxu0 0.0
    %3203 = vmatpush2.msra.mxu0 0.0
    %3204 = vmatprep.subr.mxu0 0.0
    %3205 = vmatpush2.msra.mxu0 0.0
    %3206 = vmatprep.subr.mxu0 0.0
    %3207 = vmatpush2.msra.mxu0 0.0
    %3208 = vmatprep.subr.mxu0 0.0
    %3209 = vmatpush2.msra.mxu0 0.0
    %3210 = vmatprep.subr.mxu0 0.0
    %3211 = vmatpush2.msra.mxu0 0.0
    %3212 = vmatprep.subr.mxu0 0.0
    %3213 = vmatpush2.msra.mxu0 0.0
    %3214 = vmatprep.subr.mxu0 0.0
    %3215 = vmatpush2.msra.mxu0 0.0
    %3216 = vmatprep.subr.mxu0 0.0
    %3217 = vmatpush2.msra.mxu0 0.0
    %3218 = vmatprep.subr.mxu0 0.0
    %3219 = vmatpush2.msra.mxu0 0.0
    %3220 = vmatprep.subr.mxu0 0.0
    %3221 = vmatpush2.msra.mxu0 0.0
    %3222 = vmatprep.subr.mxu0 0.0
    %3223 = vmatpush2.msra.mxu0 0.0
    %3224 = vmatprep.subr.mxu0 0.0
    %3225 = vmatpush2.msra.mxu0 0.0
    %3226 = vmatprep.subr.mxu0 0.0
    %3227 = vmatpush2.msra.mxu0 0.0
    %3228 = vmatprep.subr.mxu0 0.0
    %3229 = vmatpush2.msra.mxu0 0.0
    %3230 = vmatprep.subr.mxu0 0.0
    %3231 = vmatpush2.msra.mxu0 0.0
    %3232 = vmatprep.subr.mxu0 0.0
    %3233 = vmatpush2.msra.mxu0 0.0
    %3234 = vmatprep.mubr.f32.mxu0 0.0
    %3235 = vmatmul.mubr.f32.gmra.mxu0 %v3168
    %v3236 = vpop.f32.mrf.mxu0
    %v3237 = vadd.f32 %v2772, %v3236
    %v3238 = vpop.f32.mrf.mxu0
    %v3239 = vadd.f32 %v2776, %v3238
    %3240 = vdwg.mxu0
    %3241 = vmatprep.subr.mxu0 0.0
    %3242 = vmatpush1.msra.mxu0 0.0
    %3243 = vmatprep.subr.mxu0 0.0
    %3244 = vmatpush1.msra.mxu0 0.0
    %3245 = vmatprep.subr.mxu0 0.0
    %3246 = vmatpush1.msra.mxu0 0.0
    %3247 = vmatprep.subr.mxu0 0.0
    %3248 = vmatpush1.msra.mxu0 0.0
    %3249 = vmatprep.subr.mxu0 0.0
    %3250 = vmatpush1.msra.mxu0 0.0
    %3251 = vmatprep.subr.mxu0 0.0
    %3252 = vmatpush1.msra.mxu0 0.0
    %3253 = vmatprep.subr.mxu0 0.0
    %3254 = vmatpush1.msra.mxu0 0.0
    %3255 = vmatprep.subr.mxu0 0.0
    %3256 = vmatpush1.msra.mxu0 0.0
    %3257 = vmatprep.subr.mxu0 0.0
    %3258 = vmatpush1.msra.mxu0 0.0
    %3259 = vmatprep.subr.mxu0 0.0
    %3260 = vmatpush1.msra.mxu0 0.0
    %3261 = vmatprep.subr.mxu0 0.0
    %3262 = vmatpush1.msra.mxu0 0.0
    %3263 = vmatprep.subr.mxu0 0.0
    %3264 = vmatpush1.msra.mxu0 0.0
    %3265 = vmatprep.subr.mxu0 0.0
    %3266 = vmatpush1.msra.mxu0 0.0
    %3267 = vmatprep.subr.mxu0 0.0
    %3268 = vmatpush1.msra.mxu0 0.0
    %3269 = vmatprep.subr.mxu0 0.0
    %3270 = vmatpush1.msra.mxu0 %v2609
    %3271 = vmatprep.subr.mxu0 0.0
    %3272 = vmatpush1.msra.mxu0 %v2606
    %3273 = vmatprep.subr.mxu0 0.0
    %3274 = vmatpush2.msra.mxu0 0.0
    %3275 = vmatprep.subr.mxu0 0.0
    %3276 = vmatpush2.msra.mxu0 0.0
    %3277 = vmatprep.subr.mxu0 0.0
    %3278 = vmatpush2.msra.mxu0 0.0
    %3279 = vmatprep.subr.mxu0 0.0
    %3280 = vmatpush2.msra.mxu0 0.0
    %3281 = vmatprep.subr.mxu0 0.0
    %3282 = vmatpush2.msra.mxu0 0.0
    %3283 = vmatprep.subr.mxu0 0.0
    %3284 = vmatpush2.msra.mxu0 0.0
    %3285 = vmatprep.subr.mxu0 0.0
    %3286 = vmatpush2.msra.mxu0 0.0
    %3287 = vmatprep.subr.mxu0 0.0
    %3288 = vmatpush2.msra.mxu0 0.0
    %3289 = vmatprep.subr.mxu0 0.0
    %3290 = vmatpush2.msra.mxu0 0.0
    %3291 = vmatprep.subr.mxu0 0.0
    %3292 = vmatpush2.msra.mxu0 0.0
    %3293 = vmatprep.subr.mxu0 0.0
    %3294 = vmatpush2.msra.mxu0 0.0
    %3295 = vmatprep.subr.mxu0 0.0
    %3296 = vmatpush2.msra.mxu0 0.0
    %3297 = vmatprep.subr.mxu0 0.0
    %3298 = vmatpush2.msra.mxu0 0.0
    %3299 = vmatprep.subr.mxu0 0.0
    %3300 = vmatpush2.msra.mxu0 0.0
    %3301 = vmatprep.subr.mxu0 0.0
    %3302 = vmatpush2.msra.mxu0 0.0
    %3303 = vmatprep.subr.mxu0 0.0
    %3304 = vmatpush2.msra.mxu0 0.0
    %3305 = vmatprep.mubr.f32.mxu0 0.0
    %3306 = vmatmul.mubr.f32.gmra.mxu0 %v3168
    %v3307 = vpop.f32.mrf.mxu0
    %v3308 = vadd.f32 %v2780, %v3307
    %v3309 = vpop.f32.mrf.mxu0
    %3310 = vdwg.mxu0
    %v3311 = vmul.f32 %v3237, %v2727
    %v3312 = vmul.f32 %v3239, %v3135
    %v3313 = vadd.f32 %v3311, %v3312
    %v3314 = vadd.f32 %v3313, %v3308
    %v3315 = vxor.u32 %v3314, 2147483648
    %v3316 = vmul.f32 %v3315, 1.442695
    %v3317 = vpow.pop %v3316
    %v3318 = vadd.f32 %v3317, 1.0
    %v3319 = vrcp.pop %v3318
    %v3320 = vmul.f32 1.0, %v3319
    %v3321 = vmul.f32 %v3320, 2.0
    %v3322 = vsub.f32 %v3321, 1.0
    %v3323 = vmul.f32 %v3320, %v3049
    %3325 = vrot.lane.b32.xlu0 %v3322, 64
    %v3326 = vpop.permute.xlu0 %3325
    %v3328 = vmul.f32 %v3320, %v3326
    %3330 = vrot.lane.b32.xlu0 %v3328, 32
    %v3331 = vpop.permute.xlu0 %3330
    %v3333 = vadd.f32 %v3323, %v3331
    %v3334 = vtanh.pop %v3333
    %3336 = vrot.lane.b32.xlu0 %v3334, 64
    %v3337 = vpop.permute.xlu0 %3336
    %v3339 = vmul.f32 %v3320, %v3337
    %3341 = vrot.lane.b32.xlu0 %v3339, 32
    %v3342 = vpop.permute.xlu0 %3341
    %s3344 = scalar_lea.vmem [#allocation12], 8
    %3345 = vst.msk [vmem:[%s3344] sm:$0xff] %vm588, %v3342
    %3346 = vrot.lane.b32.xlu0 %v3164, 112
    %v3347 = vpop.permute.xlu0 %3346
    %v3349 = vsel %vm588, %v3342, %v3347
    %v3351 = vsel %vm308, %v3349, 0
    %3353 = vmatprep.subr.mxu0 0.0
    %3354 = vmatpush1.msra.mxu0 0.0
    %3355 = vmatprep.subr.mxu0 0.0
    %3356 = vmatpush1.msra.mxu0 0.0
    %3357 = vmatprep.subr.mxu0 0.0
    %3358 = vmatpush1.msra.mxu0 0.0
    %3359 = vmatprep.subr.mxu0 0.0
    %3360 = vmatpush1.msra.mxu0 0.0
    %3361 = vmatprep.subr.mxu0 0.0
    %3362 = vmatpush1.msra.mxu0 0.0
    %3363 = vmatprep.subr.mxu0 0.0
    %3364 = vmatpush1.msra.mxu0 0.0
    %3365 = vmatprep.subr.mxu0 0.0
    %3366 = vmatpush1.msra.mxu0 0.0
    %3367 = vmatprep.subr.mxu0 0.0
    %3368 = vmatpush1.msra.mxu0 0.0
    %3369 = vmatprep.subr.mxu0 0.0
    %3370 = vmatpush1.msra.mxu0 0.0
    %3371 = vmatprep.subr.mxu0 0.0
    %3372 = vmatpush1.msra.mxu0 0.0
    %3373 = vmatprep.subr.mxu0 %v2603
    %3374 = vmatpush1.msra.mxu0 %v2602
    %3375 = vmatprep.subr.mxu0 %v2601
    %3376 = vmatpush1.msra.mxu0 %v2600
    %3377 = vmatprep.subr.mxu0 %v2599
    %3378 = vmatpush1.msra.mxu0 %v2598
    %3379 = vmatprep.subr.mxu0 %v2597
    %3380 = vmatpush1.msra.mxu0 %v2596
    %3381 = vmatprep.subr.mxu0 %v2595
    %3382 = vmatpush1.msra.mxu0 %v2594
    %3383 = vmatprep.subr.mxu0 %v2593
    %3384 = vmatpush1.msra.mxu0 %v2592
    %3385 = vmatprep.subr.mxu0 0.0
    %3386 = vmatpush2.msra.mxu0 0.0
    %3387 = vmatprep.subr.mxu0 0.0
    %3388 = vmatpush2.msra.mxu0 0.0
    %3389 = vmatprep.subr.mxu0 0.0
    %3390 = vmatpush2.msra.mxu0 0.0
    %3391 = vmatprep.subr.mxu0 0.0
    %3392 = vmatpush2.msra.mxu0 0.0
    %3393 = vmatprep.subr.mxu0 0.0
    %3394 = vmatpush2.msra.mxu0 0.0
    %3395 = vmatprep.subr.mxu0 0.0
    %3396 = vmatpush2.msra.mxu0 0.0
    %3397 = vmatprep.subr.mxu0 0.0
    %3398 = vmatpush2.msra.mxu0 0.0
    %3399 = vmatprep.subr.mxu0 0.0
    %3400 = vmatpush2.msra.mxu0 0.0
    %3401 = vmatprep.subr.mxu0 0.0
    %3402 = vmatpush2.msra.mxu0 0.0
    %3403 = vmatprep.subr.mxu0 0.0
    %3404 = vmatpush2.msra.mxu0 0.0
    %3405 = vmatprep.subr.mxu0 0.0
    %3406 = vmatpush2.msra.mxu0 0.0
    %3407 = vmatprep.subr.mxu0 0.0
    %3408 = vmatpush2.msra.mxu0 0.0
    %3409 = vmatprep.subr.mxu0 0.0
    %3410 = vmatpush2.msra.mxu0 0.0
    %3411 = vmatprep.subr.mxu0 0.0
    %3412 = vmatpush2.msra.mxu0 0.0
    %3413 = vmatprep.subr.mxu0 0.0
    %3414 = vmatpush2.msra.mxu0 0.0
    %3415 = vmatprep.subr.mxu0 0.0
    %3416 = vmatpush2.msra.mxu0 0.0
    %3417 = vmatprep.mubr.f32.mxu0 0.0
    %3418 = vmatmul.mubr.f32.gmra.mxu0 %v3351
    %v3419 = vpop.f32.mrf.mxu0
    %v3420 = vadd.f32 0.0, %v3419
    %v3421 = vpop.f32.mrf.mxu0
    %v3422 = vadd.f32 0.0, %v3421
    %3423 = vdwg.mxu0
    %v3424 = vadd.f32 %v2735, %v3422
    %v3425 = vxor.u32 %v3424, 2147483648
    %v3426 = vmul.f32 %v3425, 1.442695
    %v3427 = vpow.pop %v3426
    %v3428 = vadd.f32 %v3427, 1.0
    %v3429 = vrcp.pop %v3428
    %v3430 = vmul.f32 1.0, %v3429
    %v3431 = vmul.f32 %v3430, 2.0
    %v3432 = vsub.f32 %v3431, 1.0
    %v3433 = vmul.f32 %v3430, %v3158
    %3435 = vrot.lane.b32.xlu0 %v3432, 96
    %v3436 = vpop.permute.xlu0 %3435
    %v3438 = vmul.f32 %v3430, %v3436
    %3440 = vrot.lane.b32.xlu0 %v3438, 16
    %v3441 = vpop.permute.xlu0 %3440
    %v3443 = vadd.f32 %v3433, %v3441
    %v3444 = vtanh.pop %v3443
    %3446 = vrot.lane.b32.xlu0 %v3444, 32
    %v3447 = vpop.permute.xlu0 %3446
    %v3449 = vmul.f32 %v3430, %v3447
    %3451 = vrot.lane.b32.xlu0 %v3449, 80
    %v3452 = vpop.permute.xlu0 %3451
    %v3453 = vsel %vm153, %v3452, 0
    %3455 = vmatprep.subr.mxu0 0.0
    %3456 = vmatpush1.msra.mxu0 0.0
    %3457 = vmatprep.subr.mxu0 0.0
    %3458 = vmatpush1.msra.mxu0 0.0
    %3459 = vmatprep.subr.mxu0 0.0
    %3460 = vmatpush1.msra.mxu0 0.0
    %3461 = vmatprep.subr.mxu0 0.0
    %3462 = vmatpush1.msra.mxu0 0.0
    %3463 = vmatprep.subr.mxu0 0.0
    %3464 = vmatpush1.msra.mxu0 0.0
    %3465 = vmatprep.subr.mxu0 0.0
    %3466 = vmatpush1.msra.mxu0 0.0
    %3467 = vmatprep.subr.mxu0 0.0
    %3468 = vmatpush1.msra.mxu0 0.0
    %3469 = vmatprep.subr.mxu0 0.0
    %3470 = vmatpush1.msra.mxu0 0.0
    %3471 = vmatprep.subr.mxu0 0.0
    %3472 = vmatpush1.msra.mxu0 0.0
    %3473 = vmatprep.subr.mxu0 0.0
    %3474 = vmatpush1.msra.mxu0 0.0
    %3475 = vmatprep.subr.mxu0 0.0
    %3476 = vmatpush1.msra.mxu0 0.0
    %3477 = vmatprep.subr.mxu0 0.0
    %3478 = vmatpush1.msra.mxu0 0.0
    %3479 = vmatprep.subr.mxu0 0.0
    %3480 = vmatpush1.msra.mxu0 0.0
    %3481 = vmatprep.subr.mxu0 0.0
    %3482 = vmatpush1.msra.mxu0 0.0
    %3483 = vmatprep.subr.mxu0 %v2608
    %3484 = vmatpush1.msra.mxu0 %v2607
    %3485 = vmatprep.subr.mxu0 %v2605
    %3486 = vmatpush1.msra.mxu0 %v2604
    %3487 = vmatprep.subr.mxu0 0.0
    %3488 = vmatpush2.msra.mxu0 0.0
    %3489 = vmatprep.subr.mxu0 0.0
    %3490 = vmatpush2.msra.mxu0 0.0
    %3491 = vmatprep.subr.mxu0 0.0
    %3492 = vmatpush2.msra.mxu0 0.0
    %3493 = vmatprep.subr.mxu0 0.0
    %3494 = vmatpush2.msra.mxu0 0.0
    %3495 = vmatprep.subr.mxu0 0.0
    %3496 = vmatpush2.msra.mxu0 0.0
    %3497 = vmatprep.subr.mxu0 0.0
    %3498 = vmatpush2.msra.mxu0 0.0
    %3499 = vmatprep.subr.mxu0 0.0
    %3500 = vmatpush2.msra.mxu0 0.0
    %3501 = vmatprep.subr.mxu0 0.0
    %3502 = vmatpush2.msra.mxu0 0.0
    %3503 = vmatprep.subr.mxu0 0.0
    %3504 = vmatpush2.msra.mxu0 0.0
    %3505 = vmatprep.subr.mxu0 0.0
    %3506 = vmatpush2.msra.mxu0 0.0
    %3507 = vmatprep.subr.mxu0 0.0
    %3508 = vmatpush2.msra.mxu0 0.0
    %3509 = vmatprep.subr.mxu0 0.0
    %3510 = vmatpush2.msra.mxu0 0.0
    %3511 = vmatprep.subr.mxu0 0.0
    %3512 = vmatpush2.msra.mxu0 0.0
    %3513 = vmatprep.subr.mxu0 0.0
    %3514 = vmatpush2.msra.mxu0 0.0
    %3515 = vmatprep.subr.mxu0 0.0
    %3516 = vmatpush2.msra.mxu0 0.0
    %3517 = vmatprep.subr.mxu0 0.0
    %3518 = vmatpush2.msra.mxu0 0.0
    %3519 = vmatprep.mubr.f32.mxu0 0.0
    %3520 = vmatmul.mubr.f32.gmra.mxu0 %v3453
    %v3521 = vpop.f32.mrf.mxu0
    %v3522 = vadd.f32 %v2772, %v3521
    %v3523 = vpop.f32.mrf.mxu0
    %v3524 = vadd.f32 %v2776, %v3523
    %3525 = vdwg.mxu0
    %3526 = vmatprep.subr.mxu0 0.0
    %3527 = vmatpush1.msra.mxu0 0.0
    %3528 = vmatprep.subr.mxu0 0.0
    %3529 = vmatpush1.msra.mxu0 0.0
    %3530 = vmatprep.subr.mxu0 0.0
    %3531 = vmatpush1.msra.mxu0 0.0
    %3532 = vmatprep.subr.mxu0 0.0
    %3533 = vmatpush1.msra.mxu0 0.0
    %3534 = vmatprep.subr.mxu0 0.0
    %3535 = vmatpush1.msra.mxu0 0.0
    %3536 = vmatprep.subr.mxu0 0.0
    %3537 = vmatpush1.msra.mxu0 0.0
    %3538 = vmatprep.subr.mxu0 0.0
    %3539 = vmatpush1.msra.mxu0 0.0
    %3540 = vmatprep.subr.mxu0 0.0
    %3541 = vmatpush1.msra.mxu0 0.0
    %3542 = vmatprep.subr.mxu0 0.0
    %3543 = vmatpush1.msra.mxu0 0.0
    %3544 = vmatprep.subr.mxu0 0.0
    %3545 = vmatpush1.msra.mxu0 0.0
    %3546 = vmatprep.subr.mxu0 0.0
    %3547 = vmatpush1.msra.mxu0 0.0
    %3548 = vmatprep.subr.mxu0 0.0
    %3549 = vmatpush1.msra.mxu0 0.0
    %3550 = vmatprep.subr.mxu0 0.0
    %3551 = vmatpush1.msra.mxu0 0.0
    %3552 = vmatprep.subr.mxu0 0.0
    %3553 = vmatpush1.msra.mxu0 0.0
    %3554 = vmatprep.subr.mxu0 0.0
    %3555 = vmatpush1.msra.mxu0 %v2609
    %3556 = vmatprep.subr.mxu0 0.0
    %3557 = vmatpush1.msra.mxu0 %v2606
    %3558 = vmatprep.subr.mxu0 0.0
    %3559 = vmatpush2.msra.mxu0 0.0
    %3560 = vmatprep.subr.mxu0 0.0
    %3561 = vmatpush2.msra.mxu0 0.0
    %3562 = vmatprep.subr.mxu0 0.0
    %3563 = vmatpush2.msra.mxu0 0.0
    %3564 = vmatprep.subr.mxu0 0.0
    %3565 = vmatpush2.msra.mxu0 0.0
    %3566 = vmatprep.subr.mxu0 0.0
    %3567 = vmatpush2.msra.mxu0 0.0
    %3568 = vmatprep.subr.mxu0 0.0
    %3569 = vmatpush2.msra.mxu0 0.0
    %3570 = vmatprep.subr.mxu0 0.0
    %3571 = vmatpush2.msra.mxu0 0.0
    %3572 = vmatprep.subr.mxu0 0.0
    %3573 = vmatpush2.msra.mxu0 0.0
    %3574 = vmatprep.subr.mxu0 0.0
    %3575 = vmatpush2.msra.mxu0 0.0
    %3576 = vmatprep.subr.mxu0 0.0
    %3577 = vmatpush2.msra.mxu0 0.0
    %3578 = vmatprep.subr.mxu0 0.0
    %3579 = vmatpush2.msra.mxu0 0.0
    %3580 = vmatprep.subr.mxu0 0.0
    %3581 = vmatpush2.msra.mxu0 0.0
    %3582 = vmatprep.subr.mxu0 0.0
    %3583 = vmatpush2.msra.mxu0 0.0
    %3584 = vmatprep.subr.mxu0 0.0
    %3585 = vmatpush2.msra.mxu0 0.0
    %3586 = vmatprep.subr.mxu0 0.0
    %3587 = vmatpush2.msra.mxu0 0.0
    %3588 = vmatprep.subr.mxu0 0.0
    %3589 = vmatpush2.msra.mxu0 0.0
    %3590 = vmatprep.mubr.f32.mxu0 0.0
    %3591 = vmatmul.mubr.f32.gmra.mxu0 %v3453
    %v3592 = vpop.f32.mrf.mxu0
    %v3593 = vadd.f32 %v2780, %v3592
    %v3594 = vpop.f32.mrf.mxu0
    %3595 = vdwg.mxu0
    %v3596 = vmul.f32 %v3522, %v2733
    %v3597 = vmul.f32 %v3524, %v3420
    %v3598 = vadd.f32 %v3596, %v3597
    %v3599 = vadd.f32 %v3598, %v3593
    %v3600 = vxor.u32 %v3599, 2147483648
    %v3601 = vmul.f32 %v3600, 1.442695
    %v3602 = vpow.pop %v3601
    %v3603 = vadd.f32 %v3602, 1.0
    %v3604 = vrcp.pop %v3603
    %v3605 = vmul.f32 1.0, %v3604
    %v3606 = vmul.f32 %v3605, 2.0
    %v3607 = vsub.f32 %v3606, 1.0
    %v3608 = vmul.f32 %v3605, %v3333
    %3610 = vrot.lane.b32.xlu0 %v3607, 64
    %v3611 = vpop.permute.xlu0 %3610
    %v3613 = vmul.f32 %v3605, %v3611
    %3615 = vrot.lane.b32.xlu0 %v3613, 32
    %v3616 = vpop.permute.xlu0 %3615
    %v3618 = vadd.f32 %v3608, %v3616
    %v3619 = vtanh.pop %v3618
    %3621 = vrot.lane.b32.xlu0 %v3619, 64
    %v3622 = vpop.permute.xlu0 %3621
    %v3624 = vmul.f32 %v3605, %v3622
    %3626 = vrot.lane.b32.xlu0 %v3624, 32
    %v3627 = vpop.permute.xlu0 %3626
    %s3629 = scalar_lea.vmem [#allocation12], 16
    %3630 = vst.msk [vmem:[%s3629] sm:$0xff] %vm588, %v3627
    %3631 = vrot.lane.b32.xlu0 %v3449, 112
    %v3632 = vpop.permute.xlu0 %3631
    %v3634 = vsel %vm588, %v3627, %v3632
    %v3636 = vsel %vm308, %v3634, 0
    %3638 = vmatprep.subr.mxu0 0.0
    %3639 = vmatpush1.msra.mxu0 0.0
    %3640 = vmatprep.subr.mxu0 0.0
    %3641 = vmatpush1.msra.mxu0 0.0
    %3642 = vmatprep.subr.mxu0 0.0
    %3643 = vmatpush1.msra.mxu0 0.0
    %3644 = vmatprep.subr.mxu0 0.0
    %3645 = vmatpush1.msra.mxu0 0.0
    %3646 = vmatprep.subr.mxu0 0.0
    %3647 = vmatpush1.msra.mxu0 0.0
    %3648 = vmatprep.subr.mxu0 0.0
    %3649 = vmatpush1.msra.mxu0 0.0
    %3650 = vmatprep.subr.mxu0 0.0
    %3651 = vmatpush1.msra.mxu0 0.0
    %3652 = vmatprep.subr.mxu0 0.0
    %3653 = vmatpush1.msra.mxu0 0.0
    %3654 = vmatprep.subr.mxu0 0.0
    %3655 = vmatpush1.msra.mxu0 0.0
    %3656 = vmatprep.subr.mxu0 0.0
    %3657 = vmatpush1.msra.mxu0 0.0
    %3658 = vmatprep.subr.mxu0 %v2603
    %3659 = vmatpush1.msra.mxu0 %v2602
    %3660 = vmatprep.subr.mxu0 %v2601
    %3661 = vmatpush1.msra.mxu0 %v2600
    %3662 = vmatprep.subr.mxu0 %v2599
    %3663 = vmatpush1.msra.mxu0 %v2598
    %3664 = vmatprep.subr.mxu0 %v2597
    %3665 = vmatpush1.msra.mxu0 %v2596
    %3666 = vmatprep.subr.mxu0 %v2595
    %3667 = vmatpush1.msra.mxu0 %v2594
    %3668 = vmatprep.subr.mxu0 %v2593
    %3669 = vmatpush1.msra.mxu0 %v2592
    %3670 = vmatprep.subr.mxu0 0.0
    %3671 = vmatpush2.msra.mxu0 0.0
    %3672 = vmatprep.subr.mxu0 0.0
    %3673 = vmatpush2.msra.mxu0 0.0
    %3674 = vmatprep.subr.mxu0 0.0
    %3675 = vmatpush2.msra.mxu0 0.0
    %3676 = vmatprep.subr.mxu0 0.0
    %3677 = vmatpush2.msra.mxu0 0.0
    %3678 = vmatprep.subr.mxu0 0.0
    %3679 = vmatpush2.msra.mxu0 0.0
    %3680 = vmatprep.subr.mxu0 0.0
    %3681 = vmatpush2.msra.mxu0 0.0
    %3682 = vmatprep.subr.mxu0 0.0
    %3683 = vmatpush2.msra.mxu0 0.0
    %3684 = vmatprep.subr.mxu0 0.0
    %3685 = vmatpush2.msra.mxu0 0.0
    %3686 = vmatprep.subr.mxu0 0.0
    %3687 = vmatpush2.msra.mxu0 0.0
    %3688 = vmatprep.subr.mxu0 0.0
    %3689 = vmatpush2.msra.mxu0 0.0
    %3690 = vmatprep.subr.mxu0 0.0
    %3691 = vmatpush2.msra.mxu0 0.0
    %3692 = vmatprep.subr.mxu0 0.0
    %3693 = vmatpush2.msra.mxu0 0.0
    %3694 = vmatprep.subr.mxu0 0.0
    %3695 = vmatpush2.msra.mxu0 0.0
    %3696 = vmatprep.subr.mxu0 0.0
    %3697 = vmatpush2.msra.mxu0 0.0
    %3698 = vmatprep.subr.mxu0 0.0
    %3699 = vmatpush2.msra.mxu0 0.0
    %3700 = vmatprep.subr.mxu0 0.0
    %3701 = vmatpush2.msra.mxu0 0.0
    %3702 = vmatprep.mubr.f32.mxu0 0.0
    %3703 = vmatmul.mubr.f32.gmra.mxu0 %v3636
    %v3704 = vpop.f32.mrf.mxu0
    %v3705 = vadd.f32 0.0, %v3704
    %v3706 = vpop.f32.mrf.mxu0
    %v3707 = vadd.f32 0.0, %v3706
    %3708 = vdwg.mxu0
    %v3709 = vadd.f32 %v2741, %v3707
    %v3710 = vxor.u32 %v3709, 2147483648
    %v3711 = vmul.f32 %v3710, 1.442695
    %v3712 = vpow.pop %v3711
    %v3713 = vadd.f32 %v3712, 1.0
    %v3714 = vrcp.pop %v3713
    %v3715 = vmul.f32 1.0, %v3714
    %v3716 = vmul.f32 %v3715, 2.0
    %v3717 = vsub.f32 %v3716, 1.0
    %v3718 = vmul.f32 %v3715, %v3443
    %3720 = vrot.lane.b32.xlu0 %v3717, 96
    %v3721 = vpop.permute.xlu0 %3720
    %v3723 = vmul.f32 %v3715, %v3721
    %3725 = vrot.lane.b32.xlu0 %v3723, 16
    %v3726 = vpop.permute.xlu0 %3725
    %v3728 = vadd.f32 %v3718, %v3726
    %v3729 = vtanh.pop %v3728
    %3731 = vrot.lane.b32.xlu0 %v3729, 32
    %v3732 = vpop.permute.xlu0 %3731
    %v3734 = vmul.f32 %v3715, %v3732
    %3736 = vrot.lane.b32.xlu0 %v3734, 80
    %v3737 = vpop.permute.xlu0 %3736
    %v3738 = vsel %vm153, %v3737, 0
    %3740 = vmatprep.subr.mxu0 0.0
    %3741 = vmatpush1.msra.mxu0 0.0
    %3742 = vmatprep.subr.mxu0 0.0
    %3743 = vmatpush1.msra.mxu0 0.0
    %3744 = vmatprep.subr.mxu0 0.0
    %3745 = vmatpush1.msra.mxu0 0.0
    %3746 = vmatprep.subr.mxu0 0.0
    %3747 = vmatpush1.msra.mxu0 0.0
    %3748 = vmatprep.subr.mxu0 0.0
    %3749 = vmatpush1.msra.mxu0 0.0
    %3750 = vmatprep.subr.mxu0 0.0
    %3751 = vmatpush1.msra.mxu0 0.0
    %3752 = vmatprep.subr.mxu0 0.0
    %3753 = vmatpush1.msra.mxu0 0.0
    %3754 = vmatprep.subr.mxu0 0.0
    %3755 = vmatpush1.msra.mxu0 0.0
    %3756 = vmatprep.subr.mxu0 0.0
    %3757 = vmatpush1.msra.mxu0 0.0
    %3758 = vmatprep.subr.mxu0 0.0
    %3759 = vmatpush1.msra.mxu0 0.0
    %3760 = vmatprep.subr.mxu0 0.0
    %3761 = vmatpush1.msra.mxu0 0.0
    %3762 = vmatprep.subr.mxu0 0.0
    %3763 = vmatpush1.msra.mxu0 0.0
    %3764 = vmatprep.subr.mxu0 0.0
    %3765 = vmatpush1.msra.mxu0 0.0
    %3766 = vmatprep.subr.mxu0 0.0
    %3767 = vmatpush1.msra.mxu0 0.0
    %3768 = vmatprep.subr.mxu0 %v2608
    %3769 = vmatpush1.msra.mxu0 %v2607
    %3770 = vmatprep.subr.mxu0 %v2605
    %3771 = vmatpush1.msra.mxu0 %v2604
    %3772 = vmatprep.subr.mxu0 0.0
    %3773 = vmatpush2.msra.mxu0 0.0
    %3774 = vmatprep.subr.mxu0 0.0
    %3775 = vmatpush2.msra.mxu0 0.0
    %3776 = vmatprep.subr.mxu0 0.0
    %3777 = vmatpush2.msra.mxu0 0.0
    %3778 = vmatprep.subr.mxu0 0.0
    %3779 = vmatpush2.msra.mxu0 0.0
    %3780 = vmatprep.subr.mxu0 0.0
    %3781 = vmatpush2.msra.mxu0 0.0
    %3782 = vmatprep.subr.mxu0 0.0
    %3783 = vmatpush2.msra.mxu0 0.0
    %3784 = vmatprep.subr.mxu0 0.0
    %3785 = vmatpush2.msra.mxu0 0.0
    %3786 = vmatprep.subr.mxu0 0.0
    %3787 = vmatpush2.msra.mxu0 0.0
    %3788 = vmatprep.subr.mxu0 0.0
    %3789 = vmatpush2.msra.mxu0 0.0
    %3790 = vmatprep.subr.mxu0 0.0
    %3791 = vmatpush2.msra.mxu0 0.0
    %3792 = vmatprep.subr.mxu0 0.0
    %3793 = vmatpush2.msra.mxu0 0.0
    %3794 = vmatprep.subr.mxu0 0.0
    %3795 = vmatpush2.msra.mxu0 0.0
    %3796 = vmatprep.subr.mxu0 0.0
    %3797 = vmatpush2.msra.mxu0 0.0
    %3798 = vmatprep.subr.mxu0 0.0
    %3799 = vmatpush2.msra.mxu0 0.0
    %3800 = vmatprep.subr.mxu0 0.0
    %3801 = vmatpush2.msra.mxu0 0.0
    %3802 = vmatprep.subr.mxu0 0.0
    %3803 = vmatpush2.msra.mxu0 0.0
    %3804 = vmatprep.mubr.f32.mxu0 0.0
    %3805 = vmatmul.mubr.f32.gmra.mxu0 %v3738
    %v3806 = vpop.f32.mrf.mxu0
    %v3807 = vadd.f32 %v2772, %v3806
    %v3808 = vpop.f32.mrf.mxu0
    %v3809 = vadd.f32 %v2776, %v3808
    %3810 = vdwg.mxu0
    %3811 = vmatprep.subr.mxu0 0.0
    %3812 = vmatpush1.msra.mxu0 0.0
    %3813 = vmatprep.subr.mxu0 0.0
    %3814 = vmatpush1.msra.mxu0 0.0
    %3815 = vmatprep.subr.mxu0 0.0
    %3816 = vmatpush1.msra.mxu0 0.0
    %3817 = vmatprep.subr.mxu0 0.0
    %3818 = vmatpush1.msra.mxu0 0.0
    %3819 = vmatprep.subr.mxu0 0.0
    %3820 = vmatpush1.msra.mxu0 0.0
    %3821 = vmatprep.subr.mxu0 0.0
    %3822 = vmatpush1.msra.mxu0 0.0
    %3823 = vmatprep.subr.mxu0 0.0
    %3824 = vmatpush1.msra.mxu0 0.0
    %3825 = vmatprep.subr.mxu0 0.0
    %3826 = vmatpush1.msra.mxu0 0.0
    %3827 = vmatprep.subr.mxu0 0.0
    %3828 = vmatpush1.msra.mxu0 0.0
    %3829 = vmatprep.subr.mxu0 0.0
    %3830 = vmatpush1.msra.mxu0 0.0
    %3831 = vmatprep.subr.mxu0 0.0
    %3832 = vmatpush1.msra.mxu0 0.0
    %3833 = vmatprep.subr.mxu0 0.0
    %3834 = vmatpush1.msra.mxu0 0.0
    %3835 = vmatprep.subr.mxu0 0.0
    %3836 = vmatpush1.msra.mxu0 0.0
    %3837 = vmatprep.subr.mxu0 0.0
    %3838 = vmatpush1.msra.mxu0 0.0
    %3839 = vmatprep.subr.mxu0 0.0
    %3840 = vmatpush1.msra.mxu0 %v2609
    %3841 = vmatprep.subr.mxu0 0.0
    %3842 = vmatpush1.msra.mxu0 %v2606
    %3843 = vmatprep.subr.mxu0 0.0
    %3844 = vmatpush2.msra.mxu0 0.0
    %3845 = vmatprep.subr.mxu0 0.0
    %3846 = vmatpush2.msra.mxu0 0.0
    %3847 = vmatprep.subr.mxu0 0.0
    %3848 = vmatpush2.msra.mxu0 0.0
    %3849 = vmatprep.subr.mxu0 0.0
    %3850 = vmatpush2.msra.mxu0 0.0
    %3851 = vmatprep.subr.mxu0 0.0
    %3852 = vmatpush2.msra.mxu0 0.0
    %3853 = vmatprep.subr.mxu0 0.0
    %3854 = vmatpush2.msra.mxu0 0.0
    %3855 = vmatprep.subr.mxu0 0.0
    %3856 = vmatpush2.msra.mxu0 0.0
    %3857 = vmatprep.subr.mxu0 0.0
    %3858 = vmatpush2.msra.mxu0 0.0
    %3859 = vmatprep.subr.mxu0 0.0
    %3860 = vmatpush2.msra.mxu0 0.0
    %3861 = vmatprep.subr.mxu0 0.0
    %3862 = vmatpush2.msra.mxu0 0.0
    %3863 = vmatprep.subr.mxu0 0.0
    %3864 = vmatpush2.msra.mxu0 0.0
    %3865 = vmatprep.subr.mxu0 0.0
    %3866 = vmatpush2.msra.mxu0 0.0
    %3867 = vmatprep.subr.mxu0 0.0
    %3868 = vmatpush2.msra.mxu0 0.0
    %3869 = vmatprep.subr.mxu0 0.0
    %3870 = vmatpush2.msra.mxu0 0.0
    %3871 = vmatprep.subr.mxu0 0.0
    %3872 = vmatpush2.msra.mxu0 0.0
    %3873 = vmatprep.subr.mxu0 0.0
    %3874 = vmatpush2.msra.mxu0 0.0
    %3875 = vmatprep.mubr.f32.mxu0 0.0
    %3876 = vmatmul.mubr.f32.gmra.mxu0 %v3738
    %v3877 = vpop.f32.mrf.mxu0
    %v3878 = vadd.f32 %v2780, %v3877
    %v3879 = vpop.f32.mrf.mxu0
    %3880 = vdwg.mxu0
    %v3881 = vmul.f32 %v3807, %v2739
    %v3882 = vmul.f32 %v3809, %v3705
    %v3883 = vadd.f32 %v3881, %v3882
    %v3884 = vadd.f32 %v3883, %v3878
    %v3885 = vxor.u32 %v3884, 2147483648
    %v3886 = vmul.f32 %v3885, 1.442695
    %v3887 = vpow.pop %v3886
    %v3888 = vadd.f32 %v3887, 1.0
    %v3889 = vrcp.pop %v3888
    %v3890 = vmul.f32 1.0, %v3889
    %v3891 = vmul.f32 %v3890, 2.0
    %v3892 = vsub.f32 %v3891, 1.0
    %v3893 = vmul.f32 %v3890, %v3618
    %3895 = vrot.lane.b32.xlu0 %v3892, 64
    %v3896 = vpop.permute.xlu0 %3895
    %v3898 = vmul.f32 %v3890, %v3896
    %3900 = vrot.lane.b32.xlu0 %v3898, 32
    %v3901 = vpop.permute.xlu0 %3900
    %v3903 = vadd.f32 %v3893, %v3901
    %v3904 = vtanh.pop %v3903
    %3906 = vrot.lane.b32.xlu0 %v3904, 64
    %v3907 = vpop.permute.xlu0 %3906
    %v3909 = vmul.f32 %v3890, %v3907
    %3911 = vrot.lane.b32.xlu0 %v3909, 32
    %v3912 = vpop.permute.xlu0 %3911
    %s3914 = scalar_lea.vmem [#allocation12], 24
    %3915 = vst.msk [vmem:[%s3914] sm:$0xff] %vm588, %v3912
    %3916 = vrot.lane.b32.xlu0 %v3734, 112
    %v3917 = vpop.permute.xlu0 %3916
    %v3919 = vsel %vm588, %v3912, %v3917
    %v3921 = vsel %vm308, %v3919, 0
    %3923 = vmatprep.subr.mxu0 0.0
    %3924 = vmatpush1.msra.mxu0 0.0
    %3925 = vmatprep.subr.mxu0 0.0
    %3926 = vmatpush1.msra.mxu0 0.0
    %3927 = vmatprep.subr.mxu0 0.0
    %3928 = vmatpush1.msra.mxu0 0.0
    %3929 = vmatprep.subr.mxu0 0.0
    %3930 = vmatpush1.msra.mxu0 0.0
    %3931 = vmatprep.subr.mxu0 0.0
    %3932 = vmatpush1.msra.mxu0 0.0
    %3933 = vmatprep.subr.mxu0 0.0
    %3934 = vmatpush1.msra.mxu0 0.0
    %3935 = vmatprep.subr.mxu0 0.0
    %3936 = vmatpush1.msra.mxu0 0.0
    %3937 = vmatprep.subr.mxu0 0.0
    %3938 = vmatpush1.msra.mxu0 0.0
    %3939 = vmatprep.subr.mxu0 0.0
    %3940 = vmatpush1.msra.mxu0 0.0
    %3941 = vmatprep.subr.mxu0 0.0
    %3942 = vmatpush1.msra.mxu0 0.0
    %3943 = vmatprep.subr.mxu0 %v2603
    %3944 = vmatpush1.msra.mxu0 %v2602
    %3945 = vmatprep.subr.mxu0 %v2601
    %3946 = vmatpush1.msra.mxu0 %v2600
    %3947 = vmatprep.subr.mxu0 %v2599
    %3948 = vmatpush1.msra.mxu0 %v2598
    %3949 = vmatprep.subr.mxu0 %v2597
    %3950 = vmatpush1.msra.mxu0 %v2596
    %3951 = vmatprep.subr.mxu0 %v2595
    %3952 = vmatpush1.msra.mxu0 %v2594
    %3953 = vmatprep.subr.mxu0 %v2593
    %3954 = vmatpush1.msra.mxu0 %v2592
    %3955 = vmatprep.subr.mxu0 0.0
    %3956 = vmatpush2.msra.mxu0 0.0
    %3957 = vmatprep.subr.mxu0 0.0
    %3958 = vmatpush2.msra.mxu0 0.0
    %3959 = vmatprep.subr.mxu0 0.0
    %3960 = vmatpush2.msra.mxu0 0.0
    %3961 = vmatprep.subr.mxu0 0.0
    %3962 = vmatpush2.msra.mxu0 0.0
    %3963 = vmatprep.subr.mxu0 0.0
    %3964 = vmatpush2.msra.mxu0 0.0
    %3965 = vmatprep.subr.mxu0 0.0
    %3966 = vmatpush2.msra.mxu0 0.0
    %3967 = vmatprep.subr.mxu0 0.0
    %3968 = vmatpush2.msra.mxu0 0.0
    %3969 = vmatprep.subr.mxu0 0.0
    %3970 = vmatpush2.msra.mxu0 0.0
    %3971 = vmatprep.subr.mxu0 0.0
    %3972 = vmatpush2.msra.mxu0 0.0
    %3973 = vmatprep.subr.mxu0 0.0
    %3974 = vmatpush2.msra.mxu0 0.0
    %3975 = vmatprep.subr.mxu0 0.0
    %3976 = vmatpush2.msra.mxu0 0.0
    %3977 = vmatprep.subr.mxu0 0.0
    %3978 = vmatpush2.msra.mxu0 0.0
    %3979 = vmatprep.subr.mxu0 0.0
    %3980 = vmatpush2.msra.mxu0 0.0
    %3981 = vmatprep.subr.mxu0 0.0
    %3982 = vmatpush2.msra.mxu0 0.0
    %3983 = vmatprep.subr.mxu0 0.0
    %3984 = vmatpush2.msra.mxu0 0.0
    %3985 = vmatprep.subr.mxu0 0.0
    %3986 = vmatpush2.msra.mxu0 0.0
    %3987 = vmatprep.mubr.f32.mxu0 0.0
    %3988 = vmatmul.mubr.f32.gmra.mxu0 %v3921
    %v3989 = vpop.f32.mrf.mxu0
    %v3990 = vadd.f32 0.0, %v3989
    %v3991 = vpop.f32.mrf.mxu0
    %v3992 = vadd.f32 0.0, %v3991
    %3993 = vdwg.mxu0
    %v3994 = vadd.f32 %v2747, %v3992
    %v3995 = vxor.u32 %v3994, 2147483648
    %v3996 = vmul.f32 %v3995, 1.442695
    %v3997 = vpow.pop %v3996
    %v3998 = vadd.f32 %v3997, 1.0
    %v3999 = vrcp.pop %v3998
    %v4000 = vmul.f32 1.0, %v3999
    %v4001 = vmul.f32 %v4000, 2.0
    %v4002 = vsub.f32 %v4001, 1.0
    %v4003 = vmul.f32 %v4000, %v3728
    %4005 = vrot.lane.b32.xlu0 %v4002, 96
    %v4006 = vpop.permute.xlu0 %4005
    %v4008 = vmul.f32 %v4000, %v4006
    %4010 = vrot.lane.b32.xlu0 %v4008, 16
    %v4011 = vpop.permute.xlu0 %4010
    %v4013 = vadd.f32 %v4003, %v4011
    %v4014 = vtanh.pop %v4013
    %4016 = vrot.lane.b32.xlu0 %v4014, 32
    %v4017 = vpop.permute.xlu0 %4016
    %v4019 = vmul.f32 %v4000, %v4017
    %4021 = vrot.lane.b32.xlu0 %v4019, 80
    %v4022 = vpop.permute.xlu0 %4021
    %v4023 = vsel %vm153, %v4022, 0
    %4025 = vmatprep.subr.mxu0 0.0
    %4026 = vmatpush1.msra.mxu0 0.0
    %4027 = vmatprep.subr.mxu0 0.0
    %4028 = vmatpush1.msra.mxu0 0.0
    %4029 = vmatprep.subr.mxu0 0.0
    %4030 = vmatpush1.msra.mxu0 0.0
    %4031 = vmatprep.subr.mxu0 0.0
    %4032 = vmatpush1.msra.mxu0 0.0
    %4033 = vmatprep.subr.mxu0 0.0
    %4034 = vmatpush1.msra.mxu0 0.0
    %4035 = vmatprep.subr.mxu0 0.0
    %4036 = vmatpush1.msra.mxu0 0.0
    %4037 = vmatprep.subr.mxu0 0.0
    %4038 = vmatpush1.msra.mxu0 0.0
    %4039 = vmatprep.subr.mxu0 0.0
    %4040 = vmatpush1.msra.mxu0 0.0
    %4041 = vmatprep.subr.mxu0 0.0
    %4042 = vmatpush1.msra.mxu0 0.0
    %4043 = vmatprep.subr.mxu0 0.0
    %4044 = vmatpush1.msra.mxu0 0.0
    %4045 = vmatprep.subr.mxu0 0.0
    %4046 = vmatpush1.msra.mxu0 0.0
    %4047 = vmatprep.subr.mxu0 0.0
    %4048 = vmatpush1.msra.mxu0 0.0
    %4049 = vmatprep.subr.mxu0 0.0
    %4050 = vmatpush1.msra.mxu0 0.0
    %4051 = vmatprep.subr.mxu0 0.0
    %4052 = vmatpush1.msra.mxu0 0.0
    %4053 = vmatprep.subr.mxu0 %v2608
    %4054 = vmatpush1.msra.mxu0 %v2607
    %4055 = vmatprep.subr.mxu0 %v2605
    %4056 = vmatpush1.msra.mxu0 %v2604
    %4057 = vmatprep.subr.mxu0 0.0
    %4058 = vmatpush2.msra.mxu0 0.0
    %4059 = vmatprep.subr.mxu0 0.0
    %4060 = vmatpush2.msra.mxu0 0.0
    %4061 = vmatprep.subr.mxu0 0.0
    %4062 = vmatpush2.msra.mxu0 0.0
    %4063 = vmatprep.subr.mxu0 0.0
    %4064 = vmatpush2.msra.mxu0 0.0
    %4065 = vmatprep.subr.mxu0 0.0
    %4066 = vmatpush2.msra.mxu0 0.0
    %4067 = vmatprep.subr.mxu0 0.0
    %4068 = vmatpush2.msra.mxu0 0.0
    %4069 = vmatprep.subr.mxu0 0.0
    %4070 = vmatpush2.msra.mxu0 0.0
    %4071 = vmatprep.subr.mxu0 0.0
    %4072 = vmatpush2.msra.mxu0 0.0
    %4073 = vmatprep.subr.mxu0 0.0
    %4074 = vmatpush2.msra.mxu0 0.0
    %4075 = vmatprep.subr.mxu0 0.0
    %4076 = vmatpush2.msra.mxu0 0.0
    %4077 = vmatprep.subr.mxu0 0.0
    %4078 = vmatpush2.msra.mxu0 0.0
    %4079 = vmatprep.subr.mxu0 0.0
    %4080 = vmatpush2.msra.mxu0 0.0
    %4081 = vmatprep.subr.mxu0 0.0
    %4082 = vmatpush2.msra.mxu0 0.0
    %4083 = vmatprep.subr.mxu0 0.0
    %4084 = vmatpush2.msra.mxu0 0.0
    %4085 = vmatprep.subr.mxu0 0.0
    %4086 = vmatpush2.msra.mxu0 0.0
    %4087 = vmatprep.subr.mxu0 0.0
    %4088 = vmatpush2.msra.mxu0 0.0
    %4089 = vmatprep.mubr.f32.mxu0 0.0
    %4090 = vmatmul.mubr.f32.gmra.mxu0 %v4023
    %v4091 = vpop.f32.mrf.mxu0
    %v4092 = vadd.f32 %v2772, %v4091
    %v4093 = vpop.f32.mrf.mxu0
    %v4094 = vadd.f32 %v2776, %v4093
    %4095 = vdwg.mxu0
    %4096 = vmatprep.subr.mxu0 0.0
    %4097 = vmatpush1.msra.mxu0 0.0
    %4098 = vmatprep.subr.mxu0 0.0
    %4099 = vmatpush1.msra.mxu0 0.0
    %4100 = vmatprep.subr.mxu0 0.0
    %4101 = vmatpush1.msra.mxu0 0.0
    %4102 = vmatprep.subr.mxu0 0.0
    %4103 = vmatpush1.msra.mxu0 0.0
    %4104 = vmatprep.subr.mxu0 0.0
    %4105 = vmatpush1.msra.mxu0 0.0
    %4106 = vmatprep.subr.mxu0 0.0
    %4107 = vmatpush1.msra.mxu0 0.0
    %4108 = vmatprep.subr.mxu0 0.0
    %4109 = vmatpush1.msra.mxu0 0.0
    %4110 = vmatprep.subr.mxu0 0.0
    %4111 = vmatpush1.msra.mxu0 0.0
    %4112 = vmatprep.subr.mxu0 0.0
    %4113 = vmatpush1.msra.mxu0 0.0
    %4114 = vmatprep.subr.mxu0 0.0
    %4115 = vmatpush1.msra.mxu0 0.0
    %4116 = vmatprep.subr.mxu0 0.0
    %4117 = vmatpush1.msra.mxu0 0.0
    %4118 = vmatprep.subr.mxu0 0.0
    %4119 = vmatpush1.msra.mxu0 0.0
    %4120 = vmatprep.subr.mxu0 0.0
    %4121 = vmatpush1.msra.mxu0 0.0
    %4122 = vmatprep.subr.mxu0 0.0
    %4123 = vmatpush1.msra.mxu0 0.0
    %4124 = vmatprep.subr.mxu0 0.0
    %4125 = vmatpush1.msra.mxu0 %v2609
    %4126 = vmatprep.subr.mxu0 0.0
    %4127 = vmatpush1.msra.mxu0 %v2606
    %4128 = vmatprep.subr.mxu0 0.0
    %4129 = vmatpush2.msra.mxu0 0.0
    %4130 = vmatprep.subr.mxu0 0.0
    %4131 = vmatpush2.msra.mxu0 0.0
    %4132 = vmatprep.subr.mxu0 0.0
    %4133 = vmatpush2.msra.mxu0 0.0
    %4134 = vmatprep.subr.mxu0 0.0
    %4135 = vmatpush2.msra.mxu0 0.0
    %4136 = vmatprep.subr.mxu0 0.0
    %4137 = vmatpush2.msra.mxu0 0.0
    %4138 = vmatprep.subr.mxu0 0.0
    %4139 = vmatpush2.msra.mxu0 0.0
    %4140 = vmatprep.subr.mxu0 0.0
    %4141 = vmatpush2.msra.mxu0 0.0
    %4142 = vmatprep.subr.mxu0 0.0
    %4143 = vmatpush2.msra.mxu0 0.0
    %4144 = vmatprep.subr.mxu0 0.0
    %4145 = vmatpush2.msra.mxu0 0.0
    %4146 = vmatprep.subr.mxu0 0.0
    %4147 = vmatpush2.msra.mxu0 0.0
    %4148 = vmatprep.subr.mxu0 0.0
    %4149 = vmatpush2.msra.mxu0 0.0
    %4150 = vmatprep.subr.mxu0 0.0
    %4151 = vmatpush2.msra.mxu0 0.0
    %4152 = vmatprep.subr.mxu0 0.0
    %4153 = vmatpush2.msra.mxu0 0.0
    %4154 = vmatprep.subr.mxu0 0.0
    %4155 = vmatpush2.msra.mxu0 0.0
    %4156 = vmatprep.subr.mxu0 0.0
    %4157 = vmatpush2.msra.mxu0 0.0
    %4158 = vmatprep.subr.mxu0 0.0
    %4159 = vmatpush2.msra.mxu0 0.0
    %4160 = vmatprep.mubr.f32.mxu0 0.0
    %4161 = vmatmul.mubr.f32.gmra.mxu0 %v4023
    %v4162 = vpop.f32.mrf.mxu0
    %v4163 = vadd.f32 %v2780, %v4162
    %v4164 = vpop.f32.mrf.mxu0
    %4165 = vdwg.mxu0
    %v4166 = vmul.f32 %v4092, %v2745
    %v4167 = vmul.f32 %v4094, %v3990
    %v4168 = vadd.f32 %v4166, %v4167
    %v4169 = vadd.f32 %v4168, %v4163
    %v4170 = vxor.u32 %v4169, 2147483648
    %v4171 = vmul.f32 %v4170, 1.442695
    %v4172 = vpow.pop %v4171
    %v4173 = vadd.f32 %v4172, 1.0
    %v4174 = vrcp.pop %v4173
    %v4175 = vmul.f32 1.0, %v4174
    %v4176 = vmul.f32 %v4175, 2.0
    %v4177 = vsub.f32 %v4176, 1.0
    %v4178 = vmul.f32 %v4175, %v3903
    %4180 = vrot.lane.b32.xlu0 %v4177, 64
    %v4181 = vpop.permute.xlu0 %4180
    %v4183 = vmul.f32 %v4175, %v4181
    %4185 = vrot.lane.b32.xlu0 %v4183, 32
    %v4186 = vpop.permute.xlu0 %4185
    %v4188 = vadd.f32 %v4178, %v4186
    %v4189 = vtanh.pop %v4188
    %4191 = vrot.lane.b32.xlu0 %v4189, 64
    %v4192 = vpop.permute.xlu0 %4191
    %v4194 = vmul.f32 %v4175, %v4192
    %4196 = vrot.lane.b32.xlu0 %v4194, 32
    %v4197 = vpop.permute.xlu0 %4196
    %s4199 = scalar_lea.vmem [#allocation12], 32
    %4200 = vst.msk [vmem:[%s4199] sm:$0xff] %vm588, %v4197
    %4201 = vrot.lane.b32.xlu0 %v4019, 112
    %v4202 = vpop.permute.xlu0 %4201
    %v4204 = vsel %vm588, %v4197, %v4202
    %v4206 = vsel %vm308, %v4204, 0
    %4208 = vmatprep.subr.mxu0 0.0
    %4209 = vmatpush1.msra.mxu0 0.0
    %4210 = vmatprep.subr.mxu0 0.0
    %4211 = vmatpush1.msra.mxu0 0.0
    %4212 = vmatprep.subr.mxu0 0.0
    %4213 = vmatpush1.msra.mxu0 0.0
    %4214 = vmatprep.subr.mxu0 0.0
    %4215 = vmatpush1.msra.mxu0 0.0
    %4216 = vmatprep.subr.mxu0 0.0
    %4217 = vmatpush1.msra.mxu0 0.0
    %4218 = vmatprep.subr.mxu0 0.0
    %4219 = vmatpush1.msra.mxu0 0.0
    %4220 = vmatprep.subr.mxu0 0.0
    %4221 = vmatpush1.msra.mxu0 0.0
    %4222 = vmatprep.subr.mxu0 0.0
    %4223 = vmatpush1.msra.mxu0 0.0
    %4224 = vmatprep.subr.mxu0 0.0
    %4225 = vmatpush1.msra.mxu0 0.0
    %4226 = vmatprep.subr.mxu0 0.0
    %4227 = vmatpush1.msra.mxu0 0.0
    %4228 = vmatprep.subr.mxu0 %v2603
    %4229 = vmatpush1.msra.mxu0 %v2602
    %4230 = vmatprep.subr.mxu0 %v2601
    %4231 = vmatpush1.msra.mxu0 %v2600
    %4232 = vmatprep.subr.mxu0 %v2599
    %4233 = vmatpush1.msra.mxu0 %v2598
    %4234 = vmatprep.subr.mxu0 %v2597
    %4235 = vmatpush1.msra.mxu0 %v2596
    %4236 = vmatprep.subr.mxu0 %v2595
    %4237 = vmatpush1.msra.mxu0 %v2594
    %4238 = vmatprep.subr.mxu0 %v2593
    %4239 = vmatpush1.msra.mxu0 %v2592
    %4240 = vmatprep.subr.mxu0 0.0
    %4241 = vmatpush2.msra.mxu0 0.0
    %4242 = vmatprep.subr.mxu0 0.0
    %4243 = vmatpush2.msra.mxu0 0.0
    %4244 = vmatprep.subr.mxu0 0.0
    %4245 = vmatpush2.msra.mxu0 0.0
    %4246 = vmatprep.subr.mxu0 0.0
    %4247 = vmatpush2.msra.mxu0 0.0
    %4248 = vmatprep.subr.mxu0 0.0
    %4249 = vmatpush2.msra.mxu0 0.0
    %4250 = vmatprep.subr.mxu0 0.0
    %4251 = vmatpush2.msra.mxu0 0.0
    %4252 = vmatprep.subr.mxu0 0.0
    %4253 = vmatpush2.msra.mxu0 0.0
    %4254 = vmatprep.subr.mxu0 0.0
    %4255 = vmatpush2.msra.mxu0 0.0
    %4256 = vmatprep.subr.mxu0 0.0
    %4257 = vmatpush2.msra.mxu0 0.0
    %4258 = vmatprep.subr.mxu0 0.0
    %4259 = vmatpush2.msra.mxu0 0.0
    %4260 = vmatprep.subr.mxu0 0.0
    %4261 = vmatpush2.msra.mxu0 0.0
    %4262 = vmatprep.subr.mxu0 0.0
    %4263 = vmatpush2.msra.mxu0 0.0
    %4264 = vmatprep.subr.mxu0 0.0
    %4265 = vmatpush2.msra.mxu0 0.0
    %4266 = vmatprep.subr.mxu0 0.0
    %4267 = vmatpush2.msra.mxu0 0.0
    %4268 = vmatprep.subr.mxu0 0.0
    %4269 = vmatpush2.msra.mxu0 0.0
    %4270 = vmatprep.subr.mxu0 0.0
    %4271 = vmatpush2.msra.mxu0 0.0
    %4272 = vmatprep.mubr.f32.mxu0 0.0
    %4273 = vmatmul.mubr.f32.gmra.mxu0 %v4206
    %v4274 = vpop.f32.mrf.mxu0
    %v4275 = vadd.f32 0.0, %v4274
    %v4276 = vpop.f32.mrf.mxu0
    %v4277 = vadd.f32 0.0, %v4276
    %4278 = vdwg.mxu0
    %v4279 = vadd.f32 %v2753, %v4277
    %v4280 = vxor.u32 %v4279, 2147483648
    %v4281 = vmul.f32 %v4280, 1.442695
    %v4282 = vpow.pop %v4281
    %v4283 = vadd.f32 %v4282, 1.0
    %v4284 = vrcp.pop %v4283
    %v4285 = vmul.f32 1.0, %v4284
    %v4286 = vmul.f32 %v4285, 2.0
    %v4287 = vsub.f32 %v4286, 1.0
    %v4288 = vmul.f32 %v4285, %v4013
    %4290 = vrot.lane.b32.xlu0 %v4287, 96
    %v4291 = vpop.permute.xlu0 %4290
    %v4293 = vmul.f32 %v4285, %v4291
    %4295 = vrot.lane.b32.xlu0 %v4293, 16
    %v4296 = vpop.permute.xlu0 %4295
    %v4298 = vadd.f32 %v4288, %v4296
    %v4299 = vtanh.pop %v4298
    %4301 = vrot.lane.b32.xlu0 %v4299, 32
    %v4302 = vpop.permute.xlu0 %4301
    %v4304 = vmul.f32 %v4285, %v4302
    %4306 = vrot.lane.b32.xlu0 %v4304, 80
    %v4307 = vpop.permute.xlu0 %4306
    %v4308 = vsel %vm153, %v4307, 0
    %4310 = vmatprep.subr.mxu0 0.0
    %4311 = vmatpush1.msra.mxu0 0.0
    %4312 = vmatprep.subr.mxu0 0.0
    %4313 = vmatpush1.msra.mxu0 0.0
    %4314 = vmatprep.subr.mxu0 0.0
    %4315 = vmatpush1.msra.mxu0 0.0
    %4316 = vmatprep.subr.mxu0 0.0
    %4317 = vmatpush1.msra.mxu0 0.0
    %4318 = vmatprep.subr.mxu0 0.0
    %4319 = vmatpush1.msra.mxu0 0.0
    %4320 = vmatprep.subr.mxu0 0.0
    %4321 = vmatpush1.msra.mxu0 0.0
    %4322 = vmatprep.subr.mxu0 0.0
    %4323 = vmatpush1.msra.mxu0 0.0
    %4324 = vmatprep.subr.mxu0 0.0
    %4325 = vmatpush1.msra.mxu0 0.0
    %4326 = vmatprep.subr.mxu0 0.0
    %4327 = vmatpush1.msra.mxu0 0.0
    %4328 = vmatprep.subr.mxu0 0.0
    %4329 = vmatpush1.msra.mxu0 0.0
    %4330 = vmatprep.subr.mxu0 0.0
    %4331 = vmatpush1.msra.mxu0 0.0
    %4332 = vmatprep.subr.mxu0 0.0
    %4333 = vmatpush1.msra.mxu0 0.0
    %4334 = vmatprep.subr.mxu0 0.0
    %4335 = vmatpush1.msra.mxu0 0.0
    %4336 = vmatprep.subr.mxu0 0.0
    %4337 = vmatpush1.msra.mxu0 0.0
    %4338 = vmatprep.subr.mxu0 %v2608
    %4339 = vmatpush1.msra.mxu0 %v2607
    %4340 = vmatprep.subr.mxu0 %v2605
    %4341 = vmatpush1.msra.mxu0 %v2604
    %4342 = vmatprep.subr.mxu0 0.0
    %4343 = vmatpush2.msra.mxu0 0.0
    %4344 = vmatprep.subr.mxu0 0.0
    %4345 = vmatpush2.msra.mxu0 0.0
    %4346 = vmatprep.subr.mxu0 0.0
    %4347 = vmatpush2.msra.mxu0 0.0
    %4348 = vmatprep.subr.mxu0 0.0
    %4349 = vmatpush2.msra.mxu0 0.0
    %4350 = vmatprep.subr.mxu0 0.0
    %4351 = vmatpush2.msra.mxu0 0.0
    %4352 = vmatprep.subr.mxu0 0.0
    %4353 = vmatpush2.msra.mxu0 0.0
    %4354 = vmatprep.subr.mxu0 0.0
    %4355 = vmatpush2.msra.mxu0 0.0
    %4356 = vmatprep.subr.mxu0 0.0
    %4357 = vmatpush2.msra.mxu0 0.0
    %4358 = vmatprep.subr.mxu0 0.0
    %4359 = vmatpush2.msra.mxu0 0.0
    %4360 = vmatprep.subr.mxu0 0.0
    %4361 = vmatpush2.msra.mxu0 0.0
    %4362 = vmatprep.subr.mxu0 0.0
    %4363 = vmatpush2.msra.mxu0 0.0
    %4364 = vmatprep.subr.mxu0 0.0
    %4365 = vmatpush2.msra.mxu0 0.0
    %4366 = vmatprep.subr.mxu0 0.0
    %4367 = vmatpush2.msra.mxu0 0.0
    %4368 = vmatprep.subr.mxu0 0.0
    %4369 = vmatpush2.msra.mxu0 0.0
    %4370 = vmatprep.subr.mxu0 0.0
    %4371 = vmatpush2.msra.mxu0 0.0
    %4372 = vmatprep.subr.mxu0 0.0
    %4373 = vmatpush2.msra.mxu0 0.0
    %4374 = vmatprep.mubr.f32.mxu0 0.0
    %4375 = vmatmul.mubr.f32.gmra.mxu0 %v4308
    %v4376 = vpop.f32.mrf.mxu0
    %v4377 = vadd.f32 %v2772, %v4376
    %v4378 = vpop.f32.mrf.mxu0
    %v4379 = vadd.f32 %v2776, %v4378
    %4380 = vdwg.mxu0
    %4381 = vmatprep.subr.mxu0 0.0
    %4382 = vmatpush1.msra.mxu0 0.0
    %4383 = vmatprep.subr.mxu0 0.0
    %4384 = vmatpush1.msra.mxu0 0.0
    %4385 = vmatprep.subr.mxu0 0.0
    %4386 = vmatpush1.msra.mxu0 0.0
    %4387 = vmatprep.subr.mxu0 0.0
    %4388 = vmatpush1.msra.mxu0 0.0
    %4389 = vmatprep.subr.mxu0 0.0
    %4390 = vmatpush1.msra.mxu0 0.0
    %4391 = vmatprep.subr.mxu0 0.0
    %4392 = vmatpush1.msra.mxu0 0.0
    %4393 = vmatprep.subr.mxu0 0.0
    %4394 = vmatpush1.msra.mxu0 0.0
    %4395 = vmatprep.subr.mxu0 0.0
    %4396 = vmatpush1.msra.mxu0 0.0
    %4397 = vmatprep.subr.mxu0 0.0
    %4398 = vmatpush1.msra.mxu0 0.0
    %4399 = vmatprep.subr.mxu0 0.0
    %4400 = vmatpush1.msra.mxu0 0.0
    %4401 = vmatprep.subr.mxu0 0.0
    %4402 = vmatpush1.msra.mxu0 0.0
    %4403 = vmatprep.subr.mxu0 0.0
    %4404 = vmatpush1.msra.mxu0 0.0
    %4405 = vmatprep.subr.mxu0 0.0
    %4406 = vmatpush1.msra.mxu0 0.0
    %4407 = vmatprep.subr.mxu0 0.0
    %4408 = vmatpush1.msra.mxu0 0.0
    %4409 = vmatprep.subr.mxu0 0.0
    %4410 = vmatpush1.msra.mxu0 %v2609
    %4411 = vmatprep.subr.mxu0 0.0
    %4412 = vmatpush1.msra.mxu0 %v2606
    %4413 = vmatprep.subr.mxu0 0.0
    %4414 = vmatpush2.msra.mxu0 0.0
    %4415 = vmatprep.subr.mxu0 0.0
    %4416 = vmatpush2.msra.mxu0 0.0
    %4417 = vmatprep.subr.mxu0 0.0
    %4418 = vmatpush2.msra.mxu0 0.0
    %4419 = vmatprep.subr.mxu0 0.0
    %4420 = vmatpush2.msra.mxu0 0.0
    %4421 = vmatprep.subr.mxu0 0.0
    %4422 = vmatpush2.msra.mxu0 0.0
    %4423 = vmatprep.subr.mxu0 0.0
    %4424 = vmatpush2.msra.mxu0 0.0
    %4425 = vmatprep.subr.mxu0 0.0
    %4426 = vmatpush2.msra.mxu0 0.0
    %4427 = vmatprep.subr.mxu0 0.0
    %4428 = vmatpush2.msra.mxu0 0.0
    %4429 = vmatprep.subr.mxu0 0.0
    %4430 = vmatpush2.msra.mxu0 0.0
    %4431 = vmatprep.subr.mxu0 0.0
    %4432 = vmatpush2.msra.mxu0 0.0
    %4433 = vmatprep.subr.mxu0 0.0
    %4434 = vmatpush2.msra.mxu0 0.0
    %4435 = vmatprep.subr.mxu0 0.0
    %4436 = vmatpush2.msra.mxu0 0.0
    %4437 = vmatprep.subr.mxu0 0.0
    %4438 = vmatpush2.msra.mxu0 0.0
    %4439 = vmatprep.subr.mxu0 0.0
    %4440 = vmatpush2.msra.mxu0 0.0
    %4441 = vmatprep.subr.mxu0 0.0
    %4442 = vmatpush2.msra.mxu0 0.0
    %4443 = vmatprep.subr.mxu0 0.0
    %4444 = vmatpush2.msra.mxu0 0.0
    %4445 = vmatprep.mubr.f32.mxu0 0.0
    %4446 = vmatmul.mubr.f32.gmra.mxu0 %v4308
    %v4447 = vpop.f32.mrf.mxu0
    %v4448 = vadd.f32 %v2780, %v4447
    %v4449 = vpop.f32.mrf.mxu0
    %4450 = vdwg.mxu0
    %v4451 = vmul.f32 %v4377, %v2751
    %v4452 = vmul.f32 %v4379, %v4275
    %v4453 = vadd.f32 %v4451, %v4452
    %v4454 = vadd.f32 %v4453, %v4448
    %v4455 = vxor.u32 %v4454, 2147483648
    %v4456 = vmul.f32 %v4455, 1.442695
    %v4457 = vpow.pop %v4456
    %v4458 = vadd.f32 %v4457, 1.0
    %v4459 = vrcp.pop %v4458
    %v4460 = vmul.f32 1.0, %v4459
    %v4461 = vmul.f32 %v4460, 2.0
    %v4462 = vsub.f32 %v4461, 1.0
    %v4463 = vmul.f32 %v4460, %v4188
    %4465 = vrot.lane.b32.xlu0 %v4462, 64
    %v4466 = vpop.permute.xlu0 %4465
    %v4468 = vmul.f32 %v4460, %v4466
    %4470 = vrot.lane.b32.xlu0 %v4468, 32
    %v4471 = vpop.permute.xlu0 %4470
    %v4473 = vadd.f32 %v4463, %v4471
    %v4474 = vtanh.pop %v4473
    %4476 = vrot.lane.b32.xlu0 %v4474, 64
    %v4477 = vpop.permute.xlu0 %4476
    %v4479 = vmul.f32 %v4460, %v4477
    %4481 = vrot.lane.b32.xlu0 %v4479, 32
    %v4482 = vpop.permute.xlu0 %4481
    %s4484 = scalar_lea.vmem [#allocation12], 40
    %4485 = vst.msk [vmem:[%s4484] sm:$0xff] %vm588, %v4482
    %4486 = vrot.lane.b32.xlu0 %v4304, 112
    %v4487 = vpop.permute.xlu0 %4486
    %v4489 = vsel %vm588, %v4482, %v4487
    %v4491 = vsel %vm308, %v4489, 0
    %4493 = vmatprep.subr.mxu0 0.0
    %4494 = vmatpush1.msra.mxu0 0.0
    %4495 = vmatprep.subr.mxu0 0.0
    %4496 = vmatpush1.msra.mxu0 0.0
    %4497 = vmatprep.subr.mxu0 0.0
    %4498 = vmatpush1.msra.mxu0 0.0
    %4499 = vmatprep.subr.mxu0 0.0
    %4500 = vmatpush1.msra.mxu0 0.0
    %4501 = vmatprep.subr.mxu0 0.0
    %4502 = vmatpush1.msra.mxu0 0.0
    %4503 = vmatprep.subr.mxu0 0.0
    %4504 = vmatpush1.msra.mxu0 0.0
    %4505 = vmatprep.subr.mxu0 0.0
    %4506 = vmatpush1.msra.mxu0 0.0
    %4507 = vmatprep.subr.mxu0 0.0
    %4508 = vmatpush1.msra.mxu0 0.0
    %4509 = vmatprep.subr.mxu0 0.0
    %4510 = vmatpush1.msra.mxu0 0.0
    %4511 = vmatprep.subr.mxu0 0.0
    %4512 = vmatpush1.msra.mxu0 0.0
    %4513 = vmatprep.subr.mxu0 %v2603
    %4514 = vmatpush1.msra.mxu0 %v2602
    %4515 = vmatprep.subr.mxu0 %v2601
    %4516 = vmatpush1.msra.mxu0 %v2600
    %4517 = vmatprep.subr.mxu0 %v2599
    %4518 = vmatpush1.msra.mxu0 %v2598
    %4519 = vmatprep.subr.mxu0 %v2597
    %4520 = vmatpush1.msra.mxu0 %v2596
    %4521 = vmatprep.subr.mxu0 %v2595
    %4522 = vmatpush1.msra.mxu0 %v2594
    %4523 = vmatprep.subr.mxu0 %v2593
    %4524 = vmatpush1.msra.mxu0 %v2592
    %4525 = vmatprep.subr.mxu0 0.0
    %4526 = vmatpush2.msra.mxu0 0.0
    %4527 = vmatprep.subr.mxu0 0.0
    %4528 = vmatpush2.msra.mxu0 0.0
    %4529 = vmatprep.subr.mxu0 0.0
    %4530 = vmatpush2.msra.mxu0 0.0
    %4531 = vmatprep.subr.mxu0 0.0
    %4532 = vmatpush2.msra.mxu0 0.0
    %4533 = vmatprep.subr.mxu0 0.0
    %4534 = vmatpush2.msra.mxu0 0.0
    %4535 = vmatprep.subr.mxu0 0.0
    %4536 = vmatpush2.msra.mxu0 0.0
    %4537 = vmatprep.subr.mxu0 0.0
    %4538 = vmatpush2.msra.mxu0 0.0
    %4539 = vmatprep.subr.mxu0 0.0
    %4540 = vmatpush2.msra.mxu0 0.0
    %4541 = vmatprep.subr.mxu0 0.0
    %4542 = vmatpush2.msra.mxu0 0.0
    %4543 = vmatprep.subr.mxu0 0.0
    %4544 = vmatpush2.msra.mxu0 0.0
    %4545 = vmatprep.subr.mxu0 0.0
    %4546 = vmatpush2.msra.mxu0 0.0
    %4547 = vmatprep.subr.mxu0 0.0
    %4548 = vmatpush2.msra.mxu0 0.0
    %4549 = vmatprep.subr.mxu0 0.0
    %4550 = vmatpush2.msra.mxu0 0.0
    %4551 = vmatprep.subr.mxu0 0.0
    %4552 = vmatpush2.msra.mxu0 0.0
    %4553 = vmatprep.subr.mxu0 0.0
    %4554 = vmatpush2.msra.mxu0 0.0
    %4555 = vmatprep.subr.mxu0 0.0
    %4556 = vmatpush2.msra.mxu0 0.0
    %4557 = vmatprep.mubr.f32.mxu0 0.0
    %4558 = vmatmul.mubr.f32.gmra.mxu0 %v4491
    %v4559 = vpop.f32.mrf.mxu0
    %v4560 = vadd.f32 0.0, %v4559
    %v4561 = vpop.f32.mrf.mxu0
    %v4562 = vadd.f32 0.0, %v4561
    %4563 = vdwg.mxu0
    %v4564 = vadd.f32 %v2759, %v4562
    %v4565 = vxor.u32 %v4564, 2147483648
    %v4566 = vmul.f32 %v4565, 1.442695
    %v4567 = vpow.pop %v4566
    %v4568 = vadd.f32 %v4567, 1.0
    %v4569 = vrcp.pop %v4568
    %v4570 = vmul.f32 1.0, %v4569
    %v4571 = vmul.f32 %v4570, 2.0
    %v4572 = vsub.f32 %v4571, 1.0
    %v4573 = vmul.f32 %v4570, %v4298
    %4575 = vrot.lane.b32.xlu0 %v4572, 96
    %v4576 = vpop.permute.xlu0 %4575
    %v4578 = vmul.f32 %v4570, %v4576
    %4580 = vrot.lane.b32.xlu0 %v4578, 16
    %v4581 = vpop.permute.xlu0 %4580
    %v4583 = vadd.f32 %v4573, %v4581
    %v4584 = vtanh.pop %v4583
    %4586 = vrot.lane.b32.xlu0 %v4584, 32
    %v4587 = vpop.permute.xlu0 %4586
    %v4589 = vmul.f32 %v4570, %v4587
    %4591 = vrot.lane.b32.xlu0 %v4589, 80
    %v4592 = vpop.permute.xlu0 %4591
    %v4593 = vsel %vm153, %v4592, 0
    %4595 = vmatprep.subr.mxu0 0.0
    %4596 = vmatpush1.msra.mxu0 0.0
    %4597 = vmatprep.subr.mxu0 0.0
    %4598 = vmatpush1.msra.mxu0 0.0
    %4599 = vmatprep.subr.mxu0 0.0
    %4600 = vmatpush1.msra.mxu0 0.0
    %4601 = vmatprep.subr.mxu0 0.0
    %4602 = vmatpush1.msra.mxu0 0.0
    %4603 = vmatprep.subr.mxu0 0.0
    %4604 = vmatpush1.msra.mxu0 0.0
    %4605 = vmatprep.subr.mxu0 0.0
    %4606 = vmatpush1.msra.mxu0 0.0
    %4607 = vmatprep.subr.mxu0 0.0
    %4608 = vmatpush1.msra.mxu0 0.0
    %4609 = vmatprep.subr.mxu0 0.0
    %4610 = vmatpush1.msra.mxu0 0.0
    %4611 = vmatprep.subr.mxu0 0.0
    %4612 = vmatpush1.msra.mxu0 0.0
    %4613 = vmatprep.subr.mxu0 0.0
    %4614 = vmatpush1.msra.mxu0 0.0
    %4615 = vmatprep.subr.mxu0 0.0
    %4616 = vmatpush1.msra.mxu0 0.0
    %4617 = vmatprep.subr.mxu0 0.0
    %4618 = vmatpush1.msra.mxu0 0.0
    %4619 = vmatprep.subr.mxu0 0.0
    %4620 = vmatpush1.msra.mxu0 0.0
    %4621 = vmatprep.subr.mxu0 0.0
    %4622 = vmatpush1.msra.mxu0 0.0
    %4623 = vmatprep.subr.mxu0 %v2608
    %4624 = vmatpush1.msra.mxu0 %v2607
    %4625 = vmatprep.subr.mxu0 %v2605
    %4626 = vmatpush1.msra.mxu0 %v2604
    %4627 = vmatprep.subr.mxu0 0.0
    %4628 = vmatpush2.msra.mxu0 0.0
    %4629 = vmatprep.subr.mxu0 0.0
    %4630 = vmatpush2.msra.mxu0 0.0
    %4631 = vmatprep.subr.mxu0 0.0
    %4632 = vmatpush2.msra.mxu0 0.0
    %4633 = vmatprep.subr.mxu0 0.0
    %4634 = vmatpush2.msra.mxu0 0.0
    %4635 = vmatprep.subr.mxu0 0.0
    %4636 = vmatpush2.msra.mxu0 0.0
    %4637 = vmatprep.subr.mxu0 0.0
    %4638 = vmatpush2.msra.mxu0 0.0
    %4639 = vmatprep.subr.mxu0 0.0
    %4640 = vmatpush2.msra.mxu0 0.0
    %4641 = vmatprep.subr.mxu0 0.0
    %4642 = vmatpush2.msra.mxu0 0.0
    %4643 = vmatprep.subr.mxu0 0.0
    %4644 = vmatpush2.msra.mxu0 0.0
    %4645 = vmatprep.subr.mxu0 0.0
    %4646 = vmatpush2.msra.mxu0 0.0
    %4647 = vmatprep.subr.mxu0 0.0
    %4648 = vmatpush2.msra.mxu0 0.0
    %4649 = vmatprep.subr.mxu0 0.0
    %4650 = vmatpush2.msra.mxu0 0.0
    %4651 = vmatprep.subr.mxu0 0.0
    %4652 = vmatpush2.msra.mxu0 0.0
    %4653 = vmatprep.subr.mxu0 0.0
    %4654 = vmatpush2.msra.mxu0 0.0
    %4655 = vmatprep.subr.mxu0 0.0
    %4656 = vmatpush2.msra.mxu0 0.0
    %4657 = vmatprep.subr.mxu0 0.0
    %4658 = vmatpush2.msra.mxu0 0.0
    %4659 = vmatprep.mubr.f32.mxu0 0.0
    %4660 = vmatmul.mubr.f32.gmra.mxu0 %v4593
    %v4661 = vpop.f32.mrf.mxu0
    %v4662 = vadd.f32 %v2772, %v4661
    %v4663 = vpop.f32.mrf.mxu0
    %v4664 = vadd.f32 %v2776, %v4663
    %4665 = vdwg.mxu0
    %4666 = vmatprep.subr.mxu0 0.0
    %4667 = vmatpush1.msra.mxu0 0.0
    %4668 = vmatprep.subr.mxu0 0.0
    %4669 = vmatpush1.msra.mxu0 0.0
    %4670 = vmatprep.subr.mxu0 0.0
    %4671 = vmatpush1.msra.mxu0 0.0
    %4672 = vmatprep.subr.mxu0 0.0
    %4673 = vmatpush1.msra.mxu0 0.0
    %4674 = vmatprep.subr.mxu0 0.0
    %4675 = vmatpush1.msra.mxu0 0.0
    %4676 = vmatprep.subr.mxu0 0.0
    %4677 = vmatpush1.msra.mxu0 0.0
    %4678 = vmatprep.subr.mxu0 0.0
    %4679 = vmatpush1.msra.mxu0 0.0
    %4680 = vmatprep.subr.mxu0 0.0
    %4681 = vmatpush1.msra.mxu0 0.0
    %4682 = vmatprep.subr.mxu0 0.0
    %4683 = vmatpush1.msra.mxu0 0.0
    %4684 = vmatprep.subr.mxu0 0.0
    %4685 = vmatpush1.msra.mxu0 0.0
    %4686 = vmatprep.subr.mxu0 0.0
    %4687 = vmatpush1.msra.mxu0 0.0
    %4688 = vmatprep.subr.mxu0 0.0
    %4689 = vmatpush1.msra.mxu0 0.0
    %4690 = vmatprep.subr.mxu0 0.0
    %4691 = vmatpush1.msra.mxu0 0.0
    %4692 = vmatprep.subr.mxu0 0.0
    %4693 = vmatpush1.msra.mxu0 0.0
    %4694 = vmatprep.subr.mxu0 0.0
    %4695 = vmatpush1.msra.mxu0 %v2609
    %4696 = vmatprep.subr.mxu0 0.0
    %4697 = vmatpush1.msra.mxu0 %v2606
    %4698 = vmatprep.subr.mxu0 0.0
    %4699 = vmatpush2.msra.mxu0 0.0
    %4700 = vmatprep.subr.mxu0 0.0
    %4701 = vmatpush2.msra.mxu0 0.0
    %4702 = vmatprep.subr.mxu0 0.0
    %4703 = vmatpush2.msra.mxu0 0.0
    %4704 = vmatprep.subr.mxu0 0.0
    %4705 = vmatpush2.msra.mxu0 0.0
    %4706 = vmatprep.subr.mxu0 0.0
    %4707 = vmatpush2.msra.mxu0 0.0
    %4708 = vmatprep.subr.mxu0 0.0
    %4709 = vmatpush2.msra.mxu0 0.0
    %4710 = vmatprep.subr.mxu0 0.0
    %4711 = vmatpush2.msra.mxu0 0.0
    %4712 = vmatprep.subr.mxu0 0.0
    %4713 = vmatpush2.msra.mxu0 0.0
    %4714 = vmatprep.subr.mxu0 0.0
    %4715 = vmatpush2.msra.mxu0 0.0
    %4716 = vmatprep.subr.mxu0 0.0
    %4717 = vmatpush2.msra.mxu0 0.0
    %4718 = vmatprep.subr.mxu0 0.0
    %4719 = vmatpush2.msra.mxu0 0.0
    %4720 = vmatprep.subr.mxu0 0.0
    %4721 = vmatpush2.msra.mxu0 0.0
    %4722 = vmatprep.subr.mxu0 0.0
    %4723 = vmatpush2.msra.mxu0 0.0
    %4724 = vmatprep.subr.mxu0 0.0
    %4725 = vmatpush2.msra.mxu0 0.0
    %4726 = vmatprep.subr.mxu0 0.0
    %4727 = vmatpush2.msra.mxu0 0.0
    %4728 = vmatprep.subr.mxu0 0.0
    %4729 = vmatpush2.msra.mxu0 0.0
    %4730 = vmatprep.mubr.f32.mxu0 0.0
    %4731 = vmatmul.mubr.f32.gmra.mxu0 %v4593
    %v4732 = vpop.f32.mrf.mxu0
    %v4733 = vadd.f32 %v2780, %v4732
    %v4734 = vpop.f32.mrf.mxu0
    %4735 = vdwg.mxu0
    %v4736 = vmul.f32 %v4662, %v2757
    %v4737 = vmul.f32 %v4664, %v4560
    %v4738 = vadd.f32 %v4736, %v4737
    %v4739 = vadd.f32 %v4738, %v4733
    %v4740 = vxor.u32 %v4739, 2147483648
    %v4741 = vmul.f32 %v4740, 1.442695
    %v4742 = vpow.pop %v4741
    %v4743 = vadd.f32 %v4742, 1.0
    %v4744 = vrcp.pop %v4743
    %v4745 = vmul.f32 1.0, %v4744
    %v4746 = vmul.f32 %v4745, 2.0
    %v4747 = vsub.f32 %v4746, 1.0
    %v4748 = vmul.f32 %v4745, %v4473
    %4750 = vrot.lane.b32.xlu0 %v4747, 64
    %v4751 = vpop.permute.xlu0 %4750
    %v4753 = vmul.f32 %v4745, %v4751
    %4755 = vrot.lane.b32.xlu0 %v4753, 32
    %v4756 = vpop.permute.xlu0 %4755
    %v4758 = vadd.f32 %v4748, %v4756
    %v4759 = vtanh.pop %v4758
    %4761 = vrot.lane.b32.xlu0 %v4759, 64
    %v4762 = vpop.permute.xlu0 %4761
    %v4764 = vmul.f32 %v4745, %v4762
    %4766 = vrot.lane.b32.xlu0 %v4764, 32
    %v4767 = vpop.permute.xlu0 %4766
    %s4769 = scalar_lea.vmem [#allocation12], 48
    %4770 = vst.msk [vmem:[%s4769] sm:$0xff] %vm588, %v4767
    %4771 = vrot.lane.b32.xlu0 %v4589, 112
    %v4772 = vpop.permute.xlu0 %4771
    %v4774 = vsel %vm588, %v4767, %v4772
    %v4776 = vsel %vm308, %v4774, 0
    %4778 = vmatprep.subr.mxu0 0.0
    %4779 = vmatpush1.msra.mxu0 0.0
    %4780 = vmatprep.subr.mxu0 0.0
    %4781 = vmatpush1.msra.mxu0 0.0
    %4782 = vmatprep.subr.mxu0 0.0
    %4783 = vmatpush1.msra.mxu0 0.0
    %4784 = vmatprep.subr.mxu0 0.0
    %4785 = vmatpush1.msra.mxu0 0.0
    %4786 = vmatprep.subr.mxu0 0.0
    %4787 = vmatpush1.msra.mxu0 0.0
    %4788 = vmatprep.subr.mxu0 0.0
    %4789 = vmatpush1.msra.mxu0 0.0
    %4790 = vmatprep.subr.mxu0 0.0
    %4791 = vmatpush1.msra.mxu0 0.0
    %4792 = vmatprep.subr.mxu0 0.0
    %4793 = vmatpush1.msra.mxu0 0.0
    %4794 = vmatprep.subr.mxu0 0.0
    %4795 = vmatpush1.msra.mxu0 0.0
    %4796 = vmatprep.subr.mxu0 0.0
    %4797 = vmatpush1.msra.mxu0 0.0
    %4798 = vmatprep.subr.mxu0 %v2603
    %4799 = vmatpush1.msra.mxu0 %v2602
    %4800 = vmatprep.subr.mxu0 %v2601
    %4801 = vmatpush1.msra.mxu0 %v2600
    %4802 = vmatprep.subr.mxu0 %v2599
    %4803 = vmatpush1.msra.mxu0 %v2598
    %4804 = vmatprep.subr.mxu0 %v2597
    %4805 = vmatpush1.msra.mxu0 %v2596
    %4806 = vmatprep.subr.mxu0 %v2595
    %4807 = vmatpush1.msra.mxu0 %v2594
    %4808 = vmatprep.subr.mxu0 %v2593
    %4809 = vmatpush1.msra.mxu0 %v2592
    %4810 = vmatprep.subr.mxu0 0.0
    %4811 = vmatpush2.msra.mxu0 0.0
    %4812 = vmatprep.subr.mxu0 0.0
    %4813 = vmatpush2.msra.mxu0 0.0
    %4814 = vmatprep.subr.mxu0 0.0
    %4815 = vmatpush2.msra.mxu0 0.0
    %4816 = vmatprep.subr.mxu0 0.0
    %4817 = vmatpush2.msra.mxu0 0.0
    %4818 = vmatprep.subr.mxu0 0.0
    %4819 = vmatpush2.msra.mxu0 0.0
    %4820 = vmatprep.subr.mxu0 0.0
    %4821 = vmatpush2.msra.mxu0 0.0
    %4822 = vmatprep.subr.mxu0 0.0
    %4823 = vmatpush2.msra.mxu0 0.0
    %4824 = vmatprep.subr.mxu0 0.0
    %4825 = vmatpush2.msra.mxu0 0.0
    %4826 = vmatprep.subr.mxu0 0.0
    %4827 = vmatpush2.msra.mxu0 0.0
    %4828 = vmatprep.subr.mxu0 0.0
    %4829 = vmatpush2.msra.mxu0 0.0
    %4830 = vmatprep.subr.mxu0 0.0
    %4831 = vmatpush2.msra.mxu0 0.0
    %4832 = vmatprep.subr.mxu0 0.0
    %4833 = vmatpush2.msra.mxu0 0.0
    %4834 = vmatprep.subr.mxu0 0.0
    %4835 = vmatpush2.msra.mxu0 0.0
    %4836 = vmatprep.subr.mxu0 0.0
    %4837 = vmatpush2.msra.mxu0 0.0
    %4838 = vmatprep.subr.mxu0 0.0
    %4839 = vmatpush2.msra.mxu0 0.0
    %4840 = vmatprep.subr.mxu0 0.0
    %4841 = vmatpush2.msra.mxu0 0.0
    %4842 = vmatprep.mubr.f32.mxu0 0.0
    %4843 = vmatmul.mubr.f32.gmra.mxu0 %v4776
    %v4844 = vpop.f32.mrf.mxu0
    %v4845 = vadd.f32 0.0, %v4844
    %v4846 = vpop.f32.mrf.mxu0
    %v4847 = vadd.f32 0.0, %v4846
    %4848 = vdwg.mxu0
    %v4849 = vadd.f32 %v2765, %v4847
    %v4850 = vxor.u32 %v4849, 2147483648
    %v4851 = vmul.f32 %v4850, 1.442695
    %v4852 = vpow.pop %v4851
    %v4853 = vadd.f32 %v4852, 1.0
    %v4854 = vrcp.pop %v4853
    %v4855 = vmul.f32 1.0, %v4854
    %v4856 = vmul.f32 %v4855, 2.0
    %v4857 = vsub.f32 %v4856, 1.0
    %v4858 = vmul.f32 %v4855, %v4583
    %4860 = vrot.lane.b32.xlu0 %v4857, 96
    %v4861 = vpop.permute.xlu0 %4860
    %v4863 = vmul.f32 %v4855, %v4861
    %4865 = vrot.lane.b32.xlu0 %v4863, 16
    %v4866 = vpop.permute.xlu0 %4865
    %v4868 = vadd.f32 %v4858, %v4866
    %v4869 = vtanh.pop %v4868
    %4871 = vrot.lane.b32.xlu0 %v4869, 32
    %v4872 = vpop.permute.xlu0 %4871
    %v4874 = vmul.f32 %v4855, %v4872
    %4876 = vrot.lane.b32.xlu0 %v4874, 80
    %v4877 = vpop.permute.xlu0 %4876
    %v4878 = vsel %vm153, %v4877, 0
    %4880 = vmatprep.subr.mxu0 0.0
    %4881 = vmatpush1.msra.mxu0 0.0
    %4882 = vmatprep.subr.mxu0 0.0
    %4883 = vmatpush1.msra.mxu0 0.0
    %4884 = vmatprep.subr.mxu0 0.0
    %4885 = vmatpush1.msra.mxu0 0.0
    %4886 = vmatprep.subr.mxu0 0.0
    %4887 = vmatpush1.msra.mxu0 0.0
    %4888 = vmatprep.subr.mxu0 0.0
    %4889 = vmatpush1.msra.mxu0 0.0
    %4890 = vmatprep.subr.mxu0 0.0
    %4891 = vmatpush1.msra.mxu0 0.0
    %4892 = vmatprep.subr.mxu0 0.0
    %4893 = vmatpush1.msra.mxu0 0.0
    %4894 = vmatprep.subr.mxu0 0.0
    %4895 = vmatpush1.msra.mxu0 0.0
    %4896 = vmatprep.subr.mxu0 0.0
    %4897 = vmatpush1.msra.mxu0 0.0
    %4898 = vmatprep.subr.mxu0 0.0
    %4899 = vmatpush1.msra.mxu0 0.0
    %4900 = vmatprep.subr.mxu0 0.0
    %4901 = vmatpush1.msra.mxu0 0.0
    %4902 = vmatprep.subr.mxu0 0.0
    %4903 = vmatpush1.msra.mxu0 0.0
    %4904 = vmatprep.subr.mxu0 0.0
    %4905 = vmatpush1.msra.mxu0 0.0
    %4906 = vmatprep.subr.mxu0 0.0
    %4907 = vmatpush1.msra.mxu0 0.0
    %4908 = vmatprep.subr.mxu0 %v2608
    %4909 = vmatpush1.msra.mxu0 %v2607
    %4910 = vmatprep.subr.mxu0 %v2605
    %4911 = vmatpush1.msra.mxu0 %v2604
    %4912 = vmatprep.subr.mxu0 0.0
    %4913 = vmatpush2.msra.mxu0 0.0
    %4914 = vmatprep.subr.mxu0 0.0
    %4915 = vmatpush2.msra.mxu0 0.0
    %4916 = vmatprep.subr.mxu0 0.0
    %4917 = vmatpush2.msra.mxu0 0.0
    %4918 = vmatprep.subr.mxu0 0.0
    %4919 = vmatpush2.msra.mxu0 0.0
    %4920 = vmatprep.subr.mxu0 0.0
    %4921 = vmatpush2.msra.mxu0 0.0
    %4922 = vmatprep.subr.mxu0 0.0
    %4923 = vmatpush2.msra.mxu0 0.0
    %4924 = vmatprep.subr.mxu0 0.0
    %4925 = vmatpush2.msra.mxu0 0.0
    %4926 = vmatprep.subr.mxu0 0.0
    %4927 = vmatpush2.msra.mxu0 0.0
    %4928 = vmatprep.subr.mxu0 0.0
    %4929 = vmatpush2.msra.mxu0 0.0
    %4930 = vmatprep.subr.mxu0 0.0
    %4931 = vmatpush2.msra.mxu0 0.0
    %4932 = vmatprep.subr.mxu0 0.0
    %4933 = vmatpush2.msra.mxu0 0.0
    %4934 = vmatprep.subr.mxu0 0.0
    %4935 = vmatpush2.msra.mxu0 0.0
    %4936 = vmatprep.subr.mxu0 0.0
    %4937 = vmatpush2.msra.mxu0 0.0
    %4938 = vmatprep.subr.mxu0 0.0
    %4939 = vmatpush2.msra.mxu0 0.0
    %4940 = vmatprep.subr.mxu0 0.0
    %4941 = vmatpush2.msra.mxu0 0.0
    %4942 = vmatprep.subr.mxu0 0.0
    %4943 = vmatpush2.msra.mxu0 0.0
    %4944 = vmatprep.mubr.f32.mxu0 0.0
    %4945 = vmatmul.mubr.f32.gmra.mxu0 %v4878
    %v4946 = vpop.f32.mrf.mxu0
    %v4947 = vadd.f32 %v2772, %v4946
    %v4948 = vpop.f32.mrf.mxu0
    %v4949 = vadd.f32 %v2776, %v4948
    %4950 = vdwg.mxu0
    %4951 = vmatprep.subr.mxu0 0.0
    %4952 = vmatpush1.msra.mxu0 0.0
    %4953 = vmatprep.subr.mxu0 0.0
    %4954 = vmatpush1.msra.mxu0 0.0
    %4955 = vmatprep.subr.mxu0 0.0
    %4956 = vmatpush1.msra.mxu0 0.0
    %4957 = vmatprep.subr.mxu0 0.0
    %4958 = vmatpush1.msra.mxu0 0.0
    %4959 = vmatprep.subr.mxu0 0.0
    %4960 = vmatpush1.msra.mxu0 0.0
    %4961 = vmatprep.subr.mxu0 0.0
    %4962 = vmatpush1.msra.mxu0 0.0
    %4963 = vmatprep.subr.mxu0 0.0
    %4964 = vmatpush1.msra.mxu0 0.0
    %4965 = vmatprep.subr.mxu0 0.0
    %4966 = vmatpush1.msra.mxu0 0.0
    %4967 = vmatprep.subr.mxu0 0.0
    %4968 = vmatpush1.msra.mxu0 0.0
    %4969 = vmatprep.subr.mxu0 0.0
    %4970 = vmatpush1.msra.mxu0 0.0
    %4971 = vmatprep.subr.mxu0 0.0
    %4972 = vmatpush1.msra.mxu0 0.0
    %4973 = vmatprep.subr.mxu0 0.0
    %4974 = vmatpush1.msra.mxu0 0.0
    %4975 = vmatprep.subr.mxu0 0.0
    %4976 = vmatpush1.msra.mxu0 0.0
    %4977 = vmatprep.subr.mxu0 0.0
    %4978 = vmatpush1.msra.mxu0 0.0
    %4979 = vmatprep.subr.mxu0 0.0
    %4980 = vmatpush1.msra.mxu0 %v2609
    %4981 = vmatprep.subr.mxu0 0.0
    %4982 = vmatpush1.msra.mxu0 %v2606
    %4983 = vmatprep.subr.mxu0 0.0
    %4984 = vmatpush2.msra.mxu0 0.0
    %4985 = vmatprep.subr.mxu0 0.0
    %4986 = vmatpush2.msra.mxu0 0.0
    %4987 = vmatprep.subr.mxu0 0.0
    %4988 = vmatpush2.msra.mxu0 0.0
    %4989 = vmatprep.subr.mxu0 0.0
    %4990 = vmatpush2.msra.mxu0 0.0
    %4991 = vmatprep.subr.mxu0 0.0
    %4992 = vmatpush2.msra.mxu0 0.0
    %4993 = vmatprep.subr.mxu0 0.0
    %4994 = vmatpush2.msra.mxu0 0.0
    %4995 = vmatprep.subr.mxu0 0.0
    %4996 = vmatpush2.msra.mxu0 0.0
    %4997 = vmatprep.subr.mxu0 0.0
    %4998 = vmatpush2.msra.mxu0 0.0
    %4999 = vmatprep.subr.mxu0 0.0
    %5000 = vmatpush2.msra.mxu0 0.0
    %5001 = vmatprep.subr.mxu0 0.0
    %5002 = vmatpush2.msra.mxu0 0.0
    %5003 = vmatprep.subr.mxu0 0.0
    %5004 = vmatpush2.msra.mxu0 0.0
    %5005 = vmatprep.subr.mxu0 0.0
    %5006 = vmatpush2.msra.mxu0 0.0
    %5007 = vmatprep.subr.mxu0 0.0
    %5008 = vmatpush2.msra.mxu0 0.0
    %5009 = vmatprep.subr.mxu0 0.0
    %5010 = vmatpush2.msra.mxu0 0.0
    %5011 = vmatprep.subr.mxu0 0.0
    %5012 = vmatpush2.msra.mxu0 0.0
    %5013 = vmatprep.subr.mxu0 0.0
    %5014 = vmatpush2.msra.mxu0 0.0
    %5015 = vmatprep.mubr.f32.mxu0 0.0
    %5016 = vmatmul.mubr.f32.gmra.mxu0 %v4878
    %v5017 = vpop.f32.mrf.mxu0
    %v5018 = vadd.f32 %v2780, %v5017
    %v5019 = vpop.f32.mrf.mxu0
    %5020 = vdwg.mxu0
    %v5021 = vmul.f32 %v4947, %v2763
    %v5022 = vmul.f32 %v4949, %v4845
    %v5023 = vadd.f32 %v5021, %v5022
    %v5024 = vadd.f32 %v5023, %v5018
    %v5025 = vxor.u32 %v5024, 2147483648
    %v5026 = vmul.f32 %v5025, 1.442695
    %v5027 = vpow.pop %v5026
    %v5028 = vadd.f32 %v5027, 1.0
    %v5029 = vrcp.pop %v5028
    %v5030 = vmul.f32 1.0, %v5029
    %v5031 = vmul.f32 %v5030, 2.0
    %v5032 = vsub.f32 %v5031, 1.0
    %v5033 = vmul.f32 %v5030, %v4758
    %5035 = vrot.lane.b32.xlu0 %v5032, 64
    %v5036 = vpop.permute.xlu0 %5035
    %v5038 = vmul.f32 %v5030, %v5036
    %5040 = vrot.lane.b32.xlu0 %v5038, 32
    %v5041 = vpop.permute.xlu0 %5040
    %v5043 = vadd.f32 %v5033, %v5041
    %v5044 = vtanh.pop %v5043
    %5046 = vrot.lane.b32.xlu0 %v5044, 64
    %v5047 = vpop.permute.xlu0 %5046
    %v5049 = vmul.f32 %v5030, %v5047
    %5051 = vrot.lane.b32.xlu0 %v5049, 32
    %v5052 = vpop.permute.xlu0 %5051
    %s5054 = scalar_lea.vmem [#allocation12], 56
    %5055 = vst.msk [vmem:[%s5054] sm:$0xff] %vm588, %v5052
    %s5056 = scalar_lea.vmem [#allocation13], 8
    %5057 = vst.msk [vmem:[%s5056] sm:$0xff] %vm588, %v5052
    %5059 = vrot.lane.b32.xlu0 %v5043, 96
    %v5060 = vpop.permute.xlu0 %5059
    %s5062 = scalar_lea.vmem [#allocation15], 8
    %5063 = vst.msk [vmem:[%s5062] sm:$0xff] %vm588, %v5060
    // Predicated region
    $region66: #{tpu_custom_call.1} parent=1 // pred_check
      _
    $region67: #{tpu_custom_call.1} parent=1 // pred_check_branch
      %5065 = sbr.rel (0) target = $region69
    $region68: #{tpu_custom_call.1} parent=1 // pred_region
      %s5067 = ssub.s32 1024, 1024
      %5068 = vsyncadd [#allocation5], %s5067
      %s5069 = sshll.u32 [#allocation12], 4
      %s5070 = int_to_ptr.vmem [resolvable:$true] %s5069
      %5075 = dma.vmem_to_hbm [thread:$0]  %s5070, 1024, %s11, [#allocation5], 128, 128, 8
    $region69: #{tpu_custom_call.1} parent=1 // pred_fallthru
      _
    // Predicated region
    $region70: #{tpu_custom_call.1} parent=1 // pred_check
      _
    $region71: #{tpu_custom_call.1} parent=1 // pred_check_branch
      %5077 = sbr.rel (0) target = $region73
    $region72: #{tpu_custom_call.1} parent=1 // pred_region
      %s5079 = ssub.s32 256, 256
      %5080 = vsyncadd [#allocation14], %s5079
      %s5081 = sshll.u32 [#allocation13], 4
      %s5082 = int_to_ptr.vmem [resolvable:$true] %s5081
      %5087 = dma.vmem_to_hbm [thread:$0]  %s5082, 256, %s12, [#allocation14], 128, 128, 8
    $region73: #{tpu_custom_call.1} parent=1 // pred_fallthru
      _
    // Predicated region
    $region74: #{tpu_custom_call.1} parent=1 // pred_check
      _
    $region75: #{tpu_custom_call.1} parent=1 // pred_check_branch
      %5089 = sbr.rel (0) target = $region77
    $region76: #{tpu_custom_call.1} parent=1 // pred_region
      %s5091 = ssub.s32 256, 256
      %5092 = vsyncadd [#allocation14], %s5091
      %s5093 = sshll.u32 [#allocation15], 4
      %s5094 = int_to_ptr.vmem [resolvable:$true] %s5093
      %5099 = dma.vmem_to_hbm [thread:$0]  %s5094, 256, %s13, [#allocation14], 128, 128, 8
    $region77: #{tpu_custom_call.1} parent=1 // pred_fallthru
      _
    // Predicated region
    $region78: #{tpu_custom_call.1} parent=1 // pred_check
      _
    $region79: #{tpu_custom_call.1} parent=1 // pred_check_branch
      %5101 = sbr.rel (0) target = $region81
    $region80: #{tpu_custom_call.1} parent=1 // pred_region
      %5102 = dma.done [#allocation5], 1024
    $region81: #{tpu_custom_call.1} parent=1 // pred_fallthru
      _
    // Predicated region
    $region82: #{tpu_custom_call.1} parent=1 // pred_check
      _
    $region83: #{tpu_custom_call.1} parent=1 // pred_check_branch
      %5104 = sbr.rel (0) target = $region85
    $region84: #{tpu_custom_call.1} parent=1 // pred_region
      %5105 = dma.done [#allocation14], 256
    $region85: #{tpu_custom_call.1} parent=1 // pred_fallthru
      _
    // Predicated region
    $region86: #{tpu_custom_call.1} parent=1 // pred_check
      _
    $region87: #{tpu_custom_call.1} parent=1 // pred_check_branch
      %5107 = sbr.rel (0) target = $region89
    $region88: #{tpu_custom_call.1} parent=1 // pred_region
      %5108 = dma.done [#allocation14], 256
    $region89: #{tpu_custom_call.1} parent=1 // pred_fallthru
      _
    %5109 = vsyncpa [#allocation4], 1
    %5110 = vsyncpa [#allocation7], 1
    %5111 = vsyncpa [#allocation10], 1
    %5112 = vsyncpa [#allocation5], 1
    %5113 = vsyncpa [#allocation14], 1

</llo_original>
